<compile_context>
chip_gen: v7x
topology: tpu7x:2x2x1
jax: 0.10.0
libtpu: 0.0.40
codegen_flags: <defaults>
</compile_context>

<pallas_src>
import functools

import numpy as np
import jax
import jax.numpy as jnp
from jax import lax
from jax.experimental import pallas as pl
from jax.experimental.pallas import tpu as pltpu


# --------------------------------------------------------------------------- #
# Static geometry + constant selection matrices (built once in the wrapper)
# --------------------------------------------------------------------------- #
def _geometry(h, w):
    hp1, wp1 = h + 2, w + 2                    # stage-1 zero-halo padded layout
    h2, w2 = h // 2 + 1, w // 2 + 1            # after MaxPool2d(2, 2, padding=1)
    hp2, wp2 = h2 + 2, w2 + 2                  # stage-2 zero-halo padded layout
    h3, w3 = h2 // 2 + 1, w2 // 2 + 1          # after the second maxpool
    m1, g1 = hp1 * wp1, wp1 + 1
    m2, g2 = hp2 * wp2, wp2 + 1
    return dict(hp1=hp1, wp1=wp1, h2=h2, w2=w2, hp2=hp2, wp2=wp2, h3=h3, w3=w3,
                m1=m1, m2=m2, g1=g1, g2=g2, l1=m1 - g1, l2=m2 - g2, n3=h3 * w3)


def _build_consts(h, w, b_tile):
    """Interior masks (tiled over B_TILE) + decimation / avg-pool matrices."""
    g = _geometry(h, w)
    wp1, wp2 = g["wp1"], g["wp2"]
    h2, w2, h3, w3 = g["h2"], g["w2"], g["h3"], g["w3"]
    m1, m2, n3 = g["m1"], g["m2"], g["n3"]

    mask1 = np.zeros((m1, 1), np.float32)          # 1 at interior, 0 at halo
    for y in range(1, h + 1):
        mask1[y * wp1 + 1:y * wp1 + 1 + w, 0] = 1.0
    mask2 = np.zeros((m2, 1), np.float32)
    for y in range(1, h2 + 1):
        mask2[y * wp2 + 1:y * wp2 + 1 + w2, 0] = 1.0
    mask1 = np.tile(mask1, (b_tile, 1))
    mask2 = np.tile(mask2, (b_tile, 1))

    # maxpool #1: pick stride-2 window-start rows of the stride-1-pooled slab and
    # scatter them into one image's stage-2 zero-halo padded layout (m2 rows).
    s1 = np.zeros((m2, g["l1"]), np.float32)
    for y in range(1, h2 + 1):
        for x in range(1, w2 + 1):
            s1[y * wp2 + x, 2 * (y - 1) * wp1 + 2 * (x - 1)] = 1.0
    # maxpool #2: decimate into a dense (h3*w3) layout (no further 3x3 convs).
    s2 = np.zeros((n3, g["l2"]), np.float32)
    for y in range(h3):
        for x in range(w3):
            s2[y * w3 + x, 2 * y * wp2 + 2 * x] = 1.0
    # Global average pool over all B_TILE images at once: block-diagonal 1/n3.
    pool = np.zeros((b_tile, b_tile * n3), np.float32)
    for b in range(b_tile):
        pool[b, b * n3:(b + 1) * n3] = 1.0 / n3

    consts = dict(mask1=jnp.asarray(mask1), mask2=jnp.asarray(mask2),
                  s1=jnp.asarray(s1, dtype=jnp.bfloat16),
                  s2=jnp.asarray(s2, dtype=jnp.bfloat16),
                  pool=jnp.asarray(pool, dtype=jnp.bfloat16))
    return g, consts


# --------------------------------------------------------------------------- #
# The single fused Pallas kernel: one (batch-block, modality) per grid point
# --------------------------------------------------------------------------- #
def _fused_cnn_kernel(xg_ref, w1_ref, w2_ref, w3_ref, w4_ref, w5_ref, w6_ref,
                      w7_ref, b_ref, msk1_ref, msk2_ref, s1_ref, s2_ref,
                      pool_ref, o_ref, h2_sc, pe_sc, h4_sc, x3_sc, *,
                      b_tile, wp1, wp2, m1, m2, g2, l1, l2, n3,
                      c1, c2, c3, c4, c5, c6, n_classes, inv_mod):
    f32, bf16 = jnp.float32, jnp.bfloat16
    m = pl.program_id(1)                       # modality index (innermost axis)

    # ---- conv1 (3x3 via prep-time im2col, K = 9*cmax) + conv2 (1x1); BN folded
    h1 = jnp.dot(xg_ref[...], w1_ref[...], preferred_element_type=f32)
    h1 = jnp.maximum(h1 + b_ref[0:1, :c1], 0.0).astype(bf16)
    h2 = jnp.dot(h1, w2_ref[...], preferred_element_type=f32) + b_ref[1:2, :c2]
    h2_sc[...] = jnp.maximum(h2, 0.0) * msk1_ref[...]        # zero the halo ring

    # ---- maxpool 2x2/s2/p1 + stride-2 decimation into stage-2 padded layout ----
    zeros_g = jnp.zeros((g2, c2), f32)
    pe_sc[pl.ds(0, g2), :] = zeros_g                          # top guard rows
    pe_sc[pl.ds(g2 + b_tile * m2, g2), :] = zeros_g           # bottom guard rows
    for b in range(b_tile):                                   # static unroll
        base = b * m1
        p1 = jnp.maximum(
            jnp.maximum(h2_sc[pl.ds(base, l1), :], h2_sc[pl.ds(base + 1, l1), :]),
            jnp.maximum(h2_sc[pl.ds(base + wp1, l1), :],
                        h2_sc[pl.ds(base + wp1 + 1, l1), :]))
        pe_sc[pl.ds(g2 + b * m2, m2), :] = jnp.dot(
            s1_ref[...], p1.astype(bf16), preferred_element_type=f32)

    # ---- conv3 (3x3 as ONE K = 9*c2 matmul over an in-VMEM im2col) + conv4 ----
    taps = [pe_sc[pl.ds(dy * wp2 + dx, b_tile * m2), :]
            for dy in range(3) for dx in range(3)]
    x2 = jnp.concatenate(taps, axis=-1).astype(bf16)          # (B*m2, 9*c2)
    h3 = jnp.dot(x2, w3_ref[...], preferred_element_type=f32)
    h3 = jnp.maximum(h3 + b_ref[2:3, :c3], 0.0).astype(bf16)
    h4 = jnp.dot(h3, w4_ref[...], preferred_element_type=f32) + b_ref[3:4, :c4]
    h4_sc[...] = jnp.maximum(h4, 0.0) * msk2_ref[...]

    # ---- maxpool #2 + decimation to dense (n3) layout (per image) --------------
    for b in range(b_tile):
        base = b * m2
        p2 = jnp.maximum(
            jnp.maximum(h4_sc[pl.ds(base, l2), :], h4_sc[pl.ds(base + 1, l2), :]),
            jnp.maximum(h4_sc[pl.ds(base + wp2, l2), :],
                        h4_sc[pl.ds(base + wp2 + 1, l2), :]))
        x3_sc[pl.ds(b * n3, n3), :] = jnp.dot(
            s2_ref[...], p2.astype(bf16), preferred_element_type=f32)

    # ---- conv5 / conv6 (1x1) + global average pool (block-diag matmul) + conv7 -
    h5 = jnp.maximum(jnp.dot(x3_sc[...].astype(bf16), w5_ref[...],
                             preferred_element_type=f32) + b_ref[4:5, :c5], 0.0)
    h6 = jnp.maximum(jnp.dot(h5.astype(bf16), w6_ref[...],
                             preferred_element_type=f32) + b_ref[5:6, :c6], 0.0)
    feat = jnp.dot(pool_ref[...], h6.astype(bf16), preferred_element_type=f32)
    logits = jnp.dot(feat.astype(bf16), w7_ref[...],
                     preferred_element_type=f32) + b_ref[6:7, :n_classes]

    # ---- decision fusion: mean over modalities, accumulated in the out block ----
    contrib = (logits * inv_mod).astype(o_ref.dtype)

    @pl.when(m == 0)
    def _():
        o_ref[...] = contrib

    @pl.when(m != 0)
    def _():
        o_ref[...] = o_ref[...] + contrib


# --------------------------------------------------------------------------- #
# Parameter init + (bias, eval-BN) folding + modality stacking
# --------------------------------------------------------------------------- #
def _init_conv(key, shape, fan_in):
    kw, kb = jax.random.split(key)
    bound = 1.0 / float(fan_in) ** 0.5
    w = jax.random.uniform(kw, shape, jnp.float32, -bound, bound)
    b = jax.random.uniform(kb, (shape[-1],), jnp.float32, -bound, bound)
    return w, b


def _init_bn(key, c):
    k1, k2, k3, k4 = jax.random.split(key, 4)
    gamma = 1.0 + 0.1 * jax.random.normal(k1, (c,), jnp.float32)
    beta = 0.1 * jax.random.normal(k2, (c,), jnp.float32)
    mean = 0.1 * jax.random.normal(k3, (c,), jnp.float32)
    var = 1.0 + 0.1 * jax.random.uniform(k4, (c,), jnp.float32)
    return gamma, beta, mean, var


def init_params(key, param, n_classes):
    n1 = 16
    f = [n1, n1 * 2, n1 * 4, n1 * 8, n1 * 16]
    params = []
    for p in param:
        keys = jax.random.split(key, 14)
        key = keys[-1]
        w1, b1 = _init_conv(keys[0], (3, 3, p, f[0]), 9 * p)
        w2, b2 = _init_conv(keys[1], (f[0], f[1]), f[0])
        w3, b3 = _init_conv(keys[2], (3, 3, f[1], f[2]), 9 * f[1])
        w4, b4 = _init_conv(keys[3], (f[2], f[3]), f[2])
        w5, b5 = _init_conv(keys[4], (f[3], f[3]), f[3])
        w6, b6 = _init_conv(keys[5], (f[3], f[2]), f[3])
        w7, b7 = _init_conv(keys[6], (f[2], n_classes), f[2])
        params.append(dict(
            w1=w1, b1=b1, bn1=_init_bn(keys[7], f[0]),
            w2=w2, b2=b2, bn2=_init_bn(keys[8], f[1]),
            w3=w3, b3=b3, bn3=_init_bn(keys[9], f[2]),
            w4=w4, b4=b4, bn4=_init_bn(keys[10], f[3]),
            w5=w5, b5=b5, bn5=_init_bn(keys[11], f[3]),
            w6=w6, b6=b6, bn6=_init_bn(keys[12], f[2]),
            w7=w7, b7=b7))
    return params


def _fold(w, b, bn, eps=1e-5):
    """Fold conv bias + eval-mode BatchNorm into (w_eff, shift)."""
    gamma, beta, mean, var = bn
    scale = gamma / jnp.sqrt(var + eps)
    return w * scale, (b - mean) * scale + beta


def pack_params(params):
    """Fold BN, stack per-modality params, pad conv1 Cin to a common width."""
    cmax = max(p["w1"].shape[2] for p in params)
    w1l, w2l, w3l, w4l, w5l, w6l, w7l, bl = ([] for _ in range(8))
    for p in params:
        w1, s1b = _fold(p["w1"], p["b1"], p["bn1"])
        w1 = jnp.pad(w1, ((0, 0), (0, 0), (0, cmax - w1.shape[2]), (0, 0)))
        w1l.append(w1.reshape(9 * cmax, -1))                 # tap-major, ch-minor
        w2, s2b = _fold(p["w2"], p["b2"], p["bn2"]); w2l.append(w2)
        w3, s3b = _fold(p["w3"], p["b3"], p["bn3"])
        w3l.append(w3.reshape(9 * w3.shape[2], -1))
        w4, s4b = _fold(p["w4"], p["b4"], p["bn4"]); w4l.append(w4)
        w5, s5b = _fold(p["w5"], p["b5"], p["bn5"]); w5l.append(w5)
        w6, s6b = _fold(p["w6"], p["b6"], p["bn6"]); w6l.append(w6)
        w7l.append(p["w7"])
        # consolidate the 7 bias/shift rows into a single (8, 128) operand
        bmat = jnp.zeros((8, 128), jnp.float32)
        for i, r in enumerate([s1b, s2b, s3b, s4b, s5b, s6b, p["b7"]]):
            assert r.shape[0] <= 128
            bmat = bmat.at[i, :r.shape[0]].set(r)
        bl.append(bmat)

    packed = dict(
        w1=jnp.stack(w1l).astype(jnp.bfloat16),
        w2=jnp.stack(w2l).astype(jnp.bfloat16),
        w3=jnp.stack(w3l).astype(jnp.bfloat16),
        w4=jnp.stack(w4l).astype(jnp.bfloat16),
        w5=jnp.stack(w5l).astype(jnp.bfloat16),
        w6=jnp.stack(w6l).astype(jnp.bfloat16),
        w7=jnp.stack(w7l).astype(jnp.bfloat16),
        b=jnp.stack(bl), cmax=cmax)
    return packed


# --------------------------------------------------------------------------- #
# Forward pass (mirrors Decision_fusion_CNN.forward, eval mode)
# --------------------------------------------------------------------------- #
def _prep_input(x_nhwc, cmax, geo):
    """im2col over the zero-halo padded layout: (N, m1, 9*cmax), bf16."""
    n, h, w, c = x_nhwc.shape
    xp = jnp.pad(x_nhwc, ((0, 0), (2, 2), (2, 2), (0, cmax - c)))
    taps = [xp[:, dy:dy + geo["hp1"], dx:dx + geo["wp1"], :]
            for dy in range(3) for dx in range(3)]
    im2col = jnp.concatenate(taps, axis=-1)            # (N, hp1, wp1, 9*cmax)
    return im2col.reshape(n, geo["m1"], 9 * cmax).astype(jnp.bfloat16)


def decision_fusion_cnn_forward(data_nhwc, packed, n_classes, b_tile=None):
    n_mod = len(data_nhwc)
    n, h, w, _ = data_nhwc[0].shape
    if b_tile is None:
        # keep >=2 "parallel" blocks for v7x megacore whenever n >= 2; cap per VMEM
        b_tile = max(1, min(8, (n + 1) // 2))
    nb = -(-n // b_tile)
    n_pad = nb * b_tile

    geo, consts = _build_consts(h, w, b_tile)
    cmax = packed["cmax"]
    k1 = 9 * cmax
    c1 = packed["w1"].shape[-1]; c2 = packed["w2"].shape[-1]
    c3 = packed["w3"].shape[-1]; c4 = packed["w4"].shape[-1]
    c5 = packed["w5"].shape[-1]; c6 = packed["w6"].shape[-1]

    xs = []
    for x in data_nhwc:
        xi = _prep_input(x, cmax, geo)
        if n_pad > n:
            xi = jnp.pad(xi, ((0, n_pad - n), (0, 0), (0, 0)))
        xs.append(xi.reshape(nb, b_tile * geo["m1"], k1))
    xg = jnp.stack(xs)                                  # (mod, nb, B*m1, 9*cmax)

    def mod_spec(arr):            # modality-indexed (re-fetched only when m changes)
        nd = arr.ndim - 1
        return pl.BlockSpec((None,) + arr.shape[1:],
                            lambda b, m, _nd=nd: (m,) + (0,) * _nd)

    def shared_spec(arr):         # geometry constants shared by every grid point
        nd = arr.ndim
        return pl.BlockSpec(arr.shape, lambda b, m, _nd=nd: (0,) * _nd)

    in_specs = [
        pl.BlockSpec((None, None, b_tile * geo["m1"], k1),
                     lambda b, m: (m, b, 0, 0)),                         # xg
        mod_spec(packed["w1"]), mod_spec(packed["w2"]), mod_spec(packed["w3"]),
        mod_spec(packed["w4"]), mod_spec(packed["w5"]), mod_spec(packed["w6"]),
        mod_spec(packed["w7"]), mod_spec(packed["b"]),
        shared_spec(consts["mask1"]), shared_spec(consts["mask2"]),
        shared_spec(consts["s1"]), shared_spec(consts["s2"]),
        shared_spec(consts["pool"]),
    ]
    out_spec = pl.BlockSpec((None, b_tile, n_classes), lambda b, m: (b, 0, 0))

    kernel = functools.partial(
        _fused_cnn_kernel,
        b_tile=b_tile, wp1=geo["wp1"], wp2=geo["wp2"],
        m1=geo["m1"], m2=geo["m2"], g2=geo["g2"],
        l1=geo["l1"], l2=geo["l2"], n3=geo["n3"],
        c1=c1, c2=c2, c3=c3, c4=c4, c5=c5, c6=c6,
        n_classes=n_classes, inv_mod=1.0 / n_mod)

    out = pl.pallas_call(
        kernel,
        out_shape=jax.ShapeDtypeStruct((nb, b_tile, n_classes), jnp.float32),
        grid=(nb, n_mod),
        in_specs=in_specs,
        out_specs=out_spec,
        scratch_shapes=[
            pltpu.VMEM((b_tile * geo["m1"], c2), jnp.float32),             # conv2 out
            pltpu.VMEM((2 * geo["g2"] + b_tile * geo["m2"], c2), jnp.float32),  # pooled
            pltpu.VMEM((b_tile * geo["m2"], c4), jnp.float32),             # conv4 out
            pltpu.VMEM((b_tile * geo["n3"], c4), jnp.float32),             # pooled #2
        ],
        compiler_params=pltpu.CompilerParams(
            dimension_semantics=("parallel", "arbitrary"),
            vmem_limit_bytes=32 * 1024 * 1024),
    )(xg,
      packed["w1"], packed["w2"], packed["w3"], packed["w4"],
      packed["w5"], packed["w6"], packed["w7"], packed["b"],
      consts["mask1"], consts["mask2"], consts["s1"], consts["s2"],
      consts["pool"])

    return out.reshape(nb * b_tile, n_classes)[:n]


# --------------------------------------------------------------------------- #
# Pure-JAX f32 reference (PyTorch eval-mode semantics) for a tolerance check
# --------------------------------------------------------------------------- #
def _reference_forward(data_nhwc, params, n_classes, eps=1e-5):
    def bn(x, bnp):
        gamma, beta, mean, var = bnp
        return gamma * (x - mean) / jnp.sqrt(var + eps) + beta

    def conv3x3(x, w, b):
        y = lax.conv_general_dilated(x, w, (1, 1), ((1, 1), (1, 1)),
                                     dimension_numbers=("NHWC", "HWIO", "NHWC"))
        return y + b

    def conv1x1(x, w, b):
        return jnp.einsum("nhwc,cd->nhwd", x, w) + b

    def maxpool(x):
        return lax.reduce_window(x, -jnp.inf, lax.max, (1, 2, 2, 1), (1, 2, 2, 1),
                                 [(0, 0), (1, 1), (1, 1), (0, 0)])

    outs = []
    for x, p in zip(data_nhwc, params):
        x = jax.nn.relu(bn(conv3x3(x, p["w1"], p["b1"]), p["bn1"]))
        x = jax.nn.relu(bn(conv1x1(x, p["w2"], p["b2"]), p["bn2"]))
        x = maxpool(x)
        x = jax.nn.relu(bn(conv3x3(x, p["w3"], p["b3"]), p["bn3"]))
        x = jax.nn.relu(bn(conv1x1(x, p["w4"], p["b4"]), p["bn4"]))
        x = maxpool(x)
        x = jax.nn.relu(bn(conv1x1(x, p["w5"], p["b5"]), p["bn5"]))
        x = jax.nn.relu(bn(conv1x1(x, p["w6"], p["b6"]), p["bn6"]))
        x = jnp.mean(x, axis=(1, 2), keepdims=True)
        x = conv1x1(x, p["w7"], p["b7"])
        outs.append(x.reshape(-1, n_classes))
    return sum(outs) / len(outs)


# --------------------------------------------------------------------------- #
if __name__ == "__main__":
    key = jax.random.PRNGKey(0)
    param = (3, 4)          # two modalities with 3 and 4 input channels
    n_classes = 5
    batch, hw = 4, 16

    k0, k1, kparams = jax.random.split(key, 3)
    # PyTorch-style NCHW inputs
    x0_nchw = jax.random.normal(k0, (batch, param[0], hw, hw), jnp.float32)
    x1_nchw = jax.random.normal(k1, (batch, param[1], hw, hw), jnp.float32)

    # convert NCHW -> NHWC for the kernel
    data = [jnp.transpose(x0_nchw, (0, 2, 3, 1)),
            jnp.transpose(x1_nchw, (0, 2, 3, 1))]

    params = init_params(kparams, param, n_classes)
    packed = pack_params(params)

    fwd = jax.jit(lambda d0, d1: decision_fusion_cnn_forward([d0, d1], packed,
                                                             n_classes))
    out = jax.block_until_ready(fwd(data[0], data[1]))
    assert out.shape == (batch, n_classes), out.shape
    assert bool(jnp.all(jnp.isfinite(out)))

    ref = jax.block_until_ready(_reference_forward(data, params, n_classes))
    np.testing.assert_allclose(np.asarray(out), np.asarray(ref),
                               rtol=5e-2, atol=5e-2)
    print("KERNEL_OK")
</pallas_src>

<mosaic_0001>
module attributes {stable_mosaic.version = 11 : i64} {
  func.func @_fused_cnn_kernel(%arg0: i32, %arg1: i32, %arg2: memref<1x1x648x36xbf16, #tpu.memory_space<vmem>>, %arg3: memref<1x36x16xbf16, #tpu.memory_space<vmem>>, %arg4: memref<1x16x32xbf16, #tpu.memory_space<vmem>>, %arg5: memref<1x288x64xbf16, #tpu.memory_space<vmem>>, %arg6: memref<1x64x128xbf16, #tpu.memory_space<vmem>>, %arg7: memref<1x128x128xbf16, #tpu.memory_space<vmem>>, %arg8: memref<1x128x64xbf16, #tpu.memory_space<vmem>>, %arg9: memref<1x64x5xbf16, #tpu.memory_space<vmem>>, %arg10: memref<1x8x128xf32, #tpu.memory_space<vmem>>, %arg11: memref<648x1xf32, #tpu.memory_space<vmem>>, %arg12: memref<242x1xf32, #tpu.memory_space<vmem>>, %arg13: memref<121x305xbf16, #tpu.memory_space<vmem>>, %arg14: memref<25x109xbf16, #tpu.memory_space<vmem>>, %arg15: memref<2x50xbf16, #tpu.memory_space<vmem>>, %arg16: memref<1x2x5xf32, #tpu.memory_space<vmem>>, %arg17: memref<648x32xf32, #tpu.memory_space<vmem>>, %arg18: memref<266x32xf32, #tpu.memory_space<vmem>>, %arg19: memref<242x128xf32, #tpu.memory_space<vmem>>, %arg20: memref<50x128xf32, #tpu.memory_space<vmem>>) attributes {dimension_semantics = [#tpu.dimension_semantics<parallel>, #tpu.dimension_semantics<arbitrary>], iteration_bounds = array<i64: 2, 2>, scalar_prefetch = 0 : i64, scratch_operands = 4 : i64, tpu.core_type = #tpu.core_type<tc>, window_params = [{transform_indices = @transform_0, window_bounds = array<i64: 1, 1, 648, 36>}, {transform_indices = @transform_1, window_bounds = array<i64: 1, 36, 16>}, {transform_indices = @transform_2, window_bounds = array<i64: 1, 16, 32>}, {transform_indices = @transform_3, window_bounds = array<i64: 1, 288, 64>}, {transform_indices = @transform_4, window_bounds = array<i64: 1, 64, 128>}, {transform_indices = @transform_5, window_bounds = array<i64: 1, 128, 128>}, {transform_indices = @transform_6, window_bounds = array<i64: 1, 128, 64>}, {transform_indices = @transform_7, window_bounds = array<i64: 1, 64, 5>}, {transform_indices = @transform_8, window_bounds = array<i64: 1, 8, 128>}, {pipeline_mode = #tpu.pipeline_mode<synchronous>, transform_indices = @transform_9, window_bounds = array<i64: 648, 1>}, {pipeline_mode = #tpu.pipeline_mode<synchronous>, transform_indices = @transform_10, window_bounds = array<i64: 242, 1>}, {pipeline_mode = #tpu.pipeline_mode<synchronous>, transform_indices = @transform_11, window_bounds = array<i64: 121, 305>}, {pipeline_mode = #tpu.pipeline_mode<synchronous>, transform_indices = @transform_12, window_bounds = array<i64: 25, 109>}, {pipeline_mode = #tpu.pipeline_mode<synchronous>, transform_indices = @transform_13, window_bounds = array<i64: 2, 50>}, {transform_indices = @transform_14, window_bounds = array<i64: 1, 2, 5>}]} {
    %c0 = arith.constant 0 : index
    %c0_0 = arith.constant 0 : index
    %c0_1 = arith.constant 0 : index
    %c0_2 = arith.constant 0 : index
    %0 = vector.load %arg2[%c0, %c0_0, %c0_1, %c0_2] : memref<1x1x648x36xbf16, #tpu.memory_space<vmem>>, vector<1x1x648x36xbf16>
    %1 = vector.shape_cast %0 : vector<1x1x648x36xbf16> to vector<648x36xbf16>
    %c0_3 = arith.constant 0 : index
    %c0_4 = arith.constant 0 : index
    %c0_5 = arith.constant 0 : index
    %2 = vector.load %arg3[%c0_3, %c0_4, %c0_5] : memref<1x36x16xbf16, #tpu.memory_space<vmem>>, vector<1x36x16xbf16>
    %3 = vector.shape_cast %2 : vector<1x36x16xbf16> to vector<36x16xbf16>
    %cst = arith.constant dense<0.000000e+00> : vector<648x16xf32>
    %4 = tpu.matmul %1, %3, %cst {dimension_numbers = #tpu.dot_dimension_numbers<[1], [0], [0], [1], [0, 0, 1, 1], [], []>} : vector<648x36xbf16>, vector<36x16xbf16>, vector<648x16xf32> -> vector<648x16xf32>
    %c0_6 = arith.constant 0 : index
    %c0_7 = arith.constant 0 : index
    %c0_8 = arith.constant 0 : index
    %5 = vector.load %arg10[%c0_6, %c0_7, %c0_8] : memref<1x8x128xf32, #tpu.memory_space<vmem>>, vector<1x1x16xf32>
    %6 = vector.shape_cast %5 : vector<1x1x16xf32> to vector<1x16xf32>
    %7 = vector.broadcast %6 : vector<1x16xf32> to vector<648x16xf32>
    %8 = arith.addf %4, %7 : vector<648x16xf32>
    %cst_9 = arith.constant 0.000000e+00 : f32
    %9 = vector.broadcast %cst_9 : f32 to vector<648x16xf32>
    %10 = arith.maximumf %8, %9 : vector<648x16xf32>
    %11 = arith.truncf %10 : vector<648x16xf32> to vector<648x16xbf16>
    %c0_10 = arith.constant 0 : index
    %c0_11 = arith.constant 0 : index
    %c0_12 = arith.constant 0 : index
    %12 = vector.load %arg4[%c0_10, %c0_11, %c0_12] : memref<1x16x32xbf16, #tpu.memory_space<vmem>>, vector<1x16x32xbf16>
    %13 = vector.shape_cast %12 : vector<1x16x32xbf16> to vector<16x32xbf16>
    %cst_13 = arith.constant dense<0.000000e+00> : vector<648x32xf32>
    %14 = tpu.matmul %11, %13, %cst_13 {dimension_numbers = #tpu.dot_dimension_numbers<[1], [0], [0], [1], [0, 0, 1, 1], [], []>} : vector<648x16xbf16>, vector<16x32xbf16>, vector<648x32xf32> -> vector<648x32xf32>
    %c0_14 = arith.constant 0 : index
    %c1 = arith.constant 1 : index
    %c0_15 = arith.constant 0 : index
    %15 = vector.load %arg10[%c0_14, %c1, %c0_15] : memref<1x8x128xf32, #tpu.memory_space<vmem>>, vector<1x1x32xf32>
    %16 = vector.shape_cast %15 : vector<1x1x32xf32> to vector<1x32xf32>
    %17 = vector.broadcast %16 : vector<1x32xf32> to vector<648x32xf32>
    %18 = arith.addf %14, %17 : vector<648x32xf32>
    %cst_16 = arith.constant 0.000000e+00 : f32
    %19 = vector.broadcast %cst_16 : f32 to vector<648x32xf32>
    %20 = arith.maximumf %18, %19 : vector<648x32xf32>
    %c0_17 = arith.constant 0 : index
    %c0_18 = arith.constant 0 : index
    %21 = vector.load %arg11[%c0_17, %c0_18] : memref<648x1xf32, #tpu.memory_space<vmem>>, vector<648x1xf32>
    %22 = vector.broadcast %21 : vector<648x1xf32> to vector<648x32xf32>
    %23 = arith.mulf %20, %22 : vector<648x32xf32>
    %c0_19 = arith.constant 0 : index
    %c0_20 = arith.constant 0 : index
    %24 = vector.load %arg17[%c0_19, %c0_20] : memref<648x32xf32, #tpu.memory_space<vmem>>, vector<648x32xf32>
    tpu.vector_store %arg17[%c0_19, %c0_20], %23 {strides = array<i32>} : memref<648x32xf32, #tpu.memory_space<vmem>>, vector<648x32xf32>,
    %cst_21 = arith.constant 0.000000e+00 : f32
    %25 = vector.broadcast %cst_21 : f32 to vector<12x32xf32>
    %c0_22 = arith.constant 0 : index
    %c0_23 = arith.constant 0 : index
    %26 = vector.load %arg18[%c0_22, %c0_23] : memref<266x32xf32, #tpu.memory_space<vmem>>, vector<12x32xf32>
    tpu.vector_store %arg18[%c0_22, %c0_23], %25 {strides = array<i32>} : memref<266x32xf32, #tpu.memory_space<vmem>>, vector<12x32xf32>,
    %c254 = arith.constant 254 : index
    %c0_24 = arith.constant 0 : index
    %27 = vector.load %arg18[%c254, %c0_24] : memref<266x32xf32, #tpu.memory_space<vmem>>, vector<12x32xf32>
    tpu.vector_store %arg18[%c254, %c0_24], %25 {strides = array<i32>} : memref<266x32xf32, #tpu.memory_space<vmem>>, vector<12x32xf32>,
    %c0_25 = arith.constant 0 : index
    %c0_26 = arith.constant 0 : index
    %28 = vector.load %arg17[%c0_25, %c0_26] : memref<648x32xf32, #tpu.memory_space<vmem>>, vector<305x32xf32>
    %c1_27 = arith.constant 1 : index
    %c0_28 = arith.constant 0 : index
    %29 = vector.load %arg17[%c1_27, %c0_28] : memref<648x32xf32, #tpu.memory_space<vmem>>, vector<305x32xf32>
    %30 = arith.maximumf %28, %29 : vector<305x32xf32>
    %c18 = arith.constant 18 : index
    %c0_29 = arith.constant 0 : index
    %31 = vector.load %arg17[%c18, %c0_29] : memref<648x32xf32, #tpu.memory_space<vmem>>, vector<305x32xf32>
    %c19 = arith.constant 19 : index
    %c0_30 = arith.constant 0 : index
    %32 = vector.load %arg17[%c19, %c0_30] : memref<648x32xf32, #tpu.memory_space<vmem>>, vector<305x32xf32>
    %33 = arith.maximumf %31, %32 : vector<305x32xf32>
    %34 = arith.maximumf %30, %33 : vector<305x32xf32>
    %c0_31 = arith.constant 0 : index
    %c0_32 = arith.constant 0 : index
    %35 = vector.load %arg13[%c0_31, %c0_32] : memref<121x305xbf16, #tpu.memory_space<vmem>>, vector<121x305xbf16>
    %36 = arith.truncf %34 : vector<305x32xf32> to vector<305x32xbf16>
    %cst_33 = arith.constant dense<0.000000e+00> : vector<121x32xf32>
    %37 = tpu.matmul %35, %36, %cst_33 {dimension_numbers = #tpu.dot_dimension_numbers<[1], [0], [0], [1], [0, 0, 1, 1], [], []>} : vector<121x305xbf16>, vector<305x32xbf16>, vector<121x32xf32> -> vector<121x32xf32>
    %c12 = arith.constant 12 : index
    %c0_34 = arith.constant 0 : index
    %38 = vector.load %arg18[%c12, %c0_34] : memref<266x32xf32, #tpu.memory_space<vmem>>, vector<121x32xf32>
    tpu.vector_store %arg18[%c12, %c0_34], %37 {strides = array<i32>} : memref<266x32xf32, #tpu.memory_space<vmem>>, vector<121x32xf32>,
    %c324 = arith.constant 324 : index
    %c0_35 = arith.constant 0 : index
    %39 = vector.load %arg17[%c324, %c0_35] : memref<648x32xf32, #tpu.memory_space<vmem>>, vector<305x32xf32>
    %c325 = arith.constant 325 : index
    %c0_36 = arith.constant 0 : index
    %40 = vector.load %arg17[%c325, %c0_36] : memref<648x32xf32, #tpu.memory_space<vmem>>, vector<305x32xf32>
    %41 = arith.maximumf %39, %40 : vector<305x32xf32>
    %c342 = arith.constant 342 : index
    %c0_37 = arith.constant 0 : index
    %42 = vector.load %arg17[%c342, %c0_37] : memref<648x32xf32, #tpu.memory_space<vmem>>, vector<305x32xf32>
    %c343 = arith.constant 343 : index
    %c0_38 = arith.constant 0 : index
    %43 = vector.load %arg17[%c343, %c0_38] : memref<648x32xf32, #tpu.memory_space<vmem>>, vector<305x32xf32>
    %44 = arith.maximumf %42, %43 : vector<305x32xf32>
    %45 = arith.maximumf %41, %44 : vector<305x32xf32>
    %c0_39 = arith.constant 0 : index
    %c0_40 = arith.constant 0 : index
    %46 = vector.load %arg13[%c0_39, %c0_40] : memref<121x305xbf16, #tpu.memory_space<vmem>>, vector<121x305xbf16>
    %47 = arith.truncf %45 : vector<305x32xf32> to vector<305x32xbf16>
    %cst_41 = arith.constant dense<0.000000e+00> : vector<121x32xf32>
    %48 = tpu.matmul %46, %47, %cst_41 {dimension_numbers = #tpu.dot_dimension_numbers<[1], [0], [0], [1], [0, 0, 1, 1], [], []>} : vector<121x305xbf16>, vector<305x32xbf16>, vector<121x32xf32> -> vector<121x32xf32>
    %c133 = arith.constant 133 : index
    %c0_42 = arith.constant 0 : index
    %49 = vector.load %arg18[%c133, %c0_42] : memref<266x32xf32, #tpu.memory_space<vmem>>, vector<121x32xf32>
    tpu.vector_store %arg18[%c133, %c0_42], %48 {strides = array<i32>} : memref<266x32xf32, #tpu.memory_space<vmem>>, vector<121x32xf32>,
    %c0_43 = arith.constant 0 : index
    %c0_44 = arith.constant 0 : index
    %50 = vector.load %arg18[%c0_43, %c0_44] : memref<266x32xf32, #tpu.memory_space<vmem>>, vector<242x32xf32>
    %c1_45 = arith.constant 1 : index
    %c0_46 = arith.constant 0 : index
    %51 = vector.load %arg18[%c1_45, %c0_46] : memref<266x32xf32, #tpu.memory_space<vmem>>, vector<242x32xf32>
    %c2 = arith.constant 2 : index
    %c0_47 = arith.constant 0 : index
    %52 = vector.load %arg18[%c2, %c0_47] : memref<266x32xf32, #tpu.memory_space<vmem>>, vector<242x32xf32>
    %c11 = arith.constant 11 : index
    %c0_48 = arith.constant 0 : index
    %53 = vector.load %arg18[%c11, %c0_48] : memref<266x32xf32, #tpu.memory_space<vmem>>, vector<242x32xf32>
    %c12_49 = arith.constant 12 : index
    %c0_50 = arith.constant 0 : index
    %54 = vector.load %arg18[%c12_49, %c0_50] : memref<266x32xf32, #tpu.memory_space<vmem>>, vector<242x32xf32>
    %c13 = arith.constant 13 : index
    %c0_51 = arith.constant 0 : index
    %55 = vector.load %arg18[%c13, %c0_51] : memref<266x32xf32, #tpu.memory_space<vmem>>, vector<242x32xf32>
    %c22 = arith.constant 22 : index
    %c0_52 = arith.constant 0 : index
    %56 = vector.load %arg18[%c22, %c0_52] : memref<266x32xf32, #tpu.memory_space<vmem>>, vector<242x32xf32>
    %c23 = arith.constant 23 : index
    %c0_53 = arith.constant 0 : index
    %57 = vector.load %arg18[%c23, %c0_53] : memref<266x32xf32, #tpu.memory_space<vmem>>, vector<242x32xf32>
    %c24 = arith.constant 24 : index
    %c0_54 = arith.constant 0 : index
    %58 = vector.load %arg18[%c24, %c0_54] : memref<266x32xf32, #tpu.memory_space<vmem>>, vector<242x32xf32>
    %59 = tpu.concatenate %50, %51, %52, %53, %54, %55, %56, %57, %58 in 1 : vector<242x32xf32>, vector<242x32xf32>, vector<242x32xf32>, vector<242x32xf32>, vector<242x32xf32>, vector<242x32xf32>, vector<242x32xf32>, vector<242x32xf32>, vector<242x32xf32> -> vector<242x288xf32>
    %60 = arith.truncf %59 : vector<242x288xf32> to vector<242x288xbf16>
    %c0_55 = arith.constant 0 : index
    %c0_56 = arith.constant 0 : index
    %c0_57 = arith.constant 0 : index
    %61 = vector.load %arg5[%c0_55, %c0_56, %c0_57] : memref<1x288x64xbf16, #tpu.memory_space<vmem>>, vector<1x288x64xbf16>
    %62 = vector.shape_cast %61 : vector<1x288x64xbf16> to vector<288x64xbf16>
    %cst_58 = arith.constant dense<0.000000e+00> : vector<242x64xf32>
    %63 = tpu.matmul %60, %62, %cst_58 {dimension_numbers = #tpu.dot_dimension_numbers<[1], [0], [0], [1], [0, 0, 1, 1], [], []>} : vector<242x288xbf16>, vector<288x64xbf16>, vector<242x64xf32> -> vector<242x64xf32>
    %c0_59 = arith.constant 0 : index
    %c2_60 = arith.constant 2 : index
    %c0_61 = arith.constant 0 : index
    %64 = vector.load %arg10[%c0_59, %c2_60, %c0_61] : memref<1x8x128xf32, #tpu.memory_space<vmem>>, vector<1x1x64xf32>
    %65 = vector.shape_cast %64 : vector<1x1x64xf32> to vector<1x64xf32>
    %66 = vector.broadcast %65 : vector<1x64xf32> to vector<242x64xf32>
    %67 = arith.addf %63, %66 : vector<242x64xf32>
    %cst_62 = arith.constant 0.000000e+00 : f32
    %68 = vector.broadcast %cst_62 : f32 to vector<242x64xf32>
    %69 = arith.maximumf %67, %68 : vector<242x64xf32>
    %70 = arith.truncf %69 : vector<242x64xf32> to vector<242x64xbf16>
    %c0_63 = arith.constant 0 : index
    %c0_64 = arith.constant 0 : index
    %c0_65 = arith.constant 0 : index
    %71 = vector.load %arg6[%c0_63, %c0_64, %c0_65] : memref<1x64x128xbf16, #tpu.memory_space<vmem>>, vector<1x64x128xbf16>
    %72 = vector.shape_cast %71 : vector<1x64x128xbf16> to vector<64x128xbf16>
    %cst_66 = arith.constant dense<0.000000e+00> : vector<242x128xf32>
    %73 = tpu.matmul %70, %72, %cst_66 {dimension_numbers = #tpu.dot_dimension_numbers<[1], [0], [0], [1], [0, 0, 1, 1], [], []>} : vector<242x64xbf16>, vector<64x128xbf16>, vector<242x128xf32> -> vector<242x128xf32>
    %c0_67 = arith.constant 0 : index
    %c3 = arith.constant 3 : index
    %c0_68 = arith.constant 0 : index
    %74 = vector.load %arg10[%c0_67, %c3, %c0_68] : memref<1x8x128xf32, #tpu.memory_space<vmem>>, vector<1x1x128xf32>
    %75 = vector.shape_cast %74 : vector<1x1x128xf32> to vector<1x128xf32>
    %76 = vector.broadcast %75 : vector<1x128xf32> to vector<242x128xf32>
    %77 = arith.addf %73, %76 : vector<242x128xf32>
    %cst_69 = arith.constant 0.000000e+00 : f32
    %78 = vector.broadcast %cst_69 : f32 to vector<242x128xf32>
    %79 = arith.maximumf %77, %78 : vector<242x128xf32>
    %c0_70 = arith.constant 0 : index
    %c0_71 = arith.constant 0 : index
    %80 = vector.load %arg12[%c0_70, %c0_71] : memref<242x1xf32, #tpu.memory_space<vmem>>, vector<242x1xf32>
    %81 = vector.broadcast %80 : vector<242x1xf32> to vector<242x128xf32>
    %82 = arith.mulf %79, %81 : vector<242x128xf32>
    %c0_72 = arith.constant 0 : index
    %c0_73 = arith.constant 0 : index
    %83 = vector.load %arg19[%c0_72, %c0_73] : memref<242x128xf32, #tpu.memory_space<vmem>>, vector<242x128xf32>
    tpu.vector_store %arg19[%c0_72, %c0_73], %82 {strides = array<i32>} : memref<242x128xf32, #tpu.memory_space<vmem>>, vector<242x128xf32>,
    %c0_74 = arith.constant 0 : index
    %c0_75 = arith.constant 0 : index
    %84 = vector.load %arg19[%c0_74, %c0_75] : memref<242x128xf32, #tpu.memory_space<vmem>>, vector<109x128xf32>
    %c1_76 = arith.constant 1 : index
    %c0_77 = arith.constant 0 : index
    %85 = vector.load %arg19[%c1_76, %c0_77] : memref<242x128xf32, #tpu.memory_space<vmem>>, vector<109x128xf32>
    %86 = arith.maximumf %84, %85 : vector<109x128xf32>
    %c11_78 = arith.constant 11 : index
    %c0_79 = arith.constant 0 : index
    %87 = vector.load %arg19[%c11_78, %c0_79] : memref<242x128xf32, #tpu.memory_space<vmem>>, vector<109x128xf32>
    %c12_80 = arith.constant 12 : index
    %c0_81 = arith.constant 0 : index
    %88 = vector.load %arg19[%c12_80, %c0_81] : memref<242x128xf32, #tpu.memory_space<vmem>>, vector<109x128xf32>
    %89 = arith.maximumf %87, %88 : vector<109x128xf32>
    %90 = arith.maximumf %86, %89 : vector<109x128xf32>
    %c0_82 = arith.constant 0 : index
    %c0_83 = arith.constant 0 : index
    %91 = vector.load %arg14[%c0_82, %c0_83] : memref<25x109xbf16, #tpu.memory_space<vmem>>, vector<25x109xbf16>
    %92 = arith.truncf %90 : vector<109x128xf32> to vector<109x128xbf16>
    %cst_84 = arith.constant dense<0.000000e+00> : vector<25x128xf32>
    %93 = tpu.matmul %91, %92, %cst_84 {dimension_numbers = #tpu.dot_dimension_numbers<[1], [0], [0], [1], [0, 0, 1, 1], [], []>} : vector<25x109xbf16>, vector<109x128xbf16>, vector<25x128xf32> -> vector<25x128xf32>
    %c0_85 = arith.constant 0 : index
    %c0_86 = arith.constant 0 : index
    %94 = vector.load %arg20[%c0_85, %c0_86] : memref<50x128xf32, #tpu.memory_space<vmem>>, vector<25x128xf32>
    tpu.vector_store %arg20[%c0_85, %c0_86], %93 {strides = array<i32>} : memref<50x128xf32, #tpu.memory_space<vmem>>, vector<25x128xf32>,
    %c121 = arith.constant 121 : index
    %c0_87 = arith.constant 0 : index
    %95 = vector.load %arg19[%c121, %c0_87] : memref<242x128xf32, #tpu.memory_space<vmem>>, vector<109x128xf32>
    %c122 = arith.constant 122 : index
    %c0_88 = arith.constant 0 : index
    %96 = vector.load %arg19[%c122, %c0_88] : memref<242x128xf32, #tpu.memory_space<vmem>>, vector<109x128xf32>
    %97 = arith.maximumf %95, %96 : vector<109x128xf32>
    %c132 = arith.constant 132 : index
    %c0_89 = arith.constant 0 : index
    %98 = vector.load %arg19[%c132, %c0_89] : memref<242x128xf32, #tpu.memory_space<vmem>>, vector<109x128xf32>
    %c133_90 = arith.constant 133 : index
    %c0_91 = arith.constant 0 : index
    %99 = vector.load %arg19[%c133_90, %c0_91] : memref<242x128xf32, #tpu.memory_space<vmem>>, vector<109x128xf32>
    %100 = arith.maximumf %98, %99 : vector<109x128xf32>
    %101 = arith.maximumf %97, %100 : vector<109x128xf32>
    %c0_92 = arith.constant 0 : index
    %c0_93 = arith.constant 0 : index
    %102 = vector.load %arg14[%c0_92, %c0_93] : memref<25x109xbf16, #tpu.memory_space<vmem>>, vector<25x109xbf16>
    %103 = arith.truncf %101 : vector<109x128xf32> to vector<109x128xbf16>
    %cst_94 = arith.constant dense<0.000000e+00> : vector<25x128xf32>
    %104 = tpu.matmul %102, %103, %cst_94 {dimension_numbers = #tpu.dot_dimension_numbers<[1], [0], [0], [1], [0, 0, 1, 1], [], []>} : vector<25x109xbf16>, vector<109x128xbf16>, vector<25x128xf32> -> vector<25x128xf32>
    %c25 = arith.constant 25 : index
    %c0_95 = arith.constant 0 : index
    %105 = vector.load %arg20[%c25, %c0_95] : memref<50x128xf32, #tpu.memory_space<vmem>>, vector<25x128xf32>
    tpu.vector_store %arg20[%c25, %c0_95], %104 {strides = array<i32>} : memref<50x128xf32, #tpu.memory_space<vmem>>, vector<25x128xf32>,
    %c0_96 = arith.constant 0 : index
    %c0_97 = arith.constant 0 : index
    %106 = vector.load %arg20[%c0_96, %c0_97] : memref<50x128xf32, #tpu.memory_space<vmem>>, vector<50x128xf32>
    %107 = arith.truncf %106 : vector<50x128xf32> to vector<50x128xbf16>
    %c0_98 = arith.constant 0 : index
    %c0_99 = arith.constant 0 : index
    %c0_100 = arith.constant 0 : index
    %108 = vector.load %arg7[%c0_98, %c0_99, %c0_100] : memref<1x128x128xbf16, #tpu.memory_space<vmem>>, vector<1x128x128xbf16>
    %109 = vector.shape_cast %108 : vector<1x128x128xbf16> to vector<128x128xbf16>
    %cst_101 = arith.constant dense<0.000000e+00> : vector<50x128xf32>
    %110 = tpu.matmul %107, %109, %cst_101 {dimension_numbers = #tpu.dot_dimension_numbers<[1], [0], [0], [1], [0, 0, 1, 1], [], []>} : vector<50x128xbf16>, vector<128x128xbf16>, vector<50x128xf32> -> vector<50x128xf32>
    %c0_102 = arith.constant 0 : index
    %c4 = arith.constant 4 : index
    %c0_103 = arith.constant 0 : index
    %111 = vector.load %arg10[%c0_102, %c4, %c0_103] : memref<1x8x128xf32, #tpu.memory_space<vmem>>, vector<1x1x128xf32>
    %112 = vector.shape_cast %111 : vector<1x1x128xf32> to vector<1x128xf32>
    %113 = vector.broadcast %112 : vector<1x128xf32> to vector<50x128xf32>
    %114 = arith.addf %110, %113 : vector<50x128xf32>
    %cst_104 = arith.constant 0.000000e+00 : f32
    %115 = vector.broadcast %cst_104 : f32 to vector<50x128xf32>
    %116 = arith.maximumf %114, %115 : vector<50x128xf32>
    %117 = arith.truncf %116 : vector<50x128xf32> to vector<50x128xbf16>
    %c0_105 = arith.constant 0 : index
    %c0_106 = arith.constant 0 : index
    %c0_107 = arith.constant 0 : index
    %118 = vector.load %arg8[%c0_105, %c0_106, %c0_107] : memref<1x128x64xbf16, #tpu.memory_space<vmem>>, vector<1x128x64xbf16>
    %119 = vector.shape_cast %118 : vector<1x128x64xbf16> to vector<128x64xbf16>
    %cst_108 = arith.constant dense<0.000000e+00> : vector<50x64xf32>
    %120 = tpu.matmul %117, %119, %cst_108 {dimension_numbers = #tpu.dot_dimension_numbers<[1], [0], [0], [1], [0, 0, 1, 1], [], []>} : vector<50x128xbf16>, vector<128x64xbf16>, vector<50x64xf32> -> vector<50x64xf32>
    %c0_109 = arith.constant 0 : index
    %c5 = arith.constant 5 : index
    %c0_110 = arith.constant 0 : index
    %121 = vector.load %arg10[%c0_109, %c5, %c0_110] : memref<1x8x128xf32, #tpu.memory_space<vmem>>, vector<1x1x64xf32>
    %122 = vector.shape_cast %121 : vector<1x1x64xf32> to vector<1x64xf32>
    %123 = vector.broadcast %122 : vector<1x64xf32> to vector<50x64xf32>
    %124 = arith.addf %120, %123 : vector<50x64xf32>
    %cst_111 = arith.constant 0.000000e+00 : f32
    %125 = vector.broadcast %cst_111 : f32 to vector<50x64xf32>
    %126 = arith.maximumf %124, %125 : vector<50x64xf32>
    %c0_112 = arith.constant 0 : index
    %c0_113 = arith.constant 0 : index
    %127 = vector.load %arg15[%c0_112, %c0_113] : memref<2x50xbf16, #tpu.memory_space<vmem>>, vector<2x50xbf16>
    %128 = arith.truncf %126 : vector<50x64xf32> to vector<50x64xbf16>
    %cst_114 = arith.constant dense<0.000000e+00> : vector<2x64xf32>
    %129 = tpu.matmul %127, %128, %cst_114 {dimension_numbers = #tpu.dot_dimension_numbers<[1], [0], [0], [1], [0, 0, 1, 1], [], []>} : vector<2x50xbf16>, vector<50x64xbf16>, vector<2x64xf32> -> vector<2x64xf32>
    %130 = arith.truncf %129 : vector<2x64xf32> to vector<2x64xbf16>
    %c0_115 = arith.constant 0 : index
    %c0_116 = arith.constant 0 : index
    %c0_117 = arith.constant 0 : index
    %131 = vector.load %arg9[%c0_115, %c0_116, %c0_117] : memref<1x64x5xbf16, #tpu.memory_space<vmem>>, vector<1x64x5xbf16>
    %132 = vector.shape_cast %131 : vector<1x64x5xbf16> to vector<64x5xbf16>
    %cst_118 = arith.constant dense<0.000000e+00> : vector<2x5xf32>
    %133 = tpu.matmul %130, %132, %cst_118 {dimension_numbers = #tpu.dot_dimension_numbers<[1], [0], [0], [1], [0, 0, 1, 1], [], []>} : vector<2x64xbf16>, vector<64x5xbf16>, vector<2x5xf32> -> vector<2x5xf32>
    %c0_119 = arith.constant 0 : index
    %c6 = arith.constant 6 : index
    %c0_120 = arith.constant 0 : index
    %134 = vector.load %arg10[%c0_119, %c6, %c0_120] : memref<1x8x128xf32, #tpu.memory_space<vmem>>, vector<1x1x5xf32>
    %135 = vector.shape_cast %134 : vector<1x1x5xf32> to vector<1x5xf32>
    %136 = vector.broadcast %135 : vector<1x5xf32> to vector<2x5xf32>
    %137 = arith.addf %133, %136 : vector<2x5xf32>
    %cst_121 = arith.constant 5.000000e-01 : f32
    %138 = vector.broadcast %cst_121 : f32 to vector<2x5xf32>
    %139 = arith.mulf %137, %138 : vector<2x5xf32>
    %c0_i32 = arith.constant 0 : i32
    %140 = arith.cmpi eq, %arg1, %c0_i32 : i32
    %141 = arith.extui %140 : i1 to i32
    %c0_i32_122 = arith.constant 0 : i32
    %142 = arith.cmpi ne, %141, %c0_i32_122 : i32
    scf.if %142 {
      %c0_125 = arith.constant 0 : index
      %c0_126 = arith.constant 0 : index
      %c0_127 = arith.constant 0 : index
      %146 = vector.load %arg16[%c0_125, %c0_126, %c0_127] : memref<1x2x5xf32, #tpu.memory_space<vmem>>, vector<1x2x5xf32>
      %147 = vector.shape_cast %146 : vector<1x2x5xf32> to vector<2x5xf32>
      %148 = vector.shape_cast %139 : vector<2x5xf32> to vector<1x2x5xf32>
      tpu.vector_store %arg16[%c0_125, %c0_126, %c0_127], %148 {strides = array<i32>} : memref<1x2x5xf32, #tpu.memory_space<vmem>>, vector<1x2x5xf32>,
    } else {
    }
    %c0_i32_123 = arith.constant 0 : i32
    %143 = arith.cmpi ne, %arg1, %c0_i32_123 : i32
    %144 = arith.extui %143 : i1 to i32
    %c0_i32_124 = arith.constant 0 : i32
    %145 = arith.cmpi ne, %144, %c0_i32_124 : i32
    scf.if %145 {
      %c0_125 = arith.constant 0 : index
      %c0_126 = arith.constant 0 : index
      %c0_127 = arith.constant 0 : index
      %146 = vector.load %arg16[%c0_125, %c0_126, %c0_127] : memref<1x2x5xf32, #tpu.memory_space<vmem>>, vector<1x2x5xf32>
      %147 = vector.shape_cast %146 : vector<1x2x5xf32> to vector<2x5xf32>
      %148 = arith.addf %147, %139 : vector<2x5xf32>
      %c0_128 = arith.constant 0 : index
      %c0_129 = arith.constant 0 : index
      %c0_130 = arith.constant 0 : index
      %149 = vector.load %arg16[%c0_128, %c0_129, %c0_130] : memref<1x2x5xf32, #tpu.memory_space<vmem>>, vector<1x2x5xf32>
      %150 = vector.shape_cast %149 : vector<1x2x5xf32> to vector<2x5xf32>
      %151 = vector.shape_cast %148 : vector<2x5xf32> to vector<1x2x5xf32>
      tpu.vector_store %arg16[%c0_128, %c0_129, %c0_130], %151 {strides = array<i32>} : memref<1x2x5xf32, #tpu.memory_space<vmem>>, vector<1x2x5xf32>,
    } else {
    }
    return
  }
  func.func @transform_0(%arg0: i32, %arg1: i32) -> (i32, i32, i32, i32) {
    %c0_i32 = arith.constant 0 : i32
    %c0_i32_0 = arith.constant 0 : i32
    %c0_i32_1 = arith.constant 0 : i32
    return %arg1, %arg0, %c0_i32, %c0_i32_0 : i32, i32, i32, i32
  }
  func.func @transform_1(%arg0: i32, %arg1: i32) -> (i32, i32, i32) {
    %c0_i32 = arith.constant 0 : i32
    %c0_i32_0 = arith.constant 0 : i32
    %c0_i32_1 = arith.constant 0 : i32
    return %arg1, %c0_i32, %c0_i32_0 : i32, i32, i32
  }
  func.func @transform_2(%arg0: i32, %arg1: i32) -> (i32, i32, i32) {
    %c0_i32 = arith.constant 0 : i32
    %c0_i32_0 = arith.constant 0 : i32
    %c0_i32_1 = arith.constant 0 : i32
    return %arg1, %c0_i32, %c0_i32_0 : i32, i32, i32
  }
  func.func @transform_3(%arg0: i32, %arg1: i32) -> (i32, i32, i32) {
    %c0_i32 = arith.constant 0 : i32
    %c0_i32_0 = arith.constant 0 : i32
    %c0_i32_1 = arith.constant 0 : i32
    return %arg1, %c0_i32, %c0_i32_0 : i32, i32, i32
  }
  func.func @transform_4(%arg0: i32, %arg1: i32) -> (i32, i32, i32) {
    %c0_i32 = arith.constant 0 : i32
    %c0_i32_0 = arith.constant 0 : i32
    %c0_i32_1 = arith.constant 0 : i32
    return %arg1, %c0_i32, %c0_i32_0 : i32, i32, i32
  }
  func.func @transform_5(%arg0: i32, %arg1: i32) -> (i32, i32, i32) {
    %c0_i32 = arith.constant 0 : i32
    %c0_i32_0 = arith.constant 0 : i32
    %c0_i32_1 = arith.constant 0 : i32
    return %arg1, %c0_i32, %c0_i32_0 : i32, i32, i32
  }
  func.func @transform_6(%arg0: i32, %arg1: i32) -> (i32, i32, i32) {
    %c0_i32 = arith.constant 0 : i32
    %c0_i32_0 = arith.constant 0 : i32
    %c0_i32_1 = arith.constant 0 : i32
    return %arg1, %c0_i32, %c0_i32_0 : i32, i32, i32
  }
  func.func @transform_7(%arg0: i32, %arg1: i32) -> (i32, i32, i32) {
    %c0_i32 = arith.constant 0 : i32
    %c0_i32_0 = arith.constant 0 : i32
    %c0_i32_1 = arith.constant 0 : i32
    return %arg1, %c0_i32, %c0_i32_0 : i32, i32, i32
  }
  func.func @transform_8(%arg0: i32, %arg1: i32) -> (i32, i32, i32) {
    %c0_i32 = arith.constant 0 : i32
    %c0_i32_0 = arith.constant 0 : i32
    %c0_i32_1 = arith.constant 0 : i32
    return %arg1, %c0_i32, %c0_i32_0 : i32, i32, i32
  }
  func.func @transform_9(%arg0: i32, %arg1: i32) -> (i32, i32) {
    %c0_i32 = arith.constant 0 : i32
    %c0_i32_0 = arith.constant 0 : i32
    %c0_i32_1 = arith.constant 0 : i32
    return %c0_i32, %c0_i32_0 : i32, i32
  }
  func.func @transform_10(%arg0: i32, %arg1: i32) -> (i32, i32) {
    %c0_i32 = arith.constant 0 : i32
    %c0_i32_0 = arith.constant 0 : i32
    %c0_i32_1 = arith.constant 0 : i32
    return %c0_i32, %c0_i32_0 : i32, i32
  }
  func.func @transform_11(%arg0: i32, %arg1: i32) -> (i32, i32) {
    %c0_i32 = arith.constant 0 : i32
    %c0_i32_0 = arith.constant 0 : i32
    %c0_i32_1 = arith.constant 0 : i32
    return %c0_i32, %c0_i32_0 : i32, i32
  }
  func.func @transform_12(%arg0: i32, %arg1: i32) -> (i32, i32) {
    %c0_i32 = arith.constant 0 : i32
    %c0_i32_0 = arith.constant 0 : i32
    %c0_i32_1 = arith.constant 0 : i32
    return %c0_i32, %c0_i32_0 : i32, i32
  }
  func.func @transform_13(%arg0: i32, %arg1: i32) -> (i32, i32) {
    %c0_i32 = arith.constant 0 : i32
    %c0_i32_0 = arith.constant 0 : i32
    %c0_i32_1 = arith.constant 0 : i32
    return %c0_i32, %c0_i32_0 : i32, i32
  }
  func.func @transform_14(%arg0: i32, %arg1: i32) -> (i32, i32, i32) {
    %c0_i32 = arith.constant 0 : i32
    %c0_i32_0 = arith.constant 0 : i32
    %c0_i32_1 = arith.constant 0 : i32
    return %arg0, %c0_i32, %c0_i32_0 : i32, i32, i32
  }
}

</mosaic_0001>

<llo_original>
// kernel: _lambda_.1
$region0: #{_lambda_.1}
  #allocation0 [shape = 'u32[]', space=smem, size = 0x4, offset = 0x4, fixed_abs, tag = 'smem constant byte address 0x4 - core index']
  #allocation1 [shape = 'u32[144,128]{1,0:T(1,128)}', space=vmem, size = 0x12000, scoped, tag = 'internal scratch']
  #allocation2 [shape = 'f32[648,32]{1,0:T(8,128)}', space=vmem, size = 0x51000, scoped, tag = 'scratch operand']
  #allocation3 [shape = 'f32[266,32]{1,0:T(8,128)}', space=vmem, size = 0x22000, scoped, tag = 'scratch operand']
  #allocation4 [shape = 'f32[242,128]{1,0:T(8,128)}', space=vmem, size = 0x1f000, scoped, tag = 'scratch operand']
  #allocation5 [shape = 'f32[50,128]{1,0:T(8,128)}', space=vmem, size = 0x7000, scoped, tag = 'scratch operand']
  %s0 = inlined_call_operand.vmem [shape: bf16[2,2,648,36], index: 0, kind: input, shape index: {}]
  %s1 = inlined_call_operand.vmem [shape: bf16[2,36,16], index: 1, kind: input, shape index: {}]
  %s2 = inlined_call_operand.vmem [shape: bf16[2,16,32], index: 2, kind: input, shape index: {}]
  %s3 = inlined_call_operand.vmem [shape: bf16[2,288,64], index: 3, kind: input, shape index: {}]
  %s4 = inlined_call_operand.vmem [shape: bf16[2,64,128], index: 4, kind: input, shape index: {}]
  %s5 = inlined_call_operand.vmem [shape: bf16[2,128,128], index: 5, kind: input, shape index: {}]
  %s6 = inlined_call_operand.vmem [shape: bf16[2,128,64], index: 6, kind: input, shape index: {}]
  %s7 = inlined_call_operand.vmem [shape: bf16[2,64,5], index: 7, kind: input, shape index: {}]
  %s8 = inlined_call_operand.vmem [shape: f32[2,8,128], index: 8, kind: input, shape index: {}]
  %s9 = inlined_call_operand.vmem [shape: f32[648,1], index: 9, kind: input, shape index: {}]
  %s10 = inlined_call_operand.vmem [shape: f32[242,1], index: 10, kind: input, shape index: {}]
  %s11 = inlined_call_operand.vmem [shape: bf16[121,305], index: 11, kind: input, shape index: {}]
  %s12 = inlined_call_operand.vmem [shape: bf16[25,109], index: 12, kind: input, shape index: {}]
  %s13 = inlined_call_operand.vmem [shape: bf16[2,50], index: 13, kind: input, shape index: {}]
  %s14 = inlined_call_operand.hbm [shape: f32[2,2,5], index: 14, kind: output, shape index: {}]
  %s15 = sld [smem:[#allocation0]]
  $region97: #{_lambda_.1} parent=0
    _
  %s17 = ssub.s32 1, %s15
  %s18 = scalar_select 0, %s17, %s15
  $region1: #{_lambda_.1} parent=0
    #allocation6 [shape = 'u8[2048]{0}', space=vmem, size = 0x800, scoped, tag = 'output window, operand 0']
    #allocation7 [shape = 's32[2]{0}', space=sflag, size = 0x8, scoped, tag = 'scoped memory for _lambda_.1']
    %19 = vsyncpa [#allocation7], 0
    %s20 = scalar_lea.sflag [#allocation7], 1
    %21 = vsyncpa %s20, 0
    loop: start=0, step=1, limit=6
    $region2: #{_lambda_.1} parent=1 // loop_pre_header
      _
    $region3: #{_lambda_.1} parent=1 // loop_header
      %s23 = sphi 0, %s27
      %p24 = scmp.ge.s32.totalorder %s23, 6
      %s30 = sphi 0, %s42
      %s31 = sphi 0, %s38
      %s32 = sphi 0, %s30
      %s33 = sphi 0, %s31
      %s34 = sphi 0, %s32
      %s35 = sphi 0, %s33
      %s47 = sphi 0, %s49
      %s50 = sphi 0, %s47
      %s51 = sphi 0, %s50
      %s67 = sphi 0, %s51
      %s73 = sphi 0, %s75
      %s76 = sphi 0, %s73
      %s77 = sphi 0, %s76
      %s93 = sphi 0, %s77
      %s99 = sphi 0, %s101
      %s102 = sphi 0, %s99
      %s103 = sphi 0, %s102
      %s119 = sphi 0, %s103
      %s125 = sphi 0, %s127
      %s128 = sphi 0, %s125
      %s129 = sphi 0, %s128
      %s145 = sphi 0, %s129
      %s151 = sphi 0, %s153
      %s154 = sphi 0, %s151
      %s155 = sphi 0, %s154
      %s171 = sphi 0, %s155
      %s177 = sphi 0, %s179
      %s180 = sphi 0, %s177
      %s181 = sphi 0, %s180
      %s197 = sphi 0, %s181
      %s203 = sphi 0, %s205
      %s206 = sphi 0, %s203
      %s207 = sphi 0, %s206
      %s223 = sphi 0, %s207
      %s229 = sphi 0, %s231
      %s232 = sphi 0, %s229
      %s233 = sphi 0, %s232
      %s249 = sphi 0, %s233
      %s255 = sphi 0, %s257
      %s258 = sphi 0, %s255
      %s259 = sphi 0, %s258
      %s275 = sphi 0, %s259
      %s279 = sphi 0, %s279
      %s281 = sphi 0, %s279
      %s282 = sphi 0, %s281
      %s296 = sphi 0, %s282
      %s300 = sphi 0, %s300
      %s302 = sphi 0, %s300
      %s303 = sphi 0, %s302
      %s317 = sphi 0, %s303
      %s321 = sphi 0, %s321
      %s323 = sphi 0, %s321
      %s324 = sphi 0, %s323
      %s338 = sphi 0, %s324
      %s342 = sphi 0, %s342
      %s344 = sphi 0, %s342
      %s345 = sphi 0, %s344
      %s359 = sphi 0, %s345
      %s363 = sphi 0, %s363
      %s365 = sphi 0, %s363
      %s366 = sphi 0, %s365
      %s380 = sphi 0, %s366
      %s386 = sphi 0, %s388
      %s389 = sphi 0, %s386
      %s390 = sphi 0, %s389
      %s406 = sphi 0, %s390
    $region4: #{_lambda_.1} parent=1 // loop_header_branch
      %26 = sbr.rel (%p24) target = $region8
    $region5: #{_lambda_.1} parent=1 // loop_body
      %s28 = ssub.s32 %s23, 1
      %s29 = ssub.s32 %s23, 2
      %s36 = sadd.s32 1, %s31
      %p37 = scmp.ge.s32.totalorder %s36, 2
      %s38 = scalar_select %p37, 0, %s36
      %s39 = sadd.s32 1, %s30
      %s40 = scalar_select %p37, %s39, %s30
      %p41 = scmp.ge.s32.totalorder %s40, 2
      %s42 = scalar_select %p41, 0, %s40
      %s43 = ssub.s32 %s31, %s38
      %s44 = ssub.s32 %s30, %s42
      %s45 = sor.u32 %s43, %s44
      %p46 = scmp.eq.s32.totalorder %s45, 0
      %s48 = sadd.s32 %s47, 1
      %s49 = scalar_select %p46, %s47, %s48
      %p52 = pneg %p46
      %p53 = scmp.eq.s32.totalorder %s23, 3
      %p54 = por %p52, %p53
      %p55 = scmp.ne.s32.totalorder %s47, %s50
      %p56 = scmp.eq.s32.totalorder %s23, 0
      %p57 = por %p55, %p56
      %p58 = scmp.ne.s32.totalorder %s47, %s50
      %p59 = scmp.eq.s32.totalorder %s28, 3
      %p60 = por %p58, %p59
      %p61 = scmp.ne.s32.totalorder %s50, %s51
      %p62 = scmp.eq.s32.totalorder %s28, 0
      %p63 = por %p61, %p62
      %p64 = scmp.ne.s32.totalorder %s50, %s51
      %p65 = scmp.eq.s32.totalorder %s29, 3
      %p66 = por %p64, %p65
      %p68 = scmp.ne.s32.totalorder %s51, %s67
      %p69 = scmp.eq.s32.totalorder %s29, 0
      %p70 = por %p68, %p69
      %s71 = ssub.s32 %s31, %s38
      %p72 = scmp.eq.s32.totalorder %s71, 0
      %s74 = sadd.s32 %s73, 1
      %s75 = scalar_select %p72, %s73, %s74
      %p78 = pneg %p72
      %p79 = scmp.eq.s32.totalorder %s23, 3
      %p80 = por %p78, %p79
      %p81 = scmp.ne.s32.totalorder %s73, %s76
      %p82 = scmp.eq.s32.totalorder %s23, 0
      %p83 = por %p81, %p82
      %p84 = scmp.ne.s32.totalorder %s73, %s76
      %p85 = scmp.eq.s32.totalorder %s28, 3
      %p86 = por %p84, %p85
      %p87 = scmp.ne.s32.totalorder %s76, %s77
      %p88 = scmp.eq.s32.totalorder %s28, 0
      %p89 = por %p87, %p88
      %p90 = scmp.ne.s32.totalorder %s76, %s77
      %p91 = scmp.eq.s32.totalorder %s29, 3
      %p92 = por %p90, %p91
      %p94 = scmp.ne.s32.totalorder %s77, %s93
      %p95 = scmp.eq.s32.totalorder %s29, 0
      %p96 = por %p94, %p95
      %s97 = ssub.s32 %s31, %s38
      %p98 = scmp.eq.s32.totalorder %s97, 0
      %s100 = sadd.s32 %s99, 1
      %s101 = scalar_select %p98, %s99, %s100
      %p104 = pneg %p98
      %p105 = scmp.eq.s32.totalorder %s23, 3
      %p106 = por %p104, %p105
      %p107 = scmp.ne.s32.totalorder %s99, %s102
      %p108 = scmp.eq.s32.totalorder %s23, 0
      %p109 = por %p107, %p108
      %p110 = scmp.ne.s32.totalorder %s99, %s102
      %p111 = scmp.eq.s32.totalorder %s28, 3
      %p112 = por %p110, %p111
      %p113 = scmp.ne.s32.totalorder %s102, %s103
      %p114 = scmp.eq.s32.totalorder %s28, 0
      %p115 = por %p113, %p114
      %p116 = scmp.ne.s32.totalorder %s102, %s103
      %p117 = scmp.eq.s32.totalorder %s29, 3
      %p118 = por %p116, %p117
      %p120 = scmp.ne.s32.totalorder %s103, %s119
      %p121 = scmp.eq.s32.totalorder %s29, 0
      %p122 = por %p120, %p121
      %s123 = ssub.s32 %s31, %s38
      %p124 = scmp.eq.s32.totalorder %s123, 0
      %s126 = sadd.s32 %s125, 1
      %s127 = scalar_select %p124, %s125, %s126
      %p130 = pneg %p124
      %p131 = scmp.eq.s32.totalorder %s23, 3
      %p132 = por %p130, %p131
      %p133 = scmp.ne.s32.totalorder %s125, %s128
      %p134 = scmp.eq.s32.totalorder %s23, 0
      %p135 = por %p133, %p134
      %p136 = scmp.ne.s32.totalorder %s125, %s128
      %p137 = scmp.eq.s32.totalorder %s28, 3
      %p138 = por %p136, %p137
      %p139 = scmp.ne.s32.totalorder %s128, %s129
      %p140 = scmp.eq.s32.totalorder %s28, 0
      %p141 = por %p139, %p140
      %p142 = scmp.ne.s32.totalorder %s128, %s129
      %p143 = scmp.eq.s32.totalorder %s29, 3
      %p144 = por %p142, %p143
      %p146 = scmp.ne.s32.totalorder %s129, %s145
      %p147 = scmp.eq.s32.totalorder %s29, 0
      %p148 = por %p146, %p147
      %s149 = ssub.s32 %s31, %s38
      %p150 = scmp.eq.s32.totalorder %s149, 0
      %s152 = sadd.s32 %s151, 1
      %s153 = scalar_select %p150, %s151, %s152
      %p156 = pneg %p150
      %p157 = scmp.eq.s32.totalorder %s23, 3
      %p158 = por %p156, %p157
      %p159 = scmp.ne.s32.totalorder %s151, %s154
      %p160 = scmp.eq.s32.totalorder %s23, 0
      %p161 = por %p159, %p160
      %p162 = scmp.ne.s32.totalorder %s151, %s154
      %p163 = scmp.eq.s32.totalorder %s28, 3
      %p164 = por %p162, %p163
      %p165 = scmp.ne.s32.totalorder %s154, %s155
      %p166 = scmp.eq.s32.totalorder %s28, 0
      %p167 = por %p165, %p166
      %p168 = scmp.ne.s32.totalorder %s154, %s155
      %p169 = scmp.eq.s32.totalorder %s29, 3
      %p170 = por %p168, %p169
      %p172 = scmp.ne.s32.totalorder %s155, %s171
      %p173 = scmp.eq.s32.totalorder %s29, 0
      %p174 = por %p172, %p173
      %s175 = ssub.s32 %s31, %s38
      %p176 = scmp.eq.s32.totalorder %s175, 0
      %s178 = sadd.s32 %s177, 1
      %s179 = scalar_select %p176, %s177, %s178
      %p182 = pneg %p176
      %p183 = scmp.eq.s32.totalorder %s23, 3
      %p184 = por %p182, %p183
      %p185 = scmp.ne.s32.totalorder %s177, %s180
      %p186 = scmp.eq.s32.totalorder %s23, 0
      %p187 = por %p185, %p186
      %p188 = scmp.ne.s32.totalorder %s177, %s180
      %p189 = scmp.eq.s32.totalorder %s28, 3
      %p190 = por %p188, %p189
      %p191 = scmp.ne.s32.totalorder %s180, %s181
      %p192 = scmp.eq.s32.totalorder %s28, 0
      %p193 = por %p191, %p192
      %p194 = scmp.ne.s32.totalorder %s180, %s181
      %p195 = scmp.eq.s32.totalorder %s29, 3
      %p196 = por %p194, %p195
      %p198 = scmp.ne.s32.totalorder %s181, %s197
      %p199 = scmp.eq.s32.totalorder %s29, 0
      %p200 = por %p198, %p199
      %s201 = ssub.s32 %s31, %s38
      %p202 = scmp.eq.s32.totalorder %s201, 0
      %s204 = sadd.s32 %s203, 1
      %s205 = scalar_select %p202, %s203, %s204
      %p208 = pneg %p202
      %p209 = scmp.eq.s32.totalorder %s23, 3
      %p210 = por %p208, %p209
      %p211 = scmp.ne.s32.totalorder %s203, %s206
      %p212 = scmp.eq.s32.totalorder %s23, 0
      %p213 = por %p211, %p212
      %p214 = scmp.ne.s32.totalorder %s203, %s206
      %p215 = scmp.eq.s32.totalorder %s28, 3
      %p216 = por %p214, %p215
      %p217 = scmp.ne.s32.totalorder %s206, %s207
      %p218 = scmp.eq.s32.totalorder %s28, 0
      %p219 = por %p217, %p218
      %p220 = scmp.ne.s32.totalorder %s206, %s207
      %p221 = scmp.eq.s32.totalorder %s29, 3
      %p222 = por %p220, %p221
      %p224 = scmp.ne.s32.totalorder %s207, %s223
      %p225 = scmp.eq.s32.totalorder %s29, 0
      %p226 = por %p224, %p225
      %s227 = ssub.s32 %s31, %s38
      %p228 = scmp.eq.s32.totalorder %s227, 0
      %s230 = sadd.s32 %s229, 1
      %s231 = scalar_select %p228, %s229, %s230
      %p234 = pneg %p228
      %p235 = scmp.eq.s32.totalorder %s23, 3
      %p236 = por %p234, %p235
      %p237 = scmp.ne.s32.totalorder %s229, %s232
      %p238 = scmp.eq.s32.totalorder %s23, 0
      %p239 = por %p237, %p238
      %p240 = scmp.ne.s32.totalorder %s229, %s232
      %p241 = scmp.eq.s32.totalorder %s28, 3
      %p242 = por %p240, %p241
      %p243 = scmp.ne.s32.totalorder %s232, %s233
      %p244 = scmp.eq.s32.totalorder %s28, 0
      %p245 = por %p243, %p244
      %p246 = scmp.ne.s32.totalorder %s232, %s233
      %p247 = scmp.eq.s32.totalorder %s29, 3
      %p248 = por %p246, %p247
      %p250 = scmp.ne.s32.totalorder %s233, %s249
      %p251 = scmp.eq.s32.totalorder %s29, 0
      %p252 = por %p250, %p251
      %s253 = ssub.s32 %s31, %s38
      %p254 = scmp.eq.s32.totalorder %s253, 0
      %s256 = sadd.s32 %s255, 1
      %s257 = scalar_select %p254, %s255, %s256
      %p260 = pneg %p254
      %p261 = scmp.eq.s32.totalorder %s23, 3
      %p262 = por %p260, %p261
      %p263 = scmp.ne.s32.totalorder %s255, %s258
      %p264 = scmp.eq.s32.totalorder %s23, 0
      %p265 = por %p263, %p264
      %p266 = scmp.ne.s32.totalorder %s255, %s258
      %p267 = scmp.eq.s32.totalorder %s28, 3
      %p268 = por %p266, %p267
      %p269 = scmp.ne.s32.totalorder %s258, %s259
      %p270 = scmp.eq.s32.totalorder %s28, 0
      %p271 = por %p269, %p270
      %p272 = scmp.ne.s32.totalorder %s258, %s259
      %p273 = scmp.eq.s32.totalorder %s29, 3
      %p274 = por %p272, %p273
      %p276 = scmp.ne.s32.totalorder %s259, %s275
      %p277 = scmp.eq.s32.totalorder %s29, 0
      %p278 = por %p276, %p277
      %s280 = sadd.s32 %s279, 1
      %p283 = scmp.eq.s32.totalorder %s23, 3
      %p284 = scmp.ne.s32.totalorder %s279, %s281
      %p285 = scmp.eq.s32.totalorder %s23, 0
      %p286 = por %p284, %p285
      %p287 = scmp.ne.s32.totalorder %s279, %s281
      %p288 = scmp.eq.s32.totalorder %s28, 3
      %p289 = por %p287, %p288
      %p290 = scmp.ne.s32.totalorder %s281, %s282
      %p291 = scmp.eq.s32.totalorder %s28, 0
      %p292 = por %p290, %p291
      %p293 = scmp.ne.s32.totalorder %s281, %s282
      %p294 = scmp.eq.s32.totalorder %s29, 3
      %p295 = por %p293, %p294
      %p297 = scmp.ne.s32.totalorder %s282, %s296
      %p298 = scmp.eq.s32.totalorder %s29, 0
      %p299 = por %p297, %p298
      %s301 = sadd.s32 %s300, 1
      %p304 = scmp.eq.s32.totalorder %s23, 3
      %p305 = scmp.ne.s32.totalorder %s300, %s302
      %p306 = scmp.eq.s32.totalorder %s23, 0
      %p307 = por %p305, %p306
      %p308 = scmp.ne.s32.totalorder %s300, %s302
      %p309 = scmp.eq.s32.totalorder %s28, 3
      %p310 = por %p308, %p309
      %p311 = scmp.ne.s32.totalorder %s302, %s303
      %p312 = scmp.eq.s32.totalorder %s28, 0
      %p313 = por %p311, %p312
      %p314 = scmp.ne.s32.totalorder %s302, %s303
      %p315 = scmp.eq.s32.totalorder %s29, 3
      %p316 = por %p314, %p315
      %p318 = scmp.ne.s32.totalorder %s303, %s317
      %p319 = scmp.eq.s32.totalorder %s29, 0
      %p320 = por %p318, %p319
      %s322 = sadd.s32 %s321, 1
      %p325 = scmp.eq.s32.totalorder %s23, 3
      %p326 = scmp.ne.s32.totalorder %s321, %s323
      %p327 = scmp.eq.s32.totalorder %s23, 0
      %p328 = por %p326, %p327
      %p329 = scmp.ne.s32.totalorder %s321, %s323
      %p330 = scmp.eq.s32.totalorder %s28, 3
      %p331 = por %p329, %p330
      %p332 = scmp.ne.s32.totalorder %s323, %s324
      %p333 = scmp.eq.s32.totalorder %s28, 0
      %p334 = por %p332, %p333
      %p335 = scmp.ne.s32.totalorder %s323, %s324
      %p336 = scmp.eq.s32.totalorder %s29, 3
      %p337 = por %p335, %p336
      %p339 = scmp.ne.s32.totalorder %s324, %s338
      %p340 = scmp.eq.s32.totalorder %s29, 0
      %p341 = por %p339, %p340
      %s343 = sadd.s32 %s342, 1
      %p346 = scmp.eq.s32.totalorder %s23, 3
      %p347 = scmp.ne.s32.totalorder %s342, %s344
      %p348 = scmp.eq.s32.totalorder %s23, 0
      %p349 = por %p347, %p348
      %p350 = scmp.ne.s32.totalorder %s342, %s344
      %p351 = scmp.eq.s32.totalorder %s28, 3
      %p352 = por %p350, %p351
      %p353 = scmp.ne.s32.totalorder %s344, %s345
      %p354 = scmp.eq.s32.totalorder %s28, 0
      %p355 = por %p353, %p354
      %p356 = scmp.ne.s32.totalorder %s344, %s345
      %p357 = scmp.eq.s32.totalorder %s29, 3
      %p358 = por %p356, %p357
      %p360 = scmp.ne.s32.totalorder %s345, %s359
      %p361 = scmp.eq.s32.totalorder %s29, 0
      %p362 = por %p360, %p361
      %s364 = sadd.s32 %s363, 1
      %p367 = scmp.eq.s32.totalorder %s23, 3
      %p368 = scmp.ne.s32.totalorder %s363, %s365
      %p369 = scmp.eq.s32.totalorder %s23, 0
      %p370 = por %p368, %p369
      %p371 = scmp.ne.s32.totalorder %s363, %s365
      %p372 = scmp.eq.s32.totalorder %s28, 3
      %p373 = por %p371, %p372
      %p374 = scmp.ne.s32.totalorder %s365, %s366
      %p375 = scmp.eq.s32.totalorder %s28, 0
      %p376 = por %p374, %p375
      %p377 = scmp.ne.s32.totalorder %s365, %s366
      %p378 = scmp.eq.s32.totalorder %s29, 3
      %p379 = por %p377, %p378
      %p381 = scmp.ne.s32.totalorder %s366, %s380
      %p382 = scmp.eq.s32.totalorder %s29, 0
      %p383 = por %p381, %p382
      %s384 = ssub.s32 %s30, %s42
      %p385 = scmp.eq.s32.totalorder %s384, 0
      %s387 = sadd.s32 %s386, 1
      %s388 = scalar_select %p385, %s386, %s387
      %p391 = pneg %p385
      %p392 = scmp.eq.s32.totalorder %s23, 3
      %p393 = por %p391, %p392
      %p394 = scmp.ne.s32.totalorder %s386, %s389
      %p395 = scmp.eq.s32.totalorder %s23, 0
      %p396 = por %p394, %p395
      %p397 = scmp.ne.s32.totalorder %s386, %s389
      %p398 = scmp.eq.s32.totalorder %s28, 3
      %p399 = por %p397, %p398
      %p400 = scmp.ne.s32.totalorder %s389, %s390
      %p401 = scmp.eq.s32.totalorder %s28, 0
      %p402 = por %p400, %p401
      %p403 = scmp.ne.s32.totalorder %s389, %s390
      %p404 = scmp.eq.s32.totalorder %s29, 3
      %p405 = por %p403, %p404
      %p407 = scmp.ne.s32.totalorder %s390, %s406
      %p408 = scmp.eq.s32.totalorder %s29, 0
      %p409 = por %p407, %p408
      %p410 = scmp.le.s32.totalorder 1, %s23
      %p411 = scmp.lt.s32.totalorder %s23, 5
      %p412 = pnand %p410, %p411
      %p413 = pneg %p412
      // Predicated region
      $region9: #{_lambda_.1} parent=5 // pred_check
        _
      $region10: #{_lambda_.1} parent=5 // pred_check_branch
        %415 = sbr.rel (%p412) target = $region12
      $region11: #{_lambda_.1} parent=5 // pred_region
        %s416 = ssub.s32 %s23, 1
        // Predicated region
        $region13: #{_lambda_.1} parent=11 // pred_check
          %p417 = pneg %p292
        $region14: #{_lambda_.1} parent=11 // pred_check_branch
          %419 = sbr.rel (%p417) target = $region16
        $region15: #{_lambda_.1} parent=11 // pred_region
          _
        $region16: #{_lambda_.1} parent=11 // pred_fallthru
          _
        // Predicated region
        $region17: #{_lambda_.1} parent=11 // pred_check
          %p420 = pneg %p313
        $region18: #{_lambda_.1} parent=11 // pred_check_branch
          %422 = sbr.rel (%p420) target = $region20
        $region19: #{_lambda_.1} parent=11 // pred_region
          _
        $region20: #{_lambda_.1} parent=11 // pred_fallthru
          _
        // Predicated region
        $region21: #{_lambda_.1} parent=11 // pred_check
          %p423 = pneg %p334
        $region22: #{_lambda_.1} parent=11 // pred_check_branch
          %425 = sbr.rel (%p423) target = $region24
        $region23: #{_lambda_.1} parent=11 // pred_region
          _
        $region24: #{_lambda_.1} parent=11 // pred_fallthru
          _
        // Predicated region
        $region25: #{_lambda_.1} parent=11 // pred_check
          %p426 = pneg %p355
        $region26: #{_lambda_.1} parent=11 // pred_check_branch
          %428 = sbr.rel (%p426) target = $region28
        $region27: #{_lambda_.1} parent=11 // pred_region
          _
        $region28: #{_lambda_.1} parent=11 // pred_fallthru
          _
        // Predicated region
        $region29: #{_lambda_.1} parent=11 // pred_check
          %p429 = pneg %p376
        $region30: #{_lambda_.1} parent=11 // pred_check_branch
          %431 = sbr.rel (%p429) target = $region32
        $region31: #{_lambda_.1} parent=11 // pred_region
          _
        $region32: #{_lambda_.1} parent=11 // pred_fallthru
          _
      $region12: #{_lambda_.1} parent=5 // pred_fallthru
        _
      %p432 = scmp.lt.s32.totalorder %s23, 4
      // Predicated region
      $region33: #{_lambda_.1} parent=5 // pred_check
        %p433 = pneg %p432
      $region34: #{_lambda_.1} parent=5 // pred_check_branch
        %435 = sbr.rel (%p433) target = $region36
      $region35: #{_lambda_.1} parent=5 // pred_region
        // Predicated region
        $region37: #{_lambda_.1} parent=35 // pred_check
          %p436 = pneg %p57
        $region38: #{_lambda_.1} parent=35 // pred_check_branch
          %438 = sbr.rel (%p436) target = $region40
        $region39: #{_lambda_.1} parent=35 // pred_region
          %p439 = scmp.lt.s32.totalorder %s31, 1
          %s440 = scalar_select %p439, %s31, 1
          %p441 = scmp.lt.s32.totalorder %s30, 1
          %s442 = scalar_select %p441, %s30, 1
          %s443 = smul.addr %s442, 81
          %s444 = smul.addr %s440, 162
          %s445 = sadd.s32 %s443, %s444
          %s446 = smul.addr %s445, 4
          %s447 = scalar_lea.vmem %s0, %s446
        $region40: #{_lambda_.1} parent=35 // pred_fallthru
          _
        // Predicated region
        $region41: #{_lambda_.1} parent=35 // pred_check
          %p448 = pneg %p83
        $region42: #{_lambda_.1} parent=35 // pred_check_branch
          %450 = sbr.rel (%p448) target = $region44
        $region43: #{_lambda_.1} parent=35 // pred_region
          %p451 = scmp.lt.s32.totalorder %s31, 1
          %s452 = scalar_select %p451, %s31, 1
          %s453 = smul.addr %s452, 5
          %s454 = smul.addr %s453, 4
          %s455 = scalar_lea.vmem %s1, %s454
        $region44: #{_lambda_.1} parent=35 // pred_fallthru
          _
        // Predicated region
        $region45: #{_lambda_.1} parent=35 // pred_check
          %p456 = pneg %p109
        $region46: #{_lambda_.1} parent=35 // pred_check_branch
          %458 = sbr.rel (%p456) target = $region48
        $region47: #{_lambda_.1} parent=35 // pred_region
          %p459 = scmp.lt.s32.totalorder %s31, 1
          %s460 = scalar_select %p459, %s31, 1
          %s461 = smul.addr %s460, 2
          %s462 = smul.addr %s461, 4
          %s463 = scalar_lea.vmem %s2, %s462
        $region48: #{_lambda_.1} parent=35 // pred_fallthru
          _
        // Predicated region
        $region49: #{_lambda_.1} parent=35 // pred_check
          %p464 = pneg %p135
        $region50: #{_lambda_.1} parent=35 // pred_check_branch
          %466 = sbr.rel (%p464) target = $region52
        $region51: #{_lambda_.1} parent=35 // pred_region
          %p467 = scmp.lt.s32.totalorder %s31, 1
          %s468 = scalar_select %p467, %s31, 1
          %s469 = smul.addr %s468, 36
          %s470 = smul.addr %s469, 4
          %s471 = scalar_lea.vmem %s3, %s470
        $region52: #{_lambda_.1} parent=35 // pred_fallthru
          _
        // Predicated region
        $region53: #{_lambda_.1} parent=35 // pred_check
          %p472 = pneg %p161
        $region54: #{_lambda_.1} parent=35 // pred_check_branch
          %474 = sbr.rel (%p472) target = $region56
        $region55: #{_lambda_.1} parent=35 // pred_region
          %p475 = scmp.lt.s32.totalorder %s31, 1
          %s476 = scalar_select %p475, %s31, 1
          %s477 = smul.addr %s476, 8
          %s478 = smul.addr %s477, 4
          %s479 = scalar_lea.vmem %s4, %s478
        $region56: #{_lambda_.1} parent=35 // pred_fallthru
          _
        // Predicated region
        $region57: #{_lambda_.1} parent=35 // pred_check
          %p480 = pneg %p187
        $region58: #{_lambda_.1} parent=35 // pred_check_branch
          %482 = sbr.rel (%p480) target = $region60
        $region59: #{_lambda_.1} parent=35 // pred_region
          %p483 = scmp.lt.s32.totalorder %s31, 1
          %s484 = scalar_select %p483, %s31, 1
          %s485 = smul.addr %s484, 16
          %s486 = smul.addr %s485, 4
          %s487 = scalar_lea.vmem %s5, %s486
        $region60: #{_lambda_.1} parent=35 // pred_fallthru
          _
        // Predicated region
        $region61: #{_lambda_.1} parent=35 // pred_check
          %p488 = pneg %p213
        $region62: #{_lambda_.1} parent=35 // pred_check_branch
          %490 = sbr.rel (%p488) target = $region64
        $region63: #{_lambda_.1} parent=35 // pred_region
          %p491 = scmp.lt.s32.totalorder %s31, 1
          %s492 = scalar_select %p491, %s31, 1
          %s493 = smul.addr %s492, 16
          %s494 = smul.addr %s493, 4
          %s495 = scalar_lea.vmem %s6, %s494
        $region64: #{_lambda_.1} parent=35 // pred_fallthru
          _
        // Predicated region
        $region65: #{_lambda_.1} parent=35 // pred_check
          %p496 = pneg %p239
        $region66: #{_lambda_.1} parent=35 // pred_check_branch
          %498 = sbr.rel (%p496) target = $region68
        $region67: #{_lambda_.1} parent=35 // pred_region
          %p499 = scmp.lt.s32.totalorder %s31, 1
          %s500 = scalar_select %p499, %s31, 1
          %s501 = smul.addr %s500, 8
          %s502 = smul.addr %s501, 4
          %s503 = scalar_lea.vmem %s7, %s502
        $region68: #{_lambda_.1} parent=35 // pred_fallthru
          _
        // Predicated region
        $region69: #{_lambda_.1} parent=35 // pred_check
          %p504 = pneg %p265
        $region70: #{_lambda_.1} parent=35 // pred_check_branch
          %506 = sbr.rel (%p504) target = $region72
        $region71: #{_lambda_.1} parent=35 // pred_region
          %p507 = scmp.lt.s32.totalorder %s31, 1
          %s508 = scalar_select %p507, %s31, 1
          %s509 = smul.addr %s508, 8
          %s510 = scalar_lea.vmem %s8, %s509
        $region72: #{_lambda_.1} parent=35 // pred_fallthru
          _
      $region36: #{_lambda_.1} parent=5 // pred_fallthru
        _
      %p511 = scmp.le.s32.totalorder 1, %s23
      %p512 = scmp.lt.s32.totalorder %s23, 5
      %p513 = pnand %p511, %p512
      %p514 = pneg %p513
      // Predicated region
      $region73: #{_lambda_.1} parent=5 // pred_check
        _
      $region74: #{_lambda_.1} parent=5 // pred_check_branch
        %516 = sbr.rel (%p513) target = $region76
      $region75: #{_lambda_.1} parent=5 // pred_region
        %s517 = ssub.s32 %s23, 1
        %p518 = scmp.lt.s32.totalorder %s33, 1
        %s519 = scalar_select %p518, %s33, 1
        %p520 = scmp.lt.s32.totalorder %s32, 1
        %s521 = scalar_select %p520, %s32, 1
        %s522 = smul.addr %s521, 81
        %s523 = smul.addr %s519, 162
        %s524 = sadd.s32 %s522, %s523
        %s525 = smul.addr %s524, 4
        %s526 = scalar_lea.vmem %s0, %s525
        %p527 = pneg %p63
        %p528 = pneg %p60
        %p529 = scmp.lt.s32.totalorder %s33, 1
        %s530 = scalar_select %p529, %s33, 1
        %s531 = smul.addr %s530, 5
        %s532 = smul.addr %s531, 4
        %s533 = scalar_lea.vmem %s1, %s532
        %p534 = pneg %p89
        %p535 = pneg %p86
        %p536 = scmp.lt.s32.totalorder %s33, 1
        %s537 = scalar_select %p536, %s33, 1
        %s538 = smul.addr %s537, 2
        %s539 = smul.addr %s538, 4
        %s540 = scalar_lea.vmem %s2, %s539
        %p541 = pneg %p115
        %p542 = pneg %p112
        %p543 = scmp.lt.s32.totalorder %s33, 1
        %s544 = scalar_select %p543, %s33, 1
        %s545 = smul.addr %s544, 36
        %s546 = smul.addr %s545, 4
        %s547 = scalar_lea.vmem %s3, %s546
        %p548 = pneg %p141
        %p549 = pneg %p138
        %p550 = scmp.lt.s32.totalorder %s33, 1
        %s551 = scalar_select %p550, %s33, 1
        %s552 = smul.addr %s551, 8
        %s553 = smul.addr %s552, 4
        %s554 = scalar_lea.vmem %s4, %s553
        %p555 = pneg %p167
        %p556 = pneg %p164
        %p557 = scmp.lt.s32.totalorder %s33, 1
        %s558 = scalar_select %p557, %s33, 1
        %s559 = smul.addr %s558, 16
        %s560 = smul.addr %s559, 4
        %s561 = scalar_lea.vmem %s5, %s560
        %p562 = pneg %p193
        %p563 = pneg %p190
        %p564 = scmp.lt.s32.totalorder %s33, 1
        %s565 = scalar_select %p564, %s33, 1
        %s566 = smul.addr %s565, 16
        %s567 = smul.addr %s566, 4
        %s568 = scalar_lea.vmem %s6, %s567
        %p569 = pneg %p219
        %p570 = pneg %p216
        %p571 = scmp.lt.s32.totalorder %s33, 1
        %s572 = scalar_select %p571, %s33, 1
        %s573 = smul.addr %s572, 8
        %s574 = smul.addr %s573, 4
        %s575 = scalar_lea.vmem %s7, %s574
        %p576 = pneg %p245
        %p577 = pneg %p242
        %p578 = scmp.lt.s32.totalorder %s33, 1
        %s579 = scalar_select %p578, %s33, 1
        %s580 = smul.addr %s579, 8
        %s581 = scalar_lea.vmem %s8, %s580
        %p582 = pneg %p271
        %p583 = pneg %p268
        %p584 = pneg %p292
        %p585 = pneg %p289
        %p586 = pneg %p313
        %p587 = pneg %p310
        %p588 = pneg %p334
        %p589 = pneg %p331
        %p590 = pneg %p355
        %p591 = pneg %p352
        %p592 = pneg %p376
        %p593 = pneg %p373
        %p594 = pneg %p402
        %p595 = pneg %p399
        %s596 = sand.u32 %s389, 1
        %s597 = scalar_lea.sflag [#allocation7], %s596
        %s598 = sand.u32 %s389, 1
        %s599 = smul.addr %s598, 2
        %s600 = scalar_lea.vmem [#allocation6], %s599
        %p601 = scmp.lt.s32.totalorder %s33, 1
        %s602 = scalar_select %p601, %s33, 1
        %p603 = scmp.lt.s32.totalorder %s32, 1
        %s604 = scalar_select %p603, %s32, 1
        %s605 = smul.addr %s604, 81
        %s606 = smul.addr %s602, 162
        %s607 = sadd.s32 %s605, %s606
        %s608 = smul.addr %s607, 4
        %s609 = scalar_lea.vmem %s0, %s608
        %p610 = scmp.lt.s32.totalorder %s33, 1
        %s611 = scalar_select %p610, %s33, 1
        %s612 = smul.addr %s611, 5
        %s613 = smul.addr %s612, 4
        %s614 = scalar_lea.vmem %s1, %s613
        %p615 = scmp.lt.s32.totalorder %s33, 1
        %s616 = scalar_select %p615, %s33, 1
        %s617 = smul.addr %s616, 2
        %s618 = smul.addr %s617, 4
        %s619 = scalar_lea.vmem %s2, %s618
        %p620 = scmp.lt.s32.totalorder %s33, 1
        %s621 = scalar_select %p620, %s33, 1
        %s622 = smul.addr %s621, 36
        %s623 = smul.addr %s622, 4
        %s624 = scalar_lea.vmem %s3, %s623
        %p625 = scmp.lt.s32.totalorder %s33, 1
        %s626 = scalar_select %p625, %s33, 1
        %s627 = smul.addr %s626, 8
        %s628 = smul.addr %s627, 4
        %s629 = scalar_lea.vmem %s4, %s628
        %p630 = scmp.lt.s32.totalorder %s33, 1
        %s631 = scalar_select %p630, %s33, 1
        %s632 = smul.addr %s631, 16
        %s633 = smul.addr %s632, 4
        %s634 = scalar_lea.vmem %s5, %s633
        %p635 = scmp.lt.s32.totalorder %s33, 1
        %s636 = scalar_select %p635, %s33, 1
        %s637 = smul.addr %s636, 16
        %s638 = smul.addr %s637, 4
        %s639 = scalar_lea.vmem %s6, %s638
        %p640 = scmp.lt.s32.totalorder %s33, 1
        %s641 = scalar_select %p640, %s33, 1
        %s642 = smul.addr %s641, 8
        %s643 = smul.addr %s642, 4
        %s644 = scalar_lea.vmem %s7, %s643
        %p645 = scmp.lt.s32.totalorder %s33, 1
        %s646 = scalar_select %p645, %s33, 1
        %s647 = smul.addr %s646, 8
        %s648 = scalar_lea.vmem %s8, %s647
        %v650 = vld [vmem:[%s609] sm:$0xf]
        %v651 = vld [vmem:[%s609 + $0x4] sm:$0xf]
        %v652 = vld [vmem:[%s609 + $0x8] sm:$0xf]
        %v653 = vld [vmem:[%s609 + $0xc] sm:$0xf]
        %v654 = vld [vmem:[%s609 + $0x10] sm:$0xf]
        %v655 = vld [vmem:[%s609 + $0x14] sm:$0xf]
        %v656 = vld [vmem:[%s609 + $0x18] sm:$0xf]
        %v657 = vld [vmem:[%s609 + $0x1c] sm:$0xf]
        %v658 = vld [vmem:[%s609 + $0x20] sm:$0xf]
        %v659 = vld [vmem:[%s609 + $0x24] sm:$0xf]
        %v660 = vld [vmem:[%s609 + $0x28] sm:$0xf]
        %v661 = vld [vmem:[%s609 + $0x2c] sm:$0xf]
        %v662 = vld [vmem:[%s609 + $0x30] sm:$0xf]
        %v663 = vld [vmem:[%s609 + $0x34] sm:$0xf]
        %v664 = vld [vmem:[%s609 + $0x38] sm:$0xf]
        %v665 = vld [vmem:[%s609 + $0x3c] sm:$0xf]
        %v666 = vld [vmem:[%s609 + $0x40] sm:$0xf]
        %v667 = vld [vmem:[%s609 + $0x44] sm:$0xf]
        %v668 = vld [vmem:[%s609 + $0x48] sm:$0xf]
        %v669 = vld [vmem:[%s609 + $0x4c] sm:$0xf]
        %v670 = vld [vmem:[%s609 + $0x50] sm:$0xf]
        %v671 = vld [vmem:[%s609 + $0x54] sm:$0xf]
        %v672 = vld [vmem:[%s609 + $0x58] sm:$0xf]
        %v673 = vld [vmem:[%s609 + $0x5c] sm:$0xf]
        %v674 = vld [vmem:[%s609 + $0x60] sm:$0xf]
        %v675 = vld [vmem:[%s609 + $0x64] sm:$0xf]
        %v676 = vld [vmem:[%s609 + $0x68] sm:$0xf]
        %v677 = vld [vmem:[%s609 + $0x6c] sm:$0xf]
        %v678 = vld [vmem:[%s609 + $0x70] sm:$0xf]
        %v679 = vld [vmem:[%s609 + $0x74] sm:$0xf]
        %v680 = vld [vmem:[%s609 + $0x78] sm:$0xf]
        %v681 = vld [vmem:[%s609 + $0x7c] sm:$0xf]
        %v682 = vld [vmem:[%s609 + $0x80] sm:$0xf]
        %v683 = vld [vmem:[%s609 + $0x84] sm:$0xf]
        %v684 = vld [vmem:[%s609 + $0x88] sm:$0xf]
        %v685 = vld [vmem:[%s609 + $0x8c] sm:$0xf]
        %v686 = vld [vmem:[%s609 + $0x90] sm:$0xf]
        %v687 = vld [vmem:[%s609 + $0x94] sm:$0xf]
        %v688 = vld [vmem:[%s609 + $0x98] sm:$0xf]
        %v689 = vld [vmem:[%s609 + $0x9c] sm:$0xf]
        %v690 = vld [vmem:[%s609 + $0xa0] sm:$0xf]
        %v691 = vld [vmem:[%s609 + $0xa4] sm:$0xf]
        %v692 = vld [vmem:[%s609 + $0xa8] sm:$0xf]
        %v693 = vld [vmem:[%s609 + $0xac] sm:$0xf]
        %v694 = vld [vmem:[%s609 + $0xb0] sm:$0xf]
        %v695 = vld [vmem:[%s609 + $0xb4] sm:$0xf]
        %v696 = vld [vmem:[%s609 + $0xb8] sm:$0xf]
        %v697 = vld [vmem:[%s609 + $0xbc] sm:$0xf]
        %v698 = vld [vmem:[%s609 + $0xc0] sm:$0xf]
        %v699 = vld [vmem:[%s609 + $0xc4] sm:$0xf]
        %v700 = vld [vmem:[%s609 + $0xc8] sm:$0xf]
        %v701 = vld [vmem:[%s609 + $0xcc] sm:$0xf]
        %v702 = vld [vmem:[%s609 + $0xd0] sm:$0xf]
        %v703 = vld [vmem:[%s609 + $0xd4] sm:$0xf]
        %v704 = vld [vmem:[%s609 + $0xd8] sm:$0xf]
        %v705 = vld [vmem:[%s609 + $0xdc] sm:$0xf]
        %v706 = vld [vmem:[%s609 + $0xe0] sm:$0xf]
        %v707 = vld [vmem:[%s609 + $0xe4] sm:$0xf]
        %v708 = vld [vmem:[%s609 + $0xe8] sm:$0xf]
        %v709 = vld [vmem:[%s609 + $0xec] sm:$0xf]
        %v710 = vld [vmem:[%s609 + $0xf0] sm:$0xf]
        %v711 = vld [vmem:[%s609 + $0xf4] sm:$0xf]
        %v712 = vld [vmem:[%s609 + $0xf8] sm:$0xf]
        %v713 = vld [vmem:[%s609 + $0xfc] sm:$0xf]
        %v714 = vld [vmem:[%s609 + $0x100] sm:$0xf]
        %v715 = vld [vmem:[%s609 + $0x104] sm:$0xf]
        %v716 = vld [vmem:[%s609 + $0x108] sm:$0xf]
        %v717 = vld [vmem:[%s609 + $0x10c] sm:$0xf]
        %v718 = vld [vmem:[%s609 + $0x110] sm:$0xf]
        %v719 = vld [vmem:[%s609 + $0x114] sm:$0xf]
        %v720 = vld [vmem:[%s609 + $0x118] sm:$0xf]
        %v721 = vld [vmem:[%s609 + $0x11c] sm:$0xf]
        %v722 = vld [vmem:[%s609 + $0x120] sm:$0xf]
        %v723 = vld [vmem:[%s609 + $0x124] sm:$0xf]
        %v724 = vld [vmem:[%s609 + $0x128] sm:$0xf]
        %v725 = vld [vmem:[%s609 + $0x12c] sm:$0xf]
        %v726 = vld [vmem:[%s609 + $0x130] sm:$0xf]
        %v727 = vld [vmem:[%s609 + $0x134] sm:$0xf]
        %v728 = vld [vmem:[%s609 + $0x138] sm:$0xf]
        %v729 = vld [vmem:[%s609 + $0x13c] sm:$0xf]
        %v730 = vld [vmem:[%s609 + $0x140] sm:$0xf]
        %v731 = vld [vmem:[%s614] sm:$0xf]
        %v732 = vld [vmem:[%s614 + $0x4] sm:$0xf]
        %v733 = vld [vmem:[%s614 + $0x8] sm:$0xf]
        %v734 = vld [vmem:[%s614 + $0xc] sm:$0xf]
        %v735 = vld [vmem:[%s614 + $0x10] sm:$0x3]
        %v736 = vld [vmem:[%s648] sm:$0x1]
        %v737 = vlaneseq
        %v738 = vshrl.u32 %v737, 7
        %v739 = vsub.s32 0, %v738
        %v740 = vrot.slane %v736, %v739
        %v822 = vunpack.c.l.b16 %v650
        %v823 = vunpack.c.l.b16 %v651
        %v824 = vunpack.c.l.b16 %v652
        %v825 = vunpack.c.l.b16 %v653
        %v826 = vunpack.c.l.b16 %v654
        %v827 = vunpack.c.l.b16 %v655
        %v828 = vunpack.c.l.b16 %v656
        %v829 = vunpack.c.l.b16 %v657
        %v830 = vunpack.c.l.b16 %v658
        %v831 = vunpack.c.l.b16 %v659
        %v832 = vunpack.c.l.b16 %v660
        %v833 = vunpack.c.l.b16 %v661
        %v834 = vunpack.c.l.b16 %v662
        %v835 = vunpack.c.l.b16 %v663
        %v836 = vunpack.c.l.b16 %v664
        %v837 = vunpack.c.l.b16 %v665
        %v838 = vunpack.c.l.b16 %v666
        %v839 = vunpack.c.l.b16 %v667
        %v840 = vunpack.c.l.b16 %v668
        %v841 = vunpack.c.l.b16 %v669
        %v842 = vunpack.c.l.b16 %v670
        %v843 = vunpack.c.l.b16 %v671
        %v844 = vunpack.c.l.b16 %v672
        %v845 = vunpack.c.l.b16 %v673
        %v846 = vunpack.c.l.b16 %v674
        %v847 = vunpack.c.l.b16 %v675
        %v848 = vunpack.c.l.b16 %v676
        %v849 = vunpack.c.l.b16 %v677
        %v850 = vunpack.c.l.b16 %v678
        %v851 = vunpack.c.l.b16 %v679
        %v852 = vunpack.c.l.b16 %v680
        %v853 = vunpack.c.l.b16 %v681
        %v854 = vunpack.c.l.b16 %v682
        %v855 = vunpack.c.l.b16 %v683
        %v856 = vunpack.c.l.b16 %v684
        %v857 = vunpack.c.l.b16 %v685
        %v858 = vunpack.c.l.b16 %v686
        %v859 = vunpack.c.l.b16 %v687
        %v860 = vunpack.c.l.b16 %v688
        %v861 = vunpack.c.l.b16 %v689
        %v862 = vunpack.c.l.b16 %v690
        %v863 = vunpack.c.l.b16 %v691
        %v864 = vunpack.c.l.b16 %v692
        %v865 = vunpack.c.l.b16 %v693
        %v866 = vunpack.c.l.b16 %v694
        %v867 = vunpack.c.l.b16 %v695
        %v868 = vunpack.c.l.b16 %v696
        %v869 = vunpack.c.l.b16 %v697
        %v870 = vunpack.c.l.b16 %v698
        %v871 = vunpack.c.l.b16 %v699
        %v872 = vunpack.c.l.b16 %v700
        %v873 = vunpack.c.l.b16 %v701
        %v874 = vunpack.c.l.b16 %v702
        %v875 = vunpack.c.l.b16 %v703
        %v876 = vunpack.c.l.b16 %v704
        %v877 = vunpack.c.l.b16 %v705
        %v878 = vunpack.c.l.b16 %v706
        %v879 = vunpack.c.l.b16 %v707
        %v880 = vunpack.c.l.b16 %v708
        %v881 = vunpack.c.l.b16 %v709
        %v882 = vunpack.c.l.b16 %v710
        %v883 = vunpack.c.l.b16 %v711
        %v884 = vunpack.c.l.b16 %v712
        %v885 = vunpack.c.l.b16 %v713
        %v886 = vunpack.c.l.b16 %v714
        %v887 = vunpack.c.l.b16 %v715
        %v888 = vunpack.c.l.b16 %v716
        %v889 = vunpack.c.l.b16 %v717
        %v890 = vunpack.c.l.b16 %v718
        %v891 = vunpack.c.l.b16 %v719
        %v892 = vunpack.c.l.b16 %v720
        %v893 = vunpack.c.l.b16 %v721
        %v894 = vunpack.c.l.b16 %v722
        %v895 = vunpack.c.l.b16 %v723
        %v896 = vunpack.c.l.b16 %v724
        %v897 = vunpack.c.l.b16 %v725
        %v898 = vunpack.c.l.b16 %v726
        %v899 = vunpack.c.l.b16 %v727
        %v900 = vunpack.c.l.b16 %v728
        %v901 = vunpack.c.l.b16 %v729
        %v902 = vunpack.c.l.b16 %v730
        %v903 = vpack.c.b16 %v823, %v822
        %v904 = vpack.c.b16 %v825, %v824
        %v905 = vpack.c.b16 %v827, %v826
        %v906 = vpack.c.b16 %v829, %v828
        %v907 = vpack.c.b16 %v831, %v830
        %v908 = vpack.c.b16 %v833, %v832
        %v909 = vpack.c.b16 %v835, %v834
        %v910 = vpack.c.b16 %v837, %v836
        %v911 = vpack.c.b16 %v839, %v838
        %v912 = vpack.c.b16 %v841, %v840
        %v913 = vpack.c.b16 %v843, %v842
        %v914 = vpack.c.b16 %v845, %v844
        %v915 = vpack.c.b16 %v847, %v846
        %v916 = vpack.c.b16 %v849, %v848
        %v917 = vpack.c.b16 %v851, %v850
        %v918 = vpack.c.b16 %v853, %v852
        %v919 = vpack.c.b16 %v855, %v854
        %v920 = vpack.c.b16 %v857, %v856
        %v921 = vpack.c.b16 %v859, %v858
        %v922 = vpack.c.b16 %v861, %v860
        %v923 = vpack.c.b16 %v863, %v862
        %v924 = vpack.c.b16 %v865, %v864
        %v925 = vpack.c.b16 %v867, %v866
        %v926 = vpack.c.b16 %v869, %v868
        %v927 = vpack.c.b16 %v871, %v870
        %v928 = vpack.c.b16 %v873, %v872
        %v929 = vpack.c.b16 %v875, %v874
        %v930 = vpack.c.b16 %v877, %v876
        %v931 = vpack.c.b16 %v879, %v878
        %v932 = vpack.c.b16 %v881, %v880
        %v933 = vpack.c.b16 %v883, %v882
        %v934 = vpack.c.b16 %v885, %v884
        %v935 = vpack.c.b16 %v887, %v886
        %v936 = vpack.c.b16 %v889, %v888
        %v937 = vpack.c.b16 %v891, %v890
        %v938 = vpack.c.b16 %v893, %v892
        %v939 = vpack.c.b16 %v895, %v894
        %v940 = vpack.c.b16 %v897, %v896
        %v941 = vpack.c.b16 %v899, %v898
        %v942 = vpack.c.b16 %v901, %v900
        %v943 = vpack.c.b16 %v902, %v902
        %v949 = vunpack.c.l.b16 %v731
        %v950 = vunpack.c.l.b16 %v732
        %v951 = vunpack.c.l.b16 %v733
        %v952 = vunpack.c.l.b16 %v734
        %v953 = vunpack.c.l.b16 %v735
        %v954 = vpack.c.b16 %v950, %v949
        %v955 = vpack.c.b16 %v952, %v951
        %v956 = vpack.c.b16 %v953, %v953
        %vm959 = vcmask 293888
        %v961 = vsel %vm959, %v903, 0
        %v964 = vsel %vm959, %v904, 0
        %v967 = vsel %vm959, %v905, 0
        %v970 = vsel %vm959, %v906, 0
        %v973 = vsel %vm959, %v907, 0
        %v976 = vsel %vm959, %v908, 0
        %v979 = vsel %vm959, %v909, 0
        %v982 = vsel %vm959, %v910, 0
        %v985 = vsel %vm959, %v911, 0
        %v988 = vsel %vm959, %v912, 0
        %v991 = vsel %vm959, %v913, 0
        %v994 = vsel %vm959, %v914, 0
        %v997 = vsel %vm959, %v915, 0
        %v1000 = vsel %vm959, %v916, 0
        %v1003 = vsel %vm959, %v917, 0
        %v1006 = vsel %vm959, %v918, 0
        %v1009 = vsel %vm959, %v919, 0
        %v1012 = vsel %vm959, %v920, 0
        %v1015 = vsel %vm959, %v921, 0
        %v1018 = vsel %vm959, %v922, 0
        %v1021 = vsel %vm959, %v923, 0
        %v1024 = vsel %vm959, %v924, 0
        %v1027 = vsel %vm959, %v925, 0
        %v1030 = vsel %vm959, %v926, 0
        %v1033 = vsel %vm959, %v927, 0
        %v1036 = vsel %vm959, %v928, 0
        %v1039 = vsel %vm959, %v929, 0
        %v1042 = vsel %vm959, %v930, 0
        %v1045 = vsel %vm959, %v931, 0
        %v1048 = vsel %vm959, %v932, 0
        %v1051 = vsel %vm959, %v933, 0
        %v1054 = vsel %vm959, %v934, 0
        %v1057 = vsel %vm959, %v935, 0
        %v1060 = vsel %vm959, %v936, 0
        %v1063 = vsel %vm959, %v937, 0
        %v1066 = vsel %vm959, %v938, 0
        %v1069 = vsel %vm959, %v939, 0
        %v1072 = vsel %vm959, %v940, 0
        %v1075 = vsel %vm959, %v941, 0
        %v1078 = vsel %vm959, %v942, 0
        %v1081 = vsel %vm959, %v943, 0
        %vm1083 = vcmask 1041408
        %v1085 = vsel %vm1083, %v956, 0
        %1087 = vmatprep.subr.bf16.mxu0 0
        %1088 = vmatpush1.bf16.msra.mxu0 %v954
        %1089 = vmatprep.subr.bf16.mxu0 0
        %1090 = vmatpush1.bf16.msra.mxu0 %v955
        %1091 = vmatprep.subr.bf16.mxu0 0
        %1092 = vmatpush1.bf16.msra.mxu0 %v1085
        %1093 = vmatprep.subr.bf16.mxu0 0
        %1094 = vmatpush1.bf16.msra.mxu0 0
        %1095 = vmatprep.subr.bf16.mxu0 0
        %1096 = vmatpush1.bf16.msra.mxu0 0
        %1097 = vmatprep.subr.bf16.mxu0 0
        %1098 = vmatpush1.bf16.msra.mxu0 0
        %1099 = vmatprep.subr.bf16.mxu0 0
        %1100 = vmatpush1.bf16.msra.mxu0 0
        %1101 = vmatprep.subr.bf16.mxu0 0
        %1102 = vmatpush1.bf16.msra.mxu0 0
        %1103 = vmatprep.subr.bf16.mxu0 0
        %1104 = vmatpush1.bf16.msra.mxu0 0
        %1105 = vmatprep.subr.bf16.mxu0 0
        %1106 = vmatpush1.bf16.msra.mxu0 0
        %1107 = vmatprep.subr.bf16.mxu0 0
        %1108 = vmatpush1.bf16.msra.mxu0 0
        %1109 = vmatprep.subr.bf16.mxu0 0
        %1110 = vmatpush1.bf16.msra.mxu0 0
        %1111 = vmatprep.subr.bf16.mxu0 0
        %1112 = vmatpush1.bf16.msra.mxu0 0
        %1113 = vmatprep.subr.bf16.mxu0 0
        %1114 = vmatpush1.bf16.msra.mxu0 0
        %1115 = vmatprep.subr.bf16.mxu0 0
        %1116 = vmatpush1.bf16.msra.mxu0 0
        %1117 = vmatprep.subr.bf16.mxu0 0
        %1118 = vmatpush1.bf16.msra.mxu0 0
        %1119 = vmatprep.mubr.bf16.mxu0 0
        %1120 = vmatmul.mubr.bf16.gmra.mrb[0].mxu0 %v961
        %v1121 = vpop.f32.mrb[0].mxu0
        %v1122 = vadd.f32 %v740, %v1121
        %v1123 = vpop.f32.mrb[0].mxu0
        %v1124 = vpop.f32.mrb[0].mxu0
        %v1125 = vadd.f32 %v740, %v1124
        %v1126 = vpop.f32.mrb[0].mxu0
        %1127 = vmatprep.mubr.bf16.mxu0 0
        %1128 = vmatmul.mubr.bf16.gmra.mrb[0].mxu0 %v964
        %v1129 = vpop.f32.mrb[0].mxu0
        %v1130 = vadd.f32 %v740, %v1129
        %v1131 = vpop.f32.mrb[0].mxu0
        %v1132 = vpop.f32.mrb[0].mxu0
        %v1133 = vadd.f32 %v740, %v1132
        %v1134 = vpop.f32.mrb[0].mxu0
        %1135 = vmatprep.mubr.bf16.mxu0 0
        %1136 = vmatmul.mubr.bf16.gmra.mrb[0].mxu0 %v967
        %v1137 = vpop.f32.mrb[0].mxu0
        %v1138 = vadd.f32 %v740, %v1137
        %v1139 = vpop.f32.mrb[0].mxu0
        %v1140 = vpop.f32.mrb[0].mxu0
        %v1141 = vadd.f32 %v740, %v1140
        %v1142 = vpop.f32.mrb[0].mxu0
        %1143 = vmatprep.mubr.bf16.mxu0 0
        %1144 = vmatmul.mubr.bf16.gmra.mrb[0].mxu0 %v970
        %v1145 = vpop.f32.mrb[0].mxu0
        %v1146 = vadd.f32 %v740, %v1145
        %v1147 = vpop.f32.mrb[0].mxu0
        %v1148 = vpop.f32.mrb[0].mxu0
        %v1149 = vadd.f32 %v740, %v1148
        %v1150 = vpop.f32.mrb[0].mxu0
        %1151 = vmatprep.mubr.bf16.mxu0 0
        %1152 = vmatmul.mubr.bf16.gmra.mrb[0].mxu0 %v973
        %v1153 = vpop.f32.mrb[0].mxu0
        %v1154 = vadd.f32 %v740, %v1153
        %v1155 = vpop.f32.mrb[0].mxu0
        %v1156 = vpop.f32.mrb[0].mxu0
        %v1157 = vadd.f32 %v740, %v1156
        %v1158 = vpop.f32.mrb[0].mxu0
        %1159 = vmatprep.mubr.bf16.mxu0 0
        %1160 = vmatmul.mubr.bf16.gmra.mrb[0].mxu0 %v976
        %v1161 = vpop.f32.mrb[0].mxu0
        %v1162 = vadd.f32 %v740, %v1161
        %v1163 = vpop.f32.mrb[0].mxu0
        %v1164 = vpop.f32.mrb[0].mxu0
        %v1165 = vadd.f32 %v740, %v1164
        %v1166 = vpop.f32.mrb[0].mxu0
        %1167 = vmatprep.mubr.bf16.mxu0 0
        %1168 = vmatmul.mubr.bf16.gmra.mrb[0].mxu0 %v979
        %v1169 = vpop.f32.mrb[0].mxu0
        %v1170 = vadd.f32 %v740, %v1169
        %v1171 = vpop.f32.mrb[0].mxu0
        %v1172 = vpop.f32.mrb[0].mxu0
        %v1173 = vadd.f32 %v740, %v1172
        %v1174 = vpop.f32.mrb[0].mxu0
        %1175 = vmatprep.mubr.bf16.mxu0 0
        %1176 = vmatmul.mubr.bf16.gmra.mrb[0].mxu0 %v982
        %v1177 = vpop.f32.mrb[0].mxu0
        %v1178 = vadd.f32 %v740, %v1177
        %v1179 = vpop.f32.mrb[0].mxu0
        %v1180 = vpop.f32.mrb[0].mxu0
        %v1181 = vadd.f32 %v740, %v1180
        %v1182 = vpop.f32.mrb[0].mxu0
        %1183 = vmatprep.mubr.bf16.mxu0 0
        %1184 = vmatmul.mubr.bf16.gmra.mrb[0].mxu0 %v985
        %v1185 = vpop.f32.mrb[0].mxu0
        %v1186 = vadd.f32 %v740, %v1185
        %v1187 = vpop.f32.mrb[0].mxu0
        %v1188 = vpop.f32.mrb[0].mxu0
        %v1189 = vadd.f32 %v740, %v1188
        %v1190 = vpop.f32.mrb[0].mxu0
        %1191 = vmatprep.mubr.bf16.mxu0 0
        %1192 = vmatmul.mubr.bf16.gmra.mrb[0].mxu0 %v988
        %v1193 = vpop.f32.mrb[0].mxu0
        %v1194 = vadd.f32 %v740, %v1193
        %v1195 = vpop.f32.mrb[0].mxu0
        %v1196 = vpop.f32.mrb[0].mxu0
        %v1197 = vadd.f32 %v740, %v1196
        %v1198 = vpop.f32.mrb[0].mxu0
        %1199 = vmatprep.mubr.bf16.mxu0 0
        %1200 = vmatmul.mubr.bf16.gmra.mrb[0].mxu0 %v991
        %v1201 = vpop.f32.mrb[0].mxu0
        %v1202 = vadd.f32 %v740, %v1201
        %v1203 = vpop.f32.mrb[0].mxu0
        %v1204 = vpop.f32.mrb[0].mxu0
        %v1205 = vadd.f32 %v740, %v1204
        %v1206 = vpop.f32.mrb[0].mxu0
        %1207 = vmatprep.mubr.bf16.mxu0 0
        %1208 = vmatmul.mubr.bf16.gmra.mrb[0].mxu0 %v994
        %v1209 = vpop.f32.mrb[0].mxu0
        %v1210 = vadd.f32 %v740, %v1209
        %v1211 = vpop.f32.mrb[0].mxu0
        %v1212 = vpop.f32.mrb[0].mxu0
        %v1213 = vadd.f32 %v740, %v1212
        %v1214 = vpop.f32.mrb[0].mxu0
        %1215 = vmatprep.mubr.bf16.mxu0 0
        %1216 = vmatmul.mubr.bf16.gmra.mrb[0].mxu0 %v997
        %v1217 = vpop.f32.mrb[0].mxu0
        %v1218 = vadd.f32 %v740, %v1217
        %v1219 = vpop.f32.mrb[0].mxu0
        %v1220 = vpop.f32.mrb[0].mxu0
        %v1221 = vadd.f32 %v740, %v1220
        %v1222 = vpop.f32.mrb[0].mxu0
        %1223 = vmatprep.mubr.bf16.mxu0 0
        %1224 = vmatmul.mubr.bf16.gmra.mrb[0].mxu0 %v1000
        %v1225 = vpop.f32.mrb[0].mxu0
        %v1226 = vadd.f32 %v740, %v1225
        %v1227 = vpop.f32.mrb[0].mxu0
        %v1228 = vpop.f32.mrb[0].mxu0
        %v1229 = vadd.f32 %v740, %v1228
        %v1230 = vpop.f32.mrb[0].mxu0
        %1231 = vmatprep.mubr.bf16.mxu0 0
        %1232 = vmatmul.mubr.bf16.gmra.mrb[0].mxu0 %v1003
        %v1233 = vpop.f32.mrb[0].mxu0
        %v1234 = vadd.f32 %v740, %v1233
        %v1235 = vpop.f32.mrb[0].mxu0
        %v1236 = vpop.f32.mrb[0].mxu0
        %v1237 = vadd.f32 %v740, %v1236
        %v1238 = vpop.f32.mrb[0].mxu0
        %1239 = vmatprep.mubr.bf16.mxu0 0
        %1240 = vmatmul.mubr.bf16.gmra.mrb[0].mxu0 %v1006
        %v1241 = vpop.f32.mrb[0].mxu0
        %v1242 = vadd.f32 %v740, %v1241
        %v1243 = vpop.f32.mrb[0].mxu0
        %v1244 = vpop.f32.mrb[0].mxu0
        %v1245 = vadd.f32 %v740, %v1244
        %v1246 = vpop.f32.mrb[0].mxu0
        %1247 = vmatprep.mubr.bf16.mxu0 0
        %1248 = vmatmul.mubr.bf16.gmra.mrb[0].mxu0 %v1009
        %v1249 = vpop.f32.mrb[0].mxu0
        %v1250 = vadd.f32 %v740, %v1249
        %v1251 = vpop.f32.mrb[0].mxu0
        %v1252 = vpop.f32.mrb[0].mxu0
        %v1253 = vadd.f32 %v740, %v1252
        %v1254 = vpop.f32.mrb[0].mxu0
        %1255 = vmatprep.mubr.bf16.mxu0 0
        %1256 = vmatmul.mubr.bf16.gmra.mrb[0].mxu0 %v1012
        %v1257 = vpop.f32.mrb[0].mxu0
        %v1258 = vadd.f32 %v740, %v1257
        %v1259 = vpop.f32.mrb[0].mxu0
        %v1260 = vpop.f32.mrb[0].mxu0
        %v1261 = vadd.f32 %v740, %v1260
        %v1262 = vpop.f32.mrb[0].mxu0
        %1263 = vmatprep.mubr.bf16.mxu0 0
        %1264 = vmatmul.mubr.bf16.gmra.mrb[0].mxu0 %v1015
        %v1265 = vpop.f32.mrb[0].mxu0
        %v1266 = vadd.f32 %v740, %v1265
        %v1267 = vpop.f32.mrb[0].mxu0
        %v1268 = vpop.f32.mrb[0].mxu0
        %v1269 = vadd.f32 %v740, %v1268
        %v1270 = vpop.f32.mrb[0].mxu0
        %1271 = vmatprep.mubr.bf16.mxu0 0
        %1272 = vmatmul.mubr.bf16.gmra.mrb[0].mxu0 %v1018
        %v1273 = vpop.f32.mrb[0].mxu0
        %v1274 = vadd.f32 %v740, %v1273
        %v1275 = vpop.f32.mrb[0].mxu0
        %v1276 = vpop.f32.mrb[0].mxu0
        %v1277 = vadd.f32 %v740, %v1276
        %v1278 = vpop.f32.mrb[0].mxu0
        %1279 = vmatprep.mubr.bf16.mxu0 0
        %1280 = vmatmul.mubr.bf16.gmra.mrb[0].mxu0 %v1021
        %v1281 = vpop.f32.mrb[0].mxu0
        %v1282 = vadd.f32 %v740, %v1281
        %v1283 = vpop.f32.mrb[0].mxu0
        %v1284 = vpop.f32.mrb[0].mxu0
        %v1285 = vadd.f32 %v740, %v1284
        %v1286 = vpop.f32.mrb[0].mxu0
        %1287 = vmatprep.mubr.bf16.mxu0 0
        %1288 = vmatmul.mubr.bf16.gmra.mrb[0].mxu0 %v1024
        %v1289 = vpop.f32.mrb[0].mxu0
        %v1290 = vadd.f32 %v740, %v1289
        %v1291 = vpop.f32.mrb[0].mxu0
        %v1292 = vpop.f32.mrb[0].mxu0
        %v1293 = vadd.f32 %v740, %v1292
        %v1294 = vpop.f32.mrb[0].mxu0
        %1295 = vmatprep.mubr.bf16.mxu0 0
        %1296 = vmatmul.mubr.bf16.gmra.mrb[0].mxu0 %v1027
        %v1297 = vpop.f32.mrb[0].mxu0
        %v1298 = vadd.f32 %v740, %v1297
        %v1299 = vpop.f32.mrb[0].mxu0
        %v1300 = vpop.f32.mrb[0].mxu0
        %v1301 = vadd.f32 %v740, %v1300
        %v1302 = vpop.f32.mrb[0].mxu0
        %1303 = vmatprep.mubr.bf16.mxu0 0
        %1304 = vmatmul.mubr.bf16.gmra.mrb[0].mxu0 %v1030
        %v1305 = vpop.f32.mrb[0].mxu0
        %v1306 = vadd.f32 %v740, %v1305
        %v1307 = vpop.f32.mrb[0].mxu0
        %v1308 = vpop.f32.mrb[0].mxu0
        %v1309 = vadd.f32 %v740, %v1308
        %v1310 = vpop.f32.mrb[0].mxu0
        %1311 = vmatprep.mubr.bf16.mxu0 0
        %1312 = vmatmul.mubr.bf16.gmra.mrb[0].mxu0 %v1033
        %v1313 = vpop.f32.mrb[0].mxu0
        %v1314 = vadd.f32 %v740, %v1313
        %v1315 = vpop.f32.mrb[0].mxu0
        %v1316 = vpop.f32.mrb[0].mxu0
        %v1317 = vadd.f32 %v740, %v1316
        %v1318 = vpop.f32.mrb[0].mxu0
        %1319 = vmatprep.mubr.bf16.mxu0 0
        %1320 = vmatmul.mubr.bf16.gmra.mrb[0].mxu0 %v1036
        %v1321 = vpop.f32.mrb[0].mxu0
        %v1322 = vadd.f32 %v740, %v1321
        %v1323 = vpop.f32.mrb[0].mxu0
        %v1324 = vpop.f32.mrb[0].mxu0
        %v1325 = vadd.f32 %v740, %v1324
        %v1326 = vpop.f32.mrb[0].mxu0
        %1327 = vmatprep.mubr.bf16.mxu0 0
        %1328 = vmatmul.mubr.bf16.gmra.mrb[0].mxu0 %v1039
        %v1329 = vpop.f32.mrb[0].mxu0
        %v1330 = vadd.f32 %v740, %v1329
        %v1331 = vpop.f32.mrb[0].mxu0
        %v1332 = vpop.f32.mrb[0].mxu0
        %v1333 = vadd.f32 %v740, %v1332
        %v1334 = vpop.f32.mrb[0].mxu0
        %1335 = vmatprep.mubr.bf16.mxu0 0
        %1336 = vmatmul.mubr.bf16.gmra.mrb[0].mxu0 %v1042
        %v1337 = vpop.f32.mrb[0].mxu0
        %v1338 = vadd.f32 %v740, %v1337
        %v1339 = vpop.f32.mrb[0].mxu0
        %v1340 = vpop.f32.mrb[0].mxu0
        %v1341 = vadd.f32 %v740, %v1340
        %v1342 = vpop.f32.mrb[0].mxu0
        %1343 = vmatprep.mubr.bf16.mxu0 0
        %1344 = vmatmul.mubr.bf16.gmra.mrb[0].mxu0 %v1045
        %v1345 = vpop.f32.mrb[0].mxu0
        %v1346 = vadd.f32 %v740, %v1345
        %v1347 = vpop.f32.mrb[0].mxu0
        %v1348 = vpop.f32.mrb[0].mxu0
        %v1349 = vadd.f32 %v740, %v1348
        %v1350 = vpop.f32.mrb[0].mxu0
        %1351 = vmatprep.mubr.bf16.mxu0 0
        %1352 = vmatmul.mubr.bf16.gmra.mrb[0].mxu0 %v1048
        %v1353 = vpop.f32.mrb[0].mxu0
        %v1354 = vadd.f32 %v740, %v1353
        %v1355 = vpop.f32.mrb[0].mxu0
        %v1356 = vpop.f32.mrb[0].mxu0
        %v1357 = vadd.f32 %v740, %v1356
        %v1358 = vpop.f32.mrb[0].mxu0
        %1359 = vmatprep.mubr.bf16.mxu0 0
        %1360 = vmatmul.mubr.bf16.gmra.mrb[0].mxu0 %v1051
        %v1361 = vpop.f32.mrb[0].mxu0
        %v1362 = vadd.f32 %v740, %v1361
        %v1363 = vpop.f32.mrb[0].mxu0
        %v1364 = vpop.f32.mrb[0].mxu0
        %v1365 = vadd.f32 %v740, %v1364
        %v1366 = vpop.f32.mrb[0].mxu0
        %1367 = vmatprep.mubr.bf16.mxu0 0
        %1368 = vmatmul.mubr.bf16.gmra.mrb[0].mxu0 %v1054
        %v1369 = vpop.f32.mrb[0].mxu0
        %v1370 = vadd.f32 %v740, %v1369
        %v1371 = vpop.f32.mrb[0].mxu0
        %v1372 = vpop.f32.mrb[0].mxu0
        %v1373 = vadd.f32 %v740, %v1372
        %v1374 = vpop.f32.mrb[0].mxu0
        %1375 = vmatprep.mubr.bf16.mxu0 0
        %1376 = vmatmul.mubr.bf16.gmra.mrb[0].mxu0 %v1057
        %v1377 = vpop.f32.mrb[0].mxu0
        %v1378 = vadd.f32 %v740, %v1377
        %v1379 = vpop.f32.mrb[0].mxu0
        %v1380 = vpop.f32.mrb[0].mxu0
        %v1381 = vadd.f32 %v740, %v1380
        %v1382 = vpop.f32.mrb[0].mxu0
        %1383 = vmatprep.mubr.bf16.mxu0 0
        %1384 = vmatmul.mubr.bf16.gmra.mrb[0].mxu0 %v1060
        %v1385 = vpop.f32.mrb[0].mxu0
        %v1386 = vadd.f32 %v740, %v1385
        %v1387 = vpop.f32.mrb[0].mxu0
        %v1388 = vpop.f32.mrb[0].mxu0
        %v1389 = vadd.f32 %v740, %v1388
        %v1390 = vpop.f32.mrb[0].mxu0
        %1391 = vmatprep.mubr.bf16.mxu0 0
        %1392 = vmatmul.mubr.bf16.gmra.mrb[0].mxu0 %v1063
        %v1393 = vpop.f32.mrb[0].mxu0
        %v1394 = vadd.f32 %v740, %v1393
        %v1395 = vpop.f32.mrb[0].mxu0
        %v1396 = vpop.f32.mrb[0].mxu0
        %v1397 = vadd.f32 %v740, %v1396
        %v1398 = vpop.f32.mrb[0].mxu0
        %1399 = vmatprep.mubr.bf16.mxu0 0
        %1400 = vmatmul.mubr.bf16.gmra.mrb[0].mxu0 %v1066
        %v1401 = vpop.f32.mrb[0].mxu0
        %v1402 = vadd.f32 %v740, %v1401
        %v1403 = vpop.f32.mrb[0].mxu0
        %v1404 = vpop.f32.mrb[0].mxu0
        %v1405 = vadd.f32 %v740, %v1404
        %v1406 = vpop.f32.mrb[0].mxu0
        %1407 = vmatprep.mubr.bf16.mxu0 0
        %1408 = vmatmul.mubr.bf16.gmra.mrb[0].mxu0 %v1069
        %v1409 = vpop.f32.mrb[0].mxu0
        %v1410 = vadd.f32 %v740, %v1409
        %v1411 = vpop.f32.mrb[0].mxu0
        %v1412 = vpop.f32.mrb[0].mxu0
        %v1413 = vadd.f32 %v740, %v1412
        %v1414 = vpop.f32.mrb[0].mxu0
        %1415 = vmatprep.mubr.bf16.mxu0 0
        %1416 = vmatmul.mubr.bf16.gmra.mrb[0].mxu0 %v1072
        %v1417 = vpop.f32.mrb[0].mxu0
        %v1418 = vadd.f32 %v740, %v1417
        %v1419 = vpop.f32.mrb[0].mxu0
        %v1420 = vpop.f32.mrb[0].mxu0
        %v1421 = vadd.f32 %v740, %v1420
        %v1422 = vpop.f32.mrb[0].mxu0
        %1423 = vmatprep.mubr.bf16.mxu0 0
        %1424 = vmatmul.mubr.bf16.gmra.mrb[0].mxu0 %v1075
        %v1425 = vpop.f32.mrb[0].mxu0
        %v1426 = vadd.f32 %v740, %v1425
        %v1427 = vpop.f32.mrb[0].mxu0
        %v1428 = vpop.f32.mrb[0].mxu0
        %v1429 = vadd.f32 %v740, %v1428
        %v1430 = vpop.f32.mrb[0].mxu0
        %1431 = vmatprep.mubr.bf16.mxu0 0
        %1432 = vmatmul.mubr.bf16.gmra.mrb[0].mxu0 %v1078
        %v1433 = vpop.f32.mrb[0].mxu0
        %v1434 = vadd.f32 %v740, %v1433
        %v1435 = vpop.f32.mrb[0].mxu0
        %v1436 = vpop.f32.mrb[0].mxu0
        %v1437 = vadd.f32 %v740, %v1436
        %v1438 = vpop.f32.mrb[0].mxu0
        %1439 = vmatprep.mubr.bf16.mxu0 0
        %1440 = vmatmul.mubr.bf16.gmra.mrb[0].mxu0 %v1081
        %v1441 = vpop.f32.mrb[0].mxu0
        %v1442 = vadd.f32 %v740, %v1441
        %v1443 = vpop.f32.mrb[0].mxu0
        %v1444 = vpop.f32.mrb[0].mxu0
        %v1445 = vpop.f32.mrb[0].mxu0
        %1446 = vdwg.mxu0
        %v1447 = vmax.f32 %v1122, 0.0
        %v1448 = vmax.f32 %v1125, 0.0
        %v1449 = vmax.f32 %v1130, 0.0
        %v1450 = vmax.f32 %v1133, 0.0
        %v1451 = vmax.f32 %v1138, 0.0
        %v1452 = vmax.f32 %v1141, 0.0
        %v1453 = vmax.f32 %v1146, 0.0
        %v1454 = vmax.f32 %v1149, 0.0
        %v1455 = vmax.f32 %v1154, 0.0
        %v1456 = vmax.f32 %v1157, 0.0
        %v1457 = vmax.f32 %v1162, 0.0
        %v1458 = vmax.f32 %v1165, 0.0
        %v1459 = vmax.f32 %v1170, 0.0
        %v1460 = vmax.f32 %v1173, 0.0
        %v1461 = vmax.f32 %v1178, 0.0
        %v1462 = vmax.f32 %v1181, 0.0
        %v1463 = vmax.f32 %v1186, 0.0
        %v1464 = vmax.f32 %v1189, 0.0
        %v1465 = vmax.f32 %v1194, 0.0
        %v1466 = vmax.f32 %v1197, 0.0
        %v1467 = vmax.f32 %v1202, 0.0
        %v1468 = vmax.f32 %v1205, 0.0
        %v1469 = vmax.f32 %v1210, 0.0
        %v1470 = vmax.f32 %v1213, 0.0
        %v1471 = vmax.f32 %v1218, 0.0
        %v1472 = vmax.f32 %v1221, 0.0
        %v1473 = vmax.f32 %v1226, 0.0
        %v1474 = vmax.f32 %v1229, 0.0
        %v1475 = vmax.f32 %v1234, 0.0
        %v1476 = vmax.f32 %v1237, 0.0
        %v1477 = vmax.f32 %v1242, 0.0
        %v1478 = vmax.f32 %v1245, 0.0
        %v1479 = vmax.f32 %v1250, 0.0
        %v1480 = vmax.f32 %v1253, 0.0
        %v1481 = vmax.f32 %v1258, 0.0
        %v1482 = vmax.f32 %v1261, 0.0
        %v1483 = vmax.f32 %v1266, 0.0
        %v1484 = vmax.f32 %v1269, 0.0
        %v1485 = vmax.f32 %v1274, 0.0
        %v1486 = vmax.f32 %v1277, 0.0
        %v1487 = vmax.f32 %v1282, 0.0
        %v1488 = vmax.f32 %v1285, 0.0
        %v1489 = vmax.f32 %v1290, 0.0
        %v1490 = vmax.f32 %v1293, 0.0
        %v1491 = vmax.f32 %v1298, 0.0
        %v1492 = vmax.f32 %v1301, 0.0
        %v1493 = vmax.f32 %v1306, 0.0
        %v1494 = vmax.f32 %v1309, 0.0
        %v1495 = vmax.f32 %v1314, 0.0
        %v1496 = vmax.f32 %v1317, 0.0
        %v1497 = vmax.f32 %v1322, 0.0
        %v1498 = vmax.f32 %v1325, 0.0
        %v1499 = vmax.f32 %v1330, 0.0
        %v1500 = vmax.f32 %v1333, 0.0
        %v1501 = vmax.f32 %v1338, 0.0
        %v1502 = vmax.f32 %v1341, 0.0
        %v1503 = vmax.f32 %v1346, 0.0
        %v1504 = vmax.f32 %v1349, 0.0
        %v1505 = vmax.f32 %v1354, 0.0
        %v1506 = vmax.f32 %v1357, 0.0
        %v1507 = vmax.f32 %v1362, 0.0
        %v1508 = vmax.f32 %v1365, 0.0
        %v1509 = vmax.f32 %v1370, 0.0
        %v1510 = vmax.f32 %v1373, 0.0
        %v1511 = vmax.f32 %v1378, 0.0
        %v1512 = vmax.f32 %v1381, 0.0
        %v1513 = vmax.f32 %v1386, 0.0
        %v1514 = vmax.f32 %v1389, 0.0
        %v1515 = vmax.f32 %v1394, 0.0
        %v1516 = vmax.f32 %v1397, 0.0
        %v1517 = vmax.f32 %v1402, 0.0
        %v1518 = vmax.f32 %v1405, 0.0
        %v1519 = vmax.f32 %v1410, 0.0
        %v1520 = vmax.f32 %v1413, 0.0
        %v1521 = vmax.f32 %v1418, 0.0
        %v1522 = vmax.f32 %v1421, 0.0
        %v1523 = vmax.f32 %v1426, 0.0
        %v1524 = vmax.f32 %v1429, 0.0
        %v1525 = vmax.f32 %v1434, 0.0
        %v1526 = vmax.f32 %v1437, 0.0
        %v1527 = vmax.f32 %v1442, 0.0
        %v1528 = vpack.c.bf16 %v1448, %v1447
        %v1529 = vpack.c.bf16 %v1450, %v1449
        %v1530 = vpack.c.bf16 %v1452, %v1451
        %v1531 = vpack.c.bf16 %v1454, %v1453
        %v1532 = vpack.c.bf16 %v1456, %v1455
        %v1533 = vpack.c.bf16 %v1458, %v1457
        %v1534 = vpack.c.bf16 %v1460, %v1459
        %v1535 = vpack.c.bf16 %v1462, %v1461
        %v1536 = vpack.c.bf16 %v1464, %v1463
        %v1537 = vpack.c.bf16 %v1466, %v1465
        %v1538 = vpack.c.bf16 %v1468, %v1467
        %v1539 = vpack.c.bf16 %v1470, %v1469
        %v1540 = vpack.c.bf16 %v1472, %v1471
        %v1541 = vpack.c.bf16 %v1474, %v1473
        %v1542 = vpack.c.bf16 %v1476, %v1475
        %v1543 = vpack.c.bf16 %v1478, %v1477
        %v1544 = vpack.c.bf16 %v1480, %v1479
        %v1545 = vpack.c.bf16 %v1482, %v1481
        %v1546 = vpack.c.bf16 %v1484, %v1483
        %v1547 = vpack.c.bf16 %v1486, %v1485
        %v1548 = vpack.c.bf16 %v1488, %v1487
        %v1549 = vpack.c.bf16 %v1490, %v1489
        %v1550 = vpack.c.bf16 %v1492, %v1491
        %v1551 = vpack.c.bf16 %v1494, %v1493
        %v1552 = vpack.c.bf16 %v1496, %v1495
        %v1553 = vpack.c.bf16 %v1498, %v1497
        %v1554 = vpack.c.bf16 %v1500, %v1499
        %v1555 = vpack.c.bf16 %v1502, %v1501
        %v1556 = vpack.c.bf16 %v1504, %v1503
        %v1557 = vpack.c.bf16 %v1506, %v1505
        %v1558 = vpack.c.bf16 %v1508, %v1507
        %v1559 = vpack.c.bf16 %v1510, %v1509
        %v1560 = vpack.c.bf16 %v1512, %v1511
        %v1561 = vpack.c.bf16 %v1514, %v1513
        %v1562 = vpack.c.bf16 %v1516, %v1515
        %v1563 = vpack.c.bf16 %v1518, %v1517
        %v1564 = vpack.c.bf16 %v1520, %v1519
        %v1565 = vpack.c.bf16 %v1522, %v1521
        %v1566 = vpack.c.bf16 %v1524, %v1523
        %v1567 = vpack.c.bf16 %v1526, %v1525
        %v1568 = vpack.c.bf16 %v1527, %v1527
        %v1569 = vld [vmem:[%s619] sm:$0xf]
        %v1570 = vld [vmem:[%s619 + $0x4] sm:$0xf]
        %v1571 = vld [vmem:[%s648 + $0x1] sm:$0x1]
        %v1572 = vlaneseq
        %v1573 = vshrl.u32 %v1572, 7
        %v1574 = vsub.s32 0, %v1573
        %v1575 = vrot.slane %v1571, %v1574
        %v1578 = vunpack.c.l.b16 %v1569
        %v1579 = vunpack.c.l.b16 %v1570
        %v1580 = vpack.c.b16 %v1579, %v1578
        %vm1582 = vcmask 130048
        %v1584 = vsel %vm1582, %v1528, 0
        %v1587 = vsel %vm1582, %v1529, 0
        %v1590 = vsel %vm1582, %v1530, 0
        %v1593 = vsel %vm1582, %v1531, 0
        %v1596 = vsel %vm1582, %v1532, 0
        %v1599 = vsel %vm1582, %v1533, 0
        %v1602 = vsel %vm1582, %v1534, 0
        %v1605 = vsel %vm1582, %v1535, 0
        %v1608 = vsel %vm1582, %v1536, 0
        %v1611 = vsel %vm1582, %v1537, 0
        %v1614 = vsel %vm1582, %v1538, 0
        %v1617 = vsel %vm1582, %v1539, 0
        %v1620 = vsel %vm1582, %v1540, 0
        %v1623 = vsel %vm1582, %v1541, 0
        %v1626 = vsel %vm1582, %v1542, 0
        %v1629 = vsel %vm1582, %v1543, 0
        %v1632 = vsel %vm1582, %v1544, 0
        %v1635 = vsel %vm1582, %v1545, 0
        %v1638 = vsel %vm1582, %v1546, 0
        %v1641 = vsel %vm1582, %v1547, 0
        %v1644 = vsel %vm1582, %v1548, 0
        %v1647 = vsel %vm1582, %v1549, 0
        %v1650 = vsel %vm1582, %v1550, 0
        %v1653 = vsel %vm1582, %v1551, 0
        %v1656 = vsel %vm1582, %v1552, 0
        %v1659 = vsel %vm1582, %v1553, 0
        %v1662 = vsel %vm1582, %v1554, 0
        %v1665 = vsel %vm1582, %v1555, 0
        %v1668 = vsel %vm1582, %v1556, 0
        %v1671 = vsel %vm1582, %v1557, 0
        %v1674 = vsel %vm1582, %v1558, 0
        %v1677 = vsel %vm1582, %v1559, 0
        %v1680 = vsel %vm1582, %v1560, 0
        %v1683 = vsel %vm1582, %v1561, 0
        %v1686 = vsel %vm1582, %v1562, 0
        %v1689 = vsel %vm1582, %v1563, 0
        %v1692 = vsel %vm1582, %v1564, 0
        %v1695 = vsel %vm1582, %v1565, 0
        %v1698 = vsel %vm1582, %v1566, 0
        %v1701 = vsel %vm1582, %v1567, 0
        %v1704 = vsel %vm1582, %v1568, 0
        %1706 = vmatprep.subr.bf16.mxu0 0
        %1707 = vmatpush1.bf16.msra.mxu0 %v1580
        %1708 = vmatprep.subr.bf16.mxu0 0
        %1709 = vmatpush1.bf16.msra.mxu0 0
        %1710 = vmatprep.subr.bf16.mxu0 0
        %1711 = vmatpush1.bf16.msra.mxu0 0
        %1712 = vmatprep.subr.bf16.mxu0 0
        %1713 = vmatpush1.bf16.msra.mxu0 0
        %1714 = vmatprep.subr.bf16.mxu0 0
        %1715 = vmatpush1.bf16.msra.mxu0 0
        %1716 = vmatprep.subr.bf16.mxu0 0
        %1717 = vmatpush1.bf16.msra.mxu0 0
        %1718 = vmatprep.subr.bf16.mxu0 0
        %1719 = vmatpush1.bf16.msra.mxu0 0
        %1720 = vmatprep.subr.bf16.mxu0 0
        %1721 = vmatpush1.bf16.msra.mxu0 0
        %1722 = vmatprep.subr.bf16.mxu0 0
        %1723 = vmatpush1.bf16.msra.mxu0 0
        %1724 = vmatprep.subr.bf16.mxu0 0
        %1725 = vmatpush1.bf16.msra.mxu0 0
        %1726 = vmatprep.subr.bf16.mxu0 0
        %1727 = vmatpush1.bf16.msra.mxu0 0
        %1728 = vmatprep.subr.bf16.mxu0 0
        %1729 = vmatpush1.bf16.msra.mxu0 0
        %1730 = vmatprep.subr.bf16.mxu0 0
        %1731 = vmatpush1.bf16.msra.mxu0 0
        %1732 = vmatprep.subr.bf16.mxu0 0
        %1733 = vmatpush1.bf16.msra.mxu0 0
        %1734 = vmatprep.subr.bf16.mxu0 0
        %1735 = vmatpush1.bf16.msra.mxu0 0
        %1736 = vmatprep.subr.bf16.mxu0 0
        %1737 = vmatpush1.bf16.msra.mxu0 0
        %1738 = vmatprep.mubr.bf16.mxu0 0
        %1739 = vmatmul.mubr.bf16.gmra.mrb[0].mxu0 %v1584
        %v1740 = vpop.f32.mrb[0].mxu0
        %v1741 = vadd.f32 %v1575, %v1740
        %v1742 = vpop.f32.mrb[0].mxu0
        %v1743 = vpop.f32.mrb[0].mxu0
        %v1744 = vadd.f32 %v1575, %v1743
        %v1745 = vpop.f32.mrb[0].mxu0
        %1746 = vmatprep.mubr.bf16.mxu0 0
        %1747 = vmatmul.mubr.bf16.gmra.mrb[0].mxu0 %v1587
        %v1748 = vpop.f32.mrb[0].mxu0
        %v1749 = vadd.f32 %v1575, %v1748
        %v1750 = vpop.f32.mrb[0].mxu0
        %v1751 = vpop.f32.mrb[0].mxu0
        %v1752 = vadd.f32 %v1575, %v1751
        %v1753 = vpop.f32.mrb[0].mxu0
        %1754 = vmatprep.mubr.bf16.mxu0 0
        %1755 = vmatmul.mubr.bf16.gmra.mrb[0].mxu0 %v1590
        %v1756 = vpop.f32.mrb[0].mxu0
        %v1757 = vadd.f32 %v1575, %v1756
        %v1758 = vpop.f32.mrb[0].mxu0
        %v1759 = vpop.f32.mrb[0].mxu0
        %v1760 = vadd.f32 %v1575, %v1759
        %v1761 = vpop.f32.mrb[0].mxu0
        %1762 = vmatprep.mubr.bf16.mxu0 0
        %1763 = vmatmul.mubr.bf16.gmra.mrb[0].mxu0 %v1593
        %v1764 = vpop.f32.mrb[0].mxu0
        %v1765 = vadd.f32 %v1575, %v1764
        %v1766 = vpop.f32.mrb[0].mxu0
        %v1767 = vpop.f32.mrb[0].mxu0
        %v1768 = vadd.f32 %v1575, %v1767
        %v1769 = vpop.f32.mrb[0].mxu0
        %1770 = vmatprep.mubr.bf16.mxu0 0
        %1771 = vmatmul.mubr.bf16.gmra.mrb[0].mxu0 %v1596
        %v1772 = vpop.f32.mrb[0].mxu0
        %v1773 = vadd.f32 %v1575, %v1772
        %v1774 = vpop.f32.mrb[0].mxu0
        %v1775 = vpop.f32.mrb[0].mxu0
        %v1776 = vadd.f32 %v1575, %v1775
        %v1777 = vpop.f32.mrb[0].mxu0
        %1778 = vmatprep.mubr.bf16.mxu0 0
        %1779 = vmatmul.mubr.bf16.gmra.mrb[0].mxu0 %v1599
        %v1780 = vpop.f32.mrb[0].mxu0
        %v1781 = vadd.f32 %v1575, %v1780
        %v1782 = vpop.f32.mrb[0].mxu0
        %v1783 = vpop.f32.mrb[0].mxu0
        %v1784 = vadd.f32 %v1575, %v1783
        %v1785 = vpop.f32.mrb[0].mxu0
        %1786 = vmatprep.mubr.bf16.mxu0 0
        %1787 = vmatmul.mubr.bf16.gmra.mrb[0].mxu0 %v1602
        %v1788 = vpop.f32.mrb[0].mxu0
        %v1789 = vadd.f32 %v1575, %v1788
        %v1790 = vpop.f32.mrb[0].mxu0
        %v1791 = vpop.f32.mrb[0].mxu0
        %v1792 = vadd.f32 %v1575, %v1791
        %v1793 = vpop.f32.mrb[0].mxu0
        %1794 = vmatprep.mubr.bf16.mxu0 0
        %1795 = vmatmul.mubr.bf16.gmra.mrb[0].mxu0 %v1605
        %v1796 = vpop.f32.mrb[0].mxu0
        %v1797 = vadd.f32 %v1575, %v1796
        %v1798 = vpop.f32.mrb[0].mxu0
        %v1799 = vpop.f32.mrb[0].mxu0
        %v1800 = vadd.f32 %v1575, %v1799
        %v1801 = vpop.f32.mrb[0].mxu0
        %1802 = vmatprep.mubr.bf16.mxu0 0
        %1803 = vmatmul.mubr.bf16.gmra.mrb[0].mxu0 %v1608
        %v1804 = vpop.f32.mrb[0].mxu0
        %v1805 = vadd.f32 %v1575, %v1804
        %v1806 = vpop.f32.mrb[0].mxu0
        %v1807 = vpop.f32.mrb[0].mxu0
        %v1808 = vadd.f32 %v1575, %v1807
        %v1809 = vpop.f32.mrb[0].mxu0
        %1810 = vmatprep.mubr.bf16.mxu0 0
        %1811 = vmatmul.mubr.bf16.gmra.mrb[0].mxu0 %v1611
        %v1812 = vpop.f32.mrb[0].mxu0
        %v1813 = vadd.f32 %v1575, %v1812
        %v1814 = vpop.f32.mrb[0].mxu0
        %v1815 = vpop.f32.mrb[0].mxu0
        %v1816 = vadd.f32 %v1575, %v1815
        %v1817 = vpop.f32.mrb[0].mxu0
        %1818 = vmatprep.mubr.bf16.mxu0 0
        %1819 = vmatmul.mubr.bf16.gmra.mrb[0].mxu0 %v1614
        %v1820 = vpop.f32.mrb[0].mxu0
        %v1821 = vadd.f32 %v1575, %v1820
        %v1822 = vpop.f32.mrb[0].mxu0
        %v1823 = vpop.f32.mrb[0].mxu0
        %v1824 = vadd.f32 %v1575, %v1823
        %v1825 = vpop.f32.mrb[0].mxu0
        %1826 = vmatprep.mubr.bf16.mxu0 0
        %1827 = vmatmul.mubr.bf16.gmra.mrb[0].mxu0 %v1617
        %v1828 = vpop.f32.mrb[0].mxu0
        %v1829 = vadd.f32 %v1575, %v1828
        %v1830 = vpop.f32.mrb[0].mxu0
        %v1831 = vpop.f32.mrb[0].mxu0
        %v1832 = vadd.f32 %v1575, %v1831
        %v1833 = vpop.f32.mrb[0].mxu0
        %1834 = vmatprep.mubr.bf16.mxu0 0
        %1835 = vmatmul.mubr.bf16.gmra.mrb[0].mxu0 %v1620
        %v1836 = vpop.f32.mrb[0].mxu0
        %v1837 = vadd.f32 %v1575, %v1836
        %v1838 = vpop.f32.mrb[0].mxu0
        %v1839 = vpop.f32.mrb[0].mxu0
        %v1840 = vadd.f32 %v1575, %v1839
        %v1841 = vpop.f32.mrb[0].mxu0
        %1842 = vmatprep.mubr.bf16.mxu0 0
        %1843 = vmatmul.mubr.bf16.gmra.mrb[0].mxu0 %v1623
        %v1844 = vpop.f32.mrb[0].mxu0
        %v1845 = vadd.f32 %v1575, %v1844
        %v1846 = vpop.f32.mrb[0].mxu0
        %v1847 = vpop.f32.mrb[0].mxu0
        %v1848 = vadd.f32 %v1575, %v1847
        %v1849 = vpop.f32.mrb[0].mxu0
        %1850 = vmatprep.mubr.bf16.mxu0 0
        %1851 = vmatmul.mubr.bf16.gmra.mrb[0].mxu0 %v1626
        %v1852 = vpop.f32.mrb[0].mxu0
        %v1853 = vadd.f32 %v1575, %v1852
        %v1854 = vpop.f32.mrb[0].mxu0
        %v1855 = vpop.f32.mrb[0].mxu0
        %v1856 = vadd.f32 %v1575, %v1855
        %v1857 = vpop.f32.mrb[0].mxu0
        %1858 = vmatprep.mubr.bf16.mxu0 0
        %1859 = vmatmul.mubr.bf16.gmra.mrb[0].mxu0 %v1629
        %v1860 = vpop.f32.mrb[0].mxu0
        %v1861 = vadd.f32 %v1575, %v1860
        %v1862 = vpop.f32.mrb[0].mxu0
        %v1863 = vpop.f32.mrb[0].mxu0
        %v1864 = vadd.f32 %v1575, %v1863
        %v1865 = vpop.f32.mrb[0].mxu0
        %1866 = vmatprep.mubr.bf16.mxu0 0
        %1867 = vmatmul.mubr.bf16.gmra.mrb[0].mxu0 %v1632
        %v1868 = vpop.f32.mrb[0].mxu0
        %v1869 = vadd.f32 %v1575, %v1868
        %v1870 = vpop.f32.mrb[0].mxu0
        %v1871 = vpop.f32.mrb[0].mxu0
        %v1872 = vadd.f32 %v1575, %v1871
        %v1873 = vpop.f32.mrb[0].mxu0
        %1874 = vmatprep.mubr.bf16.mxu0 0
        %1875 = vmatmul.mubr.bf16.gmra.mrb[0].mxu0 %v1635
        %v1876 = vpop.f32.mrb[0].mxu0
        %v1877 = vadd.f32 %v1575, %v1876
        %v1878 = vpop.f32.mrb[0].mxu0
        %v1879 = vpop.f32.mrb[0].mxu0
        %v1880 = vadd.f32 %v1575, %v1879
        %v1881 = vpop.f32.mrb[0].mxu0
        %1882 = vmatprep.mubr.bf16.mxu0 0
        %1883 = vmatmul.mubr.bf16.gmra.mrb[0].mxu0 %v1638
        %v1884 = vpop.f32.mrb[0].mxu0
        %v1885 = vadd.f32 %v1575, %v1884
        %v1886 = vpop.f32.mrb[0].mxu0
        %v1887 = vpop.f32.mrb[0].mxu0
        %v1888 = vadd.f32 %v1575, %v1887
        %v1889 = vpop.f32.mrb[0].mxu0
        %1890 = vmatprep.mubr.bf16.mxu0 0
        %1891 = vmatmul.mubr.bf16.gmra.mrb[0].mxu0 %v1641
        %v1892 = vpop.f32.mrb[0].mxu0
        %v1893 = vadd.f32 %v1575, %v1892
        %v1894 = vpop.f32.mrb[0].mxu0
        %v1895 = vpop.f32.mrb[0].mxu0
        %v1896 = vadd.f32 %v1575, %v1895
        %v1897 = vpop.f32.mrb[0].mxu0
        %1898 = vmatprep.mubr.bf16.mxu0 0
        %1899 = vmatmul.mubr.bf16.gmra.mrb[0].mxu0 %v1644
        %v1900 = vpop.f32.mrb[0].mxu0
        %v1901 = vadd.f32 %v1575, %v1900
        %v1902 = vpop.f32.mrb[0].mxu0
        %v1903 = vpop.f32.mrb[0].mxu0
        %v1904 = vadd.f32 %v1575, %v1903
        %v1905 = vpop.f32.mrb[0].mxu0
        %1906 = vmatprep.mubr.bf16.mxu0 0
        %1907 = vmatmul.mubr.bf16.gmra.mrb[0].mxu0 %v1647
        %v1908 = vpop.f32.mrb[0].mxu0
        %v1909 = vadd.f32 %v1575, %v1908
        %v1910 = vpop.f32.mrb[0].mxu0
        %v1911 = vpop.f32.mrb[0].mxu0
        %v1912 = vadd.f32 %v1575, %v1911
        %v1913 = vpop.f32.mrb[0].mxu0
        %1914 = vmatprep.mubr.bf16.mxu0 0
        %1915 = vmatmul.mubr.bf16.gmra.mrb[0].mxu0 %v1650
        %v1916 = vpop.f32.mrb[0].mxu0
        %v1917 = vadd.f32 %v1575, %v1916
        %v1918 = vpop.f32.mrb[0].mxu0
        %v1919 = vpop.f32.mrb[0].mxu0
        %v1920 = vadd.f32 %v1575, %v1919
        %v1921 = vpop.f32.mrb[0].mxu0
        %1922 = vmatprep.mubr.bf16.mxu0 0
        %1923 = vmatmul.mubr.bf16.gmra.mrb[0].mxu0 %v1653
        %v1924 = vpop.f32.mrb[0].mxu0
        %v1925 = vadd.f32 %v1575, %v1924
        %v1926 = vpop.f32.mrb[0].mxu0
        %v1927 = vpop.f32.mrb[0].mxu0
        %v1928 = vadd.f32 %v1575, %v1927
        %v1929 = vpop.f32.mrb[0].mxu0
        %1930 = vmatprep.mubr.bf16.mxu0 0
        %1931 = vmatmul.mubr.bf16.gmra.mrb[0].mxu0 %v1656
        %v1932 = vpop.f32.mrb[0].mxu0
        %v1933 = vadd.f32 %v1575, %v1932
        %v1934 = vpop.f32.mrb[0].mxu0
        %v1935 = vpop.f32.mrb[0].mxu0
        %v1936 = vadd.f32 %v1575, %v1935
        %v1937 = vpop.f32.mrb[0].mxu0
        %1938 = vmatprep.mubr.bf16.mxu0 0
        %1939 = vmatmul.mubr.bf16.gmra.mrb[0].mxu0 %v1659
        %v1940 = vpop.f32.mrb[0].mxu0
        %v1941 = vadd.f32 %v1575, %v1940
        %v1942 = vpop.f32.mrb[0].mxu0
        %v1943 = vpop.f32.mrb[0].mxu0
        %v1944 = vadd.f32 %v1575, %v1943
        %v1945 = vpop.f32.mrb[0].mxu0
        %1946 = vmatprep.mubr.bf16.mxu0 0
        %1947 = vmatmul.mubr.bf16.gmra.mrb[0].mxu0 %v1662
        %v1948 = vpop.f32.mrb[0].mxu0
        %v1949 = vadd.f32 %v1575, %v1948
        %v1950 = vpop.f32.mrb[0].mxu0
        %v1951 = vpop.f32.mrb[0].mxu0
        %v1952 = vadd.f32 %v1575, %v1951
        %v1953 = vpop.f32.mrb[0].mxu0
        %1954 = vmatprep.mubr.bf16.mxu0 0
        %1955 = vmatmul.mubr.bf16.gmra.mrb[0].mxu0 %v1665
        %v1956 = vpop.f32.mrb[0].mxu0
        %v1957 = vadd.f32 %v1575, %v1956
        %v1958 = vpop.f32.mrb[0].mxu0
        %v1959 = vpop.f32.mrb[0].mxu0
        %v1960 = vadd.f32 %v1575, %v1959
        %v1961 = vpop.f32.mrb[0].mxu0
        %1962 = vmatprep.mubr.bf16.mxu0 0
        %1963 = vmatmul.mubr.bf16.gmra.mrb[0].mxu0 %v1668
        %v1964 = vpop.f32.mrb[0].mxu0
        %v1965 = vadd.f32 %v1575, %v1964
        %v1966 = vpop.f32.mrb[0].mxu0
        %v1967 = vpop.f32.mrb[0].mxu0
        %v1968 = vadd.f32 %v1575, %v1967
        %v1969 = vpop.f32.mrb[0].mxu0
        %1970 = vmatprep.mubr.bf16.mxu0 0
        %1971 = vmatmul.mubr.bf16.gmra.mrb[0].mxu0 %v1671
        %v1972 = vpop.f32.mrb[0].mxu0
        %v1973 = vadd.f32 %v1575, %v1972
        %v1974 = vpop.f32.mrb[0].mxu0
        %v1975 = vpop.f32.mrb[0].mxu0
        %v1976 = vadd.f32 %v1575, %v1975
        %v1977 = vpop.f32.mrb[0].mxu0
        %1978 = vmatprep.mubr.bf16.mxu0 0
        %1979 = vmatmul.mubr.bf16.gmra.mrb[0].mxu0 %v1674
        %v1980 = vpop.f32.mrb[0].mxu0
        %v1981 = vadd.f32 %v1575, %v1980
        %v1982 = vpop.f32.mrb[0].mxu0
        %v1983 = vpop.f32.mrb[0].mxu0
        %v1984 = vadd.f32 %v1575, %v1983
        %v1985 = vpop.f32.mrb[0].mxu0
        %1986 = vmatprep.mubr.bf16.mxu0 0
        %1987 = vmatmul.mubr.bf16.gmra.mrb[0].mxu0 %v1677
        %v1988 = vpop.f32.mrb[0].mxu0
        %v1989 = vadd.f32 %v1575, %v1988
        %v1990 = vpop.f32.mrb[0].mxu0
        %v1991 = vpop.f32.mrb[0].mxu0
        %v1992 = vadd.f32 %v1575, %v1991
        %v1993 = vpop.f32.mrb[0].mxu0
        %1994 = vmatprep.mubr.bf16.mxu0 0
        %1995 = vmatmul.mubr.bf16.gmra.mrb[0].mxu0 %v1680
        %v1996 = vpop.f32.mrb[0].mxu0
        %v1997 = vadd.f32 %v1575, %v1996
        %v1998 = vpop.f32.mrb[0].mxu0
        %v1999 = vpop.f32.mrb[0].mxu0
        %v2000 = vadd.f32 %v1575, %v1999
        %v2001 = vpop.f32.mrb[0].mxu0
        %2002 = vmatprep.mubr.bf16.mxu0 0
        %2003 = vmatmul.mubr.bf16.gmra.mrb[0].mxu0 %v1683
        %v2004 = vpop.f32.mrb[0].mxu0
        %v2005 = vadd.f32 %v1575, %v2004
        %v2006 = vpop.f32.mrb[0].mxu0
        %v2007 = vpop.f32.mrb[0].mxu0
        %v2008 = vadd.f32 %v1575, %v2007
        %v2009 = vpop.f32.mrb[0].mxu0
        %2010 = vmatprep.mubr.bf16.mxu0 0
        %2011 = vmatmul.mubr.bf16.gmra.mrb[0].mxu0 %v1686
        %v2012 = vpop.f32.mrb[0].mxu0
        %v2013 = vadd.f32 %v1575, %v2012
        %v2014 = vpop.f32.mrb[0].mxu0
        %v2015 = vpop.f32.mrb[0].mxu0
        %v2016 = vadd.f32 %v1575, %v2015
        %v2017 = vpop.f32.mrb[0].mxu0
        %2018 = vmatprep.mubr.bf16.mxu0 0
        %2019 = vmatmul.mubr.bf16.gmra.mrb[0].mxu0 %v1689
        %v2020 = vpop.f32.mrb[0].mxu0
        %v2021 = vadd.f32 %v1575, %v2020
        %v2022 = vpop.f32.mrb[0].mxu0
        %v2023 = vpop.f32.mrb[0].mxu0
        %v2024 = vadd.f32 %v1575, %v2023
        %v2025 = vpop.f32.mrb[0].mxu0
        %2026 = vmatprep.mubr.bf16.mxu0 0
        %2027 = vmatmul.mubr.bf16.gmra.mrb[0].mxu0 %v1692
        %v2028 = vpop.f32.mrb[0].mxu0
        %v2029 = vadd.f32 %v1575, %v2028
        %v2030 = vpop.f32.mrb[0].mxu0
        %v2031 = vpop.f32.mrb[0].mxu0
        %v2032 = vadd.f32 %v1575, %v2031
        %v2033 = vpop.f32.mrb[0].mxu0
        %2034 = vmatprep.mubr.bf16.mxu0 0
        %2035 = vmatmul.mubr.bf16.gmra.mrb[0].mxu0 %v1695
        %v2036 = vpop.f32.mrb[0].mxu0
        %v2037 = vadd.f32 %v1575, %v2036
        %v2038 = vpop.f32.mrb[0].mxu0
        %v2039 = vpop.f32.mrb[0].mxu0
        %v2040 = vadd.f32 %v1575, %v2039
        %v2041 = vpop.f32.mrb[0].mxu0
        %2042 = vmatprep.mubr.bf16.mxu0 0
        %2043 = vmatmul.mubr.bf16.gmra.mrb[0].mxu0 %v1698
        %v2044 = vpop.f32.mrb[0].mxu0
        %v2045 = vadd.f32 %v1575, %v2044
        %v2046 = vpop.f32.mrb[0].mxu0
        %v2047 = vpop.f32.mrb[0].mxu0
        %v2048 = vadd.f32 %v1575, %v2047
        %v2049 = vpop.f32.mrb[0].mxu0
        %2050 = vmatprep.mubr.bf16.mxu0 0
        %2051 = vmatmul.mubr.bf16.gmra.mrb[0].mxu0 %v1701
        %v2052 = vpop.f32.mrb[0].mxu0
        %v2053 = vadd.f32 %v1575, %v2052
        %v2054 = vpop.f32.mrb[0].mxu0
        %v2055 = vpop.f32.mrb[0].mxu0
        %v2056 = vadd.f32 %v1575, %v2055
        %v2057 = vpop.f32.mrb[0].mxu0
        %2058 = vmatprep.mubr.bf16.mxu0 0
        %2059 = vmatmul.mubr.bf16.gmra.mrb[0].mxu0 %v1704
        %v2060 = vpop.f32.mrb[0].mxu0
        %v2061 = vadd.f32 %v1575, %v2060
        %v2062 = vpop.f32.mrb[0].mxu0
        %v2063 = vpop.f32.mrb[0].mxu0
        %v2064 = vpop.f32.mrb[0].mxu0
        %2065 = vdwg.mxu0
        %v2066 = vmax.f32 %v1741, 0.0
        %v2067 = vmax.f32 %v1744, 0.0
        %v2068 = vmax.f32 %v1749, 0.0
        %v2069 = vmax.f32 %v1752, 0.0
        %v2070 = vmax.f32 %v1757, 0.0
        %v2071 = vmax.f32 %v1760, 0.0
        %v2072 = vmax.f32 %v1765, 0.0
        %v2073 = vmax.f32 %v1768, 0.0
        %v2074 = vmax.f32 %v1773, 0.0
        %v2075 = vmax.f32 %v1776, 0.0
        %v2076 = vmax.f32 %v1781, 0.0
        %v2077 = vmax.f32 %v1784, 0.0
        %v2078 = vmax.f32 %v1789, 0.0
        %v2079 = vmax.f32 %v1792, 0.0
        %v2080 = vmax.f32 %v1797, 0.0
        %v2081 = vmax.f32 %v1800, 0.0
        %v2082 = vmax.f32 %v1805, 0.0
        %v2083 = vmax.f32 %v1808, 0.0
        %v2084 = vmax.f32 %v1813, 0.0
        %v2085 = vmax.f32 %v1816, 0.0
        %v2086 = vmax.f32 %v1821, 0.0
        %v2087 = vmax.f32 %v1824, 0.0
        %v2088 = vmax.f32 %v1829, 0.0
        %v2089 = vmax.f32 %v1832, 0.0
        %v2090 = vmax.f32 %v1837, 0.0
        %v2091 = vmax.f32 %v1840, 0.0
        %v2092 = vmax.f32 %v1845, 0.0
        %v2093 = vmax.f32 %v1848, 0.0
        %v2094 = vmax.f32 %v1853, 0.0
        %v2095 = vmax.f32 %v1856, 0.0
        %v2096 = vmax.f32 %v1861, 0.0
        %v2097 = vmax.f32 %v1864, 0.0
        %v2098 = vmax.f32 %v1869, 0.0
        %v2099 = vmax.f32 %v1872, 0.0
        %v2100 = vmax.f32 %v1877, 0.0
        %v2101 = vmax.f32 %v1880, 0.0
        %v2102 = vmax.f32 %v1885, 0.0
        %v2103 = vmax.f32 %v1888, 0.0
        %v2104 = vmax.f32 %v1893, 0.0
        %v2105 = vmax.f32 %v1896, 0.0
        %v2106 = vmax.f32 %v1901, 0.0
        %v2107 = vmax.f32 %v1904, 0.0
        %v2108 = vmax.f32 %v1909, 0.0
        %v2109 = vmax.f32 %v1912, 0.0
        %v2110 = vmax.f32 %v1917, 0.0
        %v2111 = vmax.f32 %v1920, 0.0
        %v2112 = vmax.f32 %v1925, 0.0
        %v2113 = vmax.f32 %v1928, 0.0
        %v2114 = vmax.f32 %v1933, 0.0
        %v2115 = vmax.f32 %v1936, 0.0
        %v2116 = vmax.f32 %v1941, 0.0
        %v2117 = vmax.f32 %v1944, 0.0
        %v2118 = vmax.f32 %v1949, 0.0
        %v2119 = vmax.f32 %v1952, 0.0
        %v2120 = vmax.f32 %v1957, 0.0
        %v2121 = vmax.f32 %v1960, 0.0
        %v2122 = vmax.f32 %v1965, 0.0
        %v2123 = vmax.f32 %v1968, 0.0
        %v2124 = vmax.f32 %v1973, 0.0
        %v2125 = vmax.f32 %v1976, 0.0
        %v2126 = vmax.f32 %v1981, 0.0
        %v2127 = vmax.f32 %v1984, 0.0
        %v2128 = vmax.f32 %v1989, 0.0
        %v2129 = vmax.f32 %v1992, 0.0
        %v2130 = vmax.f32 %v1997, 0.0
        %v2131 = vmax.f32 %v2000, 0.0
        %v2132 = vmax.f32 %v2005, 0.0
        %v2133 = vmax.f32 %v2008, 0.0
        %v2134 = vmax.f32 %v2013, 0.0
        %v2135 = vmax.f32 %v2016, 0.0
        %v2136 = vmax.f32 %v2021, 0.0
        %v2137 = vmax.f32 %v2024, 0.0
        %v2138 = vmax.f32 %v2029, 0.0
        %v2139 = vmax.f32 %v2032, 0.0
        %v2140 = vmax.f32 %v2037, 0.0
        %v2141 = vmax.f32 %v2040, 0.0
        %v2142 = vmax.f32 %v2045, 0.0
        %v2143 = vmax.f32 %v2048, 0.0
        %v2144 = vmax.f32 %v2053, 0.0
        %v2145 = vmax.f32 %v2056, 0.0
        %v2146 = vmax.f32 %v2061, 0.0
        %v2147 = vld [vmem:[%s9] sm:$0xff]
        %v2148 = vld [vmem:[%s9 + $0x8] sm:$0xff]
        %v2149 = vld [vmem:[%s9 + $0x10] sm:$0xff]
        %v2150 = vld [vmem:[%s9 + $0x18] sm:$0xff]
        %v2151 = vld [vmem:[%s9 + $0x20] sm:$0xff]
        %v2152 = vld [vmem:[%s9 + $0x28] sm:$0xff]
        %v2153 = vld [vmem:[%s9 + $0x30] sm:$0xff]
        %v2154 = vld [vmem:[%s9 + $0x38] sm:$0xff]
        %v2155 = vld [vmem:[%s9 + $0x40] sm:$0xff]
        %v2156 = vld [vmem:[%s9 + $0x48] sm:$0xff]
        %v2157 = vld [vmem:[%s9 + $0x50] sm:$0xff]
        %v2158 = vld [vmem:[%s9 + $0x58] sm:$0xff]
        %v2159 = vld [vmem:[%s9 + $0x60] sm:$0xff]
        %v2160 = vld [vmem:[%s9 + $0x68] sm:$0xff]
        %v2161 = vld [vmem:[%s9 + $0x70] sm:$0xff]
        %v2162 = vld [vmem:[%s9 + $0x78] sm:$0xff]
        %v2163 = vld [vmem:[%s9 + $0x80] sm:$0xff]
        %v2164 = vld [vmem:[%s9 + $0x88] sm:$0xff]
        %v2165 = vld [vmem:[%s9 + $0x90] sm:$0xff]
        %v2166 = vld [vmem:[%s9 + $0x98] sm:$0xff]
        %v2167 = vld [vmem:[%s9 + $0xa0] sm:$0xff]
        %v2168 = vld [vmem:[%s9 + $0xa8] sm:$0xff]
        %v2169 = vld [vmem:[%s9 + $0xb0] sm:$0xff]
        %v2170 = vld [vmem:[%s9 + $0xb8] sm:$0xff]
        %v2171 = vld [vmem:[%s9 + $0xc0] sm:$0xff]
        %v2172 = vld [vmem:[%s9 + $0xc8] sm:$0xff]
        %v2173 = vld [vmem:[%s9 + $0xd0] sm:$0xff]
        %v2174 = vld [vmem:[%s9 + $0xd8] sm:$0xff]
        %v2175 = vld [vmem:[%s9 + $0xe0] sm:$0xff]
        %v2176 = vld [vmem:[%s9 + $0xe8] sm:$0xff]
        %v2177 = vld [vmem:[%s9 + $0xf0] sm:$0xff]
        %v2178 = vld [vmem:[%s9 + $0xf8] sm:$0xff]
        %v2179 = vld [vmem:[%s9 + $0x100] sm:$0xff]
        %v2180 = vld [vmem:[%s9 + $0x108] sm:$0xff]
        %v2181 = vld [vmem:[%s9 + $0x110] sm:$0xff]
        %v2182 = vld [vmem:[%s9 + $0x118] sm:$0xff]
        %v2183 = vld [vmem:[%s9 + $0x120] sm:$0xff]
        %v2184 = vld [vmem:[%s9 + $0x128] sm:$0xff]
        %v2185 = vld [vmem:[%s9 + $0x130] sm:$0xff]
        %v2186 = vld [vmem:[%s9 + $0x138] sm:$0xff]
        %v2187 = vld [vmem:[%s9 + $0x140] sm:$0xff]
        %v2188 = vld [vmem:[%s9 + $0x148] sm:$0xff]
        %v2189 = vld [vmem:[%s9 + $0x150] sm:$0xff]
        %v2190 = vld [vmem:[%s9 + $0x158] sm:$0xff]
        %v2191 = vld [vmem:[%s9 + $0x160] sm:$0xff]
        %v2192 = vld [vmem:[%s9 + $0x168] sm:$0xff]
        %v2193 = vld [vmem:[%s9 + $0x170] sm:$0xff]
        %v2194 = vld [vmem:[%s9 + $0x178] sm:$0xff]
        %v2195 = vld [vmem:[%s9 + $0x180] sm:$0xff]
        %v2196 = vld [vmem:[%s9 + $0x188] sm:$0xff]
        %v2197 = vld [vmem:[%s9 + $0x190] sm:$0xff]
        %v2198 = vld [vmem:[%s9 + $0x198] sm:$0xff]
        %v2199 = vld [vmem:[%s9 + $0x1a0] sm:$0xff]
        %v2200 = vld [vmem:[%s9 + $0x1a8] sm:$0xff]
        %v2201 = vld [vmem:[%s9 + $0x1b0] sm:$0xff]
        %v2202 = vld [vmem:[%s9 + $0x1b8] sm:$0xff]
        %v2203 = vld [vmem:[%s9 + $0x1c0] sm:$0xff]
        %v2204 = vld [vmem:[%s9 + $0x1c8] sm:$0xff]
        %v2205 = vld [vmem:[%s9 + $0x1d0] sm:$0xff]
        %v2206 = vld [vmem:[%s9 + $0x1d8] sm:$0xff]
        %v2207 = vld [vmem:[%s9 + $0x1e0] sm:$0xff]
        %v2208 = vld [vmem:[%s9 + $0x1e8] sm:$0xff]
        %v2209 = vld [vmem:[%s9 + $0x1f0] sm:$0xff]
        %v2210 = vld [vmem:[%s9 + $0x1f8] sm:$0xff]
        %v2211 = vld [vmem:[%s9 + $0x200] sm:$0xff]
        %v2212 = vld [vmem:[%s9 + $0x208] sm:$0xff]
        %v2213 = vld [vmem:[%s9 + $0x210] sm:$0xff]
        %v2214 = vld [vmem:[%s9 + $0x218] sm:$0xff]
        %v2215 = vld [vmem:[%s9 + $0x220] sm:$0xff]
        %v2216 = vld [vmem:[%s9 + $0x228] sm:$0xff]
        %v2217 = vld [vmem:[%s9 + $0x230] sm:$0xff]
        %v2218 = vld [vmem:[%s9 + $0x238] sm:$0xff]
        %v2219 = vld [vmem:[%s9 + $0x240] sm:$0xff]
        %v2220 = vld [vmem:[%s9 + $0x248] sm:$0xff]
        %v2221 = vld [vmem:[%s9 + $0x250] sm:$0xff]
        %v2222 = vld [vmem:[%s9 + $0x258] sm:$0xff]
        %v2223 = vld [vmem:[%s9 + $0x260] sm:$0xff]
        %v2224 = vld [vmem:[%s9 + $0x268] sm:$0xff]
        %v2225 = vld [vmem:[%s9 + $0x270] sm:$0xff]
        %v2226 = vld [vmem:[%s9 + $0x278] sm:$0xff]
        %v2227 = vld [vmem:[%s9 + $0x280] sm:$0xff]
        %2229 = vset.pattern.permute.xlu0 0
        %2230 = vperm.xlu0 %2229, %v2147
        %v2231 = vpop.permute.xlu0 %2230
        %2234 = vset.pattern.permute.xlu0 0
        %2235 = vperm.xlu0 %2234, %v2148
        %v2236 = vpop.permute.xlu0 %2235
        %2239 = vset.pattern.permute.xlu0 0
        %2240 = vperm.xlu0 %2239, %v2149
        %v2241 = vpop.permute.xlu0 %2240
        %2244 = vset.pattern.permute.xlu0 0
        %2245 = vperm.xlu0 %2244, %v2150
        %v2246 = vpop.permute.xlu0 %2245
        %2249 = vset.pattern.permute.xlu0 0
        %2250 = vperm.xlu0 %2249, %v2151
        %v2251 = vpop.permute.xlu0 %2250
        %2254 = vset.pattern.permute.xlu0 0
        %2255 = vperm.xlu0 %2254, %v2152
        %v2256 = vpop.permute.xlu0 %2255
        %2259 = vset.pattern.permute.xlu0 0
        %2260 = vperm.xlu0 %2259, %v2153
        %v2261 = vpop.permute.xlu0 %2260
        %2264 = vset.pattern.permute.xlu0 0
        %2265 = vperm.xlu0 %2264, %v2154
        %v2266 = vpop.permute.xlu0 %2265
        %2269 = vset.pattern.permute.xlu0 0
        %2270 = vperm.xlu0 %2269, %v2155
        %v2271 = vpop.permute.xlu0 %2270
        %2274 = vset.pattern.permute.xlu0 0
        %2275 = vperm.xlu0 %2274, %v2156
        %v2276 = vpop.permute.xlu0 %2275
        %2279 = vset.pattern.permute.xlu0 0
        %2280 = vperm.xlu0 %2279, %v2157
        %v2281 = vpop.permute.xlu0 %2280
        %2284 = vset.pattern.permute.xlu0 0
        %2285 = vperm.xlu0 %2284, %v2158
        %v2286 = vpop.permute.xlu0 %2285
        %2289 = vset.pattern.permute.xlu0 0
        %2290 = vperm.xlu0 %2289, %v2159
        %v2291 = vpop.permute.xlu0 %2290
        %2294 = vset.pattern.permute.xlu0 0
        %2295 = vperm.xlu0 %2294, %v2160
        %v2296 = vpop.permute.xlu0 %2295
        %2299 = vset.pattern.permute.xlu0 0
        %2300 = vperm.xlu0 %2299, %v2161
        %v2301 = vpop.permute.xlu0 %2300
        %2304 = vset.pattern.permute.xlu0 0
        %2305 = vperm.xlu0 %2304, %v2162
        %v2306 = vpop.permute.xlu0 %2305
        %2309 = vset.pattern.permute.xlu0 0
        %2310 = vperm.xlu0 %2309, %v2163
        %v2311 = vpop.permute.xlu0 %2310
        %2314 = vset.pattern.permute.xlu0 0
        %2315 = vperm.xlu0 %2314, %v2164
        %v2316 = vpop.permute.xlu0 %2315
        %2319 = vset.pattern.permute.xlu0 0
        %2320 = vperm.xlu0 %2319, %v2165
        %v2321 = vpop.permute.xlu0 %2320
        %2324 = vset.pattern.permute.xlu0 0
        %2325 = vperm.xlu0 %2324, %v2166
        %v2326 = vpop.permute.xlu0 %2325
        %2329 = vset.pattern.permute.xlu0 0
        %2330 = vperm.xlu0 %2329, %v2167
        %v2331 = vpop.permute.xlu0 %2330
        %2334 = vset.pattern.permute.xlu0 0
        %2335 = vperm.xlu0 %2334, %v2168
        %v2336 = vpop.permute.xlu0 %2335
        %2339 = vset.pattern.permute.xlu0 0
        %2340 = vperm.xlu0 %2339, %v2169
        %v2341 = vpop.permute.xlu0 %2340
        %2344 = vset.pattern.permute.xlu0 0
        %2345 = vperm.xlu0 %2344, %v2170
        %v2346 = vpop.permute.xlu0 %2345
        %2349 = vset.pattern.permute.xlu0 0
        %2350 = vperm.xlu0 %2349, %v2171
        %v2351 = vpop.permute.xlu0 %2350
        %2354 = vset.pattern.permute.xlu0 0
        %2355 = vperm.xlu0 %2354, %v2172
        %v2356 = vpop.permute.xlu0 %2355
        %2359 = vset.pattern.permute.xlu0 0
        %2360 = vperm.xlu0 %2359, %v2173
        %v2361 = vpop.permute.xlu0 %2360
        %2364 = vset.pattern.permute.xlu0 0
        %2365 = vperm.xlu0 %2364, %v2174
        %v2366 = vpop.permute.xlu0 %2365
        %2369 = vset.pattern.permute.xlu0 0
        %2370 = vperm.xlu0 %2369, %v2175
        %v2371 = vpop.permute.xlu0 %2370
        %2374 = vset.pattern.permute.xlu0 0
        %2375 = vperm.xlu0 %2374, %v2176
        %v2376 = vpop.permute.xlu0 %2375
        %2379 = vset.pattern.permute.xlu0 0
        %2380 = vperm.xlu0 %2379, %v2177
        %v2381 = vpop.permute.xlu0 %2380
        %2384 = vset.pattern.permute.xlu0 0
        %2385 = vperm.xlu0 %2384, %v2178
        %v2386 = vpop.permute.xlu0 %2385
        %2389 = vset.pattern.permute.xlu0 0
        %2390 = vperm.xlu0 %2389, %v2179
        %v2391 = vpop.permute.xlu0 %2390
        %2394 = vset.pattern.permute.xlu0 0
        %2395 = vperm.xlu0 %2394, %v2180
        %v2396 = vpop.permute.xlu0 %2395
        %2399 = vset.pattern.permute.xlu0 0
        %2400 = vperm.xlu0 %2399, %v2181
        %v2401 = vpop.permute.xlu0 %2400
        %2404 = vset.pattern.permute.xlu0 0
        %2405 = vperm.xlu0 %2404, %v2182
        %v2406 = vpop.permute.xlu0 %2405
        %2409 = vset.pattern.permute.xlu0 0
        %2410 = vperm.xlu0 %2409, %v2183
        %v2411 = vpop.permute.xlu0 %2410
        %2414 = vset.pattern.permute.xlu0 0
        %2415 = vperm.xlu0 %2414, %v2184
        %v2416 = vpop.permute.xlu0 %2415
        %2419 = vset.pattern.permute.xlu0 0
        %2420 = vperm.xlu0 %2419, %v2185
        %v2421 = vpop.permute.xlu0 %2420
        %2424 = vset.pattern.permute.xlu0 0
        %2425 = vperm.xlu0 %2424, %v2186
        %v2426 = vpop.permute.xlu0 %2425
        %2429 = vset.pattern.permute.xlu0 0
        %2430 = vperm.xlu0 %2429, %v2187
        %v2431 = vpop.permute.xlu0 %2430
        %2434 = vset.pattern.permute.xlu0 0
        %2435 = vperm.xlu0 %2434, %v2188
        %v2436 = vpop.permute.xlu0 %2435
        %2439 = vset.pattern.permute.xlu0 0
        %2440 = vperm.xlu0 %2439, %v2189
        %v2441 = vpop.permute.xlu0 %2440
        %2444 = vset.pattern.permute.xlu0 0
        %2445 = vperm.xlu0 %2444, %v2190
        %v2446 = vpop.permute.xlu0 %2445
        %2449 = vset.pattern.permute.xlu0 0
        %2450 = vperm.xlu0 %2449, %v2191
        %v2451 = vpop.permute.xlu0 %2450
        %2454 = vset.pattern.permute.xlu0 0
        %2455 = vperm.xlu0 %2454, %v2192
        %v2456 = vpop.permute.xlu0 %2455
        %2459 = vset.pattern.permute.xlu0 0
        %2460 = vperm.xlu0 %2459, %v2193
        %v2461 = vpop.permute.xlu0 %2460
        %2464 = vset.pattern.permute.xlu0 0
        %2465 = vperm.xlu0 %2464, %v2194
        %v2466 = vpop.permute.xlu0 %2465
        %2469 = vset.pattern.permute.xlu0 0
        %2470 = vperm.xlu0 %2469, %v2195
        %v2471 = vpop.permute.xlu0 %2470
        %2474 = vset.pattern.permute.xlu0 0
        %2475 = vperm.xlu0 %2474, %v2196
        %v2476 = vpop.permute.xlu0 %2475
        %2479 = vset.pattern.permute.xlu0 0
        %2480 = vperm.xlu0 %2479, %v2197
        %v2481 = vpop.permute.xlu0 %2480
        %2484 = vset.pattern.permute.xlu0 0
        %2485 = vperm.xlu0 %2484, %v2198
        %v2486 = vpop.permute.xlu0 %2485
        %2489 = vset.pattern.permute.xlu0 0
        %2490 = vperm.xlu0 %2489, %v2199
        %v2491 = vpop.permute.xlu0 %2490
        %2494 = vset.pattern.permute.xlu0 0
        %2495 = vperm.xlu0 %2494, %v2200
        %v2496 = vpop.permute.xlu0 %2495
        %2499 = vset.pattern.permute.xlu0 0
        %2500 = vperm.xlu0 %2499, %v2201
        %v2501 = vpop.permute.xlu0 %2500
        %2504 = vset.pattern.permute.xlu0 0
        %2505 = vperm.xlu0 %2504, %v2202
        %v2506 = vpop.permute.xlu0 %2505
        %2509 = vset.pattern.permute.xlu0 0
        %2510 = vperm.xlu0 %2509, %v2203
        %v2511 = vpop.permute.xlu0 %2510
        %2514 = vset.pattern.permute.xlu0 0
        %2515 = vperm.xlu0 %2514, %v2204
        %v2516 = vpop.permute.xlu0 %2515
        %2519 = vset.pattern.permute.xlu0 0
        %2520 = vperm.xlu0 %2519, %v2205
        %v2521 = vpop.permute.xlu0 %2520
        %2524 = vset.pattern.permute.xlu0 0
        %2525 = vperm.xlu0 %2524, %v2206
        %v2526 = vpop.permute.xlu0 %2525
        %2529 = vset.pattern.permute.xlu0 0
        %2530 = vperm.xlu0 %2529, %v2207
        %v2531 = vpop.permute.xlu0 %2530
        %2534 = vset.pattern.permute.xlu0 0
        %2535 = vperm.xlu0 %2534, %v2208
        %v2536 = vpop.permute.xlu0 %2535
        %2539 = vset.pattern.permute.xlu0 0
        %2540 = vperm.xlu0 %2539, %v2209
        %v2541 = vpop.permute.xlu0 %2540
        %2544 = vset.pattern.permute.xlu0 0
        %2545 = vperm.xlu0 %2544, %v2210
        %v2546 = vpop.permute.xlu0 %2545
        %2549 = vset.pattern.permute.xlu0 0
        %2550 = vperm.xlu0 %2549, %v2211
        %v2551 = vpop.permute.xlu0 %2550
        %2554 = vset.pattern.permute.xlu0 0
        %2555 = vperm.xlu0 %2554, %v2212
        %v2556 = vpop.permute.xlu0 %2555
        %2559 = vset.pattern.permute.xlu0 0
        %2560 = vperm.xlu0 %2559, %v2213
        %v2561 = vpop.permute.xlu0 %2560
        %2564 = vset.pattern.permute.xlu0 0
        %2565 = vperm.xlu0 %2564, %v2214
        %v2566 = vpop.permute.xlu0 %2565
        %2569 = vset.pattern.permute.xlu0 0
        %2570 = vperm.xlu0 %2569, %v2215
        %v2571 = vpop.permute.xlu0 %2570
        %2574 = vset.pattern.permute.xlu0 0
        %2575 = vperm.xlu0 %2574, %v2216
        %v2576 = vpop.permute.xlu0 %2575
        %2579 = vset.pattern.permute.xlu0 0
        %2580 = vperm.xlu0 %2579, %v2217
        %v2581 = vpop.permute.xlu0 %2580
        %2584 = vset.pattern.permute.xlu0 0
        %2585 = vperm.xlu0 %2584, %v2218
        %v2586 = vpop.permute.xlu0 %2585
        %2589 = vset.pattern.permute.xlu0 0
        %2590 = vperm.xlu0 %2589, %v2219
        %v2591 = vpop.permute.xlu0 %2590
        %2594 = vset.pattern.permute.xlu0 0
        %2595 = vperm.xlu0 %2594, %v2220
        %v2596 = vpop.permute.xlu0 %2595
        %2599 = vset.pattern.permute.xlu0 0
        %2600 = vperm.xlu0 %2599, %v2221
        %v2601 = vpop.permute.xlu0 %2600
        %2604 = vset.pattern.permute.xlu0 0
        %2605 = vperm.xlu0 %2604, %v2222
        %v2606 = vpop.permute.xlu0 %2605
        %2609 = vset.pattern.permute.xlu0 0
        %2610 = vperm.xlu0 %2609, %v2223
        %v2611 = vpop.permute.xlu0 %2610
        %2614 = vset.pattern.permute.xlu0 0
        %2615 = vperm.xlu0 %2614, %v2224
        %v2616 = vpop.permute.xlu0 %2615
        %2619 = vset.pattern.permute.xlu0 0
        %2620 = vperm.xlu0 %2619, %v2225
        %v2621 = vpop.permute.xlu0 %2620
        %2624 = vset.pattern.permute.xlu0 0
        %2625 = vperm.xlu0 %2624, %v2226
        %v2626 = vpop.permute.xlu0 %2625
        %2629 = vset.pattern.permute.xlu0 0
        %2630 = vperm.xlu0 %2629, %v2227
        %v2631 = vpop.permute.xlu0 %2630
        %v2633 = vmul.f32 %v2066, %v2231
        %v2634 = vmul.f32 %v2067, %v2236
        %v2635 = vmul.f32 %v2068, %v2241
        %v2636 = vmul.f32 %v2069, %v2246
        %v2637 = vmul.f32 %v2070, %v2251
        %v2638 = vmul.f32 %v2071, %v2256
        %v2639 = vmul.f32 %v2072, %v2261
        %v2640 = vmul.f32 %v2073, %v2266
        %v2641 = vmul.f32 %v2074, %v2271
        %v2642 = vmul.f32 %v2075, %v2276
        %v2643 = vmul.f32 %v2076, %v2281
        %v2644 = vmul.f32 %v2077, %v2286
        %v2645 = vmul.f32 %v2078, %v2291
        %v2646 = vmul.f32 %v2079, %v2296
        %v2647 = vmul.f32 %v2080, %v2301
        %v2648 = vmul.f32 %v2081, %v2306
        %v2649 = vmul.f32 %v2082, %v2311
        %v2650 = vmul.f32 %v2083, %v2316
        %v2651 = vmul.f32 %v2084, %v2321
        %v2652 = vmul.f32 %v2085, %v2326
        %v2653 = vmul.f32 %v2086, %v2331
        %v2654 = vmul.f32 %v2087, %v2336
        %v2655 = vmul.f32 %v2088, %v2341
        %v2656 = vmul.f32 %v2089, %v2346
        %v2657 = vmul.f32 %v2090, %v2351
        %v2658 = vmul.f32 %v2091, %v2356
        %v2659 = vmul.f32 %v2092, %v2361
        %v2660 = vmul.f32 %v2093, %v2366
        %v2661 = vmul.f32 %v2094, %v2371
        %v2662 = vmul.f32 %v2095, %v2376
        %v2663 = vmul.f32 %v2096, %v2381
        %v2664 = vmul.f32 %v2097, %v2386
        %v2665 = vmul.f32 %v2098, %v2391
        %v2666 = vmul.f32 %v2099, %v2396
        %v2667 = vmul.f32 %v2100, %v2401
        %v2668 = vmul.f32 %v2101, %v2406
        %v2669 = vmul.f32 %v2102, %v2411
        %v2670 = vmul.f32 %v2103, %v2416
        %v2671 = vmul.f32 %v2104, %v2421
        %v2672 = vmul.f32 %v2105, %v2426
        %v2673 = vmul.f32 %v2106, %v2431
        %v2674 = vmul.f32 %v2107, %v2436
        %v2675 = vmul.f32 %v2108, %v2441
        %v2676 = vmul.f32 %v2109, %v2446
        %v2677 = vmul.f32 %v2110, %v2451
        %v2678 = vmul.f32 %v2111, %v2456
        %v2679 = vmul.f32 %v2112, %v2461
        %v2680 = vmul.f32 %v2113, %v2466
        %v2681 = vmul.f32 %v2114, %v2471
        %v2682 = vmul.f32 %v2115, %v2476
        %v2683 = vmul.f32 %v2116, %v2481
        %v2684 = vmul.f32 %v2117, %v2486
        %v2685 = vmul.f32 %v2118, %v2491
        %v2686 = vmul.f32 %v2119, %v2496
        %v2687 = vmul.f32 %v2120, %v2501
        %v2688 = vmul.f32 %v2121, %v2506
        %v2689 = vmul.f32 %v2122, %v2511
        %v2690 = vmul.f32 %v2123, %v2516
        %v2691 = vmul.f32 %v2124, %v2521
        %v2692 = vmul.f32 %v2125, %v2526
        %v2693 = vmul.f32 %v2126, %v2531
        %v2694 = vmul.f32 %v2127, %v2536
        %v2695 = vmul.f32 %v2128, %v2541
        %v2696 = vmul.f32 %v2129, %v2546
        %v2697 = vmul.f32 %v2130, %v2551
        %v2698 = vmul.f32 %v2131, %v2556
        %v2699 = vmul.f32 %v2132, %v2561
        %v2700 = vmul.f32 %v2133, %v2566
        %v2701 = vmul.f32 %v2134, %v2571
        %v2702 = vmul.f32 %v2135, %v2576
        %v2703 = vmul.f32 %v2136, %v2581
        %v2704 = vmul.f32 %v2137, %v2586
        %v2705 = vmul.f32 %v2138, %v2591
        %v2706 = vmul.f32 %v2139, %v2596
        %v2707 = vmul.f32 %v2140, %v2601
        %v2708 = vmul.f32 %v2141, %v2606
        %v2709 = vmul.f32 %v2142, %v2611
        %v2710 = vmul.f32 %v2143, %v2616
        %v2711 = vmul.f32 %v2144, %v2621
        %v2712 = vmul.f32 %v2145, %v2626
        %v2713 = vmul.f32 %v2146, %v2631
        %vm2714 = vcmask 261120
        %2715 = vst.msk [vmem:[#allocation2] sm:$0xff] %vm2714, %v2633
        %2716 = vst.msk [vmem:[#allocation2 + $0x8] sm:$0xff] %vm2714, %v2634
        %2717 = vst.msk [vmem:[#allocation2 + $0x10] sm:$0xff] %vm2714, %v2635
        %2718 = vst.msk [vmem:[#allocation2 + $0x18] sm:$0xff] %vm2714, %v2636
        %2719 = vst.msk [vmem:[#allocation2 + $0x20] sm:$0xff] %vm2714, %v2637
        %2720 = vst.msk [vmem:[#allocation2 + $0x28] sm:$0xff] %vm2714, %v2638
        %2721 = vst.msk [vmem:[#allocation2 + $0x30] sm:$0xff] %vm2714, %v2639
        %2722 = vst.msk [vmem:[#allocation2 + $0x38] sm:$0xff] %vm2714, %v2640
        %2723 = vst.msk [vmem:[#allocation2 + $0x40] sm:$0xff] %vm2714, %v2641
        %2724 = vst.msk [vmem:[#allocation2 + $0x48] sm:$0xff] %vm2714, %v2642
        %2725 = vst.msk [vmem:[#allocation2 + $0x50] sm:$0xff] %vm2714, %v2643
        %2726 = vst.msk [vmem:[#allocation2 + $0x58] sm:$0xff] %vm2714, %v2644
        %2727 = vst.msk [vmem:[#allocation2 + $0x60] sm:$0xff] %vm2714, %v2645
        %2728 = vst.msk [vmem:[#allocation2 + $0x68] sm:$0xff] %vm2714, %v2646
        %2729 = vst.msk [vmem:[#allocation2 + $0x70] sm:$0xff] %vm2714, %v2647
        %2730 = vst.msk [vmem:[#allocation2 + $0x78] sm:$0xff] %vm2714, %v2648
        %2731 = vst.msk [vmem:[#allocation2 + $0x80] sm:$0xff] %vm2714, %v2649
        %2732 = vst.msk [vmem:[#allocation2 + $0x88] sm:$0xff] %vm2714, %v2650
        %2733 = vst.msk [vmem:[#allocation2 + $0x90] sm:$0xff] %vm2714, %v2651
        %2734 = vst.msk [vmem:[#allocation2 + $0x98] sm:$0xff] %vm2714, %v2652
        %2735 = vst.msk [vmem:[#allocation2 + $0xa0] sm:$0xff] %vm2714, %v2653
        %2736 = vst.msk [vmem:[#allocation2 + $0xa8] sm:$0xff] %vm2714, %v2654
        %2737 = vst.msk [vmem:[#allocation2 + $0xb0] sm:$0xff] %vm2714, %v2655
        %2738 = vst.msk [vmem:[#allocation2 + $0xb8] sm:$0xff] %vm2714, %v2656
        %2739 = vst.msk [vmem:[#allocation2 + $0xc0] sm:$0xff] %vm2714, %v2657
        %2740 = vst.msk [vmem:[#allocation2 + $0xc8] sm:$0xff] %vm2714, %v2658
        %2741 = vst.msk [vmem:[#allocation2 + $0xd0] sm:$0xff] %vm2714, %v2659
        %2742 = vst.msk [vmem:[#allocation2 + $0xd8] sm:$0xff] %vm2714, %v2660
        %2743 = vst.msk [vmem:[#allocation2 + $0xe0] sm:$0xff] %vm2714, %v2661
        %2744 = vst.msk [vmem:[#allocation2 + $0xe8] sm:$0xff] %vm2714, %v2662
        %2745 = vst.msk [vmem:[#allocation2 + $0xf0] sm:$0xff] %vm2714, %v2663
        %2746 = vst.msk [vmem:[#allocation2 + $0xf8] sm:$0xff] %vm2714, %v2664
        %2747 = vst.msk [vmem:[#allocation2 + $0x100] sm:$0xff] %vm2714, %v2665
        %2748 = vst.msk [vmem:[#allocation2 + $0x108] sm:$0xff] %vm2714, %v2666
        %2749 = vst.msk [vmem:[#allocation2 + $0x110] sm:$0xff] %vm2714, %v2667
        %2750 = vst.msk [vmem:[#allocation2 + $0x118] sm:$0xff] %vm2714, %v2668
        %2751 = vst.msk [vmem:[#allocation2 + $0x120] sm:$0xff] %vm2714, %v2669
        %2752 = vst.msk [vmem:[#allocation2 + $0x128] sm:$0xff] %vm2714, %v2670
        %2753 = vst.msk [vmem:[#allocation2 + $0x130] sm:$0xff] %vm2714, %v2671
        %2754 = vst.msk [vmem:[#allocation2 + $0x138] sm:$0xff] %vm2714, %v2672
        %2755 = vst.msk [vmem:[#allocation2 + $0x140] sm:$0xff] %vm2714, %v2673
        %2756 = vst.msk [vmem:[#allocation2 + $0x148] sm:$0xff] %vm2714, %v2674
        %2757 = vst.msk [vmem:[#allocation2 + $0x150] sm:$0xff] %vm2714, %v2675
        %2758 = vst.msk [vmem:[#allocation2 + $0x158] sm:$0xff] %vm2714, %v2676
        %2759 = vst.msk [vmem:[#allocation2 + $0x160] sm:$0xff] %vm2714, %v2677
        %2760 = vst.msk [vmem:[#allocation2 + $0x168] sm:$0xff] %vm2714, %v2678
        %2761 = vst.msk [vmem:[#allocation2 + $0x170] sm:$0xff] %vm2714, %v2679
        %2762 = vst.msk [vmem:[#allocation2 + $0x178] sm:$0xff] %vm2714, %v2680
        %2763 = vst.msk [vmem:[#allocation2 + $0x180] sm:$0xff] %vm2714, %v2681
        %2764 = vst.msk [vmem:[#allocation2 + $0x188] sm:$0xff] %vm2714, %v2682
        %2765 = vst.msk [vmem:[#allocation2 + $0x190] sm:$0xff] %vm2714, %v2683
        %2766 = vst.msk [vmem:[#allocation2 + $0x198] sm:$0xff] %vm2714, %v2684
        %2767 = vst.msk [vmem:[#allocation2 + $0x1a0] sm:$0xff] %vm2714, %v2685
        %2768 = vst.msk [vmem:[#allocation2 + $0x1a8] sm:$0xff] %vm2714, %v2686
        %2769 = vst.msk [vmem:[#allocation2 + $0x1b0] sm:$0xff] %vm2714, %v2687
        %2770 = vst.msk [vmem:[#allocation2 + $0x1b8] sm:$0xff] %vm2714, %v2688
        %2771 = vst.msk [vmem:[#allocation2 + $0x1c0] sm:$0xff] %vm2714, %v2689
        %2772 = vst.msk [vmem:[#allocation2 + $0x1c8] sm:$0xff] %vm2714, %v2690
        %2773 = vst.msk [vmem:[#allocation2 + $0x1d0] sm:$0xff] %vm2714, %v2691
        %2774 = vst.msk [vmem:[#allocation2 + $0x1d8] sm:$0xff] %vm2714, %v2692
        %2775 = vst.msk [vmem:[#allocation2 + $0x1e0] sm:$0xff] %vm2714, %v2693
        %2776 = vst.msk [vmem:[#allocation2 + $0x1e8] sm:$0xff] %vm2714, %v2694
        %2777 = vst.msk [vmem:[#allocation2 + $0x1f0] sm:$0xff] %vm2714, %v2695
        %2778 = vst.msk [vmem:[#allocation2 + $0x1f8] sm:$0xff] %vm2714, %v2696
        %2779 = vst.msk [vmem:[#allocation2 + $0x200] sm:$0xff] %vm2714, %v2697
        %2780 = vst.msk [vmem:[#allocation2 + $0x208] sm:$0xff] %vm2714, %v2698
        %2781 = vst.msk [vmem:[#allocation2 + $0x210] sm:$0xff] %vm2714, %v2699
        %2782 = vst.msk [vmem:[#allocation2 + $0x218] sm:$0xff] %vm2714, %v2700
        %2783 = vst.msk [vmem:[#allocation2 + $0x220] sm:$0xff] %vm2714, %v2701
        %2784 = vst.msk [vmem:[#allocation2 + $0x228] sm:$0xff] %vm2714, %v2702
        %2785 = vst.msk [vmem:[#allocation2 + $0x230] sm:$0xff] %vm2714, %v2703
        %2786 = vst.msk [vmem:[#allocation2 + $0x238] sm:$0xff] %vm2714, %v2704
        %2787 = vst.msk [vmem:[#allocation2 + $0x240] sm:$0xff] %vm2714, %v2705
        %2788 = vst.msk [vmem:[#allocation2 + $0x248] sm:$0xff] %vm2714, %v2706
        %2789 = vst.msk [vmem:[#allocation2 + $0x250] sm:$0xff] %vm2714, %v2707
        %2790 = vst.msk [vmem:[#allocation2 + $0x258] sm:$0xff] %vm2714, %v2708
        %2791 = vst.msk [vmem:[#allocation2 + $0x260] sm:$0xff] %vm2714, %v2709
        %2792 = vst.msk [vmem:[#allocation2 + $0x268] sm:$0xff] %vm2714, %v2710
        %2793 = vst.msk [vmem:[#allocation2 + $0x270] sm:$0xff] %vm2714, %v2711
        %2794 = vst.msk [vmem:[#allocation2 + $0x278] sm:$0xff] %vm2714, %v2712
        %2795 = vst.msk [vmem:[#allocation2 + $0x280] sm:$0xff] %vm2714, %v2713
        %2796 = vst.msk [vmem:[#allocation3] sm:$0xff] %vm2714, 0.0
        %vm2797 = vcmask 257024
        %2798 = vst.msk [vmem:[#allocation3 + $0x8] sm:$0xf] %vm2797, 0.0
        %2799 = vst.msk [vmem:[#allocation3 + $0xfe] sm:$0xff] %vm2714, 0.0
        %2800 = vst.msk [vmem:[#allocation3 + $0x106] sm:$0xf] %vm2797, 0.0
        %v2801 = vld [vmem:[#allocation2] sm:$0xff]
        %v2802 = vld [vmem:[#allocation2 + $0x8] sm:$0xff]
        %v2803 = vld [vmem:[#allocation2 + $0x10] sm:$0xff]
        %v2804 = vld [vmem:[#allocation2 + $0x18] sm:$0xff]
        %v2805 = vld [vmem:[#allocation2 + $0x20] sm:$0xff]
        %v2806 = vld [vmem:[#allocation2 + $0x28] sm:$0xff]
        %v2807 = vld [vmem:[#allocation2 + $0x30] sm:$0xff]
        %v2808 = vld [vmem:[#allocation2 + $0x38] sm:$0xff]
        %v2809 = vld [vmem:[#allocation2 + $0x40] sm:$0xff]
        %v2810 = vld [vmem:[#allocation2 + $0x48] sm:$0xff]
        %v2811 = vld [vmem:[#allocation2 + $0x50] sm:$0xff]
        %v2812 = vld [vmem:[#allocation2 + $0x58] sm:$0xff]
        %v2813 = vld [vmem:[#allocation2 + $0x60] sm:$0xff]
        %v2814 = vld [vmem:[#allocation2 + $0x68] sm:$0xff]
        %v2815 = vld [vmem:[#allocation2 + $0x70] sm:$0xff]
        %v2816 = vld [vmem:[#allocation2 + $0x78] sm:$0xff]
        %v2817 = vld [vmem:[#allocation2 + $0x80] sm:$0xff]
        %v2818 = vld [vmem:[#allocation2 + $0x88] sm:$0xff]
        %v2819 = vld [vmem:[#allocation2 + $0x90] sm:$0xff]
        %v2820 = vld [vmem:[#allocation2 + $0x98] sm:$0xff]
        %v2821 = vld [vmem:[#allocation2 + $0xa0] sm:$0xff]
        %v2822 = vld [vmem:[#allocation2 + $0xa8] sm:$0xff]
        %v2823 = vld [vmem:[#allocation2 + $0xb0] sm:$0xff]
        %v2824 = vld [vmem:[#allocation2 + $0xb8] sm:$0xff]
        %v2825 = vld [vmem:[#allocation2 + $0xc0] sm:$0xff]
        %v2826 = vld [vmem:[#allocation2 + $0xc8] sm:$0xff]
        %v2827 = vld [vmem:[#allocation2 + $0xd0] sm:$0xff]
        %v2828 = vld [vmem:[#allocation2 + $0xd8] sm:$0xff]
        %v2829 = vld [vmem:[#allocation2 + $0xe0] sm:$0xff]
        %v2830 = vld [vmem:[#allocation2 + $0xe8] sm:$0xff]
        %v2831 = vld [vmem:[#allocation2 + $0xf0] sm:$0xff]
        %v2832 = vld [vmem:[#allocation2 + $0xf8] sm:$0xff]
        %v2833 = vld [vmem:[#allocation2 + $0x100] sm:$0xff]
        %v2834 = vld [vmem:[#allocation2 + $0x108] sm:$0xff]
        %v2835 = vld [vmem:[#allocation2 + $0x110] sm:$0xff]
        %v2836 = vld [vmem:[#allocation2 + $0x118] sm:$0xff]
        %v2837 = vld [vmem:[#allocation2 + $0x120] sm:$0xff]
        %v2838 = vld [vmem:[#allocation2 + $0x128] sm:$0xff]
        %v2839 = vld [vmem:[#allocation2 + $0x130] sm:$0x1]
        %v2840 = vld [vmem:[#allocation2 + $0x1] sm:$0xff]
        %v2841 = vld [vmem:[#allocation2 + $0x9] sm:$0xff]
        %v2842 = vld [vmem:[#allocation2 + $0x11] sm:$0xff]
        %v2843 = vld [vmem:[#allocation2 + $0x19] sm:$0xff]
        %v2844 = vld [vmem:[#allocation2 + $0x21] sm:$0xff]
        %v2845 = vld [vmem:[#allocation2 + $0x29] sm:$0xff]
        %v2846 = vld [vmem:[#allocation2 + $0x31] sm:$0xff]
        %v2847 = vld [vmem:[#allocation2 + $0x39] sm:$0xff]
        %v2848 = vld [vmem:[#allocation2 + $0x41] sm:$0xff]
        %v2849 = vld [vmem:[#allocation2 + $0x49] sm:$0xff]
        %v2850 = vld [vmem:[#allocation2 + $0x51] sm:$0xff]
        %v2851 = vld [vmem:[#allocation2 + $0x59] sm:$0xff]
        %v2852 = vld [vmem:[#allocation2 + $0x61] sm:$0xff]
        %v2853 = vld [vmem:[#allocation2 + $0x69] sm:$0xff]
        %v2854 = vld [vmem:[#allocation2 + $0x71] sm:$0xff]
        %v2855 = vld [vmem:[#allocation2 + $0x79] sm:$0xff]
        %v2856 = vld [vmem:[#allocation2 + $0x81] sm:$0xff]
        %v2857 = vld [vmem:[#allocation2 + $0x89] sm:$0xff]
        %v2858 = vld [vmem:[#allocation2 + $0x91] sm:$0xff]
        %v2859 = vld [vmem:[#allocation2 + $0x99] sm:$0xff]
        %v2860 = vld [vmem:[#allocation2 + $0xa1] sm:$0xff]
        %v2861 = vld [vmem:[#allocation2 + $0xa9] sm:$0xff]
        %v2862 = vld [vmem:[#allocation2 + $0xb1] sm:$0xff]
        %v2863 = vld [vmem:[#allocation2 + $0xb9] sm:$0xff]
        %v2864 = vld [vmem:[#allocation2 + $0xc1] sm:$0xff]
        %v2865 = vld [vmem:[#allocation2 + $0xc9] sm:$0xff]
        %v2866 = vld [vmem:[#allocation2 + $0xd1] sm:$0xff]
        %v2867 = vld [vmem:[#allocation2 + $0xd9] sm:$0xff]
        %v2868 = vld [vmem:[#allocation2 + $0xe1] sm:$0xff]
        %v2869 = vld [vmem:[#allocation2 + $0xe9] sm:$0xff]
        %v2870 = vld [vmem:[#allocation2 + $0xf1] sm:$0xff]
        %v2871 = vld [vmem:[#allocation2 + $0xf9] sm:$0xff]
        %v2872 = vld [vmem:[#allocation2 + $0x101] sm:$0xff]
        %v2873 = vld [vmem:[#allocation2 + $0x109] sm:$0xff]
        %v2874 = vld [vmem:[#allocation2 + $0x111] sm:$0xff]
        %v2875 = vld [vmem:[#allocation2 + $0x119] sm:$0xff]
        %v2876 = vld [vmem:[#allocation2 + $0x121] sm:$0xff]
        %v2877 = vld [vmem:[#allocation2 + $0x129] sm:$0xff]
        %v2878 = vld [vmem:[#allocation2 + $0x131] sm:$0x1]
        %v2879 = vmax.f32 %v2801, %v2840
        %v2880 = vmax.f32 %v2802, %v2841
        %v2881 = vmax.f32 %v2803, %v2842
        %v2882 = vmax.f32 %v2804, %v2843
        %v2883 = vmax.f32 %v2805, %v2844
        %v2884 = vmax.f32 %v2806, %v2845
        %v2885 = vmax.f32 %v2807, %v2846
        %v2886 = vmax.f32 %v2808, %v2847
        %v2887 = vmax.f32 %v2809, %v2848
        %v2888 = vmax.f32 %v2810, %v2849
        %v2889 = vmax.f32 %v2811, %v2850
        %v2890 = vmax.f32 %v2812, %v2851
        %v2891 = vmax.f32 %v2813, %v2852
        %v2892 = vmax.f32 %v2814, %v2853
        %v2893 = vmax.f32 %v2815, %v2854
        %v2894 = vmax.f32 %v2816, %v2855
        %v2895 = vmax.f32 %v2817, %v2856
        %v2896 = vmax.f32 %v2818, %v2857
        %v2897 = vmax.f32 %v2819, %v2858
        %v2898 = vmax.f32 %v2820, %v2859
        %v2899 = vmax.f32 %v2821, %v2860
        %v2900 = vmax.f32 %v2822, %v2861
        %v2901 = vmax.f32 %v2823, %v2862
        %v2902 = vmax.f32 %v2824, %v2863
        %v2903 = vmax.f32 %v2825, %v2864
        %v2904 = vmax.f32 %v2826, %v2865
        %v2905 = vmax.f32 %v2827, %v2866
        %v2906 = vmax.f32 %v2828, %v2867
        %v2907 = vmax.f32 %v2829, %v2868
        %v2908 = vmax.f32 %v2830, %v2869
        %v2909 = vmax.f32 %v2831, %v2870
        %v2910 = vmax.f32 %v2832, %v2871
        %v2911 = vmax.f32 %v2833, %v2872
        %v2912 = vmax.f32 %v2834, %v2873
        %v2913 = vmax.f32 %v2835, %v2874
        %v2914 = vmax.f32 %v2836, %v2875
        %v2915 = vmax.f32 %v2837, %v2876
        %v2916 = vmax.f32 %v2838, %v2877
        %v2917 = vmax.f32 %v2839, %v2878
        %v2918 = vld [vmem:[#allocation2 + $0x12] sm:$0xff]
        %v2919 = vld [vmem:[#allocation2 + $0x1a] sm:$0xff]
        %v2920 = vld [vmem:[#allocation2 + $0x22] sm:$0xff]
        %v2921 = vld [vmem:[#allocation2 + $0x2a] sm:$0xff]
        %v2922 = vld [vmem:[#allocation2 + $0x32] sm:$0xff]
        %v2923 = vld [vmem:[#allocation2 + $0x3a] sm:$0xff]
        %v2924 = vld [vmem:[#allocation2 + $0x42] sm:$0xff]
        %v2925 = vld [vmem:[#allocation2 + $0x4a] sm:$0xff]
        %v2926 = vld [vmem:[#allocation2 + $0x52] sm:$0xff]
        %v2927 = vld [vmem:[#allocation2 + $0x5a] sm:$0xff]
        %v2928 = vld [vmem:[#allocation2 + $0x62] sm:$0xff]
        %v2929 = vld [vmem:[#allocation2 + $0x6a] sm:$0xff]
        %v2930 = vld [vmem:[#allocation2 + $0x72] sm:$0xff]
        %v2931 = vld [vmem:[#allocation2 + $0x7a] sm:$0xff]
        %v2932 = vld [vmem:[#allocation2 + $0x82] sm:$0xff]
        %v2933 = vld [vmem:[#allocation2 + $0x8a] sm:$0xff]
        %v2934 = vld [vmem:[#allocation2 + $0x92] sm:$0xff]
        %v2935 = vld [vmem:[#allocation2 + $0x9a] sm:$0xff]
        %v2936 = vld [vmem:[#allocation2 + $0xa2] sm:$0xff]
        %v2937 = vld [vmem:[#allocation2 + $0xaa] sm:$0xff]
        %v2938 = vld [vmem:[#allocation2 + $0xb2] sm:$0xff]
        %v2939 = vld [vmem:[#allocation2 + $0xba] sm:$0xff]
        %v2940 = vld [vmem:[#allocation2 + $0xc2] sm:$0xff]
        %v2941 = vld [vmem:[#allocation2 + $0xca] sm:$0xff]
        %v2942 = vld [vmem:[#allocation2 + $0xd2] sm:$0xff]
        %v2943 = vld [vmem:[#allocation2 + $0xda] sm:$0xff]
        %v2944 = vld [vmem:[#allocation2 + $0xe2] sm:$0xff]
        %v2945 = vld [vmem:[#allocation2 + $0xea] sm:$0xff]
        %v2946 = vld [vmem:[#allocation2 + $0xf2] sm:$0xff]
        %v2947 = vld [vmem:[#allocation2 + $0xfa] sm:$0xff]
        %v2948 = vld [vmem:[#allocation2 + $0x102] sm:$0xff]
        %v2949 = vld [vmem:[#allocation2 + $0x10a] sm:$0xff]
        %v2950 = vld [vmem:[#allocation2 + $0x112] sm:$0xff]
        %v2951 = vld [vmem:[#allocation2 + $0x11a] sm:$0xff]
        %v2952 = vld [vmem:[#allocation2 + $0x122] sm:$0xff]
        %v2953 = vld [vmem:[#allocation2 + $0x12a] sm:$0xff]
        %v2954 = vld [vmem:[#allocation2 + $0x132] sm:$0xff]
        %v2955 = vld [vmem:[#allocation2 + $0x13a] sm:$0xff]
        %v2956 = vld [vmem:[#allocation2 + $0x142] sm:$0x1]
        %v2957 = vld [vmem:[#allocation2 + $0x13] sm:$0xff]
        %v2958 = vld [vmem:[#allocation2 + $0x1b] sm:$0xff]
        %v2959 = vld [vmem:[#allocation2 + $0x23] sm:$0xff]
        %v2960 = vld [vmem:[#allocation2 + $0x2b] sm:$0xff]
        %v2961 = vld [vmem:[#allocation2 + $0x33] sm:$0xff]
        %v2962 = vld [vmem:[#allocation2 + $0x3b] sm:$0xff]
        %v2963 = vld [vmem:[#allocation2 + $0x43] sm:$0xff]
        %v2964 = vld [vmem:[#allocation2 + $0x4b] sm:$0xff]
        %v2965 = vld [vmem:[#allocation2 + $0x53] sm:$0xff]
        %v2966 = vld [vmem:[#allocation2 + $0x5b] sm:$0xff]
        %v2967 = vld [vmem:[#allocation2 + $0x63] sm:$0xff]
        %v2968 = vld [vmem:[#allocation2 + $0x6b] sm:$0xff]
        %v2969 = vld [vmem:[#allocation2 + $0x73] sm:$0xff]
        %v2970 = vld [vmem:[#allocation2 + $0x7b] sm:$0xff]
        %v2971 = vld [vmem:[#allocation2 + $0x83] sm:$0xff]
        %v2972 = vld [vmem:[#allocation2 + $0x8b] sm:$0xff]
        %v2973 = vld [vmem:[#allocation2 + $0x93] sm:$0xff]
        %v2974 = vld [vmem:[#allocation2 + $0x9b] sm:$0xff]
        %v2975 = vld [vmem:[#allocation2 + $0xa3] sm:$0xff]
        %v2976 = vld [vmem:[#allocation2 + $0xab] sm:$0xff]
        %v2977 = vld [vmem:[#allocation2 + $0xb3] sm:$0xff]
        %v2978 = vld [vmem:[#allocation2 + $0xbb] sm:$0xff]
        %v2979 = vld [vmem:[#allocation2 + $0xc3] sm:$0xff]
        %v2980 = vld [vmem:[#allocation2 + $0xcb] sm:$0xff]
        %v2981 = vld [vmem:[#allocation2 + $0xd3] sm:$0xff]
        %v2982 = vld [vmem:[#allocation2 + $0xdb] sm:$0xff]
        %v2983 = vld [vmem:[#allocation2 + $0xe3] sm:$0xff]
        %v2984 = vld [vmem:[#allocation2 + $0xeb] sm:$0xff]
        %v2985 = vld [vmem:[#allocation2 + $0xf3] sm:$0xff]
        %v2986 = vld [vmem:[#allocation2 + $0xfb] sm:$0xff]
        %v2987 = vld [vmem:[#allocation2 + $0x103] sm:$0xff]
        %v2988 = vld [vmem:[#allocation2 + $0x10b] sm:$0xff]
        %v2989 = vld [vmem:[#allocation2 + $0x113] sm:$0xff]
        %v2990 = vld [vmem:[#allocation2 + $0x11b] sm:$0xff]
        %v2991 = vld [vmem:[#allocation2 + $0x123] sm:$0xff]
        %v2992 = vld [vmem:[#allocation2 + $0x12b] sm:$0xff]
        %v2993 = vld [vmem:[#allocation2 + $0x133] sm:$0xff]
        %v2994 = vld [vmem:[#allocation2 + $0x13b] sm:$0xff]
        %v2995 = vld [vmem:[#allocation2 + $0x143] sm:$0x1]
        %v2996 = vmax.f32 %v2918, %v2957
        %v2997 = vmax.f32 %v2919, %v2958
        %v2998 = vmax.f32 %v2920, %v2959
        %v2999 = vmax.f32 %v2921, %v2960
        %v3000 = vmax.f32 %v2922, %v2961
        %v3001 = vmax.f32 %v2923, %v2962
        %v3002 = vmax.f32 %v2924, %v2963
        %v3003 = vmax.f32 %v2925, %v2964
        %v3004 = vmax.f32 %v2926, %v2965
        %v3005 = vmax.f32 %v2927, %v2966
        %v3006 = vmax.f32 %v2928, %v2967
        %v3007 = vmax.f32 %v2929, %v2968
        %v3008 = vmax.f32 %v2930, %v2969
        %v3009 = vmax.f32 %v2931, %v2970
        %v3010 = vmax.f32 %v2932, %v2971
        %v3011 = vmax.f32 %v2933, %v2972
        %v3012 = vmax.f32 %v2934, %v2973
        %v3013 = vmax.f32 %v2935, %v2974
        %v3014 = vmax.f32 %v2936, %v2975
        %v3015 = vmax.f32 %v2937, %v2976
        %v3016 = vmax.f32 %v2938, %v2977
        %v3017 = vmax.f32 %v2939, %v2978
        %v3018 = vmax.f32 %v2940, %v2979
        %v3019 = vmax.f32 %v2941, %v2980
        %v3020 = vmax.f32 %v2942, %v2981
        %v3021 = vmax.f32 %v2943, %v2982
        %v3022 = vmax.f32 %v2944, %v2983
        %v3023 = vmax.f32 %v2945, %v2984
        %v3024 = vmax.f32 %v2946, %v2985
        %v3025 = vmax.f32 %v2947, %v2986
        %v3026 = vmax.f32 %v2948, %v2987
        %v3027 = vmax.f32 %v2949, %v2988
        %v3028 = vmax.f32 %v2950, %v2989
        %v3029 = vmax.f32 %v2951, %v2990
        %v3030 = vmax.f32 %v2952, %v2991
        %v3031 = vmax.f32 %v2953, %v2992
        %v3032 = vmax.f32 %v2954, %v2993
        %v3033 = vmax.f32 %v2955, %v2994
        %v3034 = vmax.f32 %v2956, %v2995
        %v3035 = vmax.f32 %v2879, %v2996
        %v3036 = vmax.f32 %v2880, %v2997
        %v3037 = vmax.f32 %v2881, %v2998
        %v3038 = vmax.f32 %v2882, %v2999
        %v3039 = vmax.f32 %v2883, %v3000
        %v3040 = vmax.f32 %v2884, %v3001
        %v3041 = vmax.f32 %v2885, %v3002
        %v3042 = vmax.f32 %v2886, %v3003
        %v3043 = vmax.f32 %v2887, %v3004
        %v3044 = vmax.f32 %v2888, %v3005
        %v3045 = vmax.f32 %v2889, %v3006
        %v3046 = vmax.f32 %v2890, %v3007
        %v3047 = vmax.f32 %v2891, %v3008
        %v3048 = vmax.f32 %v2892, %v3009
        %v3049 = vmax.f32 %v2893, %v3010
        %v3050 = vmax.f32 %v2894, %v3011
        %v3051 = vmax.f32 %v2895, %v3012
        %v3052 = vmax.f32 %v2896, %v3013
        %v3053 = vmax.f32 %v2897, %v3014
        %v3054 = vmax.f32 %v2898, %v3015
        %v3055 = vmax.f32 %v2899, %v3016
        %v3056 = vmax.f32 %v2900, %v3017
        %v3057 = vmax.f32 %v2901, %v3018
        %v3058 = vmax.f32 %v2902, %v3019
        %v3059 = vmax.f32 %v2903, %v3020
        %v3060 = vmax.f32 %v2904, %v3021
        %v3061 = vmax.f32 %v2905, %v3022
        %v3062 = vmax.f32 %v2906, %v3023
        %v3063 = vmax.f32 %v2907, %v3024
        %v3064 = vmax.f32 %v2908, %v3025
        %v3065 = vmax.f32 %v2909, %v3026
        %v3066 = vmax.f32 %v2910, %v3027
        %v3067 = vmax.f32 %v2911, %v3028
        %v3068 = vmax.f32 %v2912, %v3029
        %v3069 = vmax.f32 %v2913, %v3030
        %v3070 = vmax.f32 %v2914, %v3031
        %v3071 = vmax.f32 %v2915, %v3032
        %v3072 = vmax.f32 %v2916, %v3033
        %v3073 = vmax.f32 %v2917, %v3034
        %v3074 = vld [vmem:[%s11] sm:$0xff]
        %v3075 = vld [vmem:[%s11 + $0x8] sm:$0xf]
        %v3076 = vld [vmem:[%s11 + $0xc] sm:$0xff]
        %v3077 = vld [vmem:[%s11 + $0x14] sm:$0xf]
        %v3078 = vld [vmem:[%s11 + $0x18] sm:$0xff]
        %v3079 = vld [vmem:[%s11 + $0x20] sm:$0xf]
        %v3080 = vld [vmem:[%s11 + $0x24] sm:$0xff]
        %v3081 = vld [vmem:[%s11 + $0x2c] sm:$0xf]
        %v3082 = vld [vmem:[%s11 + $0x30] sm:$0xff]
        %v3083 = vld [vmem:[%s11 + $0x38] sm:$0xf]
        %v3084 = vld [vmem:[%s11 + $0x3c] sm:$0xff]
        %v3085 = vld [vmem:[%s11 + $0x44] sm:$0xf]
        %v3086 = vld [vmem:[%s11 + $0x48] sm:$0xff]
        %v3087 = vld [vmem:[%s11 + $0x50] sm:$0xf]
        %v3088 = vld [vmem:[%s11 + $0x54] sm:$0xff]
        %v3089 = vld [vmem:[%s11 + $0x5c] sm:$0xf]
        %v3090 = vld [vmem:[%s11 + $0x60] sm:$0xff]
        %v3091 = vld [vmem:[%s11 + $0x68] sm:$0xf]
        %v3092 = vld [vmem:[%s11 + $0x6c] sm:$0xff]
        %v3093 = vld [vmem:[%s11 + $0x74] sm:$0xf]
        %v3094 = vld [vmem:[%s11 + $0x78] sm:$0xff]
        %v3095 = vld [vmem:[%s11 + $0x80] sm:$0xf]
        %v3096 = vld [vmem:[%s11 + $0x84] sm:$0xff]
        %v3097 = vld [vmem:[%s11 + $0x8c] sm:$0xf]
        %v3098 = vld [vmem:[%s11 + $0x90] sm:$0xff]
        %v3099 = vld [vmem:[%s11 + $0x98] sm:$0xf]
        %v3100 = vld [vmem:[%s11 + $0x9c] sm:$0xff]
        %v3101 = vld [vmem:[%s11 + $0xa4] sm:$0xf]
        %v3102 = vld [vmem:[%s11 + $0xa8] sm:$0xff]
        %v3103 = vld [vmem:[%s11 + $0xb0] sm:$0xf]
        %v3104 = vld [vmem:[%s11 + $0xb4] sm:$0x11]
        %v3105 = vld [vmem:[%s11 + $0xbc] sm:$0x1]
        %v3106 = vpack.c.bf16 %v3036, %v3035
        %v3107 = vpack.c.bf16 %v3038, %v3037
        %v3108 = vpack.c.bf16 %v3040, %v3039
        %v3109 = vpack.c.bf16 %v3042, %v3041
        %v3110 = vpack.c.bf16 %v3044, %v3043
        %v3111 = vpack.c.bf16 %v3046, %v3045
        %v3112 = vpack.c.bf16 %v3048, %v3047
        %v3113 = vpack.c.bf16 %v3050, %v3049
        %v3114 = vpack.c.bf16 %v3052, %v3051
        %v3115 = vpack.c.bf16 %v3054, %v3053
        %v3116 = vpack.c.bf16 %v3056, %v3055
        %v3117 = vpack.c.bf16 %v3058, %v3057
        %v3118 = vpack.c.bf16 %v3060, %v3059
        %v3119 = vpack.c.bf16 %v3062, %v3061
        %v3120 = vpack.c.bf16 %v3064, %v3063
        %v3121 = vpack.c.bf16 %v3066, %v3065
        %v3122 = vpack.c.bf16 %v3068, %v3067
        %v3123 = vpack.c.bf16 %v3070, %v3069
        %v3124 = vpack.c.bf16 %v3072, %v3071
        %v3125 = vpack.c.bf16 %v3073, %v3073
        %v3158 = vunpack.c.l.b16 %v3074
        %v3159 = vunpack.c.h.b16 %v3074
        %v3160 = vunpack.c.l.b16 %v3075
        %v3161 = vunpack.c.l.b16 %v3076
        %v3162 = vunpack.c.h.b16 %v3076
        %v3163 = vunpack.c.l.b16 %v3077
        %v3164 = vunpack.c.l.b16 %v3078
        %v3165 = vunpack.c.h.b16 %v3078
        %v3166 = vunpack.c.l.b16 %v3079
        %v3167 = vunpack.c.l.b16 %v3080
        %v3168 = vunpack.c.h.b16 %v3080
        %v3169 = vunpack.c.l.b16 %v3081
        %v3170 = vunpack.c.l.b16 %v3082
        %v3171 = vunpack.c.h.b16 %v3082
        %v3172 = vunpack.c.l.b16 %v3083
        %v3173 = vunpack.c.l.b16 %v3084
        %v3174 = vunpack.c.h.b16 %v3084
        %v3175 = vunpack.c.l.b16 %v3085
        %v3176 = vunpack.c.l.b16 %v3086
        %v3177 = vunpack.c.h.b16 %v3086
        %v3178 = vunpack.c.l.b16 %v3087
        %v3179 = vunpack.c.l.b16 %v3088
        %v3180 = vunpack.c.h.b16 %v3088
        %v3181 = vunpack.c.l.b16 %v3089
        %v3182 = vunpack.c.l.b16 %v3090
        %v3183 = vunpack.c.h.b16 %v3090
        %v3184 = vunpack.c.l.b16 %v3091
        %v3185 = vunpack.c.l.b16 %v3092
        %v3186 = vunpack.c.h.b16 %v3092
        %v3187 = vunpack.c.l.b16 %v3093
        %v3188 = vunpack.c.l.b16 %v3094
        %v3189 = vunpack.c.h.b16 %v3094
        %v3190 = vunpack.c.l.b16 %v3095
        %v3191 = vunpack.c.l.b16 %v3096
        %v3192 = vunpack.c.h.b16 %v3096
        %v3193 = vunpack.c.l.b16 %v3097
        %v3194 = vunpack.c.l.b16 %v3098
        %v3195 = vunpack.c.h.b16 %v3098
        %v3196 = vunpack.c.l.b16 %v3099
        %v3197 = vunpack.c.l.b16 %v3100
        %v3198 = vunpack.c.h.b16 %v3100
        %v3199 = vunpack.c.l.b16 %v3101
        %v3200 = vunpack.c.l.b16 %v3102
        %v3201 = vunpack.c.h.b16 %v3102
        %v3202 = vunpack.c.l.b16 %v3103
        %v3203 = vunpack.c.l.b16 %v3104
        %v3204 = vunpack.c.h.b16 %v3104
        %v3205 = vunpack.c.l.b16 %v3105
        %v3206 = vpack.c.b16 %v3161, %v3158
        %v3207 = vpack.c.b16 %v3162, %v3159
        %v3208 = vpack.c.b16 %v3163, %v3160
        %v3209 = vpack.c.b16 %v3167, %v3164
        %v3210 = vpack.c.b16 %v3168, %v3165
        %v3211 = vpack.c.b16 %v3169, %v3166
        %v3212 = vpack.c.b16 %v3173, %v3170
        %v3213 = vpack.c.b16 %v3174, %v3171
        %v3214 = vpack.c.b16 %v3175, %v3172
        %v3215 = vpack.c.b16 %v3179, %v3176
        %v3216 = vpack.c.b16 %v3180, %v3177
        %v3217 = vpack.c.b16 %v3181, %v3178
        %v3218 = vpack.c.b16 %v3185, %v3182
        %v3219 = vpack.c.b16 %v3186, %v3183
        %v3220 = vpack.c.b16 %v3187, %v3184
        %v3221 = vpack.c.b16 %v3191, %v3188
        %v3222 = vpack.c.b16 %v3192, %v3189
        %v3223 = vpack.c.b16 %v3193, %v3190
        %v3224 = vpack.c.b16 %v3197, %v3194
        %v3225 = vpack.c.b16 %v3198, %v3195
        %v3226 = vpack.c.b16 %v3199, %v3196
        %v3227 = vpack.c.b16 %v3203, %v3200
        %v3228 = vpack.c.b16 %v3204, %v3201
        %v3229 = vpack.c.b16 %v3205, %v3202
        %vm3246 = vcmask 400384
        %v3248 = vsel %vm3246, %v3208, 0
        %v3251 = vsel %vm3246, %v3211, 0
        %v3254 = vsel %vm3246, %v3214, 0
        %v3257 = vsel %vm3246, %v3217, 0
        %v3260 = vsel %vm3246, %v3220, 0
        %v3263 = vsel %vm3246, %v3223, 0
        %v3266 = vsel %vm3246, %v3226, 0
        %v3269 = vsel %vm3246, %v3229, 0
        %vm3271 = vcmask 1040384
        %v3272 = vsel 0, 4294967295, 65535
        %v3273 = vsel %vm3271, %v3272, 0
        %v3275 = vand.u32 %v3125, %v3273
        %3277 = vmatprep.subr.bf16.mxu0 0
        %3278 = vmatpush1.bf16.msra.mxu0 %v3106
        %3279 = vmatprep.subr.bf16.mxu0 0
        %3280 = vmatpush1.bf16.msra.mxu0 %v3107
        %3281 = vmatprep.subr.bf16.mxu0 0
        %3282 = vmatpush1.bf16.msra.mxu0 %v3108
        %3283 = vmatprep.subr.bf16.mxu0 0
        %3284 = vmatpush1.bf16.msra.mxu0 %v3109
        %3285 = vmatprep.subr.bf16.mxu0 0
        %3286 = vmatpush1.bf16.msra.mxu0 %v3110
        %3287 = vmatprep.subr.bf16.mxu0 0
        %3288 = vmatpush1.bf16.msra.mxu0 %v3111
        %3289 = vmatprep.subr.bf16.mxu0 0
        %3290 = vmatpush1.bf16.msra.mxu0 %v3112
        %3291 = vmatprep.subr.bf16.mxu0 0
        %3292 = vmatpush1.bf16.msra.mxu0 %v3113
        %3293 = vmatprep.subr.bf16.mxu0 0
        %3294 = vmatpush1.bf16.msra.mxu0 %v3114
        %3295 = vmatprep.subr.bf16.mxu0 0
        %3296 = vmatpush1.bf16.msra.mxu0 %v3115
        %3297 = vmatprep.subr.bf16.mxu0 0
        %3298 = vmatpush1.bf16.msra.mxu0 %v3116
        %3299 = vmatprep.subr.bf16.mxu0 0
        %3300 = vmatpush1.bf16.msra.mxu0 %v3117
        %3301 = vmatprep.subr.bf16.mxu0 0
        %3302 = vmatpush1.bf16.msra.mxu0 %v3118
        %3303 = vmatprep.subr.bf16.mxu0 0
        %3304 = vmatpush1.bf16.msra.mxu0 %v3119
        %3305 = vmatprep.subr.bf16.mxu0 0
        %3306 = vmatpush1.bf16.msra.mxu0 %v3120
        %3307 = vmatprep.subr.bf16.mxu0 0
        %3308 = vmatpush1.bf16.msra.mxu0 %v3121
        %3309 = vmatprep.mubr.bf16.mxu0 %v3207
        %3310 = vmatmul.mubr.bf16.gmra.mrb[0].mxu0 %v3206
        %v3311 = vpop.f32.mrb[0].mxu0
        %v3312 = vadd.f32 0.0, %v3311
        %v3313 = vpop.f32.mrb[0].mxu0
        %v3314 = vpop.f32.mrb[0].mxu0
        %v3315 = vadd.f32 0.0, %v3314
        %v3316 = vpop.f32.mrb[0].mxu0
        %3317 = vmatprep.mubr.bf16.mxu0 %v3210
        %3318 = vmatmul.mubr.bf16.gmra.mrb[0].mxu0 %v3209
        %v3319 = vpop.f32.mrb[0].mxu0
        %v3320 = vadd.f32 0.0, %v3319
        %v3321 = vpop.f32.mrb[0].mxu0
        %v3322 = vpop.f32.mrb[0].mxu0
        %v3323 = vadd.f32 0.0, %v3322
        %v3324 = vpop.f32.mrb[0].mxu0
        %3325 = vmatprep.mubr.bf16.mxu0 %v3213
        %3326 = vmatmul.mubr.bf16.gmra.mrb[0].mxu0 %v3212
        %v3327 = vpop.f32.mrb[0].mxu0
        %v3328 = vadd.f32 0.0, %v3327
        %v3329 = vpop.f32.mrb[0].mxu0
        %v3330 = vpop.f32.mrb[0].mxu0
        %v3331 = vadd.f32 0.0, %v3330
        %v3332 = vpop.f32.mrb[0].mxu0
        %3333 = vmatprep.mubr.bf16.mxu0 %v3216
        %3334 = vmatmul.mubr.bf16.gmra.mrb[0].mxu0 %v3215
        %v3335 = vpop.f32.mrb[0].mxu0
        %v3336 = vadd.f32 0.0, %v3335
        %v3337 = vpop.f32.mrb[0].mxu0
        %v3338 = vpop.f32.mrb[0].mxu0
        %v3339 = vadd.f32 0.0, %v3338
        %v3340 = vpop.f32.mrb[0].mxu0
        %3341 = vmatprep.mubr.bf16.mxu0 %v3219
        %3342 = vmatmul.mubr.bf16.gmra.mrb[0].mxu0 %v3218
        %v3343 = vpop.f32.mrb[0].mxu0
        %v3344 = vadd.f32 0.0, %v3343
        %v3345 = vpop.f32.mrb[0].mxu0
        %v3346 = vpop.f32.mrb[0].mxu0
        %v3347 = vadd.f32 0.0, %v3346
        %v3348 = vpop.f32.mrb[0].mxu0
        %3349 = vmatprep.mubr.bf16.mxu0 %v3222
        %3350 = vmatmul.mubr.bf16.gmra.mrb[0].mxu0 %v3221
        %v3351 = vpop.f32.mrb[0].mxu0
        %v3352 = vadd.f32 0.0, %v3351
        %v3353 = vpop.f32.mrb[0].mxu0
        %v3354 = vpop.f32.mrb[0].mxu0
        %v3355 = vadd.f32 0.0, %v3354
        %v3356 = vpop.f32.mrb[0].mxu0
        %3357 = vmatprep.mubr.bf16.mxu0 %v3225
        %3358 = vmatmul.mubr.bf16.gmra.mrb[0].mxu0 %v3224
        %v3359 = vpop.f32.mrb[0].mxu0
        %v3360 = vadd.f32 0.0, %v3359
        %v3361 = vpop.f32.mrb[0].mxu0
        %v3362 = vpop.f32.mrb[0].mxu0
        %v3363 = vadd.f32 0.0, %v3362
        %v3364 = vpop.f32.mrb[0].mxu0
        %3365 = vmatprep.mubr.bf16.mxu0 %v3228
        %3366 = vmatmul.mubr.bf16.gmra.mrb[0].mxu0 %v3227
        %v3367 = vpop.f32.mrb[0].mxu0
        %v3368 = vadd.f32 0.0, %v3367
        %v3369 = vpop.f32.mrb[0].mxu0
        %v3370 = vpop.f32.mrb[0].mxu0
        %v3371 = vadd.f32 0.0, %v3370
        %v3372 = vpop.f32.mrb[0].mxu0
        %3373 = vdwg.mxu0
        %3374 = vmatprep.subr.bf16.mxu0 0
        %3375 = vmatpush1.bf16.msra.mxu0 %v3122
        %3376 = vmatprep.subr.bf16.mxu0 0
        %3377 = vmatpush1.bf16.msra.mxu0 %v3123
        %3378 = vmatprep.subr.bf16.mxu0 0
        %3379 = vmatpush1.bf16.msra.mxu0 %v3124
        %3380 = vmatprep.subr.bf16.mxu0 0
        %3381 = vmatpush1.bf16.msra.mxu0 %v3275
        %3382 = vmatprep.subr.bf16.mxu0 0
        %3383 = vmatpush1.bf16.msra.mxu0 0
        %3384 = vmatprep.subr.bf16.mxu0 0
        %3385 = vmatpush1.bf16.msra.mxu0 0
        %3386 = vmatprep.subr.bf16.mxu0 0
        %3387 = vmatpush1.bf16.msra.mxu0 0
        %3388 = vmatprep.subr.bf16.mxu0 0
        %3389 = vmatpush1.bf16.msra.mxu0 0
        %3390 = vmatprep.subr.bf16.mxu0 0
        %3391 = vmatpush1.bf16.msra.mxu0 0
        %3392 = vmatprep.subr.bf16.mxu0 0
        %3393 = vmatpush1.bf16.msra.mxu0 0
        %3394 = vmatprep.subr.bf16.mxu0 0
        %3395 = vmatpush1.bf16.msra.mxu0 0
        %3396 = vmatprep.subr.bf16.mxu0 0
        %3397 = vmatpush1.bf16.msra.mxu0 0
        %3398 = vmatprep.subr.bf16.mxu0 0
        %3399 = vmatpush1.bf16.msra.mxu0 0
        %3400 = vmatprep.subr.bf16.mxu0 0
        %3401 = vmatpush1.bf16.msra.mxu0 0
        %3402 = vmatprep.subr.bf16.mxu0 0
        %3403 = vmatpush1.bf16.msra.mxu0 0
        %3404 = vmatprep.subr.bf16.mxu0 0
        %3405 = vmatpush1.bf16.msra.mxu0 0
        %3406 = vmatprep.mubr.bf16.mxu0 0
        %3407 = vmatmul.mubr.bf16.gmra.mrb[0].mxu0 %v3248
        %v3408 = vpop.f32.mrb[0].mxu0
        %v3409 = vadd.f32 %v3312, %v3408
        %v3410 = vpop.f32.mrb[0].mxu0
        %v3411 = vpop.f32.mrb[0].mxu0
        %v3412 = vadd.f32 %v3315, %v3411
        %v3413 = vpop.f32.mrb[0].mxu0
        %3414 = vmatprep.mubr.bf16.mxu0 0
        %3415 = vmatmul.mubr.bf16.gmra.mrb[0].mxu0 %v3251
        %v3416 = vpop.f32.mrb[0].mxu0
        %v3417 = vadd.f32 %v3320, %v3416
        %v3418 = vpop.f32.mrb[0].mxu0
        %v3419 = vpop.f32.mrb[0].mxu0
        %v3420 = vadd.f32 %v3323, %v3419
        %v3421 = vpop.f32.mrb[0].mxu0
        %3422 = vmatprep.mubr.bf16.mxu0 0
        %3423 = vmatmul.mubr.bf16.gmra.mrb[0].mxu0 %v3254
        %v3424 = vpop.f32.mrb[0].mxu0
        %v3425 = vadd.f32 %v3328, %v3424
        %v3426 = vpop.f32.mrb[0].mxu0
        %v3427 = vpop.f32.mrb[0].mxu0
        %v3428 = vadd.f32 %v3331, %v3427
        %v3429 = vpop.f32.mrb[0].mxu0
        %3430 = vmatprep.mubr.bf16.mxu0 0
        %3431 = vmatmul.mubr.bf16.gmra.mrb[0].mxu0 %v3257
        %v3432 = vpop.f32.mrb[0].mxu0
        %v3433 = vadd.f32 %v3336, %v3432
        %v3434 = vpop.f32.mrb[0].mxu0
        %v3435 = vpop.f32.mrb[0].mxu0
        %v3436 = vadd.f32 %v3339, %v3435
        %v3437 = vpop.f32.mrb[0].mxu0
        %3438 = vmatprep.mubr.bf16.mxu0 0
        %3439 = vmatmul.mubr.bf16.gmra.mrb[0].mxu0 %v3260
        %v3440 = vpop.f32.mrb[0].mxu0
        %v3441 = vadd.f32 %v3344, %v3440
        %v3442 = vpop.f32.mrb[0].mxu0
        %v3443 = vpop.f32.mrb[0].mxu0
        %v3444 = vadd.f32 %v3347, %v3443
        %v3445 = vpop.f32.mrb[0].mxu0
        %3446 = vmatprep.mubr.bf16.mxu0 0
        %3447 = vmatmul.mubr.bf16.gmra.mrb[0].mxu0 %v3263
        %v3448 = vpop.f32.mrb[0].mxu0
        %v3449 = vadd.f32 %v3352, %v3448
        %v3450 = vpop.f32.mrb[0].mxu0
        %v3451 = vpop.f32.mrb[0].mxu0
        %v3452 = vadd.f32 %v3355, %v3451
        %v3453 = vpop.f32.mrb[0].mxu0
        %3454 = vmatprep.mubr.bf16.mxu0 0
        %3455 = vmatmul.mubr.bf16.gmra.mrb[0].mxu0 %v3266
        %v3456 = vpop.f32.mrb[0].mxu0
        %v3457 = vadd.f32 %v3360, %v3456
        %v3458 = vpop.f32.mrb[0].mxu0
        %v3459 = vpop.f32.mrb[0].mxu0
        %v3460 = vadd.f32 %v3363, %v3459
        %v3461 = vpop.f32.mrb[0].mxu0
        %3462 = vmatprep.mubr.bf16.mxu0 0
        %3463 = vmatmul.mubr.bf16.gmra.mrb[0].mxu0 %v3269
        %v3464 = vpop.f32.mrb[0].mxu0
        %v3465 = vadd.f32 %v3368, %v3464
        %v3466 = vpop.f32.mrb[0].mxu0
        %v3467 = vpop.f32.mrb[0].mxu0
        %v3468 = vadd.f32 %v3371, %v3467
        %v3469 = vpop.f32.mrb[0].mxu0
        %3470 = vdwg.mxu0
        %3471 = vst.msk [vmem:[#allocation3 + $0xc] sm:$0xff] %vm2714, %v3409
        %3472 = vst.msk [vmem:[#allocation3 + $0x14] sm:$0xff] %vm2714, %v3412
        %3473 = vst.msk [vmem:[#allocation3 + $0x1c] sm:$0xff] %vm2714, %v3417
        %3474 = vst.msk [vmem:[#allocation3 + $0x24] sm:$0xff] %vm2714, %v3420
        %3475 = vst.msk [vmem:[#allocation3 + $0x2c] sm:$0xff] %vm2714, %v3425
        %3476 = vst.msk [vmem:[#allocation3 + $0x34] sm:$0xff] %vm2714, %v3428
        %3477 = vst.msk [vmem:[#allocation3 + $0x3c] sm:$0xff] %vm2714, %v3433
        %3478 = vst.msk [vmem:[#allocation3 + $0x44] sm:$0xff] %vm2714, %v3436
        %3479 = vst.msk [vmem:[#allocation3 + $0x4c] sm:$0xff] %vm2714, %v3441
        %3480 = vst.msk [vmem:[#allocation3 + $0x54] sm:$0xff] %vm2714, %v3444
        %3481 = vst.msk [vmem:[#allocation3 + $0x5c] sm:$0xff] %vm2714, %v3449
        %3482 = vst.msk [vmem:[#allocation3 + $0x64] sm:$0xff] %vm2714, %v3452
        %3483 = vst.msk [vmem:[#allocation3 + $0x6c] sm:$0xff] %vm2714, %v3457
        %3484 = vst.msk [vmem:[#allocation3 + $0x74] sm:$0xff] %vm2714, %v3460
        %3485 = vst.msk [vmem:[#allocation3 + $0x7c] sm:$0xff] %vm2714, %v3465
        %vm3486 = vcmask 253952
        %3487 = vst.msk [vmem:[#allocation3 + $0x84] sm:$0x1] %vm3486, %v3468
        %v3488 = vld [vmem:[#allocation2 + $0x144] sm:$0xff]
        %v3489 = vld [vmem:[#allocation2 + $0x14c] sm:$0xff]
        %v3490 = vld [vmem:[#allocation2 + $0x154] sm:$0xff]
        %v3491 = vld [vmem:[#allocation2 + $0x15c] sm:$0xff]
        %v3492 = vld [vmem:[#allocation2 + $0x164] sm:$0xff]
        %v3493 = vld [vmem:[#allocation2 + $0x16c] sm:$0xff]
        %v3494 = vld [vmem:[#allocation2 + $0x174] sm:$0xff]
        %v3495 = vld [vmem:[#allocation2 + $0x17c] sm:$0xff]
        %v3496 = vld [vmem:[#allocation2 + $0x184] sm:$0xff]
        %v3497 = vld [vmem:[#allocation2 + $0x18c] sm:$0xff]
        %v3498 = vld [vmem:[#allocation2 + $0x194] sm:$0xff]
        %v3499 = vld [vmem:[#allocation2 + $0x19c] sm:$0xff]
        %v3500 = vld [vmem:[#allocation2 + $0x1a4] sm:$0xff]
        %v3501 = vld [vmem:[#allocation2 + $0x1ac] sm:$0xff]
        %v3502 = vld [vmem:[#allocation2 + $0x1b4] sm:$0xff]
        %v3503 = vld [vmem:[#allocation2 + $0x1bc] sm:$0xff]
        %v3504 = vld [vmem:[#allocation2 + $0x1c4] sm:$0xff]
        %v3505 = vld [vmem:[#allocation2 + $0x1cc] sm:$0xff]
        %v3506 = vld [vmem:[#allocation2 + $0x1d4] sm:$0xff]
        %v3507 = vld [vmem:[#allocation2 + $0x1dc] sm:$0xff]
        %v3508 = vld [vmem:[#allocation2 + $0x1e4] sm:$0xff]
        %v3509 = vld [vmem:[#allocation2 + $0x1ec] sm:$0xff]
        %v3510 = vld [vmem:[#allocation2 + $0x1f4] sm:$0xff]
        %v3511 = vld [vmem:[#allocation2 + $0x1fc] sm:$0xff]
        %v3512 = vld [vmem:[#allocation2 + $0x204] sm:$0xff]
        %v3513 = vld [vmem:[#allocation2 + $0x20c] sm:$0xff]
        %v3514 = vld [vmem:[#allocation2 + $0x214] sm:$0xff]
        %v3515 = vld [vmem:[#allocation2 + $0x21c] sm:$0xff]
        %v3516 = vld [vmem:[#allocation2 + $0x224] sm:$0xff]
        %v3517 = vld [vmem:[#allocation2 + $0x22c] sm:$0xff]
        %v3518 = vld [vmem:[#allocation2 + $0x234] sm:$0xff]
        %v3519 = vld [vmem:[#allocation2 + $0x23c] sm:$0xff]
        %v3520 = vld [vmem:[#allocation2 + $0x244] sm:$0xff]
        %v3521 = vld [vmem:[#allocation2 + $0x24c] sm:$0xff]
        %v3522 = vld [vmem:[#allocation2 + $0x254] sm:$0xff]
        %v3523 = vld [vmem:[#allocation2 + $0x25c] sm:$0xff]
        %v3524 = vld [vmem:[#allocation2 + $0x264] sm:$0xff]
        %v3525 = vld [vmem:[#allocation2 + $0x26c] sm:$0xff]
        %v3526 = vld [vmem:[#allocation2 + $0x274] sm:$0x1]
        %v3527 = vld [vmem:[#allocation2 + $0x145] sm:$0xff]
        %v3528 = vld [vmem:[#allocation2 + $0x14d] sm:$0xff]
        %v3529 = vld [vmem:[#allocation2 + $0x155] sm:$0xff]
        %v3530 = vld [vmem:[#allocation2 + $0x15d] sm:$0xff]
        %v3531 = vld [vmem:[#allocation2 + $0x165] sm:$0xff]
        %v3532 = vld [vmem:[#allocation2 + $0x16d] sm:$0xff]
        %v3533 = vld [vmem:[#allocation2 + $0x175] sm:$0xff]
        %v3534 = vld [vmem:[#allocation2 + $0x17d] sm:$0xff]
        %v3535 = vld [vmem:[#allocation2 + $0x185] sm:$0xff]
        %v3536 = vld [vmem:[#allocation2 + $0x18d] sm:$0xff]
        %v3537 = vld [vmem:[#allocation2 + $0x195] sm:$0xff]
        %v3538 = vld [vmem:[#allocation2 + $0x19d] sm:$0xff]
        %v3539 = vld [vmem:[#allocation2 + $0x1a5] sm:$0xff]
        %v3540 = vld [vmem:[#allocation2 + $0x1ad] sm:$0xff]
        %v3541 = vld [vmem:[#allocation2 + $0x1b5] sm:$0xff]
        %v3542 = vld [vmem:[#allocation2 + $0x1bd] sm:$0xff]
        %v3543 = vld [vmem:[#allocation2 + $0x1c5] sm:$0xff]
        %v3544 = vld [vmem:[#allocation2 + $0x1cd] sm:$0xff]
        %v3545 = vld [vmem:[#allocation2 + $0x1d5] sm:$0xff]
        %v3546 = vld [vmem:[#allocation2 + $0x1dd] sm:$0xff]
        %v3547 = vld [vmem:[#allocation2 + $0x1e5] sm:$0xff]
        %v3548 = vld [vmem:[#allocation2 + $0x1ed] sm:$0xff]
        %v3549 = vld [vmem:[#allocation2 + $0x1f5] sm:$0xff]
        %v3550 = vld [vmem:[#allocation2 + $0x1fd] sm:$0xff]
        %v3551 = vld [vmem:[#allocation2 + $0x205] sm:$0xff]
        %v3552 = vld [vmem:[#allocation2 + $0x20d] sm:$0xff]
        %v3553 = vld [vmem:[#allocation2 + $0x215] sm:$0xff]
        %v3554 = vld [vmem:[#allocation2 + $0x21d] sm:$0xff]
        %v3555 = vld [vmem:[#allocation2 + $0x225] sm:$0xff]
        %v3556 = vld [vmem:[#allocation2 + $0x22d] sm:$0xff]
        %v3557 = vld [vmem:[#allocation2 + $0x235] sm:$0xff]
        %v3558 = vld [vmem:[#allocation2 + $0x23d] sm:$0xff]
        %v3559 = vld [vmem:[#allocation2 + $0x245] sm:$0xff]
        %v3560 = vld [vmem:[#allocation2 + $0x24d] sm:$0xff]
        %v3561 = vld [vmem:[#allocation2 + $0x255] sm:$0xff]
        %v3562 = vld [vmem:[#allocation2 + $0x25d] sm:$0xff]
        %v3563 = vld [vmem:[#allocation2 + $0x265] sm:$0xff]
        %v3564 = vld [vmem:[#allocation2 + $0x26d] sm:$0xff]
        %v3565 = vld [vmem:[#allocation2 + $0x275] sm:$0x1]
        %v3566 = vmax.f32 %v3488, %v3527
        %v3567 = vmax.f32 %v3489, %v3528
        %v3568 = vmax.f32 %v3490, %v3529
        %v3569 = vmax.f32 %v3491, %v3530
        %v3570 = vmax.f32 %v3492, %v3531
        %v3571 = vmax.f32 %v3493, %v3532
        %v3572 = vmax.f32 %v3494, %v3533
        %v3573 = vmax.f32 %v3495, %v3534
        %v3574 = vmax.f32 %v3496, %v3535
        %v3575 = vmax.f32 %v3497, %v3536
        %v3576 = vmax.f32 %v3498, %v3537
        %v3577 = vmax.f32 %v3499, %v3538
        %v3578 = vmax.f32 %v3500, %v3539
        %v3579 = vmax.f32 %v3501, %v3540
        %v3580 = vmax.f32 %v3502, %v3541
        %v3581 = vmax.f32 %v3503, %v3542
        %v3582 = vmax.f32 %v3504, %v3543
        %v3583 = vmax.f32 %v3505, %v3544
        %v3584 = vmax.f32 %v3506, %v3545
        %v3585 = vmax.f32 %v3507, %v3546
        %v3586 = vmax.f32 %v3508, %v3547
        %v3587 = vmax.f32 %v3509, %v3548
        %v3588 = vmax.f32 %v3510, %v3549
        %v3589 = vmax.f32 %v3511, %v3550
        %v3590 = vmax.f32 %v3512, %v3551
        %v3591 = vmax.f32 %v3513, %v3552
        %v3592 = vmax.f32 %v3514, %v3553
        %v3593 = vmax.f32 %v3515, %v3554
        %v3594 = vmax.f32 %v3516, %v3555
        %v3595 = vmax.f32 %v3517, %v3556
        %v3596 = vmax.f32 %v3518, %v3557
        %v3597 = vmax.f32 %v3519, %v3558
        %v3598 = vmax.f32 %v3520, %v3559
        %v3599 = vmax.f32 %v3521, %v3560
        %v3600 = vmax.f32 %v3522, %v3561
        %v3601 = vmax.f32 %v3523, %v3562
        %v3602 = vmax.f32 %v3524, %v3563
        %v3603 = vmax.f32 %v3525, %v3564
        %v3604 = vmax.f32 %v3526, %v3565
        %v3605 = vld [vmem:[#allocation2 + $0x156] sm:$0xff]
        %v3606 = vld [vmem:[#allocation2 + $0x15e] sm:$0xff]
        %v3607 = vld [vmem:[#allocation2 + $0x166] sm:$0xff]
        %v3608 = vld [vmem:[#allocation2 + $0x16e] sm:$0xff]
        %v3609 = vld [vmem:[#allocation2 + $0x176] sm:$0xff]
        %v3610 = vld [vmem:[#allocation2 + $0x17e] sm:$0xff]
        %v3611 = vld [vmem:[#allocation2 + $0x186] sm:$0xff]
        %v3612 = vld [vmem:[#allocation2 + $0x18e] sm:$0xff]
        %v3613 = vld [vmem:[#allocation2 + $0x196] sm:$0xff]
        %v3614 = vld [vmem:[#allocation2 + $0x19e] sm:$0xff]
        %v3615 = vld [vmem:[#allocation2 + $0x1a6] sm:$0xff]
        %v3616 = vld [vmem:[#allocation2 + $0x1ae] sm:$0xff]
        %v3617 = vld [vmem:[#allocation2 + $0x1b6] sm:$0xff]
        %v3618 = vld [vmem:[#allocation2 + $0x1be] sm:$0xff]
        %v3619 = vld [vmem:[#allocation2 + $0x1c6] sm:$0xff]
        %v3620 = vld [vmem:[#allocation2 + $0x1ce] sm:$0xff]
        %v3621 = vld [vmem:[#allocation2 + $0x1d6] sm:$0xff]
        %v3622 = vld [vmem:[#allocation2 + $0x1de] sm:$0xff]
        %v3623 = vld [vmem:[#allocation2 + $0x1e6] sm:$0xff]
        %v3624 = vld [vmem:[#allocation2 + $0x1ee] sm:$0xff]
        %v3625 = vld [vmem:[#allocation2 + $0x1f6] sm:$0xff]
        %v3626 = vld [vmem:[#allocation2 + $0x1fe] sm:$0xff]
        %v3627 = vld [vmem:[#allocation2 + $0x206] sm:$0xff]
        %v3628 = vld [vmem:[#allocation2 + $0x20e] sm:$0xff]
        %v3629 = vld [vmem:[#allocation2 + $0x216] sm:$0xff]
        %v3630 = vld [vmem:[#allocation2 + $0x21e] sm:$0xff]
        %v3631 = vld [vmem:[#allocation2 + $0x226] sm:$0xff]
        %v3632 = vld [vmem:[#allocation2 + $0x22e] sm:$0xff]
        %v3633 = vld [vmem:[#allocation2 + $0x236] sm:$0xff]
        %v3634 = vld [vmem:[#allocation2 + $0x23e] sm:$0xff]
        %v3635 = vld [vmem:[#allocation2 + $0x246] sm:$0xff]
        %v3636 = vld [vmem:[#allocation2 + $0x24e] sm:$0xff]
        %v3637 = vld [vmem:[#allocation2 + $0x256] sm:$0xff]
        %v3638 = vld [vmem:[#allocation2 + $0x25e] sm:$0xff]
        %v3639 = vld [vmem:[#allocation2 + $0x266] sm:$0xff]
        %v3640 = vld [vmem:[#allocation2 + $0x26e] sm:$0xff]
        %v3641 = vld [vmem:[#allocation2 + $0x276] sm:$0xff]
        %v3642 = vld [vmem:[#allocation2 + $0x27e] sm:$0xff]
        %v3643 = vld [vmem:[#allocation2 + $0x286] sm:$0x1]
        %v3644 = vld [vmem:[#allocation2 + $0x157] sm:$0xff]
        %v3645 = vld [vmem:[#allocation2 + $0x15f] sm:$0xff]
        %v3646 = vld [vmem:[#allocation2 + $0x167] sm:$0xff]
        %v3647 = vld [vmem:[#allocation2 + $0x16f] sm:$0xff]
        %v3648 = vld [vmem:[#allocation2 + $0x177] sm:$0xff]
        %v3649 = vld [vmem:[#allocation2 + $0x17f] sm:$0xff]
        %v3650 = vld [vmem:[#allocation2 + $0x187] sm:$0xff]
        %v3651 = vld [vmem:[#allocation2 + $0x18f] sm:$0xff]
        %v3652 = vld [vmem:[#allocation2 + $0x197] sm:$0xff]
        %v3653 = vld [vmem:[#allocation2 + $0x19f] sm:$0xff]
        %v3654 = vld [vmem:[#allocation2 + $0x1a7] sm:$0xff]
        %v3655 = vld [vmem:[#allocation2 + $0x1af] sm:$0xff]
        %v3656 = vld [vmem:[#allocation2 + $0x1b7] sm:$0xff]
        %v3657 = vld [vmem:[#allocation2 + $0x1bf] sm:$0xff]
        %v3658 = vld [vmem:[#allocation2 + $0x1c7] sm:$0xff]
        %v3659 = vld [vmem:[#allocation2 + $0x1cf] sm:$0xff]
        %v3660 = vld [vmem:[#allocation2 + $0x1d7] sm:$0xff]
        %v3661 = vld [vmem:[#allocation2 + $0x1df] sm:$0xff]
        %v3662 = vld [vmem:[#allocation2 + $0x1e7] sm:$0xff]
        %v3663 = vld [vmem:[#allocation2 + $0x1ef] sm:$0xff]
        %v3664 = vld [vmem:[#allocation2 + $0x1f7] sm:$0xff]
        %v3665 = vld [vmem:[#allocation2 + $0x1ff] sm:$0xff]
        %v3666 = vld [vmem:[#allocation2 + $0x207] sm:$0xff]
        %v3667 = vld [vmem:[#allocation2 + $0x20f] sm:$0xff]
        %v3668 = vld [vmem:[#allocation2 + $0x217] sm:$0xff]
        %v3669 = vld [vmem:[#allocation2 + $0x21f] sm:$0xff]
        %v3670 = vld [vmem:[#allocation2 + $0x227] sm:$0xff]
        %v3671 = vld [vmem:[#allocation2 + $0x22f] sm:$0xff]
        %v3672 = vld [vmem:[#allocation2 + $0x237] sm:$0xff]
        %v3673 = vld [vmem:[#allocation2 + $0x23f] sm:$0xff]
        %v3674 = vld [vmem:[#allocation2 + $0x247] sm:$0xff]
        %v3675 = vld [vmem:[#allocation2 + $0x24f] sm:$0xff]
        %v3676 = vld [vmem:[#allocation2 + $0x257] sm:$0xff]
        %v3677 = vld [vmem:[#allocation2 + $0x25f] sm:$0xff]
        %v3678 = vld [vmem:[#allocation2 + $0x267] sm:$0xff]
        %v3679 = vld [vmem:[#allocation2 + $0x26f] sm:$0xff]
        %v3680 = vld [vmem:[#allocation2 + $0x277] sm:$0xff]
        %v3681 = vld [vmem:[#allocation2 + $0x27f] sm:$0xff]
        %v3682 = vld [vmem:[#allocation2 + $0x287] sm:$0x1]
        %v3683 = vmax.f32 %v3605, %v3644
        %v3684 = vmax.f32 %v3606, %v3645
        %v3685 = vmax.f32 %v3607, %v3646
        %v3686 = vmax.f32 %v3608, %v3647
        %v3687 = vmax.f32 %v3609, %v3648
        %v3688 = vmax.f32 %v3610, %v3649
        %v3689 = vmax.f32 %v3611, %v3650
        %v3690 = vmax.f32 %v3612, %v3651
        %v3691 = vmax.f32 %v3613, %v3652
        %v3692 = vmax.f32 %v3614, %v3653
        %v3693 = vmax.f32 %v3615, %v3654
        %v3694 = vmax.f32 %v3616, %v3655
        %v3695 = vmax.f32 %v3617, %v3656
        %v3696 = vmax.f32 %v3618, %v3657
        %v3697 = vmax.f32 %v3619, %v3658
        %v3698 = vmax.f32 %v3620, %v3659
        %v3699 = vmax.f32 %v3621, %v3660
        %v3700 = vmax.f32 %v3622, %v3661
        %v3701 = vmax.f32 %v3623, %v3662
        %v3702 = vmax.f32 %v3624, %v3663
        %v3703 = vmax.f32 %v3625, %v3664
        %v3704 = vmax.f32 %v3626, %v3665
        %v3705 = vmax.f32 %v3627, %v3666
        %v3706 = vmax.f32 %v3628, %v3667
        %v3707 = vmax.f32 %v3629, %v3668
        %v3708 = vmax.f32 %v3630, %v3669
        %v3709 = vmax.f32 %v3631, %v3670
        %v3710 = vmax.f32 %v3632, %v3671
        %v3711 = vmax.f32 %v3633, %v3672
        %v3712 = vmax.f32 %v3634, %v3673
        %v3713 = vmax.f32 %v3635, %v3674
        %v3714 = vmax.f32 %v3636, %v3675
        %v3715 = vmax.f32 %v3637, %v3676
        %v3716 = vmax.f32 %v3638, %v3677
        %v3717 = vmax.f32 %v3639, %v3678
        %v3718 = vmax.f32 %v3640, %v3679
        %v3719 = vmax.f32 %v3641, %v3680
        %v3720 = vmax.f32 %v3642, %v3681
        %v3721 = vmax.f32 %v3643, %v3682
        %v3722 = vmax.f32 %v3566, %v3683
        %v3723 = vmax.f32 %v3567, %v3684
        %v3724 = vmax.f32 %v3568, %v3685
        %v3725 = vmax.f32 %v3569, %v3686
        %v3726 = vmax.f32 %v3570, %v3687
        %v3727 = vmax.f32 %v3571, %v3688
        %v3728 = vmax.f32 %v3572, %v3689
        %v3729 = vmax.f32 %v3573, %v3690
        %v3730 = vmax.f32 %v3574, %v3691
        %v3731 = vmax.f32 %v3575, %v3692
        %v3732 = vmax.f32 %v3576, %v3693
        %v3733 = vmax.f32 %v3577, %v3694
        %v3734 = vmax.f32 %v3578, %v3695
        %v3735 = vmax.f32 %v3579, %v3696
        %v3736 = vmax.f32 %v3580, %v3697
        %v3737 = vmax.f32 %v3581, %v3698
        %v3738 = vmax.f32 %v3582, %v3699
        %v3739 = vmax.f32 %v3583, %v3700
        %v3740 = vmax.f32 %v3584, %v3701
        %v3741 = vmax.f32 %v3585, %v3702
        %v3742 = vmax.f32 %v3586, %v3703
        %v3743 = vmax.f32 %v3587, %v3704
        %v3744 = vmax.f32 %v3588, %v3705
        %v3745 = vmax.f32 %v3589, %v3706
        %v3746 = vmax.f32 %v3590, %v3707
        %v3747 = vmax.f32 %v3591, %v3708
        %v3748 = vmax.f32 %v3592, %v3709
        %v3749 = vmax.f32 %v3593, %v3710
        %v3750 = vmax.f32 %v3594, %v3711
        %v3751 = vmax.f32 %v3595, %v3712
        %v3752 = vmax.f32 %v3596, %v3713
        %v3753 = vmax.f32 %v3597, %v3714
        %v3754 = vmax.f32 %v3598, %v3715
        %v3755 = vmax.f32 %v3599, %v3716
        %v3756 = vmax.f32 %v3600, %v3717
        %v3757 = vmax.f32 %v3601, %v3718
        %v3758 = vmax.f32 %v3602, %v3719
        %v3759 = vmax.f32 %v3603, %v3720
        %v3760 = vmax.f32 %v3604, %v3721
        %v3761 = vld [vmem:[%s11] sm:$0xff]
        %v3762 = vld [vmem:[%s11 + $0x8] sm:$0xf]
        %v3763 = vld [vmem:[%s11 + $0xc] sm:$0xff]
        %v3764 = vld [vmem:[%s11 + $0x14] sm:$0xf]
        %v3765 = vld [vmem:[%s11 + $0x18] sm:$0xff]
        %v3766 = vld [vmem:[%s11 + $0x20] sm:$0xf]
        %v3767 = vld [vmem:[%s11 + $0x24] sm:$0xff]
        %v3768 = vld [vmem:[%s11 + $0x2c] sm:$0xf]
        %v3769 = vld [vmem:[%s11 + $0x30] sm:$0xff]
        %v3770 = vld [vmem:[%s11 + $0x38] sm:$0xf]
        %v3771 = vld [vmem:[%s11 + $0x3c] sm:$0xff]
        %v3772 = vld [vmem:[%s11 + $0x44] sm:$0xf]
        %v3773 = vld [vmem:[%s11 + $0x48] sm:$0xff]
        %v3774 = vld [vmem:[%s11 + $0x50] sm:$0xf]
        %v3775 = vld [vmem:[%s11 + $0x54] sm:$0xff]
        %v3776 = vld [vmem:[%s11 + $0x5c] sm:$0xf]
        %v3777 = vld [vmem:[%s11 + $0x60] sm:$0xff]
        %v3778 = vld [vmem:[%s11 + $0x68] sm:$0xf]
        %v3779 = vld [vmem:[%s11 + $0x6c] sm:$0xff]
        %v3780 = vld [vmem:[%s11 + $0x74] sm:$0xf]
        %v3781 = vld [vmem:[%s11 + $0x78] sm:$0xff]
        %v3782 = vld [vmem:[%s11 + $0x80] sm:$0xf]
        %v3783 = vld [vmem:[%s11 + $0x84] sm:$0xff]
        %v3784 = vld [vmem:[%s11 + $0x8c] sm:$0xf]
        %v3785 = vld [vmem:[%s11 + $0x90] sm:$0xff]
        %v3786 = vld [vmem:[%s11 + $0x98] sm:$0xf]
        %v3787 = vld [vmem:[%s11 + $0x9c] sm:$0xff]
        %v3788 = vld [vmem:[%s11 + $0xa4] sm:$0xf]
        %v3789 = vld [vmem:[%s11 + $0xa8] sm:$0xff]
        %v3790 = vld [vmem:[%s11 + $0xb0] sm:$0xf]
        %v3791 = vld [vmem:[%s11 + $0xb4] sm:$0x11]
        %v3792 = vld [vmem:[%s11 + $0xbc] sm:$0x1]
        %v3793 = vpack.c.bf16 %v3723, %v3722
        %v3794 = vpack.c.bf16 %v3725, %v3724
        %v3795 = vpack.c.bf16 %v3727, %v3726
        %v3796 = vpack.c.bf16 %v3729, %v3728
        %v3797 = vpack.c.bf16 %v3731, %v3730
        %v3798 = vpack.c.bf16 %v3733, %v3732
        %v3799 = vpack.c.bf16 %v3735, %v3734
        %v3800 = vpack.c.bf16 %v3737, %v3736
        %v3801 = vpack.c.bf16 %v3739, %v3738
        %v3802 = vpack.c.bf16 %v3741, %v3740
        %v3803 = vpack.c.bf16 %v3743, %v3742
        %v3804 = vpack.c.bf16 %v3745, %v3744
        %v3805 = vpack.c.bf16 %v3747, %v3746
        %v3806 = vpack.c.bf16 %v3749, %v3748
        %v3807 = vpack.c.bf16 %v3751, %v3750
        %v3808 = vpack.c.bf16 %v3753, %v3752
        %v3809 = vpack.c.bf16 %v3755, %v3754
        %v3810 = vpack.c.bf16 %v3757, %v3756
        %v3811 = vpack.c.bf16 %v3759, %v3758
        %v3812 = vpack.c.bf16 %v3760, %v3760
        %v3845 = vunpack.c.l.b16 %v3761
        %v3846 = vunpack.c.h.b16 %v3761
        %v3847 = vunpack.c.l.b16 %v3762
        %v3848 = vunpack.c.l.b16 %v3763
        %v3849 = vunpack.c.h.b16 %v3763
        %v3850 = vunpack.c.l.b16 %v3764
        %v3851 = vunpack.c.l.b16 %v3765
        %v3852 = vunpack.c.h.b16 %v3765
        %v3853 = vunpack.c.l.b16 %v3766
        %v3854 = vunpack.c.l.b16 %v3767
        %v3855 = vunpack.c.h.b16 %v3767
        %v3856 = vunpack.c.l.b16 %v3768
        %v3857 = vunpack.c.l.b16 %v3769
        %v3858 = vunpack.c.h.b16 %v3769
        %v3859 = vunpack.c.l.b16 %v3770
        %v3860 = vunpack.c.l.b16 %v3771
        %v3861 = vunpack.c.h.b16 %v3771
        %v3862 = vunpack.c.l.b16 %v3772
        %v3863 = vunpack.c.l.b16 %v3773
        %v3864 = vunpack.c.h.b16 %v3773
        %v3865 = vunpack.c.l.b16 %v3774
        %v3866 = vunpack.c.l.b16 %v3775
        %v3867 = vunpack.c.h.b16 %v3775
        %v3868 = vunpack.c.l.b16 %v3776
        %v3869 = vunpack.c.l.b16 %v3777
        %v3870 = vunpack.c.h.b16 %v3777
        %v3871 = vunpack.c.l.b16 %v3778
        %v3872 = vunpack.c.l.b16 %v3779
        %v3873 = vunpack.c.h.b16 %v3779
        %v3874 = vunpack.c.l.b16 %v3780
        %v3875 = vunpack.c.l.b16 %v3781
        %v3876 = vunpack.c.h.b16 %v3781
        %v3877 = vunpack.c.l.b16 %v3782
        %v3878 = vunpack.c.l.b16 %v3783
        %v3879 = vunpack.c.h.b16 %v3783
        %v3880 = vunpack.c.l.b16 %v3784
        %v3881 = vunpack.c.l.b16 %v3785
        %v3882 = vunpack.c.h.b16 %v3785
        %v3883 = vunpack.c.l.b16 %v3786
        %v3884 = vunpack.c.l.b16 %v3787
        %v3885 = vunpack.c.h.b16 %v3787
        %v3886 = vunpack.c.l.b16 %v3788
        %v3887 = vunpack.c.l.b16 %v3789
        %v3888 = vunpack.c.h.b16 %v3789
        %v3889 = vunpack.c.l.b16 %v3790
        %v3890 = vunpack.c.l.b16 %v3791
        %v3891 = vunpack.c.h.b16 %v3791
        %v3892 = vunpack.c.l.b16 %v3792
        %v3893 = vpack.c.b16 %v3848, %v3845
        %v3894 = vpack.c.b16 %v3849, %v3846
        %v3895 = vpack.c.b16 %v3850, %v3847
        %v3896 = vpack.c.b16 %v3854, %v3851
        %v3897 = vpack.c.b16 %v3855, %v3852
        %v3898 = vpack.c.b16 %v3856, %v3853
        %v3899 = vpack.c.b16 %v3860, %v3857
        %v3900 = vpack.c.b16 %v3861, %v3858
        %v3901 = vpack.c.b16 %v3862, %v3859
        %v3902 = vpack.c.b16 %v3866, %v3863
        %v3903 = vpack.c.b16 %v3867, %v3864
        %v3904 = vpack.c.b16 %v3868, %v3865
        %v3905 = vpack.c.b16 %v3872, %v3869
        %v3906 = vpack.c.b16 %v3873, %v3870
        %v3907 = vpack.c.b16 %v3874, %v3871
        %v3908 = vpack.c.b16 %v3878, %v3875
        %v3909 = vpack.c.b16 %v3879, %v3876
        %v3910 = vpack.c.b16 %v3880, %v3877
        %v3911 = vpack.c.b16 %v3884, %v3881
        %v3912 = vpack.c.b16 %v3885, %v3882
        %v3913 = vpack.c.b16 %v3886, %v3883
        %v3914 = vpack.c.b16 %v3890, %v3887
        %v3915 = vpack.c.b16 %v3891, %v3888
        %v3916 = vpack.c.b16 %v3892, %v3889
        %v3934 = vsel %vm3246, %v3895, 0
        %v3937 = vsel %vm3246, %v3898, 0
        %v3940 = vsel %vm3246, %v3901, 0
        %v3943 = vsel %vm3246, %v3904, 0
        %v3946 = vsel %vm3246, %v3907, 0
        %v3949 = vsel %vm3246, %v3910, 0
        %v3952 = vsel %vm3246, %v3913, 0
        %v3955 = vsel %vm3246, %v3916, 0
        %v3958 = vand.u32 %v3812, %v3273
        %3960 = vmatprep.subr.bf16.mxu0 0
        %3961 = vmatpush1.bf16.msra.mxu0 %v3793
        %3962 = vmatprep.subr.bf16.mxu0 0
        %3963 = vmatpush1.bf16.msra.mxu0 %v3794
        %3964 = vmatprep.subr.bf16.mxu0 0
        %3965 = vmatpush1.bf16.msra.mxu0 %v3795
        %3966 = vmatprep.subr.bf16.mxu0 0
        %3967 = vmatpush1.bf16.msra.mxu0 %v3796
        %3968 = vmatprep.subr.bf16.mxu0 0
        %3969 = vmatpush1.bf16.msra.mxu0 %v3797
        %3970 = vmatprep.subr.bf16.mxu0 0
        %3971 = vmatpush1.bf16.msra.mxu0 %v3798
        %3972 = vmatprep.subr.bf16.mxu0 0
        %3973 = vmatpush1.bf16.msra.mxu0 %v3799
        %3974 = vmatprep.subr.bf16.mxu0 0
        %3975 = vmatpush1.bf16.msra.mxu0 %v3800
        %3976 = vmatprep.subr.bf16.mxu0 0
        %3977 = vmatpush1.bf16.msra.mxu0 %v3801
        %3978 = vmatprep.subr.bf16.mxu0 0
        %3979 = vmatpush1.bf16.msra.mxu0 %v3802
        %3980 = vmatprep.subr.bf16.mxu0 0
        %3981 = vmatpush1.bf16.msra.mxu0 %v3803
        %3982 = vmatprep.subr.bf16.mxu0 0
        %3983 = vmatpush1.bf16.msra.mxu0 %v3804
        %3984 = vmatprep.subr.bf16.mxu0 0
        %3985 = vmatpush1.bf16.msra.mxu0 %v3805
        %3986 = vmatprep.subr.bf16.mxu0 0
        %3987 = vmatpush1.bf16.msra.mxu0 %v3806
        %3988 = vmatprep.subr.bf16.mxu0 0
        %3989 = vmatpush1.bf16.msra.mxu0 %v3807
        %3990 = vmatprep.subr.bf16.mxu0 0
        %3991 = vmatpush1.bf16.msra.mxu0 %v3808
        %3992 = vmatprep.mubr.bf16.mxu0 %v3894
        %3993 = vmatmul.mubr.bf16.gmra.mrb[0].mxu0 %v3893
        %v3994 = vpop.f32.mrb[0].mxu0
        %v3995 = vadd.f32 0.0, %v3994
        %v3996 = vpop.f32.mrb[0].mxu0
        %v3997 = vpop.f32.mrb[0].mxu0
        %v3998 = vadd.f32 0.0, %v3997
        %v3999 = vpop.f32.mrb[0].mxu0
        %4000 = vmatprep.mubr.bf16.mxu0 %v3897
        %4001 = vmatmul.mubr.bf16.gmra.mrb[0].mxu0 %v3896
        %v4002 = vpop.f32.mrb[0].mxu0
        %v4003 = vadd.f32 0.0, %v4002
        %v4004 = vpop.f32.mrb[0].mxu0
        %v4005 = vpop.f32.mrb[0].mxu0
        %v4006 = vadd.f32 0.0, %v4005
        %v4007 = vpop.f32.mrb[0].mxu0
        %4008 = vmatprep.mubr.bf16.mxu0 %v3900
        %4009 = vmatmul.mubr.bf16.gmra.mrb[0].mxu0 %v3899
        %v4010 = vpop.f32.mrb[0].mxu0
        %v4011 = vadd.f32 0.0, %v4010
        %v4012 = vpop.f32.mrb[0].mxu0
        %v4013 = vpop.f32.mrb[0].mxu0
        %v4014 = vadd.f32 0.0, %v4013
        %v4015 = vpop.f32.mrb[0].mxu0
        %4016 = vmatprep.mubr.bf16.mxu0 %v3903
        %4017 = vmatmul.mubr.bf16.gmra.mrb[0].mxu0 %v3902
        %v4018 = vpop.f32.mrb[0].mxu0
        %v4019 = vadd.f32 0.0, %v4018
        %v4020 = vpop.f32.mrb[0].mxu0
        %v4021 = vpop.f32.mrb[0].mxu0
        %v4022 = vadd.f32 0.0, %v4021
        %v4023 = vpop.f32.mrb[0].mxu0
        %4024 = vmatprep.mubr.bf16.mxu0 %v3906
        %4025 = vmatmul.mubr.bf16.gmra.mrb[0].mxu0 %v3905
        %v4026 = vpop.f32.mrb[0].mxu0
        %v4027 = vadd.f32 0.0, %v4026
        %v4028 = vpop.f32.mrb[0].mxu0
        %v4029 = vpop.f32.mrb[0].mxu0
        %v4030 = vadd.f32 0.0, %v4029
        %v4031 = vpop.f32.mrb[0].mxu0
        %4032 = vmatprep.mubr.bf16.mxu0 %v3909
        %4033 = vmatmul.mubr.bf16.gmra.mrb[0].mxu0 %v3908
        %v4034 = vpop.f32.mrb[0].mxu0
        %v4035 = vadd.f32 0.0, %v4034
        %v4036 = vpop.f32.mrb[0].mxu0
        %v4037 = vpop.f32.mrb[0].mxu0
        %v4038 = vadd.f32 0.0, %v4037
        %v4039 = vpop.f32.mrb[0].mxu0
        %4040 = vmatprep.mubr.bf16.mxu0 %v3912
        %4041 = vmatmul.mubr.bf16.gmra.mrb[0].mxu0 %v3911
        %v4042 = vpop.f32.mrb[0].mxu0
        %v4043 = vadd.f32 0.0, %v4042
        %v4044 = vpop.f32.mrb[0].mxu0
        %v4045 = vpop.f32.mrb[0].mxu0
        %v4046 = vadd.f32 0.0, %v4045
        %v4047 = vpop.f32.mrb[0].mxu0
        %4048 = vmatprep.mubr.bf16.mxu0 %v3915
        %4049 = vmatmul.mubr.bf16.gmra.mrb[0].mxu0 %v3914
        %v4050 = vpop.f32.mrb[0].mxu0
        %v4051 = vadd.f32 0.0, %v4050
        %v4052 = vpop.f32.mrb[0].mxu0
        %v4053 = vpop.f32.mrb[0].mxu0
        %v4054 = vadd.f32 0.0, %v4053
        %v4055 = vpop.f32.mrb[0].mxu0
        %4056 = vdwg.mxu0
        %4057 = vmatprep.subr.bf16.mxu0 0
        %4058 = vmatpush1.bf16.msra.mxu0 %v3809
        %4059 = vmatprep.subr.bf16.mxu0 0
        %4060 = vmatpush1.bf16.msra.mxu0 %v3810
        %4061 = vmatprep.subr.bf16.mxu0 0
        %4062 = vmatpush1.bf16.msra.mxu0 %v3811
        %4063 = vmatprep.subr.bf16.mxu0 0
        %4064 = vmatpush1.bf16.msra.mxu0 %v3958
        %4065 = vmatprep.subr.bf16.mxu0 0
        %4066 = vmatpush1.bf16.msra.mxu0 0
        %4067 = vmatprep.subr.bf16.mxu0 0
        %4068 = vmatpush1.bf16.msra.mxu0 0
        %4069 = vmatprep.subr.bf16.mxu0 0
        %4070 = vmatpush1.bf16.msra.mxu0 0
        %4071 = vmatprep.subr.bf16.mxu0 0
        %4072 = vmatpush1.bf16.msra.mxu0 0
        %4073 = vmatprep.subr.bf16.mxu0 0
        %4074 = vmatpush1.bf16.msra.mxu0 0
        %4075 = vmatprep.subr.bf16.mxu0 0
        %4076 = vmatpush1.bf16.msra.mxu0 0
        %4077 = vmatprep.subr.bf16.mxu0 0
        %4078 = vmatpush1.bf16.msra.mxu0 0
        %4079 = vmatprep.subr.bf16.mxu0 0
        %4080 = vmatpush1.bf16.msra.mxu0 0
        %4081 = vmatprep.subr.bf16.mxu0 0
        %4082 = vmatpush1.bf16.msra.mxu0 0
        %4083 = vmatprep.subr.bf16.mxu0 0
        %4084 = vmatpush1.bf16.msra.mxu0 0
        %4085 = vmatprep.subr.bf16.mxu0 0
        %4086 = vmatpush1.bf16.msra.mxu0 0
        %4087 = vmatprep.subr.bf16.mxu0 0
        %4088 = vmatpush1.bf16.msra.mxu0 0
        %4089 = vmatprep.mubr.bf16.mxu0 0
        %4090 = vmatmul.mubr.bf16.gmra.mrb[0].mxu0 %v3934
        %v4091 = vpop.f32.mrb[0].mxu0
        %v4092 = vadd.f32 %v3995, %v4091
        %v4093 = vpop.f32.mrb[0].mxu0
        %v4094 = vpop.f32.mrb[0].mxu0
        %v4095 = vadd.f32 %v3998, %v4094
        %v4096 = vpop.f32.mrb[0].mxu0
        %4097 = vmatprep.mubr.bf16.mxu0 0
        %4098 = vmatmul.mubr.bf16.gmra.mrb[0].mxu0 %v3937
        %v4099 = vpop.f32.mrb[0].mxu0
        %v4100 = vadd.f32 %v4003, %v4099
        %v4101 = vpop.f32.mrb[0].mxu0
        %v4102 = vpop.f32.mrb[0].mxu0
        %v4103 = vadd.f32 %v4006, %v4102
        %v4104 = vpop.f32.mrb[0].mxu0
        %4105 = vmatprep.mubr.bf16.mxu0 0
        %4106 = vmatmul.mubr.bf16.gmra.mrb[0].mxu0 %v3940
        %v4107 = vpop.f32.mrb[0].mxu0
        %v4108 = vadd.f32 %v4011, %v4107
        %v4109 = vpop.f32.mrb[0].mxu0
        %v4110 = vpop.f32.mrb[0].mxu0
        %v4111 = vadd.f32 %v4014, %v4110
        %v4112 = vpop.f32.mrb[0].mxu0
        %4113 = vmatprep.mubr.bf16.mxu0 0
        %4114 = vmatmul.mubr.bf16.gmra.mrb[0].mxu0 %v3943
        %v4115 = vpop.f32.mrb[0].mxu0
        %v4116 = vadd.f32 %v4019, %v4115
        %v4117 = vpop.f32.mrb[0].mxu0
        %v4118 = vpop.f32.mrb[0].mxu0
        %v4119 = vadd.f32 %v4022, %v4118
        %v4120 = vpop.f32.mrb[0].mxu0
        %4121 = vmatprep.mubr.bf16.mxu0 0
        %4122 = vmatmul.mubr.bf16.gmra.mrb[0].mxu0 %v3946
        %v4123 = vpop.f32.mrb[0].mxu0
        %v4124 = vadd.f32 %v4027, %v4123
        %v4125 = vpop.f32.mrb[0].mxu0
        %v4126 = vpop.f32.mrb[0].mxu0
        %v4127 = vadd.f32 %v4030, %v4126
        %v4128 = vpop.f32.mrb[0].mxu0
        %4129 = vmatprep.mubr.bf16.mxu0 0
        %4130 = vmatmul.mubr.bf16.gmra.mrb[0].mxu0 %v3949
        %v4131 = vpop.f32.mrb[0].mxu0
        %v4132 = vadd.f32 %v4035, %v4131
        %v4133 = vpop.f32.mrb[0].mxu0
        %v4134 = vpop.f32.mrb[0].mxu0
        %v4135 = vadd.f32 %v4038, %v4134
        %v4136 = vpop.f32.mrb[0].mxu0
        %4137 = vmatprep.mubr.bf16.mxu0 0
        %4138 = vmatmul.mubr.bf16.gmra.mrb[0].mxu0 %v3952
        %v4139 = vpop.f32.mrb[0].mxu0
        %v4140 = vadd.f32 %v4043, %v4139
        %v4141 = vpop.f32.mrb[0].mxu0
        %v4142 = vpop.f32.mrb[0].mxu0
        %v4143 = vadd.f32 %v4046, %v4142
        %v4144 = vpop.f32.mrb[0].mxu0
        %4145 = vmatprep.mubr.bf16.mxu0 0
        %4146 = vmatmul.mubr.bf16.gmra.mrb[0].mxu0 %v3955
        %v4147 = vpop.f32.mrb[0].mxu0
        %v4148 = vadd.f32 %v4051, %v4147
        %v4149 = vpop.f32.mrb[0].mxu0
        %v4150 = vpop.f32.mrb[0].mxu0
        %v4151 = vadd.f32 %v4054, %v4150
        %v4152 = vpop.f32.mrb[0].mxu0
        %4153 = vdwg.mxu0
        %4154 = vst.msk [vmem:[#allocation3 + $0x85] sm:$0xff] %vm2714, %v4092
        %4155 = vst.msk [vmem:[#allocation3 + $0x8d] sm:$0xff] %vm2714, %v4095
        %4156 = vst.msk [vmem:[#allocation3 + $0x95] sm:$0xff] %vm2714, %v4100
        %4157 = vst.msk [vmem:[#allocation3 + $0x9d] sm:$0xff] %vm2714, %v4103
        %4158 = vst.msk [vmem:[#allocation3 + $0xa5] sm:$0xff] %vm2714, %v4108
        %4159 = vst.msk [vmem:[#allocation3 + $0xad] sm:$0xff] %vm2714, %v4111
        %4160 = vst.msk [vmem:[#allocation3 + $0xb5] sm:$0xff] %vm2714, %v4116
        %4161 = vst.msk [vmem:[#allocation3 + $0xbd] sm:$0xff] %vm2714, %v4119
        %4162 = vst.msk [vmem:[#allocation3 + $0xc5] sm:$0xff] %vm2714, %v4124
        %4163 = vst.msk [vmem:[#allocation3 + $0xcd] sm:$0xff] %vm2714, %v4127
        %4164 = vst.msk [vmem:[#allocation3 + $0xd5] sm:$0xff] %vm2714, %v4132
        %4165 = vst.msk [vmem:[#allocation3 + $0xdd] sm:$0xff] %vm2714, %v4135
        %4166 = vst.msk [vmem:[#allocation3 + $0xe5] sm:$0xff] %vm2714, %v4140
        %4167 = vst.msk [vmem:[#allocation3 + $0xed] sm:$0xff] %vm2714, %v4143
        %4168 = vst.msk [vmem:[#allocation3 + $0xf5] sm:$0xff] %vm2714, %v4148
        %4169 = vst.msk [vmem:[#allocation3 + $0xfd] sm:$0x1] %vm3486, %v4151
        %v4170 = vld [vmem:[#allocation3] sm:$0xff]
        %v4171 = vld [vmem:[#allocation3 + $0x8] sm:$0xff]
        %v4172 = vld [vmem:[#allocation3 + $0x10] sm:$0xff]
        %v4173 = vld [vmem:[#allocation3 + $0x18] sm:$0xff]
        %v4174 = vld [vmem:[#allocation3 + $0x20] sm:$0xff]
        %v4175 = vld [vmem:[#allocation3 + $0x28] sm:$0xff]
        %v4176 = vld [vmem:[#allocation3 + $0x30] sm:$0xff]
        %v4177 = vld [vmem:[#allocation3 + $0x38] sm:$0xff]
        %v4178 = vld [vmem:[#allocation3 + $0x40] sm:$0xff]
        %v4179 = vld [vmem:[#allocation3 + $0x48] sm:$0xff]
        %v4180 = vld [vmem:[#allocation3 + $0x50] sm:$0xff]
        %v4181 = vld [vmem:[#allocation3 + $0x58] sm:$0xff]
        %v4182 = vld [vmem:[#allocation3 + $0x60] sm:$0xff]
        %v4183 = vld [vmem:[#allocation3 + $0x68] sm:$0xff]
        %v4184 = vld [vmem:[#allocation3 + $0x70] sm:$0xff]
        %v4185 = vld [vmem:[#allocation3 + $0x78] sm:$0xff]
        %v4186 = vld [vmem:[#allocation3 + $0x80] sm:$0xff]
        %v4187 = vld [vmem:[#allocation3 + $0x88] sm:$0xff]
        %v4188 = vld [vmem:[#allocation3 + $0x90] sm:$0xff]
        %v4189 = vld [vmem:[#allocation3 + $0x98] sm:$0xff]
        %v4190 = vld [vmem:[#allocation3 + $0xa0] sm:$0xff]
        %v4191 = vld [vmem:[#allocation3 + $0xa8] sm:$0xff]
        %v4192 = vld [vmem:[#allocation3 + $0xb0] sm:$0xff]
        %v4193 = vld [vmem:[#allocation3 + $0xb8] sm:$0xff]
        %v4194 = vld [vmem:[#allocation3 + $0xc0] sm:$0xff]
        %v4195 = vld [vmem:[#allocation3 + $0xc8] sm:$0xff]
        %v4196 = vld [vmem:[#allocation3 + $0xd0] sm:$0xff]
        %v4197 = vld [vmem:[#allocation3 + $0xd8] sm:$0xff]
        %v4198 = vld [vmem:[#allocation3 + $0xe0] sm:$0xff]
        %v4199 = vld [vmem:[#allocation3 + $0xe8] sm:$0xff]
        %v4200 = vld [vmem:[#allocation3 + $0xf0] sm:$0x3]
        %v4201 = vld [vmem:[#allocation3 + $0x1] sm:$0xff]
        %v4202 = vld [vmem:[#allocation3 + $0x9] sm:$0xff]
        %v4203 = vld [vmem:[#allocation3 + $0x11] sm:$0xff]
        %v4204 = vld [vmem:[#allocation3 + $0x19] sm:$0xff]
        %v4205 = vld [vmem:[#allocation3 + $0x21] sm:$0xff]
        %v4206 = vld [vmem:[#allocation3 + $0x29] sm:$0xff]
        %v4207 = vld [vmem:[#allocation3 + $0x31] sm:$0xff]
        %v4208 = vld [vmem:[#allocation3 + $0x39] sm:$0xff]
        %v4209 = vld [vmem:[#allocation3 + $0x41] sm:$0xff]
        %v4210 = vld [vmem:[#allocation3 + $0x49] sm:$0xff]
        %v4211 = vld [vmem:[#allocation3 + $0x51] sm:$0xff]
        %v4212 = vld [vmem:[#allocation3 + $0x59] sm:$0xff]
        %v4213 = vld [vmem:[#allocation3 + $0x61] sm:$0xff]
        %v4214 = vld [vmem:[#allocation3 + $0x69] sm:$0xff]
        %v4215 = vld [vmem:[#allocation3 + $0x71] sm:$0xff]
        %v4216 = vld [vmem:[#allocation3 + $0x79] sm:$0xff]
        %v4217 = vld [vmem:[#allocation3 + $0x81] sm:$0xff]
        %v4218 = vld [vmem:[#allocation3 + $0x89] sm:$0xff]
        %v4219 = vld [vmem:[#allocation3 + $0x91] sm:$0xff]
        %v4220 = vld [vmem:[#allocation3 + $0x99] sm:$0xff]
        %v4221 = vld [vmem:[#allocation3 + $0xa1] sm:$0xff]
        %v4222 = vld [vmem:[#allocation3 + $0xa9] sm:$0xff]
        %v4223 = vld [vmem:[#allocation3 + $0xb1] sm:$0xff]
        %v4224 = vld [vmem:[#allocation3 + $0xb9] sm:$0xff]
        %v4225 = vld [vmem:[#allocation3 + $0xc1] sm:$0xff]
        %v4226 = vld [vmem:[#allocation3 + $0xc9] sm:$0xff]
        %v4227 = vld [vmem:[#allocation3 + $0xd1] sm:$0xff]
        %v4228 = vld [vmem:[#allocation3 + $0xd9] sm:$0xff]
        %v4229 = vld [vmem:[#allocation3 + $0xe1] sm:$0xff]
        %v4230 = vld [vmem:[#allocation3 + $0xe9] sm:$0xff]
        %v4231 = vld [vmem:[#allocation3 + $0xf1] sm:$0x3]
        %v4232 = vld [vmem:[#allocation3 + $0x2] sm:$0xff]
        %v4233 = vld [vmem:[#allocation3 + $0xa] sm:$0xff]
        %v4234 = vld [vmem:[#allocation3 + $0x12] sm:$0xff]
        %v4235 = vld [vmem:[#allocation3 + $0x1a] sm:$0xff]
        %v4236 = vld [vmem:[#allocation3 + $0x22] sm:$0xff]
        %v4237 = vld [vmem:[#allocation3 + $0x2a] sm:$0xff]
        %v4238 = vld [vmem:[#allocation3 + $0x32] sm:$0xff]
        %v4239 = vld [vmem:[#allocation3 + $0x3a] sm:$0xff]
        %v4240 = vld [vmem:[#allocation3 + $0x42] sm:$0xff]
        %v4241 = vld [vmem:[#allocation3 + $0x4a] sm:$0xff]
        %v4242 = vld [vmem:[#allocation3 + $0x52] sm:$0xff]
        %v4243 = vld [vmem:[#allocation3 + $0x5a] sm:$0xff]
        %v4244 = vld [vmem:[#allocation3 + $0x62] sm:$0xff]
        %v4245 = vld [vmem:[#allocation3 + $0x6a] sm:$0xff]
        %v4246 = vld [vmem:[#allocation3 + $0x72] sm:$0xff]
        %v4247 = vld [vmem:[#allocation3 + $0x7a] sm:$0xff]
        %v4248 = vld [vmem:[#allocation3 + $0x82] sm:$0xff]
        %v4249 = vld [vmem:[#allocation3 + $0x8a] sm:$0xff]
        %v4250 = vld [vmem:[#allocation3 + $0x92] sm:$0xff]
        %v4251 = vld [vmem:[#allocation3 + $0x9a] sm:$0xff]
        %v4252 = vld [vmem:[#allocation3 + $0xa2] sm:$0xff]
        %v4253 = vld [vmem:[#allocation3 + $0xaa] sm:$0xff]
        %v4254 = vld [vmem:[#allocation3 + $0xb2] sm:$0xff]
        %v4255 = vld [vmem:[#allocation3 + $0xba] sm:$0xff]
        %v4256 = vld [vmem:[#allocation3 + $0xc2] sm:$0xff]
        %v4257 = vld [vmem:[#allocation3 + $0xca] sm:$0xff]
        %v4258 = vld [vmem:[#allocation3 + $0xd2] sm:$0xff]
        %v4259 = vld [vmem:[#allocation3 + $0xda] sm:$0xff]
        %v4260 = vld [vmem:[#allocation3 + $0xe2] sm:$0xff]
        %v4261 = vld [vmem:[#allocation3 + $0xea] sm:$0xff]
        %v4262 = vld [vmem:[#allocation3 + $0xf2] sm:$0x3]
        %v4263 = vld [vmem:[#allocation3 + $0xb] sm:$0xff]
        %v4264 = vld [vmem:[#allocation3 + $0x13] sm:$0xff]
        %v4265 = vld [vmem:[#allocation3 + $0x1b] sm:$0xff]
        %v4266 = vld [vmem:[#allocation3 + $0x23] sm:$0xff]
        %v4267 = vld [vmem:[#allocation3 + $0x2b] sm:$0xff]
        %v4268 = vld [vmem:[#allocation3 + $0x33] sm:$0xff]
        %v4269 = vld [vmem:[#allocation3 + $0x3b] sm:$0xff]
        %v4270 = vld [vmem:[#allocation3 + $0x43] sm:$0xff]
        %v4271 = vld [vmem:[#allocation3 + $0x4b] sm:$0xff]
        %v4272 = vld [vmem:[#allocation3 + $0x53] sm:$0xff]
        %v4273 = vld [vmem:[#allocation3 + $0x5b] sm:$0xff]
        %v4274 = vld [vmem:[#allocation3 + $0x63] sm:$0xff]
        %v4275 = vld [vmem:[#allocation3 + $0x6b] sm:$0xff]
        %v4276 = vld [vmem:[#allocation3 + $0x73] sm:$0xff]
        %v4277 = vld [vmem:[#allocation3 + $0x7b] sm:$0xff]
        %v4278 = vld [vmem:[#allocation3 + $0x83] sm:$0xff]
        %v4279 = vld [vmem:[#allocation3 + $0x8b] sm:$0xff]
        %v4280 = vld [vmem:[#allocation3 + $0x93] sm:$0xff]
        %v4281 = vld [vmem:[#allocation3 + $0x9b] sm:$0xff]
        %v4282 = vld [vmem:[#allocation3 + $0xa3] sm:$0xff]
        %v4283 = vld [vmem:[#allocation3 + $0xab] sm:$0xff]
        %v4284 = vld [vmem:[#allocation3 + $0xb3] sm:$0xff]
        %v4285 = vld [vmem:[#allocation3 + $0xbb] sm:$0xff]
        %v4286 = vld [vmem:[#allocation3 + $0xc3] sm:$0xff]
        %v4287 = vld [vmem:[#allocation3 + $0xcb] sm:$0xff]
        %v4288 = vld [vmem:[#allocation3 + $0xd3] sm:$0xff]
        %v4289 = vld [vmem:[#allocation3 + $0xdb] sm:$0xff]
        %v4290 = vld [vmem:[#allocation3 + $0xe3] sm:$0xff]
        %v4291 = vld [vmem:[#allocation3 + $0xeb] sm:$0xff]
        %v4292 = vld [vmem:[#allocation3 + $0xf3] sm:$0xff]
        %v4293 = vld [vmem:[#allocation3 + $0xfb] sm:$0x3]
        %v4294 = vld [vmem:[#allocation3 + $0xc] sm:$0xff]
        %v4295 = vld [vmem:[#allocation3 + $0x14] sm:$0xff]
        %v4296 = vld [vmem:[#allocation3 + $0x1c] sm:$0xff]
        %v4297 = vld [vmem:[#allocation3 + $0x24] sm:$0xff]
        %v4298 = vld [vmem:[#allocation3 + $0x2c] sm:$0xff]
        %v4299 = vld [vmem:[#allocation3 + $0x34] sm:$0xff]
        %v4300 = vld [vmem:[#allocation3 + $0x3c] sm:$0xff]
        %v4301 = vld [vmem:[#allocation3 + $0x44] sm:$0xff]
        %v4302 = vld [vmem:[#allocation3 + $0x4c] sm:$0xff]
        %v4303 = vld [vmem:[#allocation3 + $0x54] sm:$0xff]
        %v4304 = vld [vmem:[#allocation3 + $0x5c] sm:$0xff]
        %v4305 = vld [vmem:[#allocation3 + $0x64] sm:$0xff]
        %v4306 = vld [vmem:[#allocation3 + $0x6c] sm:$0xff]
        %v4307 = vld [vmem:[#allocation3 + $0x74] sm:$0xff]
        %v4308 = vld [vmem:[#allocation3 + $0x7c] sm:$0xff]
        %v4309 = vld [vmem:[#allocation3 + $0x84] sm:$0xff]
        %v4310 = vld [vmem:[#allocation3 + $0x8c] sm:$0xff]
        %v4311 = vld [vmem:[#allocation3 + $0x94] sm:$0xff]
        %v4312 = vld [vmem:[#allocation3 + $0x9c] sm:$0xff]
        %v4313 = vld [vmem:[#allocation3 + $0xa4] sm:$0xff]
        %v4314 = vld [vmem:[#allocation3 + $0xac] sm:$0xff]
        %v4315 = vld [vmem:[#allocation3 + $0xb4] sm:$0xff]
        %v4316 = vld [vmem:[#allocation3 + $0xbc] sm:$0xff]
        %v4317 = vld [vmem:[#allocation3 + $0xc4] sm:$0xff]
        %v4318 = vld [vmem:[#allocation3 + $0xcc] sm:$0xff]
        %v4319 = vld [vmem:[#allocation3 + $0xd4] sm:$0xff]
        %v4320 = vld [vmem:[#allocation3 + $0xdc] sm:$0xff]
        %v4321 = vld [vmem:[#allocation3 + $0xe4] sm:$0xff]
        %v4322 = vld [vmem:[#allocation3 + $0xec] sm:$0xff]
        %v4323 = vld [vmem:[#allocation3 + $0xf4] sm:$0xff]
        %v4324 = vld [vmem:[#allocation3 + $0xfc] sm:$0x3]
        %v4325 = vld [vmem:[#allocation3 + $0xd] sm:$0xff]
        %v4326 = vld [vmem:[#allocation3 + $0x15] sm:$0xff]
        %v4327 = vld [vmem:[#allocation3 + $0x1d] sm:$0xff]
        %v4328 = vld [vmem:[#allocation3 + $0x25] sm:$0xff]
        %v4329 = vld [vmem:[#allocation3 + $0x2d] sm:$0xff]
        %v4330 = vld [vmem:[#allocation3 + $0x35] sm:$0xff]
        %v4331 = vld [vmem:[#allocation3 + $0x3d] sm:$0xff]
        %v4332 = vld [vmem:[#allocation3 + $0x45] sm:$0xff]
        %v4333 = vld [vmem:[#allocation3 + $0x4d] sm:$0xff]
        %v4334 = vld [vmem:[#allocation3 + $0x55] sm:$0xff]
        %v4335 = vld [vmem:[#allocation3 + $0x5d] sm:$0xff]
        %v4336 = vld [vmem:[#allocation3 + $0x65] sm:$0xff]
        %v4337 = vld [vmem:[#allocation3 + $0x6d] sm:$0xff]
        %v4338 = vld [vmem:[#allocation3 + $0x75] sm:$0xff]
        %v4339 = vld [vmem:[#allocation3 + $0x7d] sm:$0xff]
        %v4340 = vld [vmem:[#allocation3 + $0x85] sm:$0xff]
        %v4341 = vld [vmem:[#allocation3 + $0x8d] sm:$0xff]
        %v4342 = vld [vmem:[#allocation3 + $0x95] sm:$0xff]
        %v4343 = vld [vmem:[#allocation3 + $0x9d] sm:$0xff]
        %v4344 = vld [vmem:[#allocation3 + $0xa5] sm:$0xff]
        %v4345 = vld [vmem:[#allocation3 + $0xad] sm:$0xff]
        %v4346 = vld [vmem:[#allocation3 + $0xb5] sm:$0xff]
        %v4347 = vld [vmem:[#allocation3 + $0xbd] sm:$0xff]
        %v4348 = vld [vmem:[#allocation3 + $0xc5] sm:$0xff]
        %v4349 = vld [vmem:[#allocation3 + $0xcd] sm:$0xff]
        %v4350 = vld [vmem:[#allocation3 + $0xd5] sm:$0xff]
        %v4351 = vld [vmem:[#allocation3 + $0xdd] sm:$0xff]
        %v4352 = vld [vmem:[#allocation3 + $0xe5] sm:$0xff]
        %v4353 = vld [vmem:[#allocation3 + $0xed] sm:$0xff]
        %v4354 = vld [vmem:[#allocation3 + $0xf5] sm:$0xff]
        %v4355 = vld [vmem:[#allocation3 + $0xfd] sm:$0x3]
        %v4356 = vld [vmem:[#allocation3 + $0x16] sm:$0xff]
        %v4357 = vld [vmem:[#allocation3 + $0x1e] sm:$0xff]
        %v4358 = vld [vmem:[#allocation3 + $0x26] sm:$0xff]
        %v4359 = vld [vmem:[#allocation3 + $0x2e] sm:$0xff]
        %v4360 = vld [vmem:[#allocation3 + $0x36] sm:$0xff]
        %v4361 = vld [vmem:[#allocation3 + $0x3e] sm:$0xff]
        %v4362 = vld [vmem:[#allocation3 + $0x46] sm:$0xff]
        %v4363 = vld [vmem:[#allocation3 + $0x4e] sm:$0xff]
        %v4364 = vld [vmem:[#allocation3 + $0x56] sm:$0xff]
        %v4365 = vld [vmem:[#allocation3 + $0x5e] sm:$0xff]
        %v4366 = vld [vmem:[#allocation3 + $0x66] sm:$0xff]
        %v4367 = vld [vmem:[#allocation3 + $0x6e] sm:$0xff]
        %v4368 = vld [vmem:[#allocation3 + $0x76] sm:$0xff]
        %v4369 = vld [vmem:[#allocation3 + $0x7e] sm:$0xff]
        %v4370 = vld [vmem:[#allocation3 + $0x86] sm:$0xff]
        %v4371 = vld [vmem:[#allocation3 + $0x8e] sm:$0xff]
        %v4372 = vld [vmem:[#allocation3 + $0x96] sm:$0xff]
        %v4373 = vld [vmem:[#allocation3 + $0x9e] sm:$0xff]
        %v4374 = vld [vmem:[#allocation3 + $0xa6] sm:$0xff]
        %v4375 = vld [vmem:[#allocation3 + $0xae] sm:$0xff]
        %v4376 = vld [vmem:[#allocation3 + $0xb6] sm:$0xff]
        %v4377 = vld [vmem:[#allocation3 + $0xbe] sm:$0xff]
        %v4378 = vld [vmem:[#allocation3 + $0xc6] sm:$0xff]
        %v4379 = vld [vmem:[#allocation3 + $0xce] sm:$0xff]
        %v4380 = vld [vmem:[#allocation3 + $0xd6] sm:$0xff]
        %v4381 = vld [vmem:[#allocation3 + $0xde] sm:$0xff]
        %v4382 = vld [vmem:[#allocation3 + $0xe6] sm:$0xff]
        %v4383 = vld [vmem:[#allocation3 + $0xee] sm:$0xff]
        %v4384 = vld [vmem:[#allocation3 + $0xf6] sm:$0xff]
        %v4385 = vld [vmem:[#allocation3 + $0xfe] sm:$0xff]
        %v4386 = vld [vmem:[#allocation3 + $0x106] sm:$0x3]
        %v4387 = vld [vmem:[#allocation3 + $0x17] sm:$0xff]
        %v4388 = vld [vmem:[#allocation3 + $0x1f] sm:$0xff]
        %v4389 = vld [vmem:[#allocation3 + $0x27] sm:$0xff]
        %v4390 = vld [vmem:[#allocation3 + $0x2f] sm:$0xff]
        %v4391 = vld [vmem:[#allocation3 + $0x37] sm:$0xff]
        %v4392 = vld [vmem:[#allocation3 + $0x3f] sm:$0xff]
        %v4393 = vld [vmem:[#allocation3 + $0x47] sm:$0xff]
        %v4394 = vld [vmem:[#allocation3 + $0x4f] sm:$0xff]
        %v4395 = vld [vmem:[#allocation3 + $0x57] sm:$0xff]
        %v4396 = vld [vmem:[#allocation3 + $0x5f] sm:$0xff]
        %v4397 = vld [vmem:[#allocation3 + $0x67] sm:$0xff]
        %v4398 = vld [vmem:[#allocation3 + $0x6f] sm:$0xff]
        %v4399 = vld [vmem:[#allocation3 + $0x77] sm:$0xff]
        %v4400 = vld [vmem:[#allocation3 + $0x7f] sm:$0xff]
        %v4401 = vld [vmem:[#allocation3 + $0x87] sm:$0xff]
        %v4402 = vld [vmem:[#allocation3 + $0x8f] sm:$0xff]
        %v4403 = vld [vmem:[#allocation3 + $0x97] sm:$0xff]
        %v4404 = vld [vmem:[#allocation3 + $0x9f] sm:$0xff]
        %v4405 = vld [vmem:[#allocation3 + $0xa7] sm:$0xff]
        %v4406 = vld [vmem:[#allocation3 + $0xaf] sm:$0xff]
        %v4407 = vld [vmem:[#allocation3 + $0xb7] sm:$0xff]
        %v4408 = vld [vmem:[#allocation3 + $0xbf] sm:$0xff]
        %v4409 = vld [vmem:[#allocation3 + $0xc7] sm:$0xff]
        %v4410 = vld [vmem:[#allocation3 + $0xcf] sm:$0xff]
        %v4411 = vld [vmem:[#allocation3 + $0xd7] sm:$0xff]
        %v4412 = vld [vmem:[#allocation3 + $0xdf] sm:$0xff]
        %v4413 = vld [vmem:[#allocation3 + $0xe7] sm:$0xff]
        %v4414 = vld [vmem:[#allocation3 + $0xef] sm:$0xff]
        %v4415 = vld [vmem:[#allocation3 + $0xf7] sm:$0xff]
        %v4416 = vld [vmem:[#allocation3 + $0xff] sm:$0xff]
        %v4417 = vld [vmem:[#allocation3 + $0x107] sm:$0x3]
        %v4418 = vld [vmem:[#allocation3 + $0xf0] sm:$0xff]
        %v4419 = vld [vmem:[#allocation3 + $0xf8] sm:$0xff]
        %v4420 = vld [vmem:[#allocation3 + $0x100] sm:$0xff]
        %v4421 = vld [vmem:[#allocation3 + $0x108] sm:$0x3]
        %4453 = vrot.lane.b32.xlu0 %v4201, 32
        %v4454 = vpop.permute.xlu0 %4453
        %4455 = vrot.lane.b32.xlu0 %v4202, 32
        %v4456 = vpop.permute.xlu0 %4455
        %4457 = vrot.lane.b32.xlu0 %v4203, 32
        %v4458 = vpop.permute.xlu0 %4457
        %4459 = vrot.lane.b32.xlu0 %v4204, 32
        %v4460 = vpop.permute.xlu0 %4459
        %4461 = vrot.lane.b32.xlu0 %v4205, 32
        %v4462 = vpop.permute.xlu0 %4461
        %4463 = vrot.lane.b32.xlu0 %v4206, 32
        %v4464 = vpop.permute.xlu0 %4463
        %4465 = vrot.lane.b32.xlu0 %v4207, 32
        %v4466 = vpop.permute.xlu0 %4465
        %4467 = vrot.lane.b32.xlu0 %v4208, 32
        %v4468 = vpop.permute.xlu0 %4467
        %4469 = vrot.lane.b32.xlu0 %v4209, 32
        %v4470 = vpop.permute.xlu0 %4469
        %4471 = vrot.lane.b32.xlu0 %v4210, 32
        %v4472 = vpop.permute.xlu0 %4471
        %4473 = vrot.lane.b32.xlu0 %v4211, 32
        %v4474 = vpop.permute.xlu0 %4473
        %4475 = vrot.lane.b32.xlu0 %v4212, 32
        %v4476 = vpop.permute.xlu0 %4475
        %4477 = vrot.lane.b32.xlu0 %v4213, 32
        %v4478 = vpop.permute.xlu0 %4477
        %4479 = vrot.lane.b32.xlu0 %v4214, 32
        %v4480 = vpop.permute.xlu0 %4479
        %4481 = vrot.lane.b32.xlu0 %v4215, 32
        %v4482 = vpop.permute.xlu0 %4481
        %4483 = vrot.lane.b32.xlu0 %v4216, 32
        %v4484 = vpop.permute.xlu0 %4483
        %4485 = vrot.lane.b32.xlu0 %v4217, 32
        %v4486 = vpop.permute.xlu0 %4485
        %4487 = vrot.lane.b32.xlu0 %v4218, 32
        %v4488 = vpop.permute.xlu0 %4487
        %4489 = vrot.lane.b32.xlu0 %v4219, 32
        %v4490 = vpop.permute.xlu0 %4489
        %4491 = vrot.lane.b32.xlu0 %v4220, 32
        %v4492 = vpop.permute.xlu0 %4491
        %4493 = vrot.lane.b32.xlu0 %v4221, 32
        %v4494 = vpop.permute.xlu0 %4493
        %4495 = vrot.lane.b32.xlu0 %v4222, 32
        %v4496 = vpop.permute.xlu0 %4495
        %4497 = vrot.lane.b32.xlu0 %v4223, 32
        %v4498 = vpop.permute.xlu0 %4497
        %4499 = vrot.lane.b32.xlu0 %v4224, 32
        %v4500 = vpop.permute.xlu0 %4499
        %4501 = vrot.lane.b32.xlu0 %v4225, 32
        %v4502 = vpop.permute.xlu0 %4501
        %4503 = vrot.lane.b32.xlu0 %v4226, 32
        %v4504 = vpop.permute.xlu0 %4503
        %4505 = vrot.lane.b32.xlu0 %v4227, 32
        %v4506 = vpop.permute.xlu0 %4505
        %4507 = vrot.lane.b32.xlu0 %v4228, 32
        %v4508 = vpop.permute.xlu0 %4507
        %4509 = vrot.lane.b32.xlu0 %v4229, 32
        %v4510 = vpop.permute.xlu0 %4509
        %4511 = vrot.lane.b32.xlu0 %v4230, 32
        %v4512 = vpop.permute.xlu0 %4511
        %4513 = vrot.lane.b32.xlu0 %v4231, 32
        %v4514 = vpop.permute.xlu0 %4513
        %4577 = vrot.lane.b32.xlu0 %v4232, 64
        %v4578 = vpop.permute.xlu0 %4577
        %4579 = vrot.lane.b32.xlu0 %v4233, 64
        %v4580 = vpop.permute.xlu0 %4579
        %4581 = vrot.lane.b32.xlu0 %v4234, 64
        %v4582 = vpop.permute.xlu0 %4581
        %4583 = vrot.lane.b32.xlu0 %v4235, 64
        %v4584 = vpop.permute.xlu0 %4583
        %4585 = vrot.lane.b32.xlu0 %v4236, 64
        %v4586 = vpop.permute.xlu0 %4585
        %4587 = vrot.lane.b32.xlu0 %v4237, 64
        %v4588 = vpop.permute.xlu0 %4587
        %4589 = vrot.lane.b32.xlu0 %v4238, 64
        %v4590 = vpop.permute.xlu0 %4589
        %4591 = vrot.lane.b32.xlu0 %v4239, 64
        %v4592 = vpop.permute.xlu0 %4591
        %4593 = vrot.lane.b32.xlu0 %v4240, 64
        %v4594 = vpop.permute.xlu0 %4593
        %4595 = vrot.lane.b32.xlu0 %v4241, 64
        %v4596 = vpop.permute.xlu0 %4595
        %4597 = vrot.lane.b32.xlu0 %v4242, 64
        %v4598 = vpop.permute.xlu0 %4597
        %4599 = vrot.lane.b32.xlu0 %v4243, 64
        %v4600 = vpop.permute.xlu0 %4599
        %4601 = vrot.lane.b32.xlu0 %v4244, 64
        %v4602 = vpop.permute.xlu0 %4601
        %4603 = vrot.lane.b32.xlu0 %v4245, 64
        %v4604 = vpop.permute.xlu0 %4603
        %4605 = vrot.lane.b32.xlu0 %v4246, 64
        %v4606 = vpop.permute.xlu0 %4605
        %4607 = vrot.lane.b32.xlu0 %v4247, 64
        %v4608 = vpop.permute.xlu0 %4607
        %4609 = vrot.lane.b32.xlu0 %v4248, 64
        %v4610 = vpop.permute.xlu0 %4609
        %4611 = vrot.lane.b32.xlu0 %v4249, 64
        %v4612 = vpop.permute.xlu0 %4611
        %4613 = vrot.lane.b32.xlu0 %v4250, 64
        %v4614 = vpop.permute.xlu0 %4613
        %4615 = vrot.lane.b32.xlu0 %v4251, 64
        %v4616 = vpop.permute.xlu0 %4615
        %4617 = vrot.lane.b32.xlu0 %v4252, 64
        %v4618 = vpop.permute.xlu0 %4617
        %4619 = vrot.lane.b32.xlu0 %v4253, 64
        %v4620 = vpop.permute.xlu0 %4619
        %4621 = vrot.lane.b32.xlu0 %v4254, 64
        %v4622 = vpop.permute.xlu0 %4621
        %4623 = vrot.lane.b32.xlu0 %v4255, 64
        %v4624 = vpop.permute.xlu0 %4623
        %4625 = vrot.lane.b32.xlu0 %v4256, 64
        %v4626 = vpop.permute.xlu0 %4625
        %4627 = vrot.lane.b32.xlu0 %v4257, 64
        %v4628 = vpop.permute.xlu0 %4627
        %4629 = vrot.lane.b32.xlu0 %v4258, 64
        %v4630 = vpop.permute.xlu0 %4629
        %4631 = vrot.lane.b32.xlu0 %v4259, 64
        %v4632 = vpop.permute.xlu0 %4631
        %4633 = vrot.lane.b32.xlu0 %v4260, 64
        %v4634 = vpop.permute.xlu0 %4633
        %4635 = vrot.lane.b32.xlu0 %v4261, 64
        %v4636 = vpop.permute.xlu0 %4635
        %4637 = vrot.lane.b32.xlu0 %v4262, 64
        %v4638 = vpop.permute.xlu0 %4637
        %4701 = vrot.lane.b32.xlu0 %v4263, 96
        %v4702 = vpop.permute.xlu0 %4701
        %4703 = vrot.lane.b32.xlu0 %v4264, 96
        %v4704 = vpop.permute.xlu0 %4703
        %4705 = vrot.lane.b32.xlu0 %v4265, 96
        %v4706 = vpop.permute.xlu0 %4705
        %4707 = vrot.lane.b32.xlu0 %v4266, 96
        %v4708 = vpop.permute.xlu0 %4707
        %4709 = vrot.lane.b32.xlu0 %v4267, 96
        %v4710 = vpop.permute.xlu0 %4709
        %4711 = vrot.lane.b32.xlu0 %v4268, 96
        %v4712 = vpop.permute.xlu0 %4711
        %4713 = vrot.lane.b32.xlu0 %v4269, 96
        %v4714 = vpop.permute.xlu0 %4713
        %4715 = vrot.lane.b32.xlu0 %v4270, 96
        %v4716 = vpop.permute.xlu0 %4715
        %4717 = vrot.lane.b32.xlu0 %v4271, 96
        %v4718 = vpop.permute.xlu0 %4717
        %4719 = vrot.lane.b32.xlu0 %v4272, 96
        %v4720 = vpop.permute.xlu0 %4719
        %4721 = vrot.lane.b32.xlu0 %v4273, 96
        %v4722 = vpop.permute.xlu0 %4721
        %4723 = vrot.lane.b32.xlu0 %v4274, 96
        %v4724 = vpop.permute.xlu0 %4723
        %4725 = vrot.lane.b32.xlu0 %v4275, 96
        %v4726 = vpop.permute.xlu0 %4725
        %4727 = vrot.lane.b32.xlu0 %v4276, 96
        %v4728 = vpop.permute.xlu0 %4727
        %4729 = vrot.lane.b32.xlu0 %v4277, 96
        %v4730 = vpop.permute.xlu0 %4729
        %4731 = vrot.lane.b32.xlu0 %v4278, 96
        %v4732 = vpop.permute.xlu0 %4731
        %4733 = vrot.lane.b32.xlu0 %v4279, 96
        %v4734 = vpop.permute.xlu0 %4733
        %4735 = vrot.lane.b32.xlu0 %v4280, 96
        %v4736 = vpop.permute.xlu0 %4735
        %4737 = vrot.lane.b32.xlu0 %v4281, 96
        %v4738 = vpop.permute.xlu0 %4737
        %4739 = vrot.lane.b32.xlu0 %v4282, 96
        %v4740 = vpop.permute.xlu0 %4739
        %4741 = vrot.lane.b32.xlu0 %v4283, 96
        %v4742 = vpop.permute.xlu0 %4741
        %4743 = vrot.lane.b32.xlu0 %v4284, 96
        %v4744 = vpop.permute.xlu0 %4743
        %4745 = vrot.lane.b32.xlu0 %v4285, 96
        %v4746 = vpop.permute.xlu0 %4745
        %4747 = vrot.lane.b32.xlu0 %v4286, 96
        %v4748 = vpop.permute.xlu0 %4747
        %4749 = vrot.lane.b32.xlu0 %v4287, 96
        %v4750 = vpop.permute.xlu0 %4749
        %4751 = vrot.lane.b32.xlu0 %v4288, 96
        %v4752 = vpop.permute.xlu0 %4751
        %4753 = vrot.lane.b32.xlu0 %v4289, 96
        %v4754 = vpop.permute.xlu0 %4753
        %4755 = vrot.lane.b32.xlu0 %v4290, 96
        %v4756 = vpop.permute.xlu0 %4755
        %4757 = vrot.lane.b32.xlu0 %v4291, 96
        %v4758 = vpop.permute.xlu0 %4757
        %4759 = vrot.lane.b32.xlu0 %v4292, 96
        %v4760 = vpop.permute.xlu0 %4759
        %4761 = vrot.lane.b32.xlu0 %v4293, 96
        %v4762 = vpop.permute.xlu0 %4761
        %4825 = vrot.lane.b32.xlu0 %v4325, 32
        %v4826 = vpop.permute.xlu0 %4825
        %4827 = vrot.lane.b32.xlu0 %v4326, 32
        %v4828 = vpop.permute.xlu0 %4827
        %4829 = vrot.lane.b32.xlu0 %v4327, 32
        %v4830 = vpop.permute.xlu0 %4829
        %4831 = vrot.lane.b32.xlu0 %v4328, 32
        %v4832 = vpop.permute.xlu0 %4831
        %4833 = vrot.lane.b32.xlu0 %v4329, 32
        %v4834 = vpop.permute.xlu0 %4833
        %4835 = vrot.lane.b32.xlu0 %v4330, 32
        %v4836 = vpop.permute.xlu0 %4835
        %4837 = vrot.lane.b32.xlu0 %v4331, 32
        %v4838 = vpop.permute.xlu0 %4837
        %4839 = vrot.lane.b32.xlu0 %v4332, 32
        %v4840 = vpop.permute.xlu0 %4839
        %4841 = vrot.lane.b32.xlu0 %v4333, 32
        %v4842 = vpop.permute.xlu0 %4841
        %4843 = vrot.lane.b32.xlu0 %v4334, 32
        %v4844 = vpop.permute.xlu0 %4843
        %4845 = vrot.lane.b32.xlu0 %v4335, 32
        %v4846 = vpop.permute.xlu0 %4845
        %4847 = vrot.lane.b32.xlu0 %v4336, 32
        %v4848 = vpop.permute.xlu0 %4847
        %4849 = vrot.lane.b32.xlu0 %v4337, 32
        %v4850 = vpop.permute.xlu0 %4849
        %4851 = vrot.lane.b32.xlu0 %v4338, 32
        %v4852 = vpop.permute.xlu0 %4851
        %4853 = vrot.lane.b32.xlu0 %v4339, 32
        %v4854 = vpop.permute.xlu0 %4853
        %4855 = vrot.lane.b32.xlu0 %v4340, 32
        %v4856 = vpop.permute.xlu0 %4855
        %4857 = vrot.lane.b32.xlu0 %v4341, 32
        %v4858 = vpop.permute.xlu0 %4857
        %4859 = vrot.lane.b32.xlu0 %v4342, 32
        %v4860 = vpop.permute.xlu0 %4859
        %4861 = vrot.lane.b32.xlu0 %v4343, 32
        %v4862 = vpop.permute.xlu0 %4861
        %4863 = vrot.lane.b32.xlu0 %v4344, 32
        %v4864 = vpop.permute.xlu0 %4863
        %4865 = vrot.lane.b32.xlu0 %v4345, 32
        %v4866 = vpop.permute.xlu0 %4865
        %4867 = vrot.lane.b32.xlu0 %v4346, 32
        %v4868 = vpop.permute.xlu0 %4867
        %4869 = vrot.lane.b32.xlu0 %v4347, 32
        %v4870 = vpop.permute.xlu0 %4869
        %4871 = vrot.lane.b32.xlu0 %v4348, 32
        %v4872 = vpop.permute.xlu0 %4871
        %4873 = vrot.lane.b32.xlu0 %v4349, 32
        %v4874 = vpop.permute.xlu0 %4873
        %4875 = vrot.lane.b32.xlu0 %v4350, 32
        %v4876 = vpop.permute.xlu0 %4875
        %4877 = vrot.lane.b32.xlu0 %v4351, 32
        %v4878 = vpop.permute.xlu0 %4877
        %4879 = vrot.lane.b32.xlu0 %v4352, 32
        %v4880 = vpop.permute.xlu0 %4879
        %4881 = vrot.lane.b32.xlu0 %v4353, 32
        %v4882 = vpop.permute.xlu0 %4881
        %4883 = vrot.lane.b32.xlu0 %v4354, 32
        %v4884 = vpop.permute.xlu0 %4883
        %4885 = vrot.lane.b32.xlu0 %v4355, 32
        %v4886 = vpop.permute.xlu0 %4885
        %4949 = vrot.lane.b32.xlu0 %v4356, 64
        %v4950 = vpop.permute.xlu0 %4949
        %4951 = vrot.lane.b32.xlu0 %v4357, 64
        %v4952 = vpop.permute.xlu0 %4951
        %4953 = vrot.lane.b32.xlu0 %v4358, 64
        %v4954 = vpop.permute.xlu0 %4953
        %4955 = vrot.lane.b32.xlu0 %v4359, 64
        %v4956 = vpop.permute.xlu0 %4955
        %4957 = vrot.lane.b32.xlu0 %v4360, 64
        %v4958 = vpop.permute.xlu0 %4957
        %4959 = vrot.lane.b32.xlu0 %v4361, 64
        %v4960 = vpop.permute.xlu0 %4959
        %4961 = vrot.lane.b32.xlu0 %v4362, 64
        %v4962 = vpop.permute.xlu0 %4961
        %4963 = vrot.lane.b32.xlu0 %v4363, 64
        %v4964 = vpop.permute.xlu0 %4963
        %4965 = vrot.lane.b32.xlu0 %v4364, 64
        %v4966 = vpop.permute.xlu0 %4965
        %4967 = vrot.lane.b32.xlu0 %v4365, 64
        %v4968 = vpop.permute.xlu0 %4967
        %4969 = vrot.lane.b32.xlu0 %v4366, 64
        %v4970 = vpop.permute.xlu0 %4969
        %4971 = vrot.lane.b32.xlu0 %v4367, 64
        %v4972 = vpop.permute.xlu0 %4971
        %4973 = vrot.lane.b32.xlu0 %v4368, 64
        %v4974 = vpop.permute.xlu0 %4973
        %4975 = vrot.lane.b32.xlu0 %v4369, 64
        %v4976 = vpop.permute.xlu0 %4975
        %4977 = vrot.lane.b32.xlu0 %v4370, 64
        %v4978 = vpop.permute.xlu0 %4977
        %4979 = vrot.lane.b32.xlu0 %v4371, 64
        %v4980 = vpop.permute.xlu0 %4979
        %4981 = vrot.lane.b32.xlu0 %v4372, 64
        %v4982 = vpop.permute.xlu0 %4981
        %4983 = vrot.lane.b32.xlu0 %v4373, 64
        %v4984 = vpop.permute.xlu0 %4983
        %4985 = vrot.lane.b32.xlu0 %v4374, 64
        %v4986 = vpop.permute.xlu0 %4985
        %4987 = vrot.lane.b32.xlu0 %v4375, 64
        %v4988 = vpop.permute.xlu0 %4987
        %4989 = vrot.lane.b32.xlu0 %v4376, 64
        %v4990 = vpop.permute.xlu0 %4989
        %4991 = vrot.lane.b32.xlu0 %v4377, 64
        %v4992 = vpop.permute.xlu0 %4991
        %4993 = vrot.lane.b32.xlu0 %v4378, 64
        %v4994 = vpop.permute.xlu0 %4993
        %4995 = vrot.lane.b32.xlu0 %v4379, 64
        %v4996 = vpop.permute.xlu0 %4995
        %4997 = vrot.lane.b32.xlu0 %v4380, 64
        %v4998 = vpop.permute.xlu0 %4997
        %4999 = vrot.lane.b32.xlu0 %v4381, 64
        %v5000 = vpop.permute.xlu0 %4999
        %5001 = vrot.lane.b32.xlu0 %v4382, 64
        %v5002 = vpop.permute.xlu0 %5001
        %5003 = vrot.lane.b32.xlu0 %v4383, 64
        %v5004 = vpop.permute.xlu0 %5003
        %5005 = vrot.lane.b32.xlu0 %v4384, 64
        %v5006 = vpop.permute.xlu0 %5005
        %5007 = vrot.lane.b32.xlu0 %v4385, 64
        %v5008 = vpop.permute.xlu0 %5007
        %5009 = vrot.lane.b32.xlu0 %v4386, 64
        %v5010 = vpop.permute.xlu0 %5009
        %5073 = vrot.lane.b32.xlu0 %v4387, 96
        %v5074 = vpop.permute.xlu0 %5073
        %5075 = vrot.lane.b32.xlu0 %v4388, 96
        %v5076 = vpop.permute.xlu0 %5075
        %5077 = vrot.lane.b32.xlu0 %v4389, 96
        %v5078 = vpop.permute.xlu0 %5077
        %5079 = vrot.lane.b32.xlu0 %v4390, 96
        %v5080 = vpop.permute.xlu0 %5079
        %5081 = vrot.lane.b32.xlu0 %v4391, 96
        %v5082 = vpop.permute.xlu0 %5081
        %5083 = vrot.lane.b32.xlu0 %v4392, 96
        %v5084 = vpop.permute.xlu0 %5083
        %5085 = vrot.lane.b32.xlu0 %v4393, 96
        %v5086 = vpop.permute.xlu0 %5085
        %5087 = vrot.lane.b32.xlu0 %v4394, 96
        %v5088 = vpop.permute.xlu0 %5087
        %5089 = vrot.lane.b32.xlu0 %v4395, 96
        %v5090 = vpop.permute.xlu0 %5089
        %5091 = vrot.lane.b32.xlu0 %v4396, 96
        %v5092 = vpop.permute.xlu0 %5091
        %5093 = vrot.lane.b32.xlu0 %v4397, 96
        %v5094 = vpop.permute.xlu0 %5093
        %5095 = vrot.lane.b32.xlu0 %v4398, 96
        %v5096 = vpop.permute.xlu0 %5095
        %5097 = vrot.lane.b32.xlu0 %v4399, 96
        %v5098 = vpop.permute.xlu0 %5097
        %5099 = vrot.lane.b32.xlu0 %v4400, 96
        %v5100 = vpop.permute.xlu0 %5099
        %5101 = vrot.lane.b32.xlu0 %v4401, 96
        %v5102 = vpop.permute.xlu0 %5101
        %5103 = vrot.lane.b32.xlu0 %v4402, 96
        %v5104 = vpop.permute.xlu0 %5103
        %5105 = vrot.lane.b32.xlu0 %v4403, 96
        %v5106 = vpop.permute.xlu0 %5105
        %5107 = vrot.lane.b32.xlu0 %v4404, 96
        %v5108 = vpop.permute.xlu0 %5107
        %5109 = vrot.lane.b32.xlu0 %v4405, 96
        %v5110 = vpop.permute.xlu0 %5109
        %5111 = vrot.lane.b32.xlu0 %v4406, 96
        %v5112 = vpop.permute.xlu0 %5111
        %5113 = vrot.lane.b32.xlu0 %v4407, 96
        %v5114 = vpop.permute.xlu0 %5113
        %5115 = vrot.lane.b32.xlu0 %v4408, 96
        %v5116 = vpop.permute.xlu0 %5115
        %5117 = vrot.lane.b32.xlu0 %v4409, 96
        %v5118 = vpop.permute.xlu0 %5117
        %5119 = vrot.lane.b32.xlu0 %v4410, 96
        %v5120 = vpop.permute.xlu0 %5119
        %5121 = vrot.lane.b32.xlu0 %v4411, 96
        %v5122 = vpop.permute.xlu0 %5121
        %5123 = vrot.lane.b32.xlu0 %v4412, 96
        %v5124 = vpop.permute.xlu0 %5123
        %5125 = vrot.lane.b32.xlu0 %v4413, 96
        %v5126 = vpop.permute.xlu0 %5125
        %5127 = vrot.lane.b32.xlu0 %v4414, 96
        %v5128 = vpop.permute.xlu0 %5127
        %5129 = vrot.lane.b32.xlu0 %v4415, 96
        %v5130 = vpop.permute.xlu0 %5129
        %5131 = vrot.lane.b32.xlu0 %v4416, 96
        %v5132 = vpop.permute.xlu0 %5131
        %5133 = vrot.lane.b32.xlu0 %v4417, 96
        %v5134 = vpop.permute.xlu0 %5133
        %v5166 = vsel %vm2714, %v4170, %v4454
        %v5167 = vsel %vm2714, %v4171, %v4456
        %v5168 = vsel %vm2714, %v4172, %v4458
        %v5169 = vsel %vm2714, %v4173, %v4460
        %v5170 = vsel %vm2714, %v4174, %v4462
        %v5171 = vsel %vm2714, %v4175, %v4464
        %v5172 = vsel %vm2714, %v4176, %v4466
        %v5173 = vsel %vm2714, %v4177, %v4468
        %v5174 = vsel %vm2714, %v4178, %v4470
        %v5175 = vsel %vm2714, %v4179, %v4472
        %v5176 = vsel %vm2714, %v4180, %v4474
        %v5177 = vsel %vm2714, %v4181, %v4476
        %v5178 = vsel %vm2714, %v4182, %v4478
        %v5179 = vsel %vm2714, %v4183, %v4480
        %v5180 = vsel %vm2714, %v4184, %v4482
        %v5181 = vsel %vm2714, %v4185, %v4484
        %v5182 = vsel %vm2714, %v4186, %v4486
        %v5183 = vsel %vm2714, %v4187, %v4488
        %v5184 = vsel %vm2714, %v4188, %v4490
        %v5185 = vsel %vm2714, %v4189, %v4492
        %v5186 = vsel %vm2714, %v4190, %v4494
        %v5187 = vsel %vm2714, %v4191, %v4496
        %v5188 = vsel %vm2714, %v4192, %v4498
        %v5189 = vsel %vm2714, %v4193, %v4500
        %v5190 = vsel %vm2714, %v4194, %v4502
        %v5191 = vsel %vm2714, %v4195, %v4504
        %v5192 = vsel %vm2714, %v4196, %v4506
        %v5193 = vsel %vm2714, %v4197, %v4508
        %v5194 = vsel %vm2714, %v4198, %v4510
        %v5195 = vsel %vm2714, %v4199, %v4512
        %v5196 = vsel %vm2714, %v4200, %v4514
        %vm5197 = vcmask 523264
        %v5198 = vsel %vm5197, %v5166, %v4578
        %v5199 = vsel %vm5197, %v5167, %v4580
        %v5200 = vsel %vm5197, %v5168, %v4582
        %v5201 = vsel %vm5197, %v5169, %v4584
        %v5202 = vsel %vm5197, %v5170, %v4586
        %v5203 = vsel %vm5197, %v5171, %v4588
        %v5204 = vsel %vm5197, %v5172, %v4590
        %v5205 = vsel %vm5197, %v5173, %v4592
        %v5206 = vsel %vm5197, %v5174, %v4594
        %v5207 = vsel %vm5197, %v5175, %v4596
        %v5208 = vsel %vm5197, %v5176, %v4598
        %v5209 = vsel %vm5197, %v5177, %v4600
        %v5210 = vsel %vm5197, %v5178, %v4602
        %v5211 = vsel %vm5197, %v5179, %v4604
        %v5212 = vsel %vm5197, %v5180, %v4606
        %v5213 = vsel %vm5197, %v5181, %v4608
        %v5214 = vsel %vm5197, %v5182, %v4610
        %v5215 = vsel %vm5197, %v5183, %v4612
        %v5216 = vsel %vm5197, %v5184, %v4614
        %v5217 = vsel %vm5197, %v5185, %v4616
        %v5218 = vsel %vm5197, %v5186, %v4618
        %v5219 = vsel %vm5197, %v5187, %v4620
        %v5220 = vsel %vm5197, %v5188, %v4622
        %v5221 = vsel %vm5197, %v5189, %v4624
        %v5222 = vsel %vm5197, %v5190, %v4626
        %v5223 = vsel %vm5197, %v5191, %v4628
        %v5224 = vsel %vm5197, %v5192, %v4630
        %v5225 = vsel %vm5197, %v5193, %v4632
        %v5226 = vsel %vm5197, %v5194, %v4634
        %v5227 = vsel %vm5197, %v5195, %v4636
        %v5228 = vsel %vm5197, %v5196, %v4638
        %vm5229 = vcmask 785408
        %v5230 = vsel %vm5229, %v5198, %v4702
        %v5231 = vsel %vm5229, %v5199, %v4704
        %v5232 = vsel %vm5229, %v5200, %v4706
        %v5233 = vsel %vm5229, %v5201, %v4708
        %v5234 = vsel %vm5229, %v5202, %v4710
        %v5235 = vsel %vm5229, %v5203, %v4712
        %v5236 = vsel %vm5229, %v5204, %v4714
        %v5237 = vsel %vm5229, %v5205, %v4716
        %v5238 = vsel %vm5229, %v5206, %v4718
        %v5239 = vsel %vm5229, %v5207, %v4720
        %v5240 = vsel %vm5229, %v5208, %v4722
        %v5241 = vsel %vm5229, %v5209, %v4724
        %v5242 = vsel %vm5229, %v5210, %v4726
        %v5243 = vsel %vm5229, %v5211, %v4728
        %v5244 = vsel %vm5229, %v5212, %v4730
        %v5245 = vsel %vm5229, %v5213, %v4732
        %v5246 = vsel %vm5229, %v5214, %v4734
        %v5247 = vsel %vm5229, %v5215, %v4736
        %v5248 = vsel %vm5229, %v5216, %v4738
        %v5249 = vsel %vm5229, %v5217, %v4740
        %v5250 = vsel %vm5229, %v5218, %v4742
        %v5251 = vsel %vm5229, %v5219, %v4744
        %v5252 = vsel %vm5229, %v5220, %v4746
        %v5253 = vsel %vm5229, %v5221, %v4748
        %v5254 = vsel %vm5229, %v5222, %v4750
        %v5255 = vsel %vm5229, %v5223, %v4752
        %v5256 = vsel %vm5229, %v5224, %v4754
        %v5257 = vsel %vm5229, %v5225, %v4756
        %v5258 = vsel %vm5229, %v5226, %v4758
        %v5259 = vsel %vm5229, %v5227, %v4760
        %v5260 = vsel %vm5229, %v5228, %v4762
        %v5261 = vsel %vm2714, %v4294, %v4826
        %v5262 = vsel %vm2714, %v4295, %v4828
        %v5263 = vsel %vm2714, %v4296, %v4830
        %v5264 = vsel %vm2714, %v4297, %v4832
        %v5265 = vsel %vm2714, %v4298, %v4834
        %v5266 = vsel %vm2714, %v4299, %v4836
        %v5267 = vsel %vm2714, %v4300, %v4838
        %v5268 = vsel %vm2714, %v4301, %v4840
        %v5269 = vsel %vm2714, %v4302, %v4842
        %v5270 = vsel %vm2714, %v4303, %v4844
        %v5271 = vsel %vm2714, %v4304, %v4846
        %v5272 = vsel %vm2714, %v4305, %v4848
        %v5273 = vsel %vm2714, %v4306, %v4850
        %v5274 = vsel %vm2714, %v4307, %v4852
        %v5275 = vsel %vm2714, %v4308, %v4854
        %v5276 = vsel %vm2714, %v4309, %v4856
        %v5277 = vsel %vm2714, %v4310, %v4858
        %v5278 = vsel %vm2714, %v4311, %v4860
        %v5279 = vsel %vm2714, %v4312, %v4862
        %v5280 = vsel %vm2714, %v4313, %v4864
        %v5281 = vsel %vm2714, %v4314, %v4866
        %v5282 = vsel %vm2714, %v4315, %v4868
        %v5283 = vsel %vm2714, %v4316, %v4870
        %v5284 = vsel %vm2714, %v4317, %v4872
        %v5285 = vsel %vm2714, %v4318, %v4874
        %v5286 = vsel %vm2714, %v4319, %v4876
        %v5287 = vsel %vm2714, %v4320, %v4878
        %v5288 = vsel %vm2714, %v4321, %v4880
        %v5289 = vsel %vm2714, %v4322, %v4882
        %v5290 = vsel %vm2714, %v4323, %v4884
        %v5291 = vsel %vm2714, %v4324, %v4886
        %v5292 = vsel %vm5197, %v5261, %v4950
        %v5293 = vsel %vm5197, %v5262, %v4952
        %v5294 = vsel %vm5197, %v5263, %v4954
        %v5295 = vsel %vm5197, %v5264, %v4956
        %v5296 = vsel %vm5197, %v5265, %v4958
        %v5297 = vsel %vm5197, %v5266, %v4960
        %v5298 = vsel %vm5197, %v5267, %v4962
        %v5299 = vsel %vm5197, %v5268, %v4964
        %v5300 = vsel %vm5197, %v5269, %v4966
        %v5301 = vsel %vm5197, %v5270, %v4968
        %v5302 = vsel %vm5197, %v5271, %v4970
        %v5303 = vsel %vm5197, %v5272, %v4972
        %v5304 = vsel %vm5197, %v5273, %v4974
        %v5305 = vsel %vm5197, %v5274, %v4976
        %v5306 = vsel %vm5197, %v5275, %v4978
        %v5307 = vsel %vm5197, %v5276, %v4980
        %v5308 = vsel %vm5197, %v5277, %v4982
        %v5309 = vsel %vm5197, %v5278, %v4984
        %v5310 = vsel %vm5197, %v5279, %v4986
        %v5311 = vsel %vm5197, %v5280, %v4988
        %v5312 = vsel %vm5197, %v5281, %v4990
        %v5313 = vsel %vm5197, %v5282, %v4992
        %v5314 = vsel %vm5197, %v5283, %v4994
        %v5315 = vsel %vm5197, %v5284, %v4996
        %v5316 = vsel %vm5197, %v5285, %v4998
        %v5317 = vsel %vm5197, %v5286, %v5000
        %v5318 = vsel %vm5197, %v5287, %v5002
        %v5319 = vsel %vm5197, %v5288, %v5004
        %v5320 = vsel %vm5197, %v5289, %v5006
        %v5321 = vsel %vm5197, %v5290, %v5008
        %v5322 = vsel %vm5197, %v5291, %v5010
        %v5323 = vsel %vm5229, %v5292, %v5074
        %v5324 = vsel %vm5229, %v5293, %v5076
        %v5325 = vsel %vm5229, %v5294, %v5078
        %v5326 = vsel %vm5229, %v5295, %v5080
        %v5327 = vsel %vm5229, %v5296, %v5082
        %v5328 = vsel %vm5229, %v5297, %v5084
        %v5329 = vsel %vm5229, %v5298, %v5086
        %v5330 = vsel %vm5229, %v5299, %v5088
        %v5331 = vsel %vm5229, %v5300, %v5090
        %v5332 = vsel %vm5229, %v5301, %v5092
        %v5333 = vsel %vm5229, %v5302, %v5094
        %v5334 = vsel %vm5229, %v5303, %v5096
        %v5335 = vsel %vm5229, %v5304, %v5098
        %v5336 = vsel %vm5229, %v5305, %v5100
        %v5337 = vsel %vm5229, %v5306, %v5102
        %v5338 = vsel %vm5229, %v5307, %v5104
        %v5339 = vsel %vm5229, %v5308, %v5106
        %v5340 = vsel %vm5229, %v5309, %v5108
        %v5341 = vsel %vm5229, %v5310, %v5110
        %v5342 = vsel %vm5229, %v5311, %v5112
        %v5343 = vsel %vm5229, %v5312, %v5114
        %v5344 = vsel %vm5229, %v5313, %v5116
        %v5345 = vsel %vm5229, %v5314, %v5118
        %v5346 = vsel %vm5229, %v5315, %v5120
        %v5347 = vsel %vm5229, %v5316, %v5122
        %v5348 = vsel %vm5229, %v5317, %v5124
        %v5349 = vsel %vm5229, %v5318, %v5126
        %v5350 = vsel %vm5229, %v5319, %v5128
        %v5351 = vsel %vm5229, %v5320, %v5130
        %v5352 = vsel %vm5229, %v5321, %v5132
        %v5353 = vsel %vm5229, %v5322, %v5134
        %v5354 = vpack.c.bf16 %v5231, %v5230
        %v5355 = vpack.c.bf16 %v5324, %v5323
        %v5356 = vpack.c.bf16 %v4174, %v4173
        %v5357 = vpack.c.bf16 %v5233, %v5232
        %v5358 = vpack.c.bf16 %v5326, %v5325
        %v5359 = vpack.c.bf16 %v4176, %v4175
        %v5360 = vpack.c.bf16 %v5235, %v5234
        %v5361 = vpack.c.bf16 %v5328, %v5327
        %v5362 = vpack.c.bf16 %v4178, %v4177
        %v5363 = vpack.c.bf16 %v5237, %v5236
        %v5364 = vpack.c.bf16 %v5330, %v5329
        %v5365 = vpack.c.bf16 %v4180, %v4179
        %v5366 = vpack.c.bf16 %v5239, %v5238
        %v5367 = vpack.c.bf16 %v5332, %v5331
        %v5368 = vpack.c.bf16 %v4182, %v4181
        %v5369 = vpack.c.bf16 %v5241, %v5240
        %v5370 = vpack.c.bf16 %v5334, %v5333
        %v5371 = vpack.c.bf16 %v4184, %v4183
        %v5372 = vpack.c.bf16 %v5243, %v5242
        %v5373 = vpack.c.bf16 %v5336, %v5335
        %v5374 = vpack.c.bf16 %v4186, %v4185
        %v5375 = vpack.c.bf16 %v5245, %v5244
        %v5376 = vpack.c.bf16 %v5338, %v5337
        %v5377 = vpack.c.bf16 %v4188, %v4187
        %v5378 = vpack.c.bf16 %v5247, %v5246
        %v5379 = vpack.c.bf16 %v5340, %v5339
        %v5380 = vpack.c.bf16 %v4190, %v4189
        %v5381 = vpack.c.bf16 %v5249, %v5248
        %v5382 = vpack.c.bf16 %v5342, %v5341
        %v5383 = vpack.c.bf16 %v4192, %v4191
        %v5384 = vpack.c.bf16 %v5251, %v5250
        %v5385 = vpack.c.bf16 %v5344, %v5343
        %v5386 = vpack.c.bf16 %v4194, %v4193
        %v5387 = vpack.c.bf16 %v5253, %v5252
        %v5388 = vpack.c.bf16 %v5346, %v5345
        %v5389 = vpack.c.bf16 %v4196, %v4195
        %v5390 = vpack.c.bf16 %v5255, %v5254
        %v5391 = vpack.c.bf16 %v5348, %v5347
        %v5392 = vpack.c.bf16 %v4198, %v4197
        %v5393 = vpack.c.bf16 %v5257, %v5256
        %v5394 = vpack.c.bf16 %v5350, %v5349
        %v5395 = vpack.c.bf16 %v4418, %v4199
        %v5396 = vpack.c.bf16 %v5259, %v5258
        %v5397 = vpack.c.bf16 %v5352, %v5351
        %v5398 = vpack.c.bf16 %v4420, %v4419
        %v5399 = vpack.c.bf16 %v5260, %v5260
        %v5400 = vpack.c.bf16 %v5353, %v5353
        %v5401 = vpack.c.bf16 %v4421, %v4421
        %v5402 = vld [vmem:[%s624] sm:$0xf]
        %v5403 = vld [vmem:[%s624 + $0x4] sm:$0xf]
        %v5404 = vld [vmem:[%s624 + $0x8] sm:$0xf]
        %v5405 = vld [vmem:[%s624 + $0xc] sm:$0xf]
        %v5406 = vld [vmem:[%s624 + $0x10] sm:$0xf]
        %v5407 = vld [vmem:[%s624 + $0x14] sm:$0xf]
        %v5408 = vld [vmem:[%s624 + $0x18] sm:$0xf]
        %v5409 = vld [vmem:[%s624 + $0x1c] sm:$0xf]
        %v5410 = vld [vmem:[%s624 + $0x20] sm:$0xf]
        %v5411 = vld [vmem:[%s624 + $0x24] sm:$0xf]
        %v5412 = vld [vmem:[%s624 + $0x28] sm:$0xf]
        %v5413 = vld [vmem:[%s624 + $0x2c] sm:$0xf]
        %v5414 = vld [vmem:[%s624 + $0x30] sm:$0xf]
        %v5415 = vld [vmem:[%s624 + $0x34] sm:$0xf]
        %v5416 = vld [vmem:[%s624 + $0x38] sm:$0xf]
        %v5417 = vld [vmem:[%s624 + $0x3c] sm:$0xf]
        %v5418 = vld [vmem:[%s624 + $0x40] sm:$0xf]
        %v5419 = vld [vmem:[%s624 + $0x44] sm:$0xf]
        %v5420 = vld [vmem:[%s624 + $0x48] sm:$0xf]
        %v5421 = vld [vmem:[%s624 + $0x4c] sm:$0xf]
        %v5422 = vld [vmem:[%s624 + $0x50] sm:$0xf]
        %v5423 = vld [vmem:[%s624 + $0x54] sm:$0xf]
        %v5424 = vld [vmem:[%s624 + $0x58] sm:$0xf]
        %v5425 = vld [vmem:[%s624 + $0x5c] sm:$0xf]
        %v5426 = vld [vmem:[%s624 + $0x60] sm:$0xf]
        %v5427 = vld [vmem:[%s624 + $0x64] sm:$0xf]
        %v5428 = vld [vmem:[%s624 + $0x68] sm:$0xf]
        %v5429 = vld [vmem:[%s624 + $0x6c] sm:$0xf]
        %v5430 = vld [vmem:[%s624 + $0x70] sm:$0xf]
        %v5431 = vld [vmem:[%s624 + $0x74] sm:$0xf]
        %v5432 = vld [vmem:[%s624 + $0x78] sm:$0xf]
        %v5433 = vld [vmem:[%s624 + $0x7c] sm:$0xf]
        %v5434 = vld [vmem:[%s624 + $0x80] sm:$0xf]
        %v5435 = vld [vmem:[%s624 + $0x84] sm:$0xf]
        %v5436 = vld [vmem:[%s624 + $0x88] sm:$0xf]
        %v5437 = vld [vmem:[%s624 + $0x8c] sm:$0xf]
        %v5438 = vld [vmem:[%s648 + $0x2] sm:$0x1]
        %v5439 = vlaneseq
        %v5440 = vshrl.u32 %v5439, 7
        %v5441 = vsub.s32 0, %v5440
        %v5442 = vrot.slane %v5438, %v5441
        %v5479 = vunpack.c.l.b16 %v5402
        %v5480 = vunpack.c.l.b16 %v5403
        %v5481 = vunpack.c.l.b16 %v5404
        %v5482 = vunpack.c.l.b16 %v5405
        %v5483 = vunpack.c.l.b16 %v5406
        %v5484 = vunpack.c.l.b16 %v5407
        %v5485 = vunpack.c.l.b16 %v5408
        %v5486 = vunpack.c.l.b16 %v5409
        %v5487 = vunpack.c.l.b16 %v5410
        %v5488 = vunpack.c.l.b16 %v5411
        %v5489 = vunpack.c.l.b16 %v5412
        %v5490 = vunpack.c.l.b16 %v5413
        %v5491 = vunpack.c.l.b16 %v5414
        %v5492 = vunpack.c.l.b16 %v5415
        %v5493 = vunpack.c.l.b16 %v5416
        %v5494 = vunpack.c.l.b16 %v5417
        %v5495 = vunpack.c.l.b16 %v5418
        %v5496 = vunpack.c.l.b16 %v5419
        %v5497 = vunpack.c.l.b16 %v5420
        %v5498 = vunpack.c.l.b16 %v5421
        %v5499 = vunpack.c.l.b16 %v5422
        %v5500 = vunpack.c.l.b16 %v5423
        %v5501 = vunpack.c.l.b16 %v5424
        %v5502 = vunpack.c.l.b16 %v5425
        %v5503 = vunpack.c.l.b16 %v5426
        %v5504 = vunpack.c.l.b16 %v5427
        %v5505 = vunpack.c.l.b16 %v5428
        %v5506 = vunpack.c.l.b16 %v5429
        %v5507 = vunpack.c.l.b16 %v5430
        %v5508 = vunpack.c.l.b16 %v5431
        %v5509 = vunpack.c.l.b16 %v5432
        %v5510 = vunpack.c.l.b16 %v5433
        %v5511 = vunpack.c.l.b16 %v5434
        %v5512 = vunpack.c.l.b16 %v5435
        %v5513 = vunpack.c.l.b16 %v5436
        %v5514 = vunpack.c.l.b16 %v5437
        %v5515 = vpack.c.b16 %v5480, %v5479
        %v5516 = vpack.c.b16 %v5482, %v5481
        %v5517 = vpack.c.b16 %v5484, %v5483
        %v5518 = vpack.c.b16 %v5486, %v5485
        %v5519 = vpack.c.b16 %v5488, %v5487
        %v5520 = vpack.c.b16 %v5490, %v5489
        %v5521 = vpack.c.b16 %v5492, %v5491
        %v5522 = vpack.c.b16 %v5494, %v5493
        %v5523 = vpack.c.b16 %v5496, %v5495
        %v5524 = vpack.c.b16 %v5498, %v5497
        %v5525 = vpack.c.b16 %v5500, %v5499
        %v5526 = vpack.c.b16 %v5502, %v5501
        %v5527 = vpack.c.b16 %v5504, %v5503
        %v5528 = vpack.c.b16 %v5506, %v5505
        %v5529 = vpack.c.b16 %v5508, %v5507
        %v5530 = vpack.c.b16 %v5510, %v5509
        %v5531 = vpack.c.b16 %v5512, %v5511
        %v5532 = vpack.c.b16 %v5514, %v5513
        %v5552 = vsel %vm2714, %v5356, 0
        %v5555 = vsel %vm2714, %v5359, 0
        %v5558 = vsel %vm2714, %v5362, 0
        %v5561 = vsel %vm2714, %v5365, 0
        %v5564 = vsel %vm2714, %v5368, 0
        %v5567 = vsel %vm2714, %v5371, 0
        %v5570 = vsel %vm2714, %v5374, 0
        %v5573 = vsel %vm2714, %v5377, 0
        %v5576 = vsel %vm2714, %v5380, 0
        %v5579 = vsel %vm2714, %v5383, 0
        %v5582 = vsel %vm2714, %v5386, 0
        %v5585 = vsel %vm2714, %v5389, 0
        %v5588 = vsel %vm2714, %v5392, 0
        %v5591 = vsel %vm2714, %v5395, 0
        %v5594 = vsel %vm2714, %v5398, 0
        %v5597 = vsel %vm2714, %v5401, 0
        %5599 = vmatprep.subr.bf16.mxu0 0
        %5600 = vmatpush1.bf16.msra.mxu0 %v5515
        %5601 = vmatprep.subr.bf16.mxu0 0
        %5602 = vmatpush1.bf16.msra.mxu0 %v5516
        %5603 = vmatprep.subr.bf16.mxu0 0
        %5604 = vmatpush1.bf16.msra.mxu0 %v5517
        %5605 = vmatprep.subr.bf16.mxu0 0
        %5606 = vmatpush1.bf16.msra.mxu0 %v5518
        %5607 = vmatprep.subr.bf16.mxu0 0
        %5608 = vmatpush1.bf16.msra.mxu0 %v5519
        %5609 = vmatprep.subr.bf16.mxu0 0
        %5610 = vmatpush1.bf16.msra.mxu0 %v5520
        %5611 = vmatprep.subr.bf16.mxu0 0
        %5612 = vmatpush1.bf16.msra.mxu0 %v5521
        %5613 = vmatprep.subr.bf16.mxu0 0
        %5614 = vmatpush1.bf16.msra.mxu0 %v5522
        %5615 = vmatprep.subr.bf16.mxu0 0
        %5616 = vmatpush1.bf16.msra.mxu0 %v5523
        %5617 = vmatprep.subr.bf16.mxu0 0
        %5618 = vmatpush1.bf16.msra.mxu0 %v5524
        %5619 = vmatprep.subr.bf16.mxu0 0
        %5620 = vmatpush1.bf16.msra.mxu0 %v5525
        %5621 = vmatprep.subr.bf16.mxu0 0
        %5622 = vmatpush1.bf16.msra.mxu0 %v5526
        %5623 = vmatprep.subr.bf16.mxu0 0
        %5624 = vmatpush1.bf16.msra.mxu0 %v5527
        %5625 = vmatprep.subr.bf16.mxu0 0
        %5626 = vmatpush1.bf16.msra.mxu0 %v5528
        %5627 = vmatprep.subr.bf16.mxu0 0
        %5628 = vmatpush1.bf16.msra.mxu0 %v5529
        %5629 = vmatprep.subr.bf16.mxu0 0
        %5630 = vmatpush1.bf16.msra.mxu0 %v5530
        %5631 = vmatprep.mubr.bf16.mxu0 %v5355
        %5632 = vmatmul.mubr.bf16.gmra.mrb[0].mxu0 %v5354
        %v5633 = vpop.f32.mrb[0].mxu0
        %v5634 = vadd.f32 %v5442, %v5633
        %v5635 = vpop.f32.mrb[0].mxu0
        %v5636 = vpop.f32.mrb[0].mxu0
        %v5637 = vadd.f32 %v5442, %v5636
        %v5638 = vpop.f32.mrb[0].mxu0
        %5639 = vmatprep.mubr.bf16.mxu0 %v5358
        %5640 = vmatmul.mubr.bf16.gmra.mrb[0].mxu0 %v5357
        %v5641 = vpop.f32.mrb[0].mxu0
        %v5642 = vadd.f32 %v5442, %v5641
        %v5643 = vpop.f32.mrb[0].mxu0
        %v5644 = vpop.f32.mrb[0].mxu0
        %v5645 = vadd.f32 %v5442, %v5644
        %v5646 = vpop.f32.mrb[0].mxu0
        %5647 = vmatprep.mubr.bf16.mxu0 %v5361
        %5648 = vmatmul.mubr.bf16.gmra.mrb[0].mxu0 %v5360
        %v5649 = vpop.f32.mrb[0].mxu0
        %v5650 = vadd.f32 %v5442, %v5649
        %v5651 = vpop.f32.mrb[0].mxu0
        %v5652 = vpop.f32.mrb[0].mxu0
        %v5653 = vadd.f32 %v5442, %v5652
        %v5654 = vpop.f32.mrb[0].mxu0
        %5655 = vmatprep.mubr.bf16.mxu0 %v5364
        %5656 = vmatmul.mubr.bf16.gmra.mrb[0].mxu0 %v5363
        %v5657 = vpop.f32.mrb[0].mxu0
        %v5658 = vadd.f32 %v5442, %v5657
        %v5659 = vpop.f32.mrb[0].mxu0
        %v5660 = vpop.f32.mrb[0].mxu0
        %v5661 = vadd.f32 %v5442, %v5660
        %v5662 = vpop.f32.mrb[0].mxu0
        %5663 = vmatprep.mubr.bf16.mxu0 %v5367
        %5664 = vmatmul.mubr.bf16.gmra.mrb[0].mxu0 %v5366
        %v5665 = vpop.f32.mrb[0].mxu0
        %v5666 = vadd.f32 %v5442, %v5665
        %v5667 = vpop.f32.mrb[0].mxu0
        %v5668 = vpop.f32.mrb[0].mxu0
        %v5669 = vadd.f32 %v5442, %v5668
        %v5670 = vpop.f32.mrb[0].mxu0
        %5671 = vmatprep.mubr.bf16.mxu0 %v5370
        %5672 = vmatmul.mubr.bf16.gmra.mrb[0].mxu0 %v5369
        %v5673 = vpop.f32.mrb[0].mxu0
        %v5674 = vadd.f32 %v5442, %v5673
        %v5675 = vpop.f32.mrb[0].mxu0
        %v5676 = vpop.f32.mrb[0].mxu0
        %v5677 = vadd.f32 %v5442, %v5676
        %v5678 = vpop.f32.mrb[0].mxu0
        %5679 = vmatprep.mubr.bf16.mxu0 %v5373
        %5680 = vmatmul.mubr.bf16.gmra.mrb[0].mxu0 %v5372
        %v5681 = vpop.f32.mrb[0].mxu0
        %v5682 = vadd.f32 %v5442, %v5681
        %v5683 = vpop.f32.mrb[0].mxu0
        %v5684 = vpop.f32.mrb[0].mxu0
        %v5685 = vadd.f32 %v5442, %v5684
        %v5686 = vpop.f32.mrb[0].mxu0
        %5687 = vmatprep.mubr.bf16.mxu0 %v5376
        %5688 = vmatmul.mubr.bf16.gmra.mrb[0].mxu0 %v5375
        %v5689 = vpop.f32.mrb[0].mxu0
        %v5690 = vadd.f32 %v5442, %v5689
        %v5691 = vpop.f32.mrb[0].mxu0
        %v5692 = vpop.f32.mrb[0].mxu0
        %v5693 = vadd.f32 %v5442, %v5692
        %v5694 = vpop.f32.mrb[0].mxu0
        %5695 = vmatprep.mubr.bf16.mxu0 %v5379
        %5696 = vmatmul.mubr.bf16.gmra.mrb[0].mxu0 %v5378
        %v5697 = vpop.f32.mrb[0].mxu0
        %v5698 = vadd.f32 %v5442, %v5697
        %v5699 = vpop.f32.mrb[0].mxu0
        %v5700 = vpop.f32.mrb[0].mxu0
        %v5701 = vadd.f32 %v5442, %v5700
        %v5702 = vpop.f32.mrb[0].mxu0
        %5703 = vmatprep.mubr.bf16.mxu0 %v5382
        %5704 = vmatmul.mubr.bf16.gmra.mrb[0].mxu0 %v5381
        %v5705 = vpop.f32.mrb[0].mxu0
        %v5706 = vadd.f32 %v5442, %v5705
        %v5707 = vpop.f32.mrb[0].mxu0
        %v5708 = vpop.f32.mrb[0].mxu0
        %v5709 = vadd.f32 %v5442, %v5708
        %v5710 = vpop.f32.mrb[0].mxu0
        %5711 = vmatprep.mubr.bf16.mxu0 %v5385
        %5712 = vmatmul.mubr.bf16.gmra.mrb[0].mxu0 %v5384
        %v5713 = vpop.f32.mrb[0].mxu0
        %v5714 = vadd.f32 %v5442, %v5713
        %v5715 = vpop.f32.mrb[0].mxu0
        %v5716 = vpop.f32.mrb[0].mxu0
        %v5717 = vadd.f32 %v5442, %v5716
        %v5718 = vpop.f32.mrb[0].mxu0
        %5719 = vmatprep.mubr.bf16.mxu0 %v5388
        %5720 = vmatmul.mubr.bf16.gmra.mrb[0].mxu0 %v5387
        %v5721 = vpop.f32.mrb[0].mxu0
        %v5722 = vadd.f32 %v5442, %v5721
        %v5723 = vpop.f32.mrb[0].mxu0
        %v5724 = vpop.f32.mrb[0].mxu0
        %v5725 = vadd.f32 %v5442, %v5724
        %v5726 = vpop.f32.mrb[0].mxu0
        %5727 = vmatprep.mubr.bf16.mxu0 %v5391
        %5728 = vmatmul.mubr.bf16.gmra.mrb[0].mxu0 %v5390
        %v5729 = vpop.f32.mrb[0].mxu0
        %v5730 = vadd.f32 %v5442, %v5729
        %v5731 = vpop.f32.mrb[0].mxu0
        %v5732 = vpop.f32.mrb[0].mxu0
        %v5733 = vadd.f32 %v5442, %v5732
        %v5734 = vpop.f32.mrb[0].mxu0
        %5735 = vmatprep.mubr.bf16.mxu0 %v5394
        %5736 = vmatmul.mubr.bf16.gmra.mrb[0].mxu0 %v5393
        %v5737 = vpop.f32.mrb[0].mxu0
        %v5738 = vadd.f32 %v5442, %v5737
        %v5739 = vpop.f32.mrb[0].mxu0
        %v5740 = vpop.f32.mrb[0].mxu0
        %v5741 = vadd.f32 %v5442, %v5740
        %v5742 = vpop.f32.mrb[0].mxu0
        %5743 = vmatprep.mubr.bf16.mxu0 %v5397
        %5744 = vmatmul.mubr.bf16.gmra.mrb[0].mxu0 %v5396
        %v5745 = vpop.f32.mrb[0].mxu0
        %v5746 = vadd.f32 %v5442, %v5745
        %v5747 = vpop.f32.mrb[0].mxu0
        %v5748 = vpop.f32.mrb[0].mxu0
        %v5749 = vadd.f32 %v5442, %v5748
        %v5750 = vpop.f32.mrb[0].mxu0
        %5751 = vmatprep.mubr.bf16.mxu0 %v5400
        %5752 = vmatmul.mubr.bf16.gmra.mrb[0].mxu0 %v5399
        %v5753 = vpop.f32.mrb[0].mxu0
        %v5754 = vadd.f32 %v5442, %v5753
        %v5755 = vpop.f32.mrb[0].mxu0
        %v5756 = vpop.f32.mrb[0].mxu0
        %v5757 = vpop.f32.mrb[0].mxu0
        %5758 = vdwg.mxu0
        %5759 = vmatprep.subr.bf16.mxu0 0
        %5760 = vmatpush1.bf16.msra.mxu0 %v5531
        %5761 = vmatprep.subr.bf16.mxu0 0
        %5762 = vmatpush1.bf16.msra.mxu0 %v5532
        %5763 = vmatprep.subr.bf16.mxu0 0
        %5764 = vmatpush1.bf16.msra.mxu0 0
        %5765 = vmatprep.subr.bf16.mxu0 0
        %5766 = vmatpush1.bf16.msra.mxu0 0
        %5767 = vmatprep.subr.bf16.mxu0 0
        %5768 = vmatpush1.bf16.msra.mxu0 0
        %5769 = vmatprep.subr.bf16.mxu0 0
        %5770 = vmatpush1.bf16.msra.mxu0 0
        %5771 = vmatprep.subr.bf16.mxu0 0
        %5772 = vmatpush1.bf16.msra.mxu0 0
        %5773 = vmatprep.subr.bf16.mxu0 0
        %5774 = vmatpush1.bf16.msra.mxu0 0
        %5775 = vmatprep.subr.bf16.mxu0 0
        %5776 = vmatpush1.bf16.msra.mxu0 0
        %5777 = vmatprep.subr.bf16.mxu0 0
        %5778 = vmatpush1.bf16.msra.mxu0 0
        %5779 = vmatprep.subr.bf16.mxu0 0
        %5780 = vmatpush1.bf16.msra.mxu0 0
        %5781 = vmatprep.subr.bf16.mxu0 0
        %5782 = vmatpush1.bf16.msra.mxu0 0
        %5783 = vmatprep.subr.bf16.mxu0 0
        %5784 = vmatpush1.bf16.msra.mxu0 0
        %5785 = vmatprep.subr.bf16.mxu0 0
        %5786 = vmatpush1.bf16.msra.mxu0 0
        %5787 = vmatprep.subr.bf16.mxu0 0
        %5788 = vmatpush1.bf16.msra.mxu0 0
        %5789 = vmatprep.subr.bf16.mxu0 0
        %5790 = vmatpush1.bf16.msra.mxu0 0
        %5791 = vmatprep.mubr.bf16.mxu0 0
        %5792 = vmatmul.mubr.bf16.gmra.mrb[0].mxu0 %v5552
        %v5793 = vpop.f32.mrb[0].mxu0
        %v5794 = vadd.f32 %v5634, %v5793
        %v5795 = vpop.f32.mrb[0].mxu0
        %v5796 = vpop.f32.mrb[0].mxu0
        %v5797 = vadd.f32 %v5637, %v5796
        %v5798 = vpop.f32.mrb[0].mxu0
        %5799 = vmatprep.mubr.bf16.mxu0 0
        %5800 = vmatmul.mubr.bf16.gmra.mrb[0].mxu0 %v5555
        %v5801 = vpop.f32.mrb[0].mxu0
        %v5802 = vadd.f32 %v5642, %v5801
        %v5803 = vpop.f32.mrb[0].mxu0
        %v5804 = vpop.f32.mrb[0].mxu0
        %v5805 = vadd.f32 %v5645, %v5804
        %v5806 = vpop.f32.mrb[0].mxu0
        %5807 = vmatprep.mubr.bf16.mxu0 0
        %5808 = vmatmul.mubr.bf16.gmra.mrb[0].mxu0 %v5558
        %v5809 = vpop.f32.mrb[0].mxu0
        %v5810 = vadd.f32 %v5650, %v5809
        %v5811 = vpop.f32.mrb[0].mxu0
        %v5812 = vpop.f32.mrb[0].mxu0
        %v5813 = vadd.f32 %v5653, %v5812
        %v5814 = vpop.f32.mrb[0].mxu0
        %5815 = vmatprep.mubr.bf16.mxu0 0
        %5816 = vmatmul.mubr.bf16.gmra.mrb[0].mxu0 %v5561
        %v5817 = vpop.f32.mrb[0].mxu0
        %v5818 = vadd.f32 %v5658, %v5817
        %v5819 = vpop.f32.mrb[0].mxu0
        %v5820 = vpop.f32.mrb[0].mxu0
        %v5821 = vadd.f32 %v5661, %v5820
        %v5822 = vpop.f32.mrb[0].mxu0
        %5823 = vmatprep.mubr.bf16.mxu0 0
        %5824 = vmatmul.mubr.bf16.gmra.mrb[0].mxu0 %v5564
        %v5825 = vpop.f32.mrb[0].mxu0
        %v5826 = vadd.f32 %v5666, %v5825
        %v5827 = vpop.f32.mrb[0].mxu0
        %v5828 = vpop.f32.mrb[0].mxu0
        %v5829 = vadd.f32 %v5669, %v5828
        %v5830 = vpop.f32.mrb[0].mxu0
        %5831 = vmatprep.mubr.bf16.mxu0 0
        %5832 = vmatmul.mubr.bf16.gmra.mrb[0].mxu0 %v5567
        %v5833 = vpop.f32.mrb[0].mxu0
        %v5834 = vadd.f32 %v5674, %v5833
        %v5835 = vpop.f32.mrb[0].mxu0
        %v5836 = vpop.f32.mrb[0].mxu0
        %v5837 = vadd.f32 %v5677, %v5836
        %v5838 = vpop.f32.mrb[0].mxu0
        %5839 = vmatprep.mubr.bf16.mxu0 0
        %5840 = vmatmul.mubr.bf16.gmra.mrb[0].mxu0 %v5570
        %v5841 = vpop.f32.mrb[0].mxu0
        %v5842 = vadd.f32 %v5682, %v5841
        %v5843 = vpop.f32.mrb[0].mxu0
        %v5844 = vpop.f32.mrb[0].mxu0
        %v5845 = vadd.f32 %v5685, %v5844
        %v5846 = vpop.f32.mrb[0].mxu0
        %5847 = vmatprep.mubr.bf16.mxu0 0
        %5848 = vmatmul.mubr.bf16.gmra.mrb[0].mxu0 %v5573
        %v5849 = vpop.f32.mrb[0].mxu0
        %v5850 = vadd.f32 %v5690, %v5849
        %v5851 = vpop.f32.mrb[0].mxu0
        %v5852 = vpop.f32.mrb[0].mxu0
        %v5853 = vadd.f32 %v5693, %v5852
        %v5854 = vpop.f32.mrb[0].mxu0
        %5855 = vmatprep.mubr.bf16.mxu0 0
        %5856 = vmatmul.mubr.bf16.gmra.mrb[0].mxu0 %v5576
        %v5857 = vpop.f32.mrb[0].mxu0
        %v5858 = vadd.f32 %v5698, %v5857
        %v5859 = vpop.f32.mrb[0].mxu0
        %v5860 = vpop.f32.mrb[0].mxu0
        %v5861 = vadd.f32 %v5701, %v5860
        %v5862 = vpop.f32.mrb[0].mxu0
        %5863 = vmatprep.mubr.bf16.mxu0 0
        %5864 = vmatmul.mubr.bf16.gmra.mrb[0].mxu0 %v5579
        %v5865 = vpop.f32.mrb[0].mxu0
        %v5866 = vadd.f32 %v5706, %v5865
        %v5867 = vpop.f32.mrb[0].mxu0
        %v5868 = vpop.f32.mrb[0].mxu0
        %v5869 = vadd.f32 %v5709, %v5868
        %v5870 = vpop.f32.mrb[0].mxu0
        %5871 = vmatprep.mubr.bf16.mxu0 0
        %5872 = vmatmul.mubr.bf16.gmra.mrb[0].mxu0 %v5582
        %v5873 = vpop.f32.mrb[0].mxu0
        %v5874 = vadd.f32 %v5714, %v5873
        %v5875 = vpop.f32.mrb[0].mxu0
        %v5876 = vpop.f32.mrb[0].mxu0
        %v5877 = vadd.f32 %v5717, %v5876
        %v5878 = vpop.f32.mrb[0].mxu0
        %5879 = vmatprep.mubr.bf16.mxu0 0
        %5880 = vmatmul.mubr.bf16.gmra.mrb[0].mxu0 %v5585
        %v5881 = vpop.f32.mrb[0].mxu0
        %v5882 = vadd.f32 %v5722, %v5881
        %v5883 = vpop.f32.mrb[0].mxu0
        %v5884 = vpop.f32.mrb[0].mxu0
        %v5885 = vadd.f32 %v5725, %v5884
        %v5886 = vpop.f32.mrb[0].mxu0
        %5887 = vmatprep.mubr.bf16.mxu0 0
        %5888 = vmatmul.mubr.bf16.gmra.mrb[0].mxu0 %v5588
        %v5889 = vpop.f32.mrb[0].mxu0
        %v5890 = vadd.f32 %v5730, %v5889
        %v5891 = vpop.f32.mrb[0].mxu0
        %v5892 = vpop.f32.mrb[0].mxu0
        %v5893 = vadd.f32 %v5733, %v5892
        %v5894 = vpop.f32.mrb[0].mxu0
        %5895 = vmatprep.mubr.bf16.mxu0 0
        %5896 = vmatmul.mubr.bf16.gmra.mrb[0].mxu0 %v5591
        %v5897 = vpop.f32.mrb[0].mxu0
        %v5898 = vadd.f32 %v5738, %v5897
        %v5899 = vpop.f32.mrb[0].mxu0
        %v5900 = vpop.f32.mrb[0].mxu0
        %v5901 = vadd.f32 %v5741, %v5900
        %v5902 = vpop.f32.mrb[0].mxu0
        %5903 = vmatprep.mubr.bf16.mxu0 0
        %5904 = vmatmul.mubr.bf16.gmra.mrb[0].mxu0 %v5594
        %v5905 = vpop.f32.mrb[0].mxu0
        %v5906 = vadd.f32 %v5746, %v5905
        %v5907 = vpop.f32.mrb[0].mxu0
        %v5908 = vpop.f32.mrb[0].mxu0
        %v5909 = vadd.f32 %v5749, %v5908
        %v5910 = vpop.f32.mrb[0].mxu0
        %5911 = vmatprep.mubr.bf16.mxu0 0
        %5912 = vmatmul.mubr.bf16.gmra.mrb[0].mxu0 %v5597
        %v5913 = vpop.f32.mrb[0].mxu0
        %v5914 = vadd.f32 %v5754, %v5913
        %v5915 = vpop.f32.mrb[0].mxu0
        %v5916 = vpop.f32.mrb[0].mxu0
        %v5917 = vpop.f32.mrb[0].mxu0
        %5918 = vdwg.mxu0
        %v5919 = vmax.f32 %v5794, 0.0
        %v5920 = vmax.f32 %v5797, 0.0
        %v5921 = vmax.f32 %v5802, 0.0
        %v5922 = vmax.f32 %v5805, 0.0
        %v5923 = vmax.f32 %v5810, 0.0
        %v5924 = vmax.f32 %v5813, 0.0
        %v5925 = vmax.f32 %v5818, 0.0
        %v5926 = vmax.f32 %v5821, 0.0
        %v5927 = vmax.f32 %v5826, 0.0
        %v5928 = vmax.f32 %v5829, 0.0
        %v5929 = vmax.f32 %v5834, 0.0
        %v5930 = vmax.f32 %v5837, 0.0
        %v5931 = vmax.f32 %v5842, 0.0
        %v5932 = vmax.f32 %v5845, 0.0
        %v5933 = vmax.f32 %v5850, 0.0
        %v5934 = vmax.f32 %v5853, 0.0
        %v5935 = vmax.f32 %v5858, 0.0
        %v5936 = vmax.f32 %v5861, 0.0
        %v5937 = vmax.f32 %v5866, 0.0
        %v5938 = vmax.f32 %v5869, 0.0
        %v5939 = vmax.f32 %v5874, 0.0
        %v5940 = vmax.f32 %v5877, 0.0
        %v5941 = vmax.f32 %v5882, 0.0
        %v5942 = vmax.f32 %v5885, 0.0
        %v5943 = vmax.f32 %v5890, 0.0
        %v5944 = vmax.f32 %v5893, 0.0
        %v5945 = vmax.f32 %v5898, 0.0
        %v5946 = vmax.f32 %v5901, 0.0
        %v5947 = vmax.f32 %v5906, 0.0
        %v5948 = vmax.f32 %v5909, 0.0
        %v5949 = vmax.f32 %v5914, 0.0
        %v5950 = vpack.c.bf16 %v5920, %v5919
        %v5951 = vpack.c.bf16 %v5922, %v5921
        %v5952 = vpack.c.bf16 %v5924, %v5923
        %v5953 = vpack.c.bf16 %v5926, %v5925
        %v5954 = vpack.c.bf16 %v5928, %v5927
        %v5955 = vpack.c.bf16 %v5930, %v5929
        %v5956 = vpack.c.bf16 %v5932, %v5931
        %v5957 = vpack.c.bf16 %v5934, %v5933
        %v5958 = vpack.c.bf16 %v5936, %v5935
        %v5959 = vpack.c.bf16 %v5938, %v5937
        %v5960 = vpack.c.bf16 %v5940, %v5939
        %v5961 = vpack.c.bf16 %v5942, %v5941
        %v5962 = vpack.c.bf16 %v5944, %v5943
        %v5963 = vpack.c.bf16 %v5946, %v5945
        %v5964 = vpack.c.bf16 %v5948, %v5947
        %v5965 = vpack.c.bf16 %v5949, %v5949
        %v5966 = vld [vmem:[%s629] sm:$0xf]
        %v5967 = vld [vmem:[%s629 + $0x4] sm:$0xf]
        %v5968 = vld [vmem:[%s629 + $0x8] sm:$0xf]
        %v5969 = vld [vmem:[%s629 + $0xc] sm:$0xf]
        %v5970 = vld [vmem:[%s629 + $0x10] sm:$0xf]
        %v5971 = vld [vmem:[%s629 + $0x14] sm:$0xf]
        %v5972 = vld [vmem:[%s629 + $0x18] sm:$0xf]
        %v5973 = vld [vmem:[%s629 + $0x1c] sm:$0xf]
        %v5974 = vld [vmem:[%s648 + $0x3] sm:$0x1]
        %v5975 = vlaneseq
        %v5976 = vshrl.u32 %v5975, 7
        %v5977 = vsub.s32 0, %v5976
        %v5978 = vrot.slane %v5974, %v5977
        %v5987 = vunpack.c.l.b16 %v5966
        %v5988 = vunpack.c.l.b16 %v5967
        %v5989 = vunpack.c.l.b16 %v5968
        %v5990 = vunpack.c.l.b16 %v5969
        %v5991 = vunpack.c.l.b16 %v5970
        %v5992 = vunpack.c.l.b16 %v5971
        %v5993 = vunpack.c.l.b16 %v5972
        %v5994 = vunpack.c.l.b16 %v5973
        %v5995 = vpack.c.b16 %v5988, %v5987
        %v5996 = vpack.c.b16 %v5990, %v5989
        %v5997 = vpack.c.b16 %v5992, %v5991
        %v5998 = vpack.c.b16 %v5994, %v5993
        %v6004 = vsel %vm5197, %v5950, 0
        %v6007 = vsel %vm5197, %v5951, 0
        %v6010 = vsel %vm5197, %v5952, 0
        %v6013 = vsel %vm5197, %v5953, 0
        %v6016 = vsel %vm5197, %v5954, 0
        %v6019 = vsel %vm5197, %v5955, 0
        %v6022 = vsel %vm5197, %v5956, 0
        %v6025 = vsel %vm5197, %v5957, 0
        %v6028 = vsel %vm5197, %v5958, 0
        %v6031 = vsel %vm5197, %v5959, 0
        %v6034 = vsel %vm5197, %v5960, 0
        %v6037 = vsel %vm5197, %v5961, 0
        %v6040 = vsel %vm5197, %v5962, 0
        %v6043 = vsel %vm5197, %v5963, 0
        %v6046 = vsel %vm5197, %v5964, 0
        %v6049 = vsel %vm5197, %v5965, 0
        %6051 = vmatprep.subr.bf16.mxu0 0
        %6052 = vmatpush1.bf16.msra.mxu0 %v5995
        %6053 = vmatprep.subr.bf16.mxu0 0
        %6054 = vmatpush1.bf16.msra.mxu0 %v5996
        %6055 = vmatprep.subr.bf16.mxu0 0
        %6056 = vmatpush1.bf16.msra.mxu0 %v5997
        %6057 = vmatprep.subr.bf16.mxu0 0
        %6058 = vmatpush1.bf16.msra.mxu0 %v5998
        %6059 = vmatprep.subr.bf16.mxu0 0
        %6060 = vmatpush1.bf16.msra.mxu0 0
        %6061 = vmatprep.subr.bf16.mxu0 0
        %6062 = vmatpush1.bf16.msra.mxu0 0
        %6063 = vmatprep.subr.bf16.mxu0 0
        %6064 = vmatpush1.bf16.msra.mxu0 0
        %6065 = vmatprep.subr.bf16.mxu0 0
        %6066 = vmatpush1.bf16.msra.mxu0 0
        %6067 = vmatprep.subr.bf16.mxu0 0
        %6068 = vmatpush1.bf16.msra.mxu0 0
        %6069 = vmatprep.subr.bf16.mxu0 0
        %6070 = vmatpush1.bf16.msra.mxu0 0
        %6071 = vmatprep.subr.bf16.mxu0 0
        %6072 = vmatpush1.bf16.msra.mxu0 0
        %6073 = vmatprep.subr.bf16.mxu0 0
        %6074 = vmatpush1.bf16.msra.mxu0 0
        %6075 = vmatprep.subr.bf16.mxu0 0
        %6076 = vmatpush1.bf16.msra.mxu0 0
        %6077 = vmatprep.subr.bf16.mxu0 0
        %6078 = vmatpush1.bf16.msra.mxu0 0
        %6079 = vmatprep.subr.bf16.mxu0 0
        %6080 = vmatpush1.bf16.msra.mxu0 0
        %6081 = vmatprep.subr.bf16.mxu0 0
        %6082 = vmatpush1.bf16.msra.mxu0 0
        %6083 = vmatprep.mubr.bf16.mxu0 0
        %6084 = vmatmul.mubr.bf16.gmra.mrb[0].mxu0 %v6004
        %v6085 = vpop.f32.mrb[0].mxu0
        %v6086 = vadd.f32 %v5978, %v6085
        %v6087 = vpop.f32.mrb[0].mxu0
        %v6088 = vpop.f32.mrb[0].mxu0
        %v6089 = vadd.f32 %v5978, %v6088
        %v6090 = vpop.f32.mrb[0].mxu0
        %6091 = vmatprep.mubr.bf16.mxu0 0
        %6092 = vmatmul.mubr.bf16.gmra.mrb[0].mxu0 %v6007
        %v6093 = vpop.f32.mrb[0].mxu0
        %v6094 = vadd.f32 %v5978, %v6093
        %v6095 = vpop.f32.mrb[0].mxu0
        %v6096 = vpop.f32.mrb[0].mxu0
        %v6097 = vadd.f32 %v5978, %v6096
        %v6098 = vpop.f32.mrb[0].mxu0
        %6099 = vmatprep.mubr.bf16.mxu0 0
        %6100 = vmatmul.mubr.bf16.gmra.mrb[0].mxu0 %v6010
        %v6101 = vpop.f32.mrb[0].mxu0
        %v6102 = vadd.f32 %v5978, %v6101
        %v6103 = vpop.f32.mrb[0].mxu0
        %v6104 = vpop.f32.mrb[0].mxu0
        %v6105 = vadd.f32 %v5978, %v6104
        %v6106 = vpop.f32.mrb[0].mxu0
        %6107 = vmatprep.mubr.bf16.mxu0 0
        %6108 = vmatmul.mubr.bf16.gmra.mrb[0].mxu0 %v6013
        %v6109 = vpop.f32.mrb[0].mxu0
        %v6110 = vadd.f32 %v5978, %v6109
        %v6111 = vpop.f32.mrb[0].mxu0
        %v6112 = vpop.f32.mrb[0].mxu0
        %v6113 = vadd.f32 %v5978, %v6112
        %v6114 = vpop.f32.mrb[0].mxu0
        %6115 = vmatprep.mubr.bf16.mxu0 0
        %6116 = vmatmul.mubr.bf16.gmra.mrb[0].mxu0 %v6016
        %v6117 = vpop.f32.mrb[0].mxu0
        %v6118 = vadd.f32 %v5978, %v6117
        %v6119 = vpop.f32.mrb[0].mxu0
        %v6120 = vpop.f32.mrb[0].mxu0
        %v6121 = vadd.f32 %v5978, %v6120
        %v6122 = vpop.f32.mrb[0].mxu0
        %6123 = vmatprep.mubr.bf16.mxu0 0
        %6124 = vmatmul.mubr.bf16.gmra.mrb[0].mxu0 %v6019
        %v6125 = vpop.f32.mrb[0].mxu0
        %v6126 = vadd.f32 %v5978, %v6125
        %v6127 = vpop.f32.mrb[0].mxu0
        %v6128 = vpop.f32.mrb[0].mxu0
        %v6129 = vadd.f32 %v5978, %v6128
        %v6130 = vpop.f32.mrb[0].mxu0
        %6131 = vmatprep.mubr.bf16.mxu0 0
        %6132 = vmatmul.mubr.bf16.gmra.mrb[0].mxu0 %v6022
        %v6133 = vpop.f32.mrb[0].mxu0
        %v6134 = vadd.f32 %v5978, %v6133
        %v6135 = vpop.f32.mrb[0].mxu0
        %v6136 = vpop.f32.mrb[0].mxu0
        %v6137 = vadd.f32 %v5978, %v6136
        %v6138 = vpop.f32.mrb[0].mxu0
        %6139 = vmatprep.mubr.bf16.mxu0 0
        %6140 = vmatmul.mubr.bf16.gmra.mrb[0].mxu0 %v6025
        %v6141 = vpop.f32.mrb[0].mxu0
        %v6142 = vadd.f32 %v5978, %v6141
        %v6143 = vpop.f32.mrb[0].mxu0
        %v6144 = vpop.f32.mrb[0].mxu0
        %v6145 = vadd.f32 %v5978, %v6144
        %v6146 = vpop.f32.mrb[0].mxu0
        %6147 = vmatprep.mubr.bf16.mxu0 0
        %6148 = vmatmul.mubr.bf16.gmra.mrb[0].mxu0 %v6028
        %v6149 = vpop.f32.mrb[0].mxu0
        %v6150 = vadd.f32 %v5978, %v6149
        %v6151 = vpop.f32.mrb[0].mxu0
        %v6152 = vpop.f32.mrb[0].mxu0
        %v6153 = vadd.f32 %v5978, %v6152
        %v6154 = vpop.f32.mrb[0].mxu0
        %6155 = vmatprep.mubr.bf16.mxu0 0
        %6156 = vmatmul.mubr.bf16.gmra.mrb[0].mxu0 %v6031
        %v6157 = vpop.f32.mrb[0].mxu0
        %v6158 = vadd.f32 %v5978, %v6157
        %v6159 = vpop.f32.mrb[0].mxu0
        %v6160 = vpop.f32.mrb[0].mxu0
        %v6161 = vadd.f32 %v5978, %v6160
        %v6162 = vpop.f32.mrb[0].mxu0
        %6163 = vmatprep.mubr.bf16.mxu0 0
        %6164 = vmatmul.mubr.bf16.gmra.mrb[0].mxu0 %v6034
        %v6165 = vpop.f32.mrb[0].mxu0
        %v6166 = vadd.f32 %v5978, %v6165
        %v6167 = vpop.f32.mrb[0].mxu0
        %v6168 = vpop.f32.mrb[0].mxu0
        %v6169 = vadd.f32 %v5978, %v6168
        %v6170 = vpop.f32.mrb[0].mxu0
        %6171 = vmatprep.mubr.bf16.mxu0 0
        %6172 = vmatmul.mubr.bf16.gmra.mrb[0].mxu0 %v6037
        %v6173 = vpop.f32.mrb[0].mxu0
        %v6174 = vadd.f32 %v5978, %v6173
        %v6175 = vpop.f32.mrb[0].mxu0
        %v6176 = vpop.f32.mrb[0].mxu0
        %v6177 = vadd.f32 %v5978, %v6176
        %v6178 = vpop.f32.mrb[0].mxu0
        %6179 = vmatprep.mubr.bf16.mxu0 0
        %6180 = vmatmul.mubr.bf16.gmra.mrb[0].mxu0 %v6040
        %v6181 = vpop.f32.mrb[0].mxu0
        %v6182 = vadd.f32 %v5978, %v6181
        %v6183 = vpop.f32.mrb[0].mxu0
        %v6184 = vpop.f32.mrb[0].mxu0
        %v6185 = vadd.f32 %v5978, %v6184
        %v6186 = vpop.f32.mrb[0].mxu0
        %6187 = vmatprep.mubr.bf16.mxu0 0
        %6188 = vmatmul.mubr.bf16.gmra.mrb[0].mxu0 %v6043
        %v6189 = vpop.f32.mrb[0].mxu0
        %v6190 = vadd.f32 %v5978, %v6189
        %v6191 = vpop.f32.mrb[0].mxu0
        %v6192 = vpop.f32.mrb[0].mxu0
        %v6193 = vadd.f32 %v5978, %v6192
        %v6194 = vpop.f32.mrb[0].mxu0
        %6195 = vmatprep.mubr.bf16.mxu0 0
        %6196 = vmatmul.mubr.bf16.gmra.mrb[0].mxu0 %v6046
        %v6197 = vpop.f32.mrb[0].mxu0
        %v6198 = vadd.f32 %v5978, %v6197
        %v6199 = vpop.f32.mrb[0].mxu0
        %v6200 = vpop.f32.mrb[0].mxu0
        %v6201 = vadd.f32 %v5978, %v6200
        %v6202 = vpop.f32.mrb[0].mxu0
        %6203 = vmatprep.mubr.bf16.mxu0 0
        %6204 = vmatmul.mubr.bf16.gmra.mrb[0].mxu0 %v6049
        %v6205 = vpop.f32.mrb[0].mxu0
        %v6206 = vadd.f32 %v5978, %v6205
        %v6207 = vpop.f32.mrb[0].mxu0
        %v6208 = vpop.f32.mrb[0].mxu0
        %v6209 = vpop.f32.mrb[0].mxu0
        %6210 = vdwg.mxu0
        %v6211 = vmax.f32 %v6086, 0.0
        %v6212 = vmax.f32 %v6089, 0.0
        %v6213 = vmax.f32 %v6094, 0.0
        %v6214 = vmax.f32 %v6097, 0.0
        %v6215 = vmax.f32 %v6102, 0.0
        %v6216 = vmax.f32 %v6105, 0.0
        %v6217 = vmax.f32 %v6110, 0.0
        %v6218 = vmax.f32 %v6113, 0.0
        %v6219 = vmax.f32 %v6118, 0.0
        %v6220 = vmax.f32 %v6121, 0.0
        %v6221 = vmax.f32 %v6126, 0.0
        %v6222 = vmax.f32 %v6129, 0.0
        %v6223 = vmax.f32 %v6134, 0.0
        %v6224 = vmax.f32 %v6137, 0.0
        %v6225 = vmax.f32 %v6142, 0.0
        %v6226 = vmax.f32 %v6145, 0.0
        %v6227 = vmax.f32 %v6150, 0.0
        %v6228 = vmax.f32 %v6153, 0.0
        %v6229 = vmax.f32 %v6158, 0.0
        %v6230 = vmax.f32 %v6161, 0.0
        %v6231 = vmax.f32 %v6166, 0.0
        %v6232 = vmax.f32 %v6169, 0.0
        %v6233 = vmax.f32 %v6174, 0.0
        %v6234 = vmax.f32 %v6177, 0.0
        %v6235 = vmax.f32 %v6182, 0.0
        %v6236 = vmax.f32 %v6185, 0.0
        %v6237 = vmax.f32 %v6190, 0.0
        %v6238 = vmax.f32 %v6193, 0.0
        %v6239 = vmax.f32 %v6198, 0.0
        %v6240 = vmax.f32 %v6201, 0.0
        %v6241 = vmax.f32 %v6206, 0.0
        %v6242 = vld [vmem:[%s10] sm:$0xff]
        %v6243 = vld [vmem:[%s10 + $0x8] sm:$0xff]
        %v6244 = vld [vmem:[%s10 + $0x10] sm:$0xff]
        %v6245 = vld [vmem:[%s10 + $0x18] sm:$0xff]
        %v6246 = vld [vmem:[%s10 + $0x20] sm:$0xff]
        %v6247 = vld [vmem:[%s10 + $0x28] sm:$0xff]
        %v6248 = vld [vmem:[%s10 + $0x30] sm:$0xff]
        %v6249 = vld [vmem:[%s10 + $0x38] sm:$0xff]
        %v6250 = vld [vmem:[%s10 + $0x40] sm:$0xff]
        %v6251 = vld [vmem:[%s10 + $0x48] sm:$0xff]
        %v6252 = vld [vmem:[%s10 + $0x50] sm:$0xff]
        %v6253 = vld [vmem:[%s10 + $0x58] sm:$0xff]
        %v6254 = vld [vmem:[%s10 + $0x60] sm:$0xff]
        %v6255 = vld [vmem:[%s10 + $0x68] sm:$0xff]
        %v6256 = vld [vmem:[%s10 + $0x70] sm:$0xff]
        %v6257 = vld [vmem:[%s10 + $0x78] sm:$0xff]
        %v6258 = vld [vmem:[%s10 + $0x80] sm:$0xff]
        %v6259 = vld [vmem:[%s10 + $0x88] sm:$0xff]
        %v6260 = vld [vmem:[%s10 + $0x90] sm:$0xff]
        %v6261 = vld [vmem:[%s10 + $0x98] sm:$0xff]
        %v6262 = vld [vmem:[%s10 + $0xa0] sm:$0xff]
        %v6263 = vld [vmem:[%s10 + $0xa8] sm:$0xff]
        %v6264 = vld [vmem:[%s10 + $0xb0] sm:$0xff]
        %v6265 = vld [vmem:[%s10 + $0xb8] sm:$0xff]
        %v6266 = vld [vmem:[%s10 + $0xc0] sm:$0xff]
        %v6267 = vld [vmem:[%s10 + $0xc8] sm:$0xff]
        %v6268 = vld [vmem:[%s10 + $0xd0] sm:$0xff]
        %v6269 = vld [vmem:[%s10 + $0xd8] sm:$0xff]
        %v6270 = vld [vmem:[%s10 + $0xe0] sm:$0xff]
        %v6271 = vld [vmem:[%s10 + $0xe8] sm:$0xff]
        %v6272 = vld [vmem:[%s10 + $0xf0] sm:$0x3]
        %6274 = vset.pattern.permute.xlu0 0
        %6275 = vperm.xlu0 %6274, %v6242
        %v6276 = vpop.permute.xlu0 %6275
        %6279 = vset.pattern.permute.xlu0 0
        %6280 = vperm.xlu0 %6279, %v6243
        %v6281 = vpop.permute.xlu0 %6280
        %6284 = vset.pattern.permute.xlu0 0
        %6285 = vperm.xlu0 %6284, %v6244
        %v6286 = vpop.permute.xlu0 %6285
        %6289 = vset.pattern.permute.xlu0 0
        %6290 = vperm.xlu0 %6289, %v6245
        %v6291 = vpop.permute.xlu0 %6290
        %6294 = vset.pattern.permute.xlu0 0
        %6295 = vperm.xlu0 %6294, %v6246
        %v6296 = vpop.permute.xlu0 %6295
        %6299 = vset.pattern.permute.xlu0 0
        %6300 = vperm.xlu0 %6299, %v6247
        %v6301 = vpop.permute.xlu0 %6300
        %6304 = vset.pattern.permute.xlu0 0
        %6305 = vperm.xlu0 %6304, %v6248
        %v6306 = vpop.permute.xlu0 %6305
        %6309 = vset.pattern.permute.xlu0 0
        %6310 = vperm.xlu0 %6309, %v6249
        %v6311 = vpop.permute.xlu0 %6310
        %6314 = vset.pattern.permute.xlu0 0
        %6315 = vperm.xlu0 %6314, %v6250
        %v6316 = vpop.permute.xlu0 %6315
        %6319 = vset.pattern.permute.xlu0 0
        %6320 = vperm.xlu0 %6319, %v6251
        %v6321 = vpop.permute.xlu0 %6320
        %6324 = vset.pattern.permute.xlu0 0
        %6325 = vperm.xlu0 %6324, %v6252
        %v6326 = vpop.permute.xlu0 %6325
        %6329 = vset.pattern.permute.xlu0 0
        %6330 = vperm.xlu0 %6329, %v6253
        %v6331 = vpop.permute.xlu0 %6330
        %6334 = vset.pattern.permute.xlu0 0
        %6335 = vperm.xlu0 %6334, %v6254
        %v6336 = vpop.permute.xlu0 %6335
        %6339 = vset.pattern.permute.xlu0 0
        %6340 = vperm.xlu0 %6339, %v6255
        %v6341 = vpop.permute.xlu0 %6340
        %6344 = vset.pattern.permute.xlu0 0
        %6345 = vperm.xlu0 %6344, %v6256
        %v6346 = vpop.permute.xlu0 %6345
        %6349 = vset.pattern.permute.xlu0 0
        %6350 = vperm.xlu0 %6349, %v6257
        %v6351 = vpop.permute.xlu0 %6350
        %6354 = vset.pattern.permute.xlu0 0
        %6355 = vperm.xlu0 %6354, %v6258
        %v6356 = vpop.permute.xlu0 %6355
        %6359 = vset.pattern.permute.xlu0 0
        %6360 = vperm.xlu0 %6359, %v6259
        %v6361 = vpop.permute.xlu0 %6360
        %6364 = vset.pattern.permute.xlu0 0
        %6365 = vperm.xlu0 %6364, %v6260
        %v6366 = vpop.permute.xlu0 %6365
        %6369 = vset.pattern.permute.xlu0 0
        %6370 = vperm.xlu0 %6369, %v6261
        %v6371 = vpop.permute.xlu0 %6370
        %6374 = vset.pattern.permute.xlu0 0
        %6375 = vperm.xlu0 %6374, %v6262
        %v6376 = vpop.permute.xlu0 %6375
        %6379 = vset.pattern.permute.xlu0 0
        %6380 = vperm.xlu0 %6379, %v6263
        %v6381 = vpop.permute.xlu0 %6380
        %6384 = vset.pattern.permute.xlu0 0
        %6385 = vperm.xlu0 %6384, %v6264
        %v6386 = vpop.permute.xlu0 %6385
        %6389 = vset.pattern.permute.xlu0 0
        %6390 = vperm.xlu0 %6389, %v6265
        %v6391 = vpop.permute.xlu0 %6390
        %6394 = vset.pattern.permute.xlu0 0
        %6395 = vperm.xlu0 %6394, %v6266
        %v6396 = vpop.permute.xlu0 %6395
        %6399 = vset.pattern.permute.xlu0 0
        %6400 = vperm.xlu0 %6399, %v6267
        %v6401 = vpop.permute.xlu0 %6400
        %6404 = vset.pattern.permute.xlu0 0
        %6405 = vperm.xlu0 %6404, %v6268
        %v6406 = vpop.permute.xlu0 %6405
        %6409 = vset.pattern.permute.xlu0 0
        %6410 = vperm.xlu0 %6409, %v6269
        %v6411 = vpop.permute.xlu0 %6410
        %6414 = vset.pattern.permute.xlu0 0
        %6415 = vperm.xlu0 %6414, %v6270
        %v6416 = vpop.permute.xlu0 %6415
        %6419 = vset.pattern.permute.xlu0 0
        %6420 = vperm.xlu0 %6419, %v6271
        %v6421 = vpop.permute.xlu0 %6420
        %6424 = vset.pattern.permute.xlu0 0
        %6425 = vperm.xlu0 %6424, %v6272
        %v6426 = vpop.permute.xlu0 %6425
        %v6428 = vmul.f32 %v6211, %v6276
        %v6429 = vmul.f32 %v6212, %v6281
        %v6430 = vmul.f32 %v6213, %v6286
        %v6431 = vmul.f32 %v6214, %v6291
        %v6432 = vmul.f32 %v6215, %v6296
        %v6433 = vmul.f32 %v6216, %v6301
        %v6434 = vmul.f32 %v6217, %v6306
        %v6435 = vmul.f32 %v6218, %v6311
        %v6436 = vmul.f32 %v6219, %v6316
        %v6437 = vmul.f32 %v6220, %v6321
        %v6438 = vmul.f32 %v6221, %v6326
        %v6439 = vmul.f32 %v6222, %v6331
        %v6440 = vmul.f32 %v6223, %v6336
        %v6441 = vmul.f32 %v6224, %v6341
        %v6442 = vmul.f32 %v6225, %v6346
        %v6443 = vmul.f32 %v6226, %v6351
        %v6444 = vmul.f32 %v6227, %v6356
        %v6445 = vmul.f32 %v6228, %v6361
        %v6446 = vmul.f32 %v6229, %v6366
        %v6447 = vmul.f32 %v6230, %v6371
        %v6448 = vmul.f32 %v6231, %v6376
        %v6449 = vmul.f32 %v6232, %v6381
        %v6450 = vmul.f32 %v6233, %v6386
        %v6451 = vmul.f32 %v6234, %v6391
        %v6452 = vmul.f32 %v6235, %v6396
        %v6453 = vmul.f32 %v6236, %v6401
        %v6454 = vmul.f32 %v6237, %v6406
        %v6455 = vmul.f32 %v6238, %v6411
        %v6456 = vmul.f32 %v6239, %v6416
        %v6457 = vmul.f32 %v6240, %v6421
        %v6458 = vmul.f32 %v6241, %v6426
        %6459 = vst [vmem:[#allocation4] sm:$0xff] %v6428
        %6460 = vst [vmem:[#allocation4 + $0x8] sm:$0xff] %v6429
        %6461 = vst [vmem:[#allocation4 + $0x10] sm:$0xff] %v6430
        %6462 = vst [vmem:[#allocation4 + $0x18] sm:$0xff] %v6431
        %6463 = vst [vmem:[#allocation4 + $0x20] sm:$0xff] %v6432
        %6464 = vst [vmem:[#allocation4 + $0x28] sm:$0xff] %v6433
        %6465 = vst [vmem:[#allocation4 + $0x30] sm:$0xff] %v6434
        %6466 = vst [vmem:[#allocation4 + $0x38] sm:$0xff] %v6435
        %6467 = vst [vmem:[#allocation4 + $0x40] sm:$0xff] %v6436
        %6468 = vst [vmem:[#allocation4 + $0x48] sm:$0xff] %v6437
        %6469 = vst [vmem:[#allocation4 + $0x50] sm:$0xff] %v6438
        %6470 = vst [vmem:[#allocation4 + $0x58] sm:$0xff] %v6439
        %6471 = vst [vmem:[#allocation4 + $0x60] sm:$0xff] %v6440
        %6472 = vst [vmem:[#allocation4 + $0x68] sm:$0xff] %v6441
        %6473 = vst [vmem:[#allocation4 + $0x70] sm:$0xff] %v6442
        %6474 = vst [vmem:[#allocation4 + $0x78] sm:$0xff] %v6443
        %6475 = vst [vmem:[#allocation4 + $0x80] sm:$0xff] %v6444
        %6476 = vst [vmem:[#allocation4 + $0x88] sm:$0xff] %v6445
        %6477 = vst [vmem:[#allocation4 + $0x90] sm:$0xff] %v6446
        %6478 = vst [vmem:[#allocation4 + $0x98] sm:$0xff] %v6447
        %6479 = vst [vmem:[#allocation4 + $0xa0] sm:$0xff] %v6448
        %6480 = vst [vmem:[#allocation4 + $0xa8] sm:$0xff] %v6449
        %6481 = vst [vmem:[#allocation4 + $0xb0] sm:$0xff] %v6450
        %6482 = vst [vmem:[#allocation4 + $0xb8] sm:$0xff] %v6451
        %6483 = vst [vmem:[#allocation4 + $0xc0] sm:$0xff] %v6452
        %6484 = vst [vmem:[#allocation4 + $0xc8] sm:$0xff] %v6453
        %6485 = vst [vmem:[#allocation4 + $0xd0] sm:$0xff] %v6454
        %6486 = vst [vmem:[#allocation4 + $0xd8] sm:$0xff] %v6455
        %6487 = vst [vmem:[#allocation4 + $0xe0] sm:$0xff] %v6456
        %6488 = vst [vmem:[#allocation4 + $0xe8] sm:$0xff] %v6457
        %6489 = vst [vmem:[#allocation4 + $0xf0] sm:$0x3] %v6458
        %v6490 = vld [vmem:[#allocation4] sm:$0xff]
        %v6491 = vld [vmem:[#allocation4 + $0x8] sm:$0xff]
        %v6492 = vld [vmem:[#allocation4 + $0x10] sm:$0xff]
        %v6493 = vld [vmem:[#allocation4 + $0x18] sm:$0xff]
        %v6494 = vld [vmem:[#allocation4 + $0x20] sm:$0xff]
        %v6495 = vld [vmem:[#allocation4 + $0x28] sm:$0xff]
        %v6496 = vld [vmem:[#allocation4 + $0x30] sm:$0xff]
        %v6497 = vld [vmem:[#allocation4 + $0x38] sm:$0xff]
        %v6498 = vld [vmem:[#allocation4 + $0x40] sm:$0xff]
        %v6499 = vld [vmem:[#allocation4 + $0x48] sm:$0xff]
        %v6500 = vld [vmem:[#allocation4 + $0x50] sm:$0xff]
        %v6501 = vld [vmem:[#allocation4 + $0x58] sm:$0xff]
        %v6502 = vld [vmem:[#allocation4 + $0x60] sm:$0xff]
        %v6503 = vld [vmem:[#allocation4 + $0x68] sm:$0x1f]
        %v6504 = vld [vmem:[#allocation4 + $0x1] sm:$0xff]
        %v6505 = vld [vmem:[#allocation4 + $0x9] sm:$0xff]
        %v6506 = vld [vmem:[#allocation4 + $0x11] sm:$0xff]
        %v6507 = vld [vmem:[#allocation4 + $0x19] sm:$0xff]
        %v6508 = vld [vmem:[#allocation4 + $0x21] sm:$0xff]
        %v6509 = vld [vmem:[#allocation4 + $0x29] sm:$0xff]
        %v6510 = vld [vmem:[#allocation4 + $0x31] sm:$0xff]
        %v6511 = vld [vmem:[#allocation4 + $0x39] sm:$0xff]
        %v6512 = vld [vmem:[#allocation4 + $0x41] sm:$0xff]
        %v6513 = vld [vmem:[#allocation4 + $0x49] sm:$0xff]
        %v6514 = vld [vmem:[#allocation4 + $0x51] sm:$0xff]
        %v6515 = vld [vmem:[#allocation4 + $0x59] sm:$0xff]
        %v6516 = vld [vmem:[#allocation4 + $0x61] sm:$0xff]
        %v6517 = vld [vmem:[#allocation4 + $0x69] sm:$0x1f]
        %v6518 = vmax.f32 %v6490, %v6504
        %v6519 = vmax.f32 %v6491, %v6505
        %v6520 = vmax.f32 %v6492, %v6506
        %v6521 = vmax.f32 %v6493, %v6507
        %v6522 = vmax.f32 %v6494, %v6508
        %v6523 = vmax.f32 %v6495, %v6509
        %v6524 = vmax.f32 %v6496, %v6510
        %v6525 = vmax.f32 %v6497, %v6511
        %v6526 = vmax.f32 %v6498, %v6512
        %v6527 = vmax.f32 %v6499, %v6513
        %v6528 = vmax.f32 %v6500, %v6514
        %v6529 = vmax.f32 %v6501, %v6515
        %v6530 = vmax.f32 %v6502, %v6516
        %v6531 = vmax.f32 %v6503, %v6517
        %v6532 = vld [vmem:[#allocation4 + $0xb] sm:$0xff]
        %v6533 = vld [vmem:[#allocation4 + $0x13] sm:$0xff]
        %v6534 = vld [vmem:[#allocation4 + $0x1b] sm:$0xff]
        %v6535 = vld [vmem:[#allocation4 + $0x23] sm:$0xff]
        %v6536 = vld [vmem:[#allocation4 + $0x2b] sm:$0xff]
        %v6537 = vld [vmem:[#allocation4 + $0x33] sm:$0xff]
        %v6538 = vld [vmem:[#allocation4 + $0x3b] sm:$0xff]
        %v6539 = vld [vmem:[#allocation4 + $0x43] sm:$0xff]
        %v6540 = vld [vmem:[#allocation4 + $0x4b] sm:$0xff]
        %v6541 = vld [vmem:[#allocation4 + $0x53] sm:$0xff]
        %v6542 = vld [vmem:[#allocation4 + $0x5b] sm:$0xff]
        %v6543 = vld [vmem:[#allocation4 + $0x63] sm:$0xff]
        %v6544 = vld [vmem:[#allocation4 + $0x6b] sm:$0xff]
        %v6545 = vld [vmem:[#allocation4 + $0x73] sm:$0x1f]
        %v6546 = vld [vmem:[#allocation4 + $0xc] sm:$0xff]
        %v6547 = vld [vmem:[#allocation4 + $0x14] sm:$0xff]
        %v6548 = vld [vmem:[#allocation4 + $0x1c] sm:$0xff]
        %v6549 = vld [vmem:[#allocation4 + $0x24] sm:$0xff]
        %v6550 = vld [vmem:[#allocation4 + $0x2c] sm:$0xff]
        %v6551 = vld [vmem:[#allocation4 + $0x34] sm:$0xff]
        %v6552 = vld [vmem:[#allocation4 + $0x3c] sm:$0xff]
        %v6553 = vld [vmem:[#allocation4 + $0x44] sm:$0xff]
        %v6554 = vld [vmem:[#allocation4 + $0x4c] sm:$0xff]
        %v6555 = vld [vmem:[#allocation4 + $0x54] sm:$0xff]
        %v6556 = vld [vmem:[#allocation4 + $0x5c] sm:$0xff]
        %v6557 = vld [vmem:[#allocation4 + $0x64] sm:$0xff]
        %v6558 = vld [vmem:[#allocation4 + $0x6c] sm:$0xff]
        %v6559 = vld [vmem:[#allocation4 + $0x74] sm:$0x1f]
        %v6560 = vmax.f32 %v6532, %v6546
        %v6561 = vmax.f32 %v6533, %v6547
        %v6562 = vmax.f32 %v6534, %v6548
        %v6563 = vmax.f32 %v6535, %v6549
        %v6564 = vmax.f32 %v6536, %v6550
        %v6565 = vmax.f32 %v6537, %v6551
        %v6566 = vmax.f32 %v6538, %v6552
        %v6567 = vmax.f32 %v6539, %v6553
        %v6568 = vmax.f32 %v6540, %v6554
        %v6569 = vmax.f32 %v6541, %v6555
        %v6570 = vmax.f32 %v6542, %v6556
        %v6571 = vmax.f32 %v6543, %v6557
        %v6572 = vmax.f32 %v6544, %v6558
        %v6573 = vmax.f32 %v6545, %v6559
        %v6574 = vmax.f32 %v6518, %v6560
        %v6575 = vmax.f32 %v6519, %v6561
        %v6576 = vmax.f32 %v6520, %v6562
        %v6577 = vmax.f32 %v6521, %v6563
        %v6578 = vmax.f32 %v6522, %v6564
        %v6579 = vmax.f32 %v6523, %v6565
        %v6580 = vmax.f32 %v6524, %v6566
        %v6581 = vmax.f32 %v6525, %v6567
        %v6582 = vmax.f32 %v6526, %v6568
        %v6583 = vmax.f32 %v6527, %v6569
        %v6584 = vmax.f32 %v6528, %v6570
        %v6585 = vmax.f32 %v6529, %v6571
        %v6586 = vmax.f32 %v6530, %v6572
        %v6587 = vmax.f32 %v6531, %v6573
        %v6588 = vld [vmem:[%s12] sm:$0xf]
        %v6589 = vld [vmem:[%s12 + $0x4] sm:$0xf]
        %v6590 = vld [vmem:[%s12 + $0x8] sm:$0xf]
        %v6591 = vld [vmem:[%s12 + $0xc] sm:$0x1]
        %v6592 = vpack.c.bf16 %v6575, %v6574
        %v6593 = vpack.c.bf16 %v6577, %v6576
        %v6594 = vpack.c.bf16 %v6579, %v6578
        %v6595 = vpack.c.bf16 %v6581, %v6580
        %v6596 = vpack.c.bf16 %v6583, %v6582
        %v6597 = vpack.c.bf16 %v6585, %v6584
        %v6598 = vpack.c.bf16 %v6587, %v6586
        %v6603 = vunpack.c.l.b16 %v6588
        %v6604 = vunpack.c.l.b16 %v6589
        %v6605 = vunpack.c.l.b16 %v6590
        %v6606 = vunpack.c.l.b16 %v6591
        %v6607 = vpack.c.b16 %v6604, %v6603
        %v6608 = vpack.c.b16 %v6606, %v6605
        %vm6609 = vcmask 891904
        %v6611 = vsel %vm6609, %v6607, 0
        %v6614 = vsel %vm6609, %v6608, 0
        %vm6616 = vcmask 1045504
        %vm6617 = vcmask 1046528
        %v6618 = vsel %vm6616, 4294967295, 65535
        %v6619 = vsel %vm6617, %v6618, 0
        %v6621 = vand.u32 %v6598, %v6619
        %6623 = vmatprep.subr.bf16.mxu0 0
        %6624 = vmatpush1.bf16.msra.mxu0 %v6592
        %6625 = vmatprep.subr.bf16.mxu0 0
        %6626 = vmatpush1.bf16.msra.mxu0 %v6593
        %6627 = vmatprep.subr.bf16.mxu0 0
        %6628 = vmatpush1.bf16.msra.mxu0 %v6594
        %6629 = vmatprep.subr.bf16.mxu0 0
        %6630 = vmatpush1.bf16.msra.mxu0 %v6595
        %6631 = vmatprep.subr.bf16.mxu0 0
        %6632 = vmatpush1.bf16.msra.mxu0 %v6596
        %6633 = vmatprep.subr.bf16.mxu0 0
        %6634 = vmatpush1.bf16.msra.mxu0 %v6597
        %6635 = vmatprep.subr.bf16.mxu0 0
        %6636 = vmatpush1.bf16.msra.mxu0 %v6621
        %6637 = vmatprep.subr.bf16.mxu0 0
        %6638 = vmatpush1.bf16.msra.mxu0 0
        %6639 = vmatprep.subr.bf16.mxu0 0
        %6640 = vmatpush1.bf16.msra.mxu0 0
        %6641 = vmatprep.subr.bf16.mxu0 0
        %6642 = vmatpush1.bf16.msra.mxu0 0
        %6643 = vmatprep.subr.bf16.mxu0 0
        %6644 = vmatpush1.bf16.msra.mxu0 0
        %6645 = vmatprep.subr.bf16.mxu0 0
        %6646 = vmatpush1.bf16.msra.mxu0 0
        %6647 = vmatprep.subr.bf16.mxu0 0
        %6648 = vmatpush1.bf16.msra.mxu0 0
        %6649 = vmatprep.subr.bf16.mxu0 0
        %6650 = vmatpush1.bf16.msra.mxu0 0
        %6651 = vmatprep.subr.bf16.mxu0 0
        %6652 = vmatpush1.bf16.msra.mxu0 0
        %6653 = vmatprep.subr.bf16.mxu0 0
        %6654 = vmatpush1.bf16.msra.mxu0 0
        %6655 = vmatprep.mubr.bf16.mxu0 0
        %6656 = vmatmul.mubr.bf16.gmra.mrb[0].mxu0 %v6611
        %v6657 = vpop.f32.mrb[0].mxu0
        %v6658 = vadd.f32 0.0, %v6657
        %v6659 = vpop.f32.mrb[0].mxu0
        %v6660 = vpop.f32.mrb[0].mxu0
        %v6661 = vadd.f32 0.0, %v6660
        %v6662 = vpop.f32.mrb[0].mxu0
        %6663 = vmatprep.mubr.bf16.mxu0 0
        %6664 = vmatmul.mubr.bf16.gmra.mrb[0].mxu0 %v6614
        %v6665 = vpop.f32.mrb[0].mxu0
        %v6666 = vadd.f32 0.0, %v6665
        %v6667 = vpop.f32.mrb[0].mxu0
        %v6668 = vpop.f32.mrb[0].mxu0
        %v6669 = vadd.f32 0.0, %v6668
        %v6670 = vpop.f32.mrb[0].mxu0
        %6671 = vdwg.mxu0
        %6672 = vst [vmem:[#allocation5] sm:$0xff] %v6658
        %6673 = vst [vmem:[#allocation5 + $0x8] sm:$0xff] %v6661
        %6674 = vst [vmem:[#allocation5 + $0x10] sm:$0xff] %v6666
        %6675 = vst [vmem:[#allocation5 + $0x18] sm:$0x1] %v6669
        %v6676 = vld [vmem:[#allocation4 + $0x79] sm:$0xff]
        %v6677 = vld [vmem:[#allocation4 + $0x81] sm:$0xff]
        %v6678 = vld [vmem:[#allocation4 + $0x89] sm:$0xff]
        %v6679 = vld [vmem:[#allocation4 + $0x91] sm:$0xff]
        %v6680 = vld [vmem:[#allocation4 + $0x99] sm:$0xff]
        %v6681 = vld [vmem:[#allocation4 + $0xa1] sm:$0xff]
        %v6682 = vld [vmem:[#allocation4 + $0xa9] sm:$0xff]
        %v6683 = vld [vmem:[#allocation4 + $0xb1] sm:$0xff]
        %v6684 = vld [vmem:[#allocation4 + $0xb9] sm:$0xff]
        %v6685 = vld [vmem:[#allocation4 + $0xc1] sm:$0xff]
        %v6686 = vld [vmem:[#allocation4 + $0xc9] sm:$0xff]
        %v6687 = vld [vmem:[#allocation4 + $0xd1] sm:$0xff]
        %v6688 = vld [vmem:[#allocation4 + $0xd9] sm:$0xff]
        %v6689 = vld [vmem:[#allocation4 + $0xe1] sm:$0x1f]
        %v6690 = vld [vmem:[#allocation4 + $0x7a] sm:$0xff]
        %v6691 = vld [vmem:[#allocation4 + $0x82] sm:$0xff]
        %v6692 = vld [vmem:[#allocation4 + $0x8a] sm:$0xff]
        %v6693 = vld [vmem:[#allocation4 + $0x92] sm:$0xff]
        %v6694 = vld [vmem:[#allocation4 + $0x9a] sm:$0xff]
        %v6695 = vld [vmem:[#allocation4 + $0xa2] sm:$0xff]
        %v6696 = vld [vmem:[#allocation4 + $0xaa] sm:$0xff]
        %v6697 = vld [vmem:[#allocation4 + $0xb2] sm:$0xff]
        %v6698 = vld [vmem:[#allocation4 + $0xba] sm:$0xff]
        %v6699 = vld [vmem:[#allocation4 + $0xc2] sm:$0xff]
        %v6700 = vld [vmem:[#allocation4 + $0xca] sm:$0xff]
        %v6701 = vld [vmem:[#allocation4 + $0xd2] sm:$0xff]
        %v6702 = vld [vmem:[#allocation4 + $0xda] sm:$0xff]
        %v6703 = vld [vmem:[#allocation4 + $0xe2] sm:$0x1f]
        %v6704 = vmax.f32 %v6676, %v6690
        %v6705 = vmax.f32 %v6677, %v6691
        %v6706 = vmax.f32 %v6678, %v6692
        %v6707 = vmax.f32 %v6679, %v6693
        %v6708 = vmax.f32 %v6680, %v6694
        %v6709 = vmax.f32 %v6681, %v6695
        %v6710 = vmax.f32 %v6682, %v6696
        %v6711 = vmax.f32 %v6683, %v6697
        %v6712 = vmax.f32 %v6684, %v6698
        %v6713 = vmax.f32 %v6685, %v6699
        %v6714 = vmax.f32 %v6686, %v6700
        %v6715 = vmax.f32 %v6687, %v6701
        %v6716 = vmax.f32 %v6688, %v6702
        %v6717 = vmax.f32 %v6689, %v6703
        %v6718 = vld [vmem:[#allocation4 + $0x84] sm:$0xff]
        %v6719 = vld [vmem:[#allocation4 + $0x8c] sm:$0xff]
        %v6720 = vld [vmem:[#allocation4 + $0x94] sm:$0xff]
        %v6721 = vld [vmem:[#allocation4 + $0x9c] sm:$0xff]
        %v6722 = vld [vmem:[#allocation4 + $0xa4] sm:$0xff]
        %v6723 = vld [vmem:[#allocation4 + $0xac] sm:$0xff]
        %v6724 = vld [vmem:[#allocation4 + $0xb4] sm:$0xff]
        %v6725 = vld [vmem:[#allocation4 + $0xbc] sm:$0xff]
        %v6726 = vld [vmem:[#allocation4 + $0xc4] sm:$0xff]
        %v6727 = vld [vmem:[#allocation4 + $0xcc] sm:$0xff]
        %v6728 = vld [vmem:[#allocation4 + $0xd4] sm:$0xff]
        %v6729 = vld [vmem:[#allocation4 + $0xdc] sm:$0xff]
        %v6730 = vld [vmem:[#allocation4 + $0xe4] sm:$0xff]
        %v6731 = vld [vmem:[#allocation4 + $0xec] sm:$0x1f]
        %v6732 = vld [vmem:[#allocation4 + $0x85] sm:$0xff]
        %v6733 = vld [vmem:[#allocation4 + $0x8d] sm:$0xff]
        %v6734 = vld [vmem:[#allocation4 + $0x95] sm:$0xff]
        %v6735 = vld [vmem:[#allocation4 + $0x9d] sm:$0xff]
        %v6736 = vld [vmem:[#allocation4 + $0xa5] sm:$0xff]
        %v6737 = vld [vmem:[#allocation4 + $0xad] sm:$0xff]
        %v6738 = vld [vmem:[#allocation4 + $0xb5] sm:$0xff]
        %v6739 = vld [vmem:[#allocation4 + $0xbd] sm:$0xff]
        %v6740 = vld [vmem:[#allocation4 + $0xc5] sm:$0xff]
        %v6741 = vld [vmem:[#allocation4 + $0xcd] sm:$0xff]
        %v6742 = vld [vmem:[#allocation4 + $0xd5] sm:$0xff]
        %v6743 = vld [vmem:[#allocation4 + $0xdd] sm:$0xff]
        %v6744 = vld [vmem:[#allocation4 + $0xe5] sm:$0xff]
        %v6745 = vld [vmem:[#allocation4 + $0xed] sm:$0x1f]
        %v6746 = vmax.f32 %v6718, %v6732
        %v6747 = vmax.f32 %v6719, %v6733
        %v6748 = vmax.f32 %v6720, %v6734
        %v6749 = vmax.f32 %v6721, %v6735
        %v6750 = vmax.f32 %v6722, %v6736
        %v6751 = vmax.f32 %v6723, %v6737
        %v6752 = vmax.f32 %v6724, %v6738
        %v6753 = vmax.f32 %v6725, %v6739
        %v6754 = vmax.f32 %v6726, %v6740
        %v6755 = vmax.f32 %v6727, %v6741
        %v6756 = vmax.f32 %v6728, %v6742
        %v6757 = vmax.f32 %v6729, %v6743
        %v6758 = vmax.f32 %v6730, %v6744
        %v6759 = vmax.f32 %v6731, %v6745
        %v6760 = vmax.f32 %v6704, %v6746
        %v6761 = vmax.f32 %v6705, %v6747
        %v6762 = vmax.f32 %v6706, %v6748
        %v6763 = vmax.f32 %v6707, %v6749
        %v6764 = vmax.f32 %v6708, %v6750
        %v6765 = vmax.f32 %v6709, %v6751
        %v6766 = vmax.f32 %v6710, %v6752
        %v6767 = vmax.f32 %v6711, %v6753
        %v6768 = vmax.f32 %v6712, %v6754
        %v6769 = vmax.f32 %v6713, %v6755
        %v6770 = vmax.f32 %v6714, %v6756
        %v6771 = vmax.f32 %v6715, %v6757
        %v6772 = vmax.f32 %v6716, %v6758
        %v6773 = vmax.f32 %v6717, %v6759
        %v6774 = vld [vmem:[%s12] sm:$0xf]
        %v6775 = vld [vmem:[%s12 + $0x4] sm:$0xf]
        %v6776 = vld [vmem:[%s12 + $0x8] sm:$0xf]
        %v6777 = vld [vmem:[%s12 + $0xc] sm:$0x1]
        %v6778 = vpack.c.bf16 %v6761, %v6760
        %v6779 = vpack.c.bf16 %v6763, %v6762
        %v6780 = vpack.c.bf16 %v6765, %v6764
        %v6781 = vpack.c.bf16 %v6767, %v6766
        %v6782 = vpack.c.bf16 %v6769, %v6768
        %v6783 = vpack.c.bf16 %v6771, %v6770
        %v6784 = vpack.c.bf16 %v6773, %v6772
        %v6789 = vunpack.c.l.b16 %v6774
        %v6790 = vunpack.c.l.b16 %v6775
        %v6791 = vunpack.c.l.b16 %v6776
        %v6792 = vunpack.c.l.b16 %v6777
        %v6793 = vpack.c.b16 %v6790, %v6789
        %v6794 = vpack.c.b16 %v6792, %v6791
        %v6796 = vsel %vm6609, %v6793, 0
        %v6799 = vsel %vm6609, %v6794, 0
        %v6802 = vand.u32 %v6784, %v6619
        %6804 = vmatprep.subr.bf16.mxu0 0
        %6805 = vmatpush1.bf16.msra.mxu0 %v6778
        %6806 = vmatprep.subr.bf16.mxu0 0
        %6807 = vmatpush1.bf16.msra.mxu0 %v6779
        %6808 = vmatprep.subr.bf16.mxu0 0
        %6809 = vmatpush1.bf16.msra.mxu0 %v6780
        %6810 = vmatprep.subr.bf16.mxu0 0
        %6811 = vmatpush1.bf16.msra.mxu0 %v6781
        %6812 = vmatprep.subr.bf16.mxu0 0
        %6813 = vmatpush1.bf16.msra.mxu0 %v6782
        %6814 = vmatprep.subr.bf16.mxu0 0
        %6815 = vmatpush1.bf16.msra.mxu0 %v6783
        %6816 = vmatprep.subr.bf16.mxu0 0
        %6817 = vmatpush1.bf16.msra.mxu0 %v6802
        %6818 = vmatprep.subr.bf16.mxu0 0
        %6819 = vmatpush1.bf16.msra.mxu0 0
        %6820 = vmatprep.subr.bf16.mxu0 0
        %6821 = vmatpush1.bf16.msra.mxu0 0
        %6822 = vmatprep.subr.bf16.mxu0 0
        %6823 = vmatpush1.bf16.msra.mxu0 0
        %6824 = vmatprep.subr.bf16.mxu0 0
        %6825 = vmatpush1.bf16.msra.mxu0 0
        %6826 = vmatprep.subr.bf16.mxu0 0
        %6827 = vmatpush1.bf16.msra.mxu0 0
        %6828 = vmatprep.subr.bf16.mxu0 0
        %6829 = vmatpush1.bf16.msra.mxu0 0
        %6830 = vmatprep.subr.bf16.mxu0 0
        %6831 = vmatpush1.bf16.msra.mxu0 0
        %6832 = vmatprep.subr.bf16.mxu0 0
        %6833 = vmatpush1.bf16.msra.mxu0 0
        %6834 = vmatprep.subr.bf16.mxu0 0
        %6835 = vmatpush1.bf16.msra.mxu0 0
        %6836 = vmatprep.mubr.bf16.mxu0 0
        %6837 = vmatmul.mubr.bf16.gmra.mrb[0].mxu0 %v6796
        %v6838 = vpop.f32.mrb[0].mxu0
        %v6839 = vadd.f32 0.0, %v6838
        %v6840 = vpop.f32.mrb[0].mxu0
        %v6841 = vpop.f32.mrb[0].mxu0
        %v6842 = vadd.f32 0.0, %v6841
        %v6843 = vpop.f32.mrb[0].mxu0
        %6844 = vmatprep.mubr.bf16.mxu0 0
        %6845 = vmatmul.mubr.bf16.gmra.mrb[0].mxu0 %v6799
        %v6846 = vpop.f32.mrb[0].mxu0
        %v6847 = vadd.f32 0.0, %v6846
        %v6848 = vpop.f32.mrb[0].mxu0
        %v6849 = vpop.f32.mrb[0].mxu0
        %v6850 = vadd.f32 0.0, %v6849
        %v6851 = vpop.f32.mrb[0].mxu0
        %6852 = vdwg.mxu0
        %6853 = vst [vmem:[#allocation5 + $0x19] sm:$0xff] %v6839
        %6854 = vst [vmem:[#allocation5 + $0x21] sm:$0xff] %v6842
        %6855 = vst [vmem:[#allocation5 + $0x29] sm:$0xff] %v6847
        %6856 = vst [vmem:[#allocation5 + $0x31] sm:$0x1] %v6850
        %v6857 = vld [vmem:[#allocation5] sm:$0xff]
        %v6858 = vld [vmem:[#allocation5 + $0x8] sm:$0xff]
        %v6859 = vld [vmem:[#allocation5 + $0x10] sm:$0xff]
        %v6860 = vld [vmem:[#allocation5 + $0x18] sm:$0xff]
        %v6861 = vld [vmem:[#allocation5 + $0x20] sm:$0xff]
        %v6862 = vld [vmem:[#allocation5 + $0x28] sm:$0xff]
        %v6863 = vld [vmem:[#allocation5 + $0x30] sm:$0x3]
        %v6864 = vpack.c.bf16 %v6858, %v6857
        %v6865 = vpack.c.bf16 %v6860, %v6859
        %v6866 = vpack.c.bf16 %v6862, %v6861
        %v6867 = vpack.c.bf16 %v6863, %v6863
        %v6868 = vld [vmem:[%s634] sm:$0xf]
        %v6869 = vld [vmem:[%s634 + $0x4] sm:$0xf]
        %v6870 = vld [vmem:[%s634 + $0x8] sm:$0xf]
        %v6871 = vld [vmem:[%s634 + $0xc] sm:$0xf]
        %v6872 = vld [vmem:[%s634 + $0x10] sm:$0xf]
        %v6873 = vld [vmem:[%s634 + $0x14] sm:$0xf]
        %v6874 = vld [vmem:[%s634 + $0x18] sm:$0xf]
        %v6875 = vld [vmem:[%s634 + $0x1c] sm:$0xf]
        %v6876 = vld [vmem:[%s634 + $0x20] sm:$0xf]
        %v6877 = vld [vmem:[%s634 + $0x24] sm:$0xf]
        %v6878 = vld [vmem:[%s634 + $0x28] sm:$0xf]
        %v6879 = vld [vmem:[%s634 + $0x2c] sm:$0xf]
        %v6880 = vld [vmem:[%s634 + $0x30] sm:$0xf]
        %v6881 = vld [vmem:[%s634 + $0x34] sm:$0xf]
        %v6882 = vld [vmem:[%s634 + $0x38] sm:$0xf]
        %v6883 = vld [vmem:[%s634 + $0x3c] sm:$0xf]
        %v6884 = vld [vmem:[%s648 + $0x4] sm:$0x1]
        %v6885 = vlaneseq
        %v6886 = vshrl.u32 %v6885, 7
        %v6887 = vsub.s32 0, %v6886
        %v6888 = vrot.slane %v6884, %v6887
        %v6905 = vunpack.c.l.b16 %v6868
        %v6906 = vunpack.c.l.b16 %v6869
        %v6907 = vunpack.c.l.b16 %v6870
        %v6908 = vunpack.c.l.b16 %v6871
        %v6909 = vunpack.c.l.b16 %v6872
        %v6910 = vunpack.c.l.b16 %v6873
        %v6911 = vunpack.c.l.b16 %v6874
        %v6912 = vunpack.c.l.b16 %v6875
        %v6913 = vunpack.c.l.b16 %v6876
        %v6914 = vunpack.c.l.b16 %v6877
        %v6915 = vunpack.c.l.b16 %v6878
        %v6916 = vunpack.c.l.b16 %v6879
        %v6917 = vunpack.c.l.b16 %v6880
        %v6918 = vunpack.c.l.b16 %v6881
        %v6919 = vunpack.c.l.b16 %v6882
        %v6920 = vunpack.c.l.b16 %v6883
        %v6921 = vpack.c.b16 %v6906, %v6905
        %v6922 = vpack.c.b16 %v6908, %v6907
        %v6923 = vpack.c.b16 %v6910, %v6909
        %v6924 = vpack.c.b16 %v6912, %v6911
        %v6925 = vpack.c.b16 %v6914, %v6913
        %v6926 = vpack.c.b16 %v6916, %v6915
        %v6927 = vpack.c.b16 %v6918, %v6917
        %v6928 = vpack.c.b16 %v6920, %v6919
        %6937 = vmatprep.subr.bf16.mxu0 0
        %6938 = vmatpush1.bf16.msra.mxu0 %v6921
        %6939 = vmatprep.subr.bf16.mxu0 0
        %6940 = vmatpush1.bf16.msra.mxu0 %v6922
        %6941 = vmatprep.subr.bf16.mxu0 0
        %6942 = vmatpush1.bf16.msra.mxu0 %v6923
        %6943 = vmatprep.subr.bf16.mxu0 0
        %6944 = vmatpush1.bf16.msra.mxu0 %v6924
        %6945 = vmatprep.subr.bf16.mxu0 0
        %6946 = vmatpush1.bf16.msra.mxu0 %v6925
        %6947 = vmatprep.subr.bf16.mxu0 0
        %6948 = vmatpush1.bf16.msra.mxu0 %v6926
        %6949 = vmatprep.subr.bf16.mxu0 0
        %6950 = vmatpush1.bf16.msra.mxu0 %v6927
        %6951 = vmatprep.subr.bf16.mxu0 0
        %6952 = vmatpush1.bf16.msra.mxu0 %v6928
        %6953 = vmatprep.subr.bf16.mxu0 0
        %6954 = vmatpush1.bf16.msra.mxu0 0
        %6955 = vmatprep.subr.bf16.mxu0 0
        %6956 = vmatpush1.bf16.msra.mxu0 0
        %6957 = vmatprep.subr.bf16.mxu0 0
        %6958 = vmatpush1.bf16.msra.mxu0 0
        %6959 = vmatprep.subr.bf16.mxu0 0
        %6960 = vmatpush1.bf16.msra.mxu0 0
        %6961 = vmatprep.subr.bf16.mxu0 0
        %6962 = vmatpush1.bf16.msra.mxu0 0
        %6963 = vmatprep.subr.bf16.mxu0 0
        %6964 = vmatpush1.bf16.msra.mxu0 0
        %6965 = vmatprep.subr.bf16.mxu0 0
        %6966 = vmatpush1.bf16.msra.mxu0 0
        %6967 = vmatprep.subr.bf16.mxu0 0
        %6968 = vmatpush1.bf16.msra.mxu0 0
        %6969 = vmatprep.mubr.bf16.mxu0 0
        %6970 = vmatmul.mubr.bf16.gmra.mrb[0].mxu0 %v6864
        %v6971 = vpop.f32.mrb[0].mxu0
        %v6972 = vadd.f32 %v6888, %v6971
        %v6973 = vpop.f32.mrb[0].mxu0
        %v6974 = vpop.f32.mrb[0].mxu0
        %v6975 = vadd.f32 %v6888, %v6974
        %v6976 = vpop.f32.mrb[0].mxu0
        %6977 = vmatprep.mubr.bf16.mxu0 0
        %6978 = vmatmul.mubr.bf16.gmra.mrb[0].mxu0 %v6865
        %v6979 = vpop.f32.mrb[0].mxu0
        %v6980 = vadd.f32 %v6888, %v6979
        %v6981 = vpop.f32.mrb[0].mxu0
        %v6982 = vpop.f32.mrb[0].mxu0
        %v6983 = vadd.f32 %v6888, %v6982
        %v6984 = vpop.f32.mrb[0].mxu0
        %6985 = vmatprep.mubr.bf16.mxu0 0
        %6986 = vmatmul.mubr.bf16.gmra.mrb[0].mxu0 %v6866
        %v6987 = vpop.f32.mrb[0].mxu0
        %v6988 = vadd.f32 %v6888, %v6987
        %v6989 = vpop.f32.mrb[0].mxu0
        %v6990 = vpop.f32.mrb[0].mxu0
        %v6991 = vadd.f32 %v6888, %v6990
        %v6992 = vpop.f32.mrb[0].mxu0
        %6993 = vmatprep.mubr.bf16.mxu0 0
        %6994 = vmatmul.mubr.bf16.gmra.mrb[0].mxu0 %v6867
        %v6995 = vpop.f32.mrb[0].mxu0
        %v6996 = vadd.f32 %v6888, %v6995
        %v6997 = vpop.f32.mrb[0].mxu0
        %v6998 = vpop.f32.mrb[0].mxu0
        %v6999 = vpop.f32.mrb[0].mxu0
        %7000 = vdwg.mxu0
        %v7001 = vmax.f32 %v6972, 0.0
        %v7002 = vmax.f32 %v6975, 0.0
        %v7003 = vmax.f32 %v6980, 0.0
        %v7004 = vmax.f32 %v6983, 0.0
        %v7005 = vmax.f32 %v6988, 0.0
        %v7006 = vmax.f32 %v6991, 0.0
        %v7007 = vmax.f32 %v6996, 0.0
        %v7008 = vpack.c.bf16 %v7002, %v7001
        %v7009 = vpack.c.bf16 %v7004, %v7003
        %v7010 = vpack.c.bf16 %v7006, %v7005
        %v7011 = vpack.c.bf16 %v7007, %v7007
        %v7012 = vld [vmem:[%s639] sm:$0xf]
        %v7013 = vld [vmem:[%s639 + $0x4] sm:$0xf]
        %v7014 = vld [vmem:[%s639 + $0x8] sm:$0xf]
        %v7015 = vld [vmem:[%s639 + $0xc] sm:$0xf]
        %v7016 = vld [vmem:[%s639 + $0x10] sm:$0xf]
        %v7017 = vld [vmem:[%s639 + $0x14] sm:$0xf]
        %v7018 = vld [vmem:[%s639 + $0x18] sm:$0xf]
        %v7019 = vld [vmem:[%s639 + $0x1c] sm:$0xf]
        %v7020 = vld [vmem:[%s639 + $0x20] sm:$0xf]
        %v7021 = vld [vmem:[%s639 + $0x24] sm:$0xf]
        %v7022 = vld [vmem:[%s639 + $0x28] sm:$0xf]
        %v7023 = vld [vmem:[%s639 + $0x2c] sm:$0xf]
        %v7024 = vld [vmem:[%s639 + $0x30] sm:$0xf]
        %v7025 = vld [vmem:[%s639 + $0x34] sm:$0xf]
        %v7026 = vld [vmem:[%s639 + $0x38] sm:$0xf]
        %v7027 = vld [vmem:[%s639 + $0x3c] sm:$0xf]
        %v7028 = vld [vmem:[%s648 + $0x5] sm:$0x1]
        %v7029 = vlaneseq
        %v7030 = vshrl.u32 %v7029, 7
        %v7031 = vsub.s32 0, %v7030
        %v7032 = vrot.slane %v7028, %v7031
        %v7049 = vunpack.c.l.b16 %v7012
        %v7050 = vunpack.c.l.b16 %v7013
        %v7051 = vunpack.c.l.b16 %v7014
        %v7052 = vunpack.c.l.b16 %v7015
        %v7053 = vunpack.c.l.b16 %v7016
        %v7054 = vunpack.c.l.b16 %v7017
        %v7055 = vunpack.c.l.b16 %v7018
        %v7056 = vunpack.c.l.b16 %v7019
        %v7057 = vunpack.c.l.b16 %v7020
        %v7058 = vunpack.c.l.b16 %v7021
        %v7059 = vunpack.c.l.b16 %v7022
        %v7060 = vunpack.c.l.b16 %v7023
        %v7061 = vunpack.c.l.b16 %v7024
        %v7062 = vunpack.c.l.b16 %v7025
        %v7063 = vunpack.c.l.b16 %v7026
        %v7064 = vunpack.c.l.b16 %v7027
        %v7065 = vpack.c.b16 %v7050, %v7049
        %v7066 = vpack.c.b16 %v7052, %v7051
        %v7067 = vpack.c.b16 %v7054, %v7053
        %v7068 = vpack.c.b16 %v7056, %v7055
        %v7069 = vpack.c.b16 %v7058, %v7057
        %v7070 = vpack.c.b16 %v7060, %v7059
        %v7071 = vpack.c.b16 %v7062, %v7061
        %v7072 = vpack.c.b16 %v7064, %v7063
        %7081 = vmatprep.subr.bf16.mxu0 0
        %7082 = vmatpush1.bf16.msra.mxu0 %v7065
        %7083 = vmatprep.subr.bf16.mxu0 0
        %7084 = vmatpush1.bf16.msra.mxu0 %v7066
        %7085 = vmatprep.subr.bf16.mxu0 0
        %7086 = vmatpush1.bf16.msra.mxu0 %v7067
        %7087 = vmatprep.subr.bf16.mxu0 0
        %7088 = vmatpush1.bf16.msra.mxu0 %v7068
        %7089 = vmatprep.subr.bf16.mxu0 0
        %7090 = vmatpush1.bf16.msra.mxu0 %v7069
        %7091 = vmatprep.subr.bf16.mxu0 0
        %7092 = vmatpush1.bf16.msra.mxu0 %v7070
        %7093 = vmatprep.subr.bf16.mxu0 0
        %7094 = vmatpush1.bf16.msra.mxu0 %v7071
        %7095 = vmatprep.subr.bf16.mxu0 0
        %7096 = vmatpush1.bf16.msra.mxu0 %v7072
        %7097 = vmatprep.subr.bf16.mxu0 0
        %7098 = vmatpush1.bf16.msra.mxu0 0
        %7099 = vmatprep.subr.bf16.mxu0 0
        %7100 = vmatpush1.bf16.msra.mxu0 0
        %7101 = vmatprep.subr.bf16.mxu0 0
        %7102 = vmatpush1.bf16.msra.mxu0 0
        %7103 = vmatprep.subr.bf16.mxu0 0
        %7104 = vmatpush1.bf16.msra.mxu0 0
        %7105 = vmatprep.subr.bf16.mxu0 0
        %7106 = vmatpush1.bf16.msra.mxu0 0
        %7107 = vmatprep.subr.bf16.mxu0 0
        %7108 = vmatpush1.bf16.msra.mxu0 0
        %7109 = vmatprep.subr.bf16.mxu0 0
        %7110 = vmatpush1.bf16.msra.mxu0 0
        %7111 = vmatprep.subr.bf16.mxu0 0
        %7112 = vmatpush1.bf16.msra.mxu0 0
        %7113 = vmatprep.mubr.bf16.mxu0 0
        %7114 = vmatmul.mubr.bf16.gmra.mrb[0].mxu0 %v7008
        %v7115 = vpop.f32.mrb[0].mxu0
        %v7116 = vadd.f32 %v7032, %v7115
        %v7117 = vpop.f32.mrb[0].mxu0
        %v7118 = vpop.f32.mrb[0].mxu0
        %v7119 = vadd.f32 %v7032, %v7118
        %v7120 = vpop.f32.mrb[0].mxu0
        %7121 = vmatprep.mubr.bf16.mxu0 0
        %7122 = vmatmul.mubr.bf16.gmra.mrb[0].mxu0 %v7009
        %v7123 = vpop.f32.mrb[0].mxu0
        %v7124 = vadd.f32 %v7032, %v7123
        %v7125 = vpop.f32.mrb[0].mxu0
        %v7126 = vpop.f32.mrb[0].mxu0
        %v7127 = vadd.f32 %v7032, %v7126
        %v7128 = vpop.f32.mrb[0].mxu0
        %7129 = vmatprep.mubr.bf16.mxu0 0
        %7130 = vmatmul.mubr.bf16.gmra.mrb[0].mxu0 %v7010
        %v7131 = vpop.f32.mrb[0].mxu0
        %v7132 = vadd.f32 %v7032, %v7131
        %v7133 = vpop.f32.mrb[0].mxu0
        %v7134 = vpop.f32.mrb[0].mxu0
        %v7135 = vadd.f32 %v7032, %v7134
        %v7136 = vpop.f32.mrb[0].mxu0
        %7137 = vmatprep.mubr.bf16.mxu0 0
        %7138 = vmatmul.mubr.bf16.gmra.mrb[0].mxu0 %v7011
        %v7139 = vpop.f32.mrb[0].mxu0
        %v7140 = vadd.f32 %v7032, %v7139
        %v7141 = vpop.f32.mrb[0].mxu0
        %v7142 = vpop.f32.mrb[0].mxu0
        %v7143 = vpop.f32.mrb[0].mxu0
        %7144 = vdwg.mxu0
        %v7145 = vmax.f32 %v7116, 0.0
        %v7146 = vmax.f32 %v7119, 0.0
        %v7147 = vmax.f32 %v7124, 0.0
        %v7148 = vmax.f32 %v7127, 0.0
        %v7149 = vmax.f32 %v7132, 0.0
        %v7150 = vmax.f32 %v7135, 0.0
        %v7151 = vmax.f32 %v7140, 0.0
        %v7152 = vld [vmem:[%s13] sm:$0x1]
        %v7153 = vpack.c.bf16 %v7146, %v7145
        %v7154 = vpack.c.bf16 %v7148, %v7147
        %v7155 = vpack.c.bf16 %v7150, %v7149
        %v7156 = vpack.c.bf16 %v7151, %v7151
        %vm7157 = vcmask 408576
        %v7159 = vsel %vm7157, %v7152, 0
        %v7162 = vsel %vm3271, %v7156, 0
        %7164 = vmatprep.subr.bf16.mxu0 0
        %7165 = vmatpush1.bf16.msra.mxu0 %v7153
        %7166 = vmatprep.subr.bf16.mxu0 0
        %7167 = vmatpush1.bf16.msra.mxu0 %v7154
        %7168 = vmatprep.subr.bf16.mxu0 0
        %7169 = vmatpush1.bf16.msra.mxu0 %v7155
        %7170 = vmatprep.subr.bf16.mxu0 0
        %7171 = vmatpush1.bf16.msra.mxu0 %v7162
        %7172 = vmatprep.subr.bf16.mxu0 0
        %7173 = vmatpush1.bf16.msra.mxu0 0
        %7174 = vmatprep.subr.bf16.mxu0 0
        %7175 = vmatpush1.bf16.msra.mxu0 0
        %7176 = vmatprep.subr.bf16.mxu0 0
        %7177 = vmatpush1.bf16.msra.mxu0 0
        %7178 = vmatprep.subr.bf16.mxu0 0
        %7179 = vmatpush1.bf16.msra.mxu0 0
        %7180 = vmatprep.subr.bf16.mxu0 0
        %7181 = vmatpush1.bf16.msra.mxu0 0
        %7182 = vmatprep.subr.bf16.mxu0 0
        %7183 = vmatpush1.bf16.msra.mxu0 0
        %7184 = vmatprep.subr.bf16.mxu0 0
        %7185 = vmatpush1.bf16.msra.mxu0 0
        %7186 = vmatprep.subr.bf16.mxu0 0
        %7187 = vmatpush1.bf16.msra.mxu0 0
        %7188 = vmatprep.subr.bf16.mxu0 0
        %7189 = vmatpush1.bf16.msra.mxu0 0
        %7190 = vmatprep.subr.bf16.mxu0 0
        %7191 = vmatpush1.bf16.msra.mxu0 0
        %7192 = vmatprep.subr.bf16.mxu0 0
        %7193 = vmatpush1.bf16.msra.mxu0 0
        %7194 = vmatprep.subr.bf16.mxu0 0
        %7195 = vmatpush1.bf16.msra.mxu0 0
        %7196 = vmatprep.mubr.bf16.mxu0 0
        %7197 = vmatmul.mubr.bf16.gmra.mrb[0].mxu0 %v7159
        %v7198 = vpop.f32.mrb[0].mxu0
        %v7199 = vadd.f32 0.0, %v7198
        %v7200 = vpop.f32.mrb[0].mxu0
        %v7201 = vpop.f32.mrb[0].mxu0
        %v7202 = vpop.f32.mrb[0].mxu0
        %7203 = vdwg.mxu0
        %v7204 = vpack.c.bf16 %v7199, %v7199
        %v7205 = vld [vmem:[%s644] sm:$0xf]
        %v7206 = vld [vmem:[%s644 + $0x4] sm:$0xf]
        %v7207 = vld [vmem:[%s644 + $0x8] sm:$0xf]
        %v7208 = vld [vmem:[%s644 + $0xc] sm:$0xf]
        %v7209 = vld [vmem:[%s644 + $0x10] sm:$0xf]
        %v7210 = vld [vmem:[%s644 + $0x14] sm:$0xf]
        %v7211 = vld [vmem:[%s644 + $0x18] sm:$0xf]
        %v7212 = vld [vmem:[%s644 + $0x1c] sm:$0xf]
        %v7213 = vld [vmem:[%s648 + $0x6] sm:$0x1]
        %v7214 = vlaneseq
        %v7215 = vshrl.u32 %v7214, 7
        %v7216 = vsub.s32 0, %v7215
        %v7217 = vrot.slane %v7213, %v7216
        %v7226 = vunpack.c.l.b16 %v7205
        %v7227 = vunpack.c.l.b16 %v7206
        %v7228 = vunpack.c.l.b16 %v7207
        %v7229 = vunpack.c.l.b16 %v7208
        %v7230 = vunpack.c.l.b16 %v7209
        %v7231 = vunpack.c.l.b16 %v7210
        %v7232 = vunpack.c.l.b16 %v7211
        %v7233 = vunpack.c.l.b16 %v7212
        %v7234 = vpack.c.b16 %v7227, %v7226
        %v7235 = vpack.c.b16 %v7229, %v7228
        %v7236 = vpack.c.b16 %v7231, %v7230
        %v7237 = vpack.c.b16 %v7233, %v7232
        %v7243 = vsel %vm5197, %v7204, 0
        %7245 = vmatprep.subr.bf16.mxu0 0
        %7246 = vmatpush1.bf16.msra.mxu0 %v7234
        %7247 = vmatprep.subr.bf16.mxu0 0
        %7248 = vmatpush1.bf16.msra.mxu0 %v7235
        %7249 = vmatprep.subr.bf16.mxu0 0
        %7250 = vmatpush1.bf16.msra.mxu0 %v7236
        %7251 = vmatprep.subr.bf16.mxu0 0
        %7252 = vmatpush1.bf16.msra.mxu0 %v7237
        %7253 = vmatprep.subr.bf16.mxu0 0
        %7254 = vmatpush1.bf16.msra.mxu0 0
        %7255 = vmatprep.subr.bf16.mxu0 0
        %7256 = vmatpush1.bf16.msra.mxu0 0
        %7257 = vmatprep.subr.bf16.mxu0 0
        %7258 = vmatpush1.bf16.msra.mxu0 0
        %7259 = vmatprep.subr.bf16.mxu0 0
        %7260 = vmatpush1.bf16.msra.mxu0 0
        %7261 = vmatprep.subr.bf16.mxu0 0
        %7262 = vmatpush1.bf16.msra.mxu0 0
        %7263 = vmatprep.subr.bf16.mxu0 0
        %7264 = vmatpush1.bf16.msra.mxu0 0
        %7265 = vmatprep.subr.bf16.mxu0 0
        %7266 = vmatpush1.bf16.msra.mxu0 0
        %7267 = vmatprep.subr.bf16.mxu0 0
        %7268 = vmatpush1.bf16.msra.mxu0 0
        %7269 = vmatprep.subr.bf16.mxu0 0
        %7270 = vmatpush1.bf16.msra.mxu0 0
        %7271 = vmatprep.subr.bf16.mxu0 0
        %7272 = vmatpush1.bf16.msra.mxu0 0
        %7273 = vmatprep.subr.bf16.mxu0 0
        %7274 = vmatpush1.bf16.msra.mxu0 0
        %7275 = vmatprep.subr.bf16.mxu0 0
        %7276 = vmatpush1.bf16.msra.mxu0 0
        %7277 = vmatprep.mubr.bf16.mxu0 0
        %7278 = vmatmul.mubr.bf16.gmra.mrb[0].mxu0 %v7243
        %v7279 = vpop.f32.mrb[0].mxu0
        %v7280 = vadd.f32 %v7217, %v7279
        %v7281 = vpop.f32.mrb[0].mxu0
        %v7282 = vpop.f32.mrb[0].mxu0
        %v7283 = vpop.f32.mrb[0].mxu0
        %7284 = vdwg.mxu0
        %v7285 = vmul.f32 %v7280, 0.5
        %p7286 = scmp.eq.s32.totalorder %s33, 0
        // Predicated region
        $region77: #{_lambda_.1} parent=75 // pred_check
          %p7287 = pneg %p7286
        $region78: #{_lambda_.1} parent=75 // pred_check_branch
          %7289 = sbr.rel (%p7287) target = $region80
        $region79: #{_lambda_.1} parent=75 // pred_region
          %vm7290 = vcmask 33792
          %7291 = vst.msk [vmem:[%s600] sm:$0x3] %vm7290, %v7285
        $region80: #{_lambda_.1} parent=75 // pred_fallthru
          _
        %p7292 = scmp.ne.s32.totalorder %s33, 0
        // Predicated region
        $region81: #{_lambda_.1} parent=75 // pred_check
          %p7293 = pneg %p7292
        $region82: #{_lambda_.1} parent=75 // pred_check_branch
          %7295 = sbr.rel (%p7293) target = $region84
        $region83: #{_lambda_.1} parent=75 // pred_region
          %v7296 = vld [vmem:[%s600] sm:$0x3]
          %v7297 = vadd.f32 %v7296, %v7285
          %vm7298 = vcmask 33792
          %7299 = vst.msk [vmem:[%s600] sm:$0x3] %vm7298, %v7297
        $region84: #{_lambda_.1} parent=75 // pred_fallthru
          _
        %s7300 = sand.u32 %s389, 1
        %s7301 = scalar_lea.sflag [#allocation7], %s7300
        %s7302 = sand.u32 %s389, 1
        %s7303 = smul.addr %s7302, 2
        %s7304 = scalar_lea.vmem [#allocation6], %s7303
        // Predicated region
        $region85: #{_lambda_.1} parent=75 // pred_check
          %p7305 = pneg %p399
        $region86: #{_lambda_.1} parent=75 // pred_check_branch
          %7307 = sbr.rel (%p7305) target = $region88
        $region87: #{_lambda_.1} parent=75 // pred_region
          %s7309 = ssub.s32 32, 32
          %7310 = vsyncadd %s7301, %s7309
          %s7311 = smul.addr %s32, 32
          %s7312 = scalar_lea.hbm %s14, %s7311
          %s7314 = sshll.u32 %s7304, 4
          %s7315 = int_to_ptr.vmem [resolvable:$true] %s7314
          %7317 = dma.vmem_to_hbm [thread:$0]  %s7315, 32, %s7312, %s7301
        $region88: #{_lambda_.1} parent=75 // pred_fallthru
          _
      $region76: #{_lambda_.1} parent=5 // pred_fallthru
        _
      %p7318 = scmp.le.s32.totalorder 2, %s23
      // Predicated region
      $region89: #{_lambda_.1} parent=5 // pred_check
        %p7319 = pneg %p7318
      $region90: #{_lambda_.1} parent=5 // pred_check_branch
        %7321 = sbr.rel (%p7319) target = $region92
      $region91: #{_lambda_.1} parent=5 // pred_region
        %s7322 = ssub.s32 %s23, 2
        // Predicated region
        $region93: #{_lambda_.1} parent=91 // pred_check
          %p7323 = pneg %p405
        $region94: #{_lambda_.1} parent=91 // pred_check_branch
          %7325 = sbr.rel (%p7323) target = $region96
        $region95: #{_lambda_.1} parent=91 // pred_region
          %s7326 = sand.u32 %s390, 1
          %s7327 = scalar_lea.sflag [#allocation7], %s7326
          %s7328 = sand.u32 %s390, 1
          %s7329 = smul.addr %s7328, 2
          %s7330 = scalar_lea.vmem [#allocation6], %s7329
          %7331 = dma.done %s7327, 32
        $region96: #{_lambda_.1} parent=91 // pred_fallthru
          _
      $region92: #{_lambda_.1} parent=5 // pred_fallthru
        _
    $region6: #{_lambda_.1} parent=1 // loop_footer
      %s27 = sadd.s32 1, %s23
    $region7: #{_lambda_.1} parent=1 // loop_footer_branch
      %22 = sbr.rel target = $region3
    $region8: #{_lambda_.1} parent=1 // loop_exit
      _
    %7332 = vsyncpa [#allocation7], 1
    %s7333 = scalar_lea.sflag [#allocation7], 1
    %7334 = vsyncpa %s7333, 1

</llo_original>
